<compile_context>
chip_gen: v7x
topology: tpu7x:2x2x1
jax: 0.10.0
libtpu: 0.0.40
codegen_flags: <defaults>
</compile_context>

<pallas_src>
import functools
import numpy as np

import jax
import jax.numpy as jnp
from jax.experimental import pallas as pl
from jax.experimental.pallas import tpu as pltpu

# ----------------------------- model hyper-parameters (small synthetic config) ----
D_MODEL = 32          # transformer encoder/decoder hidden
N_HEAD = 2
D_K = 16              # per-head dim (N_HEAD * D_K == D_MODEL)
D_FFN = 64            # FFT-block conv filter size
FFN_KERNELS = (9, 1)  # FastSpeech2 position-wise FFN conv kernel sizes
VP_FILTER = 32        # variance-predictor conv filter
VP_KERNEL = 3
N_BINS = 8            # energy / k quantization bins
N_MEL = 16            # mel channels
POSTNET_DIM = 32
POSTNET_KERNEL = 5
POSTNET_LAYERS = 5
VOCAB = 40
N_AUDIOTYPE = 3
ENC_LAYERS = 1
DEC_LAYERS = 1
MAX_POS = 256
IMG_C = 4             # image feature channels (visual front-end projection)
LN_EPS = 1e-5

_FFT_KEYS = ("wq", "wk", "wv", "bq", "bk", "bv", "wo", "bo",
             "ln1_g", "ln1_b", "ffn1_w", "ffn1_b", "ffn2_w", "ffn2_b",
             "ln2_g", "ln2_b")
_VP_KEYS = ("c1w", "c1b", "l1g", "l1b", "c2w", "c2b", "l2g", "l2b", "lw", "lb")
_N_FFT = len(_FFT_KEYS)
_N_VP = len(_VP_KEYS)


# ----------------------------- small helpers --------------------------------------
def sinusoid_table(n_pos, d):
    pos = np.arange(n_pos)[:, None].astype(np.float64)
    i = np.arange(d)[None, :].astype(np.float64)
    angle = pos / np.power(10000.0, 2.0 * (i // 2) / d)
    tab = np.zeros((n_pos, d), np.float32)
    tab[:, 0::2] = np.sin(angle[:, 0::2])
    tab[:, 1::2] = np.cos(angle[:, 1::2])
    return jnp.asarray(tab)


def get_mask_from_lengths(lengths, max_len):
    # True == padded position (FastSpeech2 convention)
    ids = jnp.arange(max_len)[None, :]
    return ids >= lengths[:, None]


def _batch_shards(B):
    # 2 shards -> v7x's two TensorCores via "parallel" semantics; harmless on v5e/v6e.
    return 2 if (B >= 2 and B % 2 == 0) else 1


def _full_spec(a):
    return pl.BlockSpec(a.shape, lambda i, _n=a.ndim: (0,) * _n)


# ----------------------------- in-kernel math helpers -------------------------------
def _ln(x, g, b, eps=LN_EPS):
    """LayerNorm over the last dim; g/b broadcast (e.g. (1, C))."""
    mu = jnp.mean(x, axis=-1, keepdims=True)
    var = jnp.mean((x - mu) ** 2, axis=-1, keepdims=True)
    return (x - mu) * jax.lax.rsqrt(var + eps) * g + b


def _im2col(h, k):
    """h: (Bs, T, C) f32 -> (Bs, T, k*C), 'same' zero padding along T (value-level)."""
    if k == 1:
        return h
    Bs, T, C = h.shape
    pad = (k - 1) // 2
    z = jnp.zeros((Bs, pad, C), h.dtype)
    hp = jnp.concatenate([z, h, z], axis=1)                       # (Bs, T+2*pad, C)
    return jnp.concatenate([hp[:, kk:kk + T, :] for kk in range(k)], axis=-1)


def _conv1d_same(h, w, b, k):
    """'same' 1-D conv along T as im2col + ONE MXU matmul (contraction = k*Cin).

    h: (Bs, T, Cin) f32;  w: (k*Cin, Cout) bf16 value;  b: (1, Cout) f32.
    Returns (Bs, T, Cout) f32.
    """
    Bs, T, C = h.shape
    cols = _im2col(h, k).reshape(Bs * T, k * C).astype(jnp.bfloat16)
    out = jnp.dot(cols, w, preferred_element_type=jnp.float32) + b
    return out.reshape(Bs, T, -1)


def _fft_block_math(x, keep_c, keep_r, refs, *, n_head, ffn_k):
    """One FastSpeech2 FFT block on a (Bs, T, D) slab.  All weight refs resident."""
    (wq, wk, wv, bq, bk, bv, wo, bo, ln1g, ln1b,
     w1, b1, w2, b2, ln2g, ln2b) = refs
    Bs, T, D = x.shape
    x2 = x.reshape(Bs * T, D)
    xb = x2.astype(jnp.bfloat16)
    keep2 = keep_c.reshape(Bs * T, 1)
    neg = (keep_r - 1.0) * 1e9                                    # (Bs,1,T): 0 keep / -1e9 pad

    # ---- multi-head self attention: per-head resident weight views (no lane slicing),
    #      batched over Bs with 3-D einsums; head outputs accumulate into the out-proj.
    acc = jnp.zeros((Bs * T, D), jnp.float32)
    for h in range(n_head):
        qh = jnp.dot(xb, wq[h], preferred_element_type=jnp.float32) + bq[h]
        kh = jnp.dot(xb, wk[h], preferred_element_type=jnp.float32) + bk[h]
        vh = jnp.dot(xb, wv[h], preferred_element_type=jnp.float32) + bv[h]
        dk = qh.shape[-1]
        s = jnp.einsum('bqe,bke->bqk',
                       qh.reshape(Bs, T, dk).astype(jnp.bfloat16),
                       kh.reshape(Bs, T, dk).astype(jnp.bfloat16),
                       preferred_element_type=jnp.float32) + neg
        s = s - jnp.max(s, axis=-1, keepdims=True)
        p = jnp.exp(s)
        p = p * pl.reciprocal(jnp.sum(p, axis=-1, keepdims=True), approx=True)
        ctx = jnp.einsum('bqk,bke->bqe',
                         p.astype(jnp.bfloat16),
                         vh.reshape(Bs, T, dk).astype(jnp.bfloat16),
                         preferred_element_type=jnp.float32)
        acc = acc + jnp.dot(ctx.reshape(Bs * T, dk).astype(jnp.bfloat16), wo[h],
                            preferred_element_type=jnp.float32)
    attn = acc + bo[...]

    # ---- residual + LayerNorm + mask zeroing ---------------------------------------
    h1 = _ln(attn + x2, ln1g[...], ln1b[...]) * keep2             # (Bs*T, D)

    # ---- position-wise FFN: conv(k=9) via im2col matmul + ReLU, conv(k=1) as matmul --
    f = jnp.maximum(_conv1d_same(h1.reshape(Bs, T, D), w1[...], b1[...], ffn_k), 0.0)
    g = jnp.dot(f.reshape(Bs * T, -1).astype(jnp.bfloat16), w2[...],
                preferred_element_type=jnp.float32) + b2[...]

    out = _ln(g + h1, ln2g[...], ln2b[...]) * keep2
    return out.reshape(Bs, T, D)


def _variance_predictors(h3, keep_c, refs, *, vp_k):
    """Duration / energy / k predictors on the same (Bs,T,D) input.

    Stacked weights indexed per predictor; the first-conv im2col tile is shared.
    Returns a single lane-dense (Bs, T, 3) tile = [log_dur, energy, k].
    """
    (c1w, c1b, l1g, l1b, c2w, c2b, l2g, l2b, lw, lb) = refs
    Bs, T, D = h3.shape
    keep2 = keep_c.reshape(Bs * T, 1)
    cols1 = _im2col(h3, vp_k).reshape(Bs * T, vp_k * D).astype(jnp.bfloat16)   # shared
    outs = []
    for p in range(3):
        u = jnp.maximum(
            jnp.dot(cols1, c1w[p], preferred_element_type=jnp.float32) + c1b[p], 0.0)
        u = _ln(u, l1g[p], l1b[p])                                 # (Bs*T, F)
        u = jnp.maximum(_conv1d_same(u.reshape(Bs, T, -1), c2w[p], c2b[p], vp_k), 0.0)
        u = _ln(u.reshape(Bs * T, -1), l2g[p], l2b[p])
        o = jnp.dot(u.astype(jnp.bfloat16), lw[p],
                    preferred_element_type=jnp.float32) + lb[p]    # (Bs*T, 1)
        outs.append(o * keep2)
    return jnp.concatenate(outs, axis=-1).reshape(Bs, T, 3)


# ----------------------------- kernels ----------------------------------------------
def _fft_kernel(x_ref, keepc_ref, keepr_ref, *refs, n_head, ffn_k):
    fft = refs[:_N_FFT]
    o_ref = refs[_N_FFT]
    x = x_ref[...].astype(jnp.float32)
    o_ref[...] = _fft_block_math(x, keepc_ref[...], keepr_ref[...], fft,
                                 n_head=n_head, ffn_k=ffn_k).astype(o_ref.dtype)


def _enc_vp_kernel(x_ref, keepc_ref, keepr_ref, at_ref, *refs, n_head, ffn_k, vp_k):
    """Encoder FFT block + audiotype-embedding add + all 3 variance predictors."""
    fft = refs[:_N_FFT]
    vp = refs[_N_FFT:_N_FFT + _N_VP]
    enc_ref = refs[_N_FFT + _N_VP]
    vp_ref = refs[_N_FFT + _N_VP + 1]

    x = x_ref[...].astype(jnp.float32)
    keep_c = keepc_ref[...]
    h = _fft_block_math(x, keep_c, keepr_ref[...], fft, n_head=n_head, ffn_k=ffn_k)
    h = h + at_ref[...].astype(jnp.float32)           # audiotype emb (broadcast over T)
    enc_ref[...] = h.astype(enc_ref.dtype)
    vp_ref[...] = _variance_predictors(h, keep_c, vp, vp_k=vp_k).astype(vp_ref.dtype)


def _dec_mel_post_kernel(x_ref, keepc_ref, keepr_ref, *refs,
                         n_head, ffn_k, post_k, n_mel, post_dim, post_layers):
    """Decoder FFT block + mel_linear + PostNet (BN folded) + residual add."""
    fft = refs[:_N_FFT]
    wm_ref, bm_ref, pw_ref, pb_ref = refs[_N_FFT:_N_FFT + 4]
    mel_ref = refs[_N_FFT + 4]
    post_ref = refs[_N_FFT + 5]

    x = x_ref[...].astype(jnp.float32)
    Bs, M, D = x.shape
    h = _fft_block_math(x, keepc_ref[...], keepr_ref[...], fft,
                        n_head=n_head, ffn_k=ffn_k)
    mel = (jnp.dot(h.reshape(Bs * M, D).astype(jnp.bfloat16), wm_ref[...],
                   preferred_element_type=jnp.float32) + bm_ref[...]).reshape(Bs, M, -1)
    mel_ref[...] = mel.astype(mel_ref.dtype)

    # PostNet: 5 'same' convs (BatchNorm pre-folded, channels zero-padded to post_dim),
    # tanh on all but the last layer, each conv a single im2col matmul.
    g = mel
    for li in range(post_layers):
        cin = g.shape[-1]
        if cin < post_dim:
            g = jnp.concatenate(
                [g, jnp.zeros(g.shape[:-1] + (post_dim - cin,), g.dtype)], axis=-1)
        g = _conv1d_same(g, pw_ref[li], pb_ref[li], post_k)
        if li < post_layers - 1:
            g = jnp.tanh(g)
    post_ref[...] = (g[:, :, :n_mel] + mel).astype(post_ref.dtype)


# ----------------------------- pallas_call wrappers ---------------------------------
def fused_fft_block(x, keep_col, keep_row, fft_p):
    """Standalone FFT block (used for all-but-last encoder/decoder layers)."""
    B, T, D = x.shape
    G = _batch_shards(B)
    Bs = B // G
    fft_w = tuple(fft_p[k] for k in _FFT_KEYS)
    return pl.pallas_call(
        functools.partial(_fft_kernel, n_head=N_HEAD, ffn_k=FFN_KERNELS[0]),
        out_shape=jax.ShapeDtypeStruct((B, T, D), jnp.float32),
        grid=(G,),
        in_specs=[pl.BlockSpec((Bs, T, D), lambda i: (i, 0, 0)),
                  pl.BlockSpec((Bs, T, 1), lambda i: (i, 0, 0)),
                  pl.BlockSpec((Bs, 1, T), lambda i: (i, 0, 0))]
                 + [_full_spec(w) for w in fft_w],
        out_specs=pl.BlockSpec((Bs, T, D), lambda i: (i, 0, 0)),
        compiler_params=pltpu.CompilerParams(dimension_semantics=("parallel",)),
    )(x, keep_col, keep_row, *fft_w)


def fused_encoder_vp(x, keep_col, keep_row, at_vec, fft_p, vp_p):
    """Last encoder FFT block + audiotype add + 3 variance predictors in ONE kernel."""
    B, T, D = x.shape
    G = _batch_shards(B)
    Bs = B // G
    fft_w = tuple(fft_p[k] for k in _FFT_KEYS)
    vp_w = tuple(vp_p[k] for k in _VP_KEYS)
    enc_out, vp_out = pl.pallas_call(
        functools.partial(_enc_vp_kernel, n_head=N_HEAD,
                          ffn_k=FFN_KERNELS[0], vp_k=VP_KERNEL),
        out_shape=(jax.ShapeDtypeStruct((B, T, D), jnp.float32),
                   jax.ShapeDtypeStruct((B, T, 3), jnp.float32)),
        grid=(G,),
        in_specs=[pl.BlockSpec((Bs, T, D), lambda i: (i, 0, 0)),
                  pl.BlockSpec((Bs, T, 1), lambda i: (i, 0, 0)),
                  pl.BlockSpec((Bs, 1, T), lambda i: (i, 0, 0)),
                  pl.BlockSpec((Bs, 1, D), lambda i: (i, 0, 0))]
                 + [_full_spec(w) for w in fft_w + vp_w],
        out_specs=(pl.BlockSpec((Bs, T, D), lambda i: (i, 0, 0)),
                   pl.BlockSpec((Bs, T, 3), lambda i: (i, 0, 0))),
        compiler_params=pltpu.CompilerParams(dimension_semantics=("parallel",)),
    )(x, keep_col, keep_row, at_vec, *fft_w, *vp_w)
    return enc_out, vp_out


def fused_decoder_mel_postnet(x, keep_col, keep_row, fft_p, mel_p, post_p):
    """Last decoder FFT block + mel_linear + PostNet + residual in ONE kernel."""
    B, M, D = x.shape
    G = _batch_shards(B)
    Bs = B // G
    fft_w = tuple(fft_p[k] for k in _FFT_KEYS)
    extra = (mel_p["w"], mel_p["b"], post_p["pw"], post_p["pb"])
    mel, post = pl.pallas_call(
        functools.partial(_dec_mel_post_kernel, n_head=N_HEAD,
                          ffn_k=FFN_KERNELS[0], post_k=POSTNET_KERNEL,
                          n_mel=N_MEL, post_dim=POSTNET_DIM,
                          post_layers=POSTNET_LAYERS),
        out_shape=(jax.ShapeDtypeStruct((B, M, N_MEL), jnp.float32),
                   jax.ShapeDtypeStruct((B, M, N_MEL), jnp.float32)),
        grid=(G,),
        in_specs=[pl.BlockSpec((Bs, M, D), lambda i: (i, 0, 0)),
                  pl.BlockSpec((Bs, M, 1), lambda i: (i, 0, 0)),
                  pl.BlockSpec((Bs, 1, M), lambda i: (i, 0, 0))]
                 + [_full_spec(w) for w in fft_w + extra],
        out_specs=(pl.BlockSpec((Bs, M, N_MEL), lambda i: (i, 0, 0)),
                   pl.BlockSpec((Bs, M, N_MEL), lambda i: (i, 0, 0))),
        compiler_params=pltpu.CompilerParams(dimension_semantics=("parallel",)),
    )(x, keep_col, keep_row, *fft_w, *extra)
    return mel, post


# ----------------------------- full vTTS forward ------------------------------------
@functools.partial(jax.jit, static_argnames=("max_src_len", "max_mel_len", "use_image"))
def vtts_forward(params, audiotypes, texts, src_lens, max_src_len,
                 mels=None, mel_lens=None, max_mel_len=None,
                 e_targets=None, k_targets=None, d_targets=None,
                 images=None, event_image_features=None, use_image=True,
                 e_control=1.0, d_control=1.0):
    # TODO(synk): event_image_features is unused in the reference forward as well.
    B = texts.shape[0]
    src_masks = get_mask_from_lengths(src_lens, max_src_len)
    mel_masks = (get_mask_from_lengths(mel_lens, max_mel_len)
                 if mels is not None else None)

    keep_src = (~src_masks).astype(jnp.float32)
    keep_src_col = keep_src[:, :, None]                                      # (B,T,1)
    keep_src_row = keep_src[:, None, :]                                      # (B,1,T)

    enc = params["encoder"]
    if use_image and images is not None:
        # TODO(synk): the real vTTS visual front-end (CNN/ViT feature extractor) is
        # approximated by a single linear patch projection (plain JAX - the K=4
        # contraction cannot feed the MXU, a kernel launch would only add overhead).
        Bi, C, H, W = images.shape
        patches = images.reshape(Bi, C, H * W).transpose(0, 2, 1)            # (B,HW,C)
        tok = patches @ enc["img_proj_w"] + enc["img_proj_b"]                # (B,HW,D)
        x = tok[:, :max_src_len, :]
    else:
        x = enc["word_emb"][texts]                                           # (B,T,D)
    x = x + enc["pos_enc"][:max_src_len][None, :, :]

    for layer in enc["layers"][:-1]:
        x = fused_fft_block(x, keep_src_col, keep_src_row, layer)

    if params.get("audiotype_emb") is not None:
        at_vec = params["audiotype_emb"][audiotypes][:, None, :]
    else:
        at_vec = jnp.zeros((B, 1, D_MODEL), jnp.float32)

    # last encoder layer + audiotype add + duration/energy/k predictors: ONE kernel
    x, vp_out = fused_encoder_vp(x, keep_src_col, keep_src_row, at_vec,
                                 enc["layers"][-1], params["va"]["vp"])
    log_d_pred = vp_out[..., 0]
    e_pred = vp_out[..., 1]
    k_pred = vp_out[..., 2]

    va = params["va"]
    e_val = e_targets if e_targets is not None else e_pred * e_control
    k_val = k_targets if k_targets is not None else k_pred
    x = x + va["energy_emb"][jnp.searchsorted(va["energy_bins"], e_val)]
    x = x + va["k_emb"][jnp.searchsorted(va["k_bins"], k_val)]

    if d_targets is not None:
        d_rounded = d_targets.astype(jnp.int32)
    else:
        d_rounded = jnp.maximum(
            jnp.round((jnp.exp(log_d_pred) - 1.0) * d_control), 0.0).astype(jnp.int32)
        d_rounded = jnp.where(src_masks, 0, d_rounded)

    # length regulation: data-dependent expand in plain JAX (static max_mel_len)
    T = max_src_len
    mel_len = jnp.minimum(jnp.sum(d_rounded, axis=1), max_mel_len)
    cum = jnp.cumsum(d_rounded, axis=1)                                      # (B,T)
    frames = jnp.arange(max_mel_len)                                         # (M,)
    idx = jnp.sum(frames[None, :, None] >= cum[:, None, :], axis=-1)         # (B,M)
    idx = jnp.clip(idx, 0, T - 1)
    expanded = jnp.take_along_axis(x, idx[:, :, None], axis=1)               # (B,M,D)
    if mel_masks is None:
        mel_masks = frames[None, :] >= mel_len[:, None]
    expanded = jnp.where(mel_masks[..., None], 0.0, expanded)
    mel_lens_out = mel_len

    keep_mel = (~mel_masks).astype(jnp.float32)
    keep_mel_col = keep_mel[:, :, None]
    keep_mel_row = keep_mel[:, None, :]

    dec = params["decoder"]
    y = expanded + dec["pos_enc"][:max_mel_len][None, :, :]
    for layer in dec["layers"][:-1]:
        y = fused_fft_block(y, keep_mel_col, keep_mel_row, layer)

    # last decoder layer + mel_linear + PostNet: ONE kernel
    output, postnet_output = fused_decoder_mel_postnet(
        y, keep_mel_col, keep_mel_row, dec["layers"][-1],
        params["mel_linear"], params["postnet"])

    return (output, postnet_output, e_pred, k_pred, log_d_pred, d_rounded,
            src_masks, mel_masks, src_lens, mel_lens_out)


# ----------------------------- deterministic parameter init -------------------------
def init_params(key):
    keys = iter(jax.random.split(key, 256))

    def nrm(shape, scale=0.1):
        return (scale * jax.random.normal(next(keys), shape)).astype(jnp.float32)

    def zeros(shape):
        return jnp.zeros(shape, jnp.float32)

    def ones(shape):
        return jnp.ones(shape, jnp.float32)

    def fft_layer():
        return dict(
            wq=nrm((D_MODEL, N_HEAD * D_K)), bq=zeros((N_HEAD * D_K,)),
            wk=nrm((D_MODEL, N_HEAD * D_K)), bk=zeros((N_HEAD * D_K,)),
            wv=nrm((D_MODEL, N_HEAD * D_K)), bv=zeros((N_HEAD * D_K,)),
            wo=nrm((N_HEAD * D_K, D_MODEL)), bo=zeros((D_MODEL,)),
            ln1_g=ones((D_MODEL,)), ln1_b=zeros((D_MODEL,)),
            ffn1_w=nrm((FFN_KERNELS[0], D_MODEL, D_FFN)), ffn1_b=zeros((D_FFN,)),
            ffn2_w=nrm((FFN_KERNELS[1], D_FFN, D_MODEL)), ffn2_b=zeros((D_MODEL,)),
            ln2_g=ones((D_MODEL,)), ln2_b=zeros((D_MODEL,)),
        )

    def vp():
        return dict(
            conv1_w=nrm((VP_KERNEL, D_MODEL, VP_FILTER)), conv1_b=zeros((VP_FILTER,)),
            ln1_g=ones((VP_FILTER,)), ln1_b=zeros((VP_FILTER,)),
            conv2_w=nrm((VP_KERNEL, VP_FILTER, VP_FILTER)), conv2_b=zeros((VP_FILTER,)),
            ln2_g=ones((VP_FILTER,)), ln2_b=zeros((VP_FILTER,)),
            lin_w=nrm((VP_FILTER, 1)), lin_b=zeros((1,)),
        )

    postnet = []
    dims = [N_MEL] + [POSTNET_DIM] * (POSTNET_LAYERS - 1) + [N_MEL]
    for i in range(POSTNET_LAYERS):
        postnet.append(dict(
            w=nrm((POSTNET_KERNEL, dims[i], dims[i + 1])),
            b=zeros((dims[i + 1],)),
            bn_g=ones((dims[i + 1],)), bn_b=zeros((dims[i + 1],)),
            bn_mean=zeros((dims[i + 1],)), bn_var=ones((dims[i + 1],)),
        ))

    return dict(
        encoder=dict(
            word_emb=nrm((VOCAB, D_MODEL)),
            img_proj_w=nrm((IMG_C, D_MODEL)), img_proj_b=zeros((D_MODEL,)),
            pos_enc=sinusoid_table(MAX_POS, D_MODEL),
            layers=[fft_layer() for _ in range(ENC_LAYERS)],
        ),
        audiotype_emb=nrm((N_AUDIOTYPE, D_MODEL)),
        va=dict(
            duration=vp(), energy=vp(), k=vp(),
            energy_bins=jnp.linspace(-1.0, 1.0, N_BINS - 1),
            k_bins=jnp.linspace(-1.0, 1.0, N_BINS - 1),
            energy_emb=nrm((N_BINS, D_MODEL)),
            k_emb=nrm((N_BINS, D_MODEL)),
        ),
        decoder=dict(
            pos_enc=sinusoid_table(MAX_POS, D_MODEL),
            layers=[fft_layer() for _ in range(DEC_LAYERS)],
        ),
        mel_linear=dict(w=nrm((D_MODEL, N_MEL)), b=zeros((N_MEL,))),
        postnet=postnet,
    )


# ----------------------------- parameter preparation for fused kernels --------------
def prepare_params(params):
    """One-time host-side transform: per-head weight stacks (bf16, 1/sqrt(d_k) folded),
    im2col conv-weight layouts, BatchNorm folding, stacked VP/PostNet weights."""
    scale = 1.0 / float(D_K) ** 0.5
    bf = jnp.bfloat16

    def heads_in(w):                                # (D, H*Dk) -> (H, D, Dk)
        return jnp.transpose(w.reshape(D_MODEL, N_HEAD, D_K), (1, 0, 2))

    def prep_fft(lp):
        k1 = FFN_KERNELS[0]
        return dict(
            wq=(heads_in(lp["wq"]) * scale).astype(bf),
            wk=heads_in(lp["wk"]).astype(bf),
            wv=heads_in(lp["wv"]).astype(bf),
            bq=lp["bq"].reshape(N_HEAD, 1, D_K) * scale,
            bk=lp["bk"].reshape(N_HEAD, 1, D_K),
            bv=lp["bv"].reshape(N_HEAD, 1, D_K),
            wo=lp["wo"].reshape(N_HEAD, D_K, D_MODEL).astype(bf),
            bo=lp["bo"].reshape(1, D_MODEL),
            ln1_g=lp["ln1_g"].reshape(1, D_MODEL), ln1_b=lp["ln1_b"].reshape(1, D_MODEL),
            ffn1_w=lp["ffn1_w"].reshape(k1 * D_MODEL, D_FFN).astype(bf),
            ffn1_b=lp["ffn1_b"].reshape(1, D_FFN),
            ffn2_w=lp["ffn2_w"].reshape(D_FFN, D_MODEL).astype(bf),
            ffn2_b=lp["ffn2_b"].reshape(1, D_MODEL),
            ln2_g=lp["ln2_g"].reshape(1, D_MODEL), ln2_b=lp["ln2_b"].reshape(1, D_MODEL),
        )

    def prep_vp(va):
        names = ("duration", "energy", "k")

        def stack(fn):
            return jnp.stack([fn(va[n]) for n in names])

        return dict(
            c1w=stack(lambda p: p["conv1_w"].reshape(VP_KERNEL * D_MODEL,
                                                     VP_FILTER)).astype(bf),
            c1b=stack(lambda p: p["conv1_b"].reshape(1, VP_FILTER)),
            l1g=stack(lambda p: p["ln1_g"].reshape(1, VP_FILTER)),
            l1b=stack(lambda p: p["ln1_b"].reshape(1, VP_FILTER)),
            c2w=stack(lambda p: p["conv2_w"].reshape(VP_KERNEL * VP_FILTER,
                                                     VP_FILTER)).astype(bf),
            c2b=stack(lambda p: p["conv2_b"].reshape(1, VP_FILTER)),
            l2g=stack(lambda p: p["ln2_g"].reshape(1, VP_FILTER)),
            l2b=stack(lambda p: p["ln2_b"].reshape(1, VP_FILTER)),
            lw=stack(lambda p: p["lin_w"]).astype(bf),               # (3, F, 1)
            lb=stack(lambda p: p["lin_b"].reshape(1, 1)),            # (3, 1, 1)
        )

    def prep_postnet(layers):
        # Fold inference-mode BatchNorm into conv weights, pad channel dims to
        # POSTNET_DIM, and reshape to the im2col (K*Cin, Cout) layout.
        ws, bs = [], []
        for lp in layers:
            s = lp["bn_g"] * jax.lax.rsqrt(lp["bn_var"] + 1e-5)
            w = lp["w"] * s[None, None, :]
            b = (lp["b"] - lp["bn_mean"]) * s + lp["bn_b"]
            K, cin, cout = w.shape
            w = jnp.pad(w, ((0, 0), (0, POSTNET_DIM - cin), (0, POSTNET_DIM - cout)))
            b = jnp.pad(b, ((0, POSTNET_DIM - cout),))
            ws.append(w.reshape(K * POSTNET_DIM, POSTNET_DIM))
            bs.append(b.reshape(1, POSTNET_DIM))
        return dict(pw=jnp.stack(ws).astype(bf), pb=jnp.stack(bs))

    return dict(
        encoder=dict(
            word_emb=params["encoder"]["word_emb"],
            img_proj_w=params["encoder"]["img_proj_w"],
            img_proj_b=params["encoder"]["img_proj_b"],
            pos_enc=params["encoder"]["pos_enc"],
            layers=[prep_fft(l) for l in params["encoder"]["layers"]],
        ),
        audiotype_emb=params.get("audiotype_emb"),
        va=dict(
            vp=prep_vp(params["va"]),
            energy_bins=params["va"]["energy_bins"],
            k_bins=params["va"]["k_bins"],
            energy_emb=params["va"]["energy_emb"],
            k_emb=params["va"]["k_emb"],
        ),
        decoder=dict(
            pos_enc=params["decoder"]["pos_enc"],
            layers=[prep_fft(l) for l in params["decoder"]["layers"]],
        ),
        mel_linear=dict(w=params["mel_linear"]["w"].astype(bf),
                        b=params["mel_linear"]["b"].reshape(1, N_MEL)),
        postnet=prep_postnet(params["postnet"]),
    )


# ----------------------------- main --------------------------------------------------
if __name__ == "__main__":
    raw_params = init_params(jax.random.PRNGKey(42))
    params = prepare_params(raw_params)

    key = jax.random.PRNGKey(0)
    k_txt, k_img, k_dur, k_e, k_k = jax.random.split(key, 5)

    B, T_SRC = 2, 8
    IMG_H, IMG_W = 4, 4
    MAX_MEL_LEN = 3 * T_SRC  # static cap on expanded mel length

    texts = jax.random.randint(k_txt, (B, T_SRC), 0, VOCAB, dtype=jnp.int32)
    src_lens = jnp.array([8, 6], jnp.int32)
    audiotypes = jnp.array([0, 2], jnp.int32)
    images = jax.random.normal(k_img, (B, IMG_C, IMG_H, IMG_W), jnp.float32)

    pad_mask = jnp.arange(T_SRC)[None, :] >= src_lens[:, None]
    d_targets = jax.random.randint(k_dur, (B, T_SRC), 1, 4, dtype=jnp.int32)
    d_targets = jnp.where(pad_mask, 0, d_targets)
    e_targets = jax.random.normal(k_e, (B, T_SRC), jnp.float32)
    k_targets = jax.random.normal(k_k, (B, T_SRC), jnp.float32)

    outs = vtts_forward(
        params, audiotypes, texts, src_lens, max_src_len=T_SRC,
        mels=None, mel_lens=None, max_mel_len=MAX_MEL_LEN,
        e_targets=e_targets, k_targets=k_targets, d_targets=d_targets,
        images=images, event_image_features=None, use_image=True,
        e_control=1.0, d_control=1.0,
    )
    jax.block_until_ready(outs)

    mel, postnet_mel = outs[0], outs[1]
    assert mel.shape == (B, MAX_MEL_LEN, N_MEL)
    assert postnet_mel.shape == (B, MAX_MEL_LEN, N_MEL)
    assert bool(jnp.all(jnp.isfinite(mel))) and bool(jnp.all(jnp.isfinite(postnet_mel)))
    print("KERNEL_OK")
</pallas_src>

<mosaic_0001>
module attributes {stable_mosaic.version = 11 : i64} {
  func.func @_enc_vp_kernel(%arg0: i32, %arg1: memref<1x8x32xf32, #tpu.memory_space<vmem>>, %arg2: memref<1x8x1xf32, #tpu.memory_space<vmem>>, %arg3: memref<1x1x8xf32, #tpu.memory_space<vmem>>, %arg4: memref<1x1x32xf32, #tpu.memory_space<vmem>>, %arg5: memref<2x32x16xbf16, #tpu.memory_space<vmem>>, %arg6: memref<2x32x16xbf16, #tpu.memory_space<vmem>>, %arg7: memref<2x32x16xbf16, #tpu.memory_space<vmem>>, %arg8: memref<2x1x16xf32, #tpu.memory_space<vmem>>, %arg9: memref<2x1x16xf32, #tpu.memory_space<vmem>>, %arg10: memref<2x1x16xf32, #tpu.memory_space<vmem>>, %arg11: memref<2x16x32xbf16, #tpu.memory_space<vmem>>, %arg12: memref<1x32xf32, #tpu.memory_space<vmem>>, %arg13: memref<1x32xf32, #tpu.memory_space<vmem>>, %arg14: memref<1x32xf32, #tpu.memory_space<vmem>>, %arg15: memref<288x64xbf16, #tpu.memory_space<vmem>>, %arg16: memref<1x64xf32, #tpu.memory_space<vmem>>, %arg17: memref<64x32xbf16, #tpu.memory_space<vmem>>, %arg18: memref<1x32xf32, #tpu.memory_space<vmem>>, %arg19: memref<1x32xf32, #tpu.memory_space<vmem>>, %arg20: memref<1x32xf32, #tpu.memory_space<vmem>>, %arg21: memref<3x96x32xbf16, #tpu.memory_space<vmem>>, %arg22: memref<3x1x32xf32, #tpu.memory_space<vmem>>, %arg23: memref<3x1x32xf32, #tpu.memory_space<vmem>>, %arg24: memref<3x1x32xf32, #tpu.memory_space<vmem>>, %arg25: memref<3x96x32xbf16, #tpu.memory_space<vmem>>, %arg26: memref<3x1x32xf32, #tpu.memory_space<vmem>>, %arg27: memref<3x1x32xf32, #tpu.memory_space<vmem>>, %arg28: memref<3x1x32xf32, #tpu.memory_space<vmem>>, %arg29: memref<3x32x1xbf16, #tpu.memory_space<vmem>>, %arg30: memref<3x1x1xf32, #tpu.memory_space<vmem>>, %arg31: memref<1x8x32xf32, #tpu.memory_space<vmem>>, %arg32: memref<1x8x3xf32, #tpu.memory_space<vmem>>) attributes {dimension_semantics = [#tpu.dimension_semantics<parallel>], iteration_bounds = array<i64: 2>, scalar_prefetch = 0 : i64, scratch_operands = 0 : i64, tpu.core_type = #tpu.core_type<tc>, window_params = [{transform_indices = @transform_0, window_bounds = array<i64: 1, 8, 32>}, {transform_indices = @transform_1, window_bounds = array<i64: 1, 8, 1>}, {transform_indices = @transform_2, window_bounds = array<i64: 1, 1, 8>}, {transform_indices = @transform_3, window_bounds = array<i64: 1, 1, 32>}, {pipeline_mode = #tpu.pipeline_mode<synchronous>, transform_indices = @transform_4, window_bounds = array<i64: 2, 32, 16>}, {pipeline_mode = #tpu.pipeline_mode<synchronous>, transform_indices = @transform_5, window_bounds = array<i64: 2, 32, 16>}, {pipeline_mode = #tpu.pipeline_mode<synchronous>, transform_indices = @transform_6, window_bounds = array<i64: 2, 32, 16>}, {pipeline_mode = #tpu.pipeline_mode<synchronous>, transform_indices = @transform_7, window_bounds = array<i64: 2, 1, 16>}, {pipeline_mode = #tpu.pipeline_mode<synchronous>, transform_indices = @transform_8, window_bounds = array<i64: 2, 1, 16>}, {pipeline_mode = #tpu.pipeline_mode<synchronous>, transform_indices = @transform_9, window_bounds = array<i64: 2, 1, 16>}, {pipeline_mode = #tpu.pipeline_mode<synchronous>, transform_indices = @transform_10, window_bounds = array<i64: 2, 16, 32>}, {pipeline_mode = #tpu.pipeline_mode<synchronous>, transform_indices = @transform_11, window_bounds = array<i64: 1, 32>}, {pipeline_mode = #tpu.pipeline_mode<synchronous>, transform_indices = @transform_12, window_bounds = array<i64: 1, 32>}, {pipeline_mode = #tpu.pipeline_mode<synchronous>, transform_indices = @transform_13, window_bounds = array<i64: 1, 32>}, {pipeline_mode = #tpu.pipeline_mode<synchronous>, transform_indices = @transform_14, window_bounds = array<i64: 288, 64>}, {pipeline_mode = #tpu.pipeline_mode<synchronous>, transform_indices = @transform_15, window_bounds = array<i64: 1, 64>}, {pipeline_mode = #tpu.pipeline_mode<synchronous>, transform_indices = @transform_16, window_bounds = array<i64: 64, 32>}, {pipeline_mode = #tpu.pipeline_mode<synchronous>, transform_indices = @transform_17, window_bounds = array<i64: 1, 32>}, {pipeline_mode = #tpu.pipeline_mode<synchronous>, transform_indices = @transform_18, window_bounds = array<i64: 1, 32>}, {pipeline_mode = #tpu.pipeline_mode<synchronous>, transform_indices = @transform_19, window_bounds = array<i64: 1, 32>}, {pipeline_mode = #tpu.pipeline_mode<synchronous>, transform_indices = @transform_20, window_bounds = array<i64: 3, 96, 32>}, {pipeline_mode = #tpu.pipeline_mode<synchronous>, transform_indices = @transform_21, window_bounds = array<i64: 3, 1, 32>}, {pipeline_mode = #tpu.pipeline_mode<synchronous>, transform_indices = @transform_22, window_bounds = array<i64: 3, 1, 32>}, {pipeline_mode = #tpu.pipeline_mode<synchronous>, transform_indices = @transform_23, window_bounds = array<i64: 3, 1, 32>}, {pipeline_mode = #tpu.pipeline_mode<synchronous>, transform_indices = @transform_24, window_bounds = array<i64: 3, 96, 32>}, {pipeline_mode = #tpu.pipeline_mode<synchronous>, transform_indices = @transform_25, window_bounds = array<i64: 3, 1, 32>}, {pipeline_mode = #tpu.pipeline_mode<synchronous>, transform_indices = @transform_26, window_bounds = array<i64: 3, 1, 32>}, {pipeline_mode = #tpu.pipeline_mode<synchronous>, transform_indices = @transform_27, window_bounds = array<i64: 3, 1, 32>}, {pipeline_mode = #tpu.pipeline_mode<synchronous>, transform_indices = @transform_28, window_bounds = array<i64: 3, 32, 1>}, {pipeline_mode = #tpu.pipeline_mode<synchronous>, transform_indices = @transform_29, window_bounds = array<i64: 3, 1, 1>}, {transform_indices = @transform_30, window_bounds = array<i64: 1, 8, 32>}, {transform_indices = @transform_31, window_bounds = array<i64: 1, 8, 3>}]} {
    %c0 = arith.constant 0 : index
    %c0_0 = arith.constant 0 : index
    %c0_1 = arith.constant 0 : index
    %0 = vector.load %arg1[%c0, %c0_0, %c0_1] : memref<1x8x32xf32, #tpu.memory_space<vmem>>, vector<1x8x32xf32>
    %c0_2 = arith.constant 0 : index
    %c0_3 = arith.constant 0 : index
    %c0_4 = arith.constant 0 : index
    %1 = vector.load %arg2[%c0_2, %c0_3, %c0_4] : memref<1x8x1xf32, #tpu.memory_space<vmem>>, vector<1x8x1xf32>
    %c0_5 = arith.constant 0 : index
    %c0_6 = arith.constant 0 : index
    %c0_7 = arith.constant 0 : index
    %2 = vector.load %arg3[%c0_5, %c0_6, %c0_7] : memref<1x1x8xf32, #tpu.memory_space<vmem>>, vector<1x1x8xf32>
    %3 = vector.shape_cast %0 : vector<1x8x32xf32> to vector<8x32xf32>
    %4 = arith.truncf %3 : vector<8x32xf32> to vector<8x32xbf16>
    %5 = vector.shape_cast %1 : vector<1x8x1xf32> to vector<8x1xf32>
    %cst = arith.constant 1.000000e+00 : f32
    %6 = vector.broadcast %cst : f32 to vector<1x1x8xf32>
    %7 = arith.subf %2, %6 : vector<1x1x8xf32>
    %cst_8 = arith.constant 1.000000e+09 : f32
    %8 = vector.broadcast %cst_8 : f32 to vector<1x1x8xf32>
    %9 = arith.mulf %7, %8 : vector<1x1x8xf32>
    %cst_9 = arith.constant 0.000000e+00 : f32
    %10 = vector.broadcast %cst_9 : f32 to vector<8x32xf32>
    %c0_10 = arith.constant 0 : index
    %c0_11 = arith.constant 0 : index
    %c0_12 = arith.constant 0 : index
    %11 = vector.load %arg5[%c0_10, %c0_11, %c0_12] : memref<2x32x16xbf16, #tpu.memory_space<vmem>>, vector<1x32x16xbf16>
    %12 = vector.shape_cast %11 : vector<1x32x16xbf16> to vector<32x16xbf16>
    %cst_13 = arith.constant dense<0.000000e+00> : vector<8x16xf32>
    %13 = tpu.matmul %4, %12, %cst_13 {dimension_numbers = #tpu.dot_dimension_numbers<[1], [0], [0], [1], [0, 0, 1, 1], [], []>} : vector<8x32xbf16>, vector<32x16xbf16>, vector<8x16xf32> -> vector<8x16xf32>
    %c0_14 = arith.constant 0 : index
    %c0_15 = arith.constant 0 : index
    %c0_16 = arith.constant 0 : index
    %14 = vector.load %arg8[%c0_14, %c0_15, %c0_16] : memref<2x1x16xf32, #tpu.memory_space<vmem>>, vector<1x1x16xf32>
    %15 = vector.shape_cast %14 : vector<1x1x16xf32> to vector<1x16xf32>
    %16 = vector.broadcast %15 : vector<1x16xf32> to vector<8x16xf32>
    %17 = arith.addf %13, %16 : vector<8x16xf32>
    %c0_17 = arith.constant 0 : index
    %c0_18 = arith.constant 0 : index
    %c0_19 = arith.constant 0 : index
    %18 = vector.load %arg6[%c0_17, %c0_18, %c0_19] : memref<2x32x16xbf16, #tpu.memory_space<vmem>>, vector<1x32x16xbf16>
    %19 = vector.shape_cast %18 : vector<1x32x16xbf16> to vector<32x16xbf16>
    %cst_20 = arith.constant dense<0.000000e+00> : vector<8x16xf32>
    %20 = tpu.matmul %4, %19, %cst_20 {dimension_numbers = #tpu.dot_dimension_numbers<[1], [0], [0], [1], [0, 0, 1, 1], [], []>} : vector<8x32xbf16>, vector<32x16xbf16>, vector<8x16xf32> -> vector<8x16xf32>
    %c0_21 = arith.constant 0 : index
    %c0_22 = arith.constant 0 : index
    %c0_23 = arith.constant 0 : index
    %21 = vector.load %arg9[%c0_21, %c0_22, %c0_23] : memref<2x1x16xf32, #tpu.memory_space<vmem>>, vector<1x1x16xf32>
    %22 = vector.shape_cast %21 : vector<1x1x16xf32> to vector<1x16xf32>
    %23 = vector.broadcast %22 : vector<1x16xf32> to vector<8x16xf32>
    %24 = arith.addf %20, %23 : vector<8x16xf32>
    %c0_24 = arith.constant 0 : index
    %c0_25 = arith.constant 0 : index
    %c0_26 = arith.constant 0 : index
    %25 = vector.load %arg7[%c0_24, %c0_25, %c0_26] : memref<2x32x16xbf16, #tpu.memory_space<vmem>>, vector<1x32x16xbf16>
    %26 = vector.shape_cast %25 : vector<1x32x16xbf16> to vector<32x16xbf16>
    %cst_27 = arith.constant dense<0.000000e+00> : vector<8x16xf32>
    %27 = tpu.matmul %4, %26, %cst_27 {dimension_numbers = #tpu.dot_dimension_numbers<[1], [0], [0], [1], [0, 0, 1, 1], [], []>} : vector<8x32xbf16>, vector<32x16xbf16>, vector<8x16xf32> -> vector<8x16xf32>
    %c0_28 = arith.constant 0 : index
    %c0_29 = arith.constant 0 : index
    %c0_30 = arith.constant 0 : index
    %28 = vector.load %arg10[%c0_28, %c0_29, %c0_30] : memref<2x1x16xf32, #tpu.memory_space<vmem>>, vector<1x1x16xf32>
    %29 = vector.shape_cast %28 : vector<1x1x16xf32> to vector<1x16xf32>
    %30 = vector.broadcast %29 : vector<1x16xf32> to vector<8x16xf32>
    %31 = arith.addf %27, %30 : vector<8x16xf32>
    %32 = vector.shape_cast %17 : vector<8x16xf32> to vector<1x8x16xf32>
    %33 = arith.truncf %32 : vector<1x8x16xf32> to vector<1x8x16xbf16>
    %34 = vector.shape_cast %24 : vector<8x16xf32> to vector<1x8x16xf32>
    %35 = arith.truncf %34 : vector<1x8x16xf32> to vector<1x8x16xbf16>
    "tpu.trace_start"() <{level = 10 : i32, message = "bqe,bke->bqk"}> : () -> ()
    %cst_31 = arith.constant dense<0.000000e+00> : vector<1x8x8xf32>
    %36 = tpu.matmul %33, %35, %cst_31 {dimension_numbers = #tpu.dot_dimension_numbers<[2], [2], [1], [1], [0, 0, 0, 1, 1, 1], [0], [0]>} : vector<1x8x16xbf16>, vector<1x8x16xbf16>, vector<1x8x8xf32> -> vector<1x8x8xf32>
    "tpu.trace_stop"() : () -> ()
    %37 = vector.broadcast %9 : vector<1x1x8xf32> to vector<1x8x8xf32>
    %38 = arith.addf %36, %37 : vector<1x8x8xf32>
    %cst_32 = arith.constant dense<0xFF800000> : vector<1x8xf32>
    %39 = vector.multi_reduction <maximumf>, %38, %cst_32 [2] : vector<1x8x8xf32> to vector<1x8xf32>
    %40 = vector.shape_cast %39 : vector<1x8xf32> to vector<1x8x1xf32>
    %41 = vector.broadcast %40 : vector<1x8x1xf32> to vector<1x8x8xf32>
    %42 = arith.subf %38, %41 : vector<1x8x8xf32>
    %43 = math.exp %42 : vector<1x8x8xf32>
    %cst_33 = arith.constant dense<0.000000e+00> : vector<1x8xf32>
    %44 = vector.multi_reduction <add>, %43, %cst_33 [2] : vector<1x8x8xf32> to vector<1x8xf32>
    %45 = vector.shape_cast %44 : vector<1x8xf32> to vector<1x8x1xf32>
    %46 = tpu.reciprocal %45 {approx = true} : vector<1x8x1xf32> -> vector<1x8x1xf32>
    %47 = vector.broadcast %46 : vector<1x8x1xf32> to vector<1x8x8xf32>
    %48 = arith.mulf %43, %47 : vector<1x8x8xf32>
    %49 = arith.truncf %48 : vector<1x8x8xf32> to vector<1x8x8xbf16>
    %50 = vector.shape_cast %31 : vector<8x16xf32> to vector<1x8x16xf32>
    %51 = arith.truncf %50 : vector<1x8x16xf32> to vector<1x8x16xbf16>
    "tpu.trace_start"() <{level = 10 : i32, message = "bqk,bke->bqe"}> : () -> ()
    %cst_34 = arith.constant dense<0.000000e+00> : vector<1x8x16xf32>
    %52 = tpu.matmul %49, %51, %cst_34 {dimension_numbers = #tpu.dot_dimension_numbers<[2], [1], [1], [2], [0, 0, 0, 1, 1, 2], [0], [0]>} : vector<1x8x8xbf16>, vector<1x8x16xbf16>, vector<1x8x16xf32> -> vector<1x8x16xf32>
    "tpu.trace_stop"() : () -> ()
    %53 = vector.shape_cast %52 : vector<1x8x16xf32> to vector<8x16xf32>
    %54 = arith.truncf %53 : vector<8x16xf32> to vector<8x16xbf16>
    %c0_35 = arith.constant 0 : index
    %c0_36 = arith.constant 0 : index
    %c0_37 = arith.constant 0 : index
    %55 = vector.load %arg11[%c0_35, %c0_36, %c0_37] : memref<2x16x32xbf16, #tpu.memory_space<vmem>>, vector<1x16x32xbf16>
    %56 = vector.shape_cast %55 : vector<1x16x32xbf16> to vector<16x32xbf16>
    %cst_38 = arith.constant dense<0.000000e+00> : vector<8x32xf32>
    %57 = tpu.matmul %54, %56, %cst_38 {dimension_numbers = #tpu.dot_dimension_numbers<[1], [0], [0], [1], [0, 0, 1, 1], [], []>} : vector<8x16xbf16>, vector<16x32xbf16>, vector<8x32xf32> -> vector<8x32xf32>
    %58 = arith.addf %10, %57 : vector<8x32xf32>
    %c1 = arith.constant 1 : index
    %c0_39 = arith.constant 0 : index
    %c0_40 = arith.constant 0 : index
    %59 = vector.load %arg5[%c1, %c0_39, %c0_40] : memref<2x32x16xbf16, #tpu.memory_space<vmem>>, vector<1x32x16xbf16>
    %60 = vector.shape_cast %59 : vector<1x32x16xbf16> to vector<32x16xbf16>
    %cst_41 = arith.constant dense<0.000000e+00> : vector<8x16xf32>
    %61 = tpu.matmul %4, %60, %cst_41 {dimension_numbers = #tpu.dot_dimension_numbers<[1], [0], [0], [1], [0, 0, 1, 1], [], []>} : vector<8x32xbf16>, vector<32x16xbf16>, vector<8x16xf32> -> vector<8x16xf32>
    %c1_42 = arith.constant 1 : index
    %c0_43 = arith.constant 0 : index
    %c0_44 = arith.constant 0 : index
    %62 = vector.load %arg8[%c1_42, %c0_43, %c0_44] : memref<2x1x16xf32, #tpu.memory_space<vmem>>, vector<1x1x16xf32>
    %63 = vector.shape_cast %62 : vector<1x1x16xf32> to vector<1x16xf32>
    %64 = vector.broadcast %63 : vector<1x16xf32> to vector<8x16xf32>
    %65 = arith.addf %61, %64 : vector<8x16xf32>
    %c1_45 = arith.constant 1 : index
    %c0_46 = arith.constant 0 : index
    %c0_47 = arith.constant 0 : index
    %66 = vector.load %arg6[%c1_45, %c0_46, %c0_47] : memref<2x32x16xbf16, #tpu.memory_space<vmem>>, vector<1x32x16xbf16>
    %67 = vector.shape_cast %66 : vector<1x32x16xbf16> to vector<32x16xbf16>
    %cst_48 = arith.constant dense<0.000000e+00> : vector<8x16xf32>
    %68 = tpu.matmul %4, %67, %cst_48 {dimension_numbers = #tpu.dot_dimension_numbers<[1], [0], [0], [1], [0, 0, 1, 1], [], []>} : vector<8x32xbf16>, vector<32x16xbf16>, vector<8x16xf32> -> vector<8x16xf32>
    %c1_49 = arith.constant 1 : index
    %c0_50 = arith.constant 0 : index
    %c0_51 = arith.constant 0 : index
    %69 = vector.load %arg9[%c1_49, %c0_50, %c0_51] : memref<2x1x16xf32, #tpu.memory_space<vmem>>, vector<1x1x16xf32>
    %70 = vector.shape_cast %69 : vector<1x1x16xf32> to vector<1x16xf32>
    %71 = vector.broadcast %70 : vector<1x16xf32> to vector<8x16xf32>
    %72 = arith.addf %68, %71 : vector<8x16xf32>
    %c1_52 = arith.constant 1 : index
    %c0_53 = arith.constant 0 : index
    %c0_54 = arith.constant 0 : index
    %73 = vector.load %arg7[%c1_52, %c0_53, %c0_54] : memref<2x32x16xbf16, #tpu.memory_space<vmem>>, vector<1x32x16xbf16>
    %74 = vector.shape_cast %73 : vector<1x32x16xbf16> to vector<32x16xbf16>
    %cst_55 = arith.constant dense<0.000000e+00> : vector<8x16xf32>
    %75 = tpu.matmul %4, %74, %cst_55 {dimension_numbers = #tpu.dot_dimension_numbers<[1], [0], [0], [1], [0, 0, 1, 1], [], []>} : vector<8x32xbf16>, vector<32x16xbf16>, vector<8x16xf32> -> vector<8x16xf32>
    %c1_56 = arith.constant 1 : index
    %c0_57 = arith.constant 0 : index
    %c0_58 = arith.constant 0 : index
    %76 = vector.load %arg10[%c1_56, %c0_57, %c0_58] : memref<2x1x16xf32, #tpu.memory_space<vmem>>, vector<1x1x16xf32>
    %77 = vector.shape_cast %76 : vector<1x1x16xf32> to vector<1x16xf32>
    %78 = vector.broadcast %77 : vector<1x16xf32> to vector<8x16xf32>
    %79 = arith.addf %75, %78 : vector<8x16xf32>
    %80 = vector.shape_cast %65 : vector<8x16xf32> to vector<1x8x16xf32>
    %81 = arith.truncf %80 : vector<1x8x16xf32> to vector<1x8x16xbf16>
    %82 = vector.shape_cast %72 : vector<8x16xf32> to vector<1x8x16xf32>
    %83 = arith.truncf %82 : vector<1x8x16xf32> to vector<1x8x16xbf16>
    "tpu.trace_start"() <{level = 10 : i32, message = "bqe,bke->bqk"}> : () -> ()
    %cst_59 = arith.constant dense<0.000000e+00> : vector<1x8x8xf32>
    %84 = tpu.matmul %81, %83, %cst_59 {dimension_numbers = #tpu.dot_dimension_numbers<[2], [2], [1], [1], [0, 0, 0, 1, 1, 1], [0], [0]>} : vector<1x8x16xbf16>, vector<1x8x16xbf16>, vector<1x8x8xf32> -> vector<1x8x8xf32>
    "tpu.trace_stop"() : () -> ()
    %85 = vector.broadcast %9 : vector<1x1x8xf32> to vector<1x8x8xf32>
    %86 = arith.addf %84, %85 : vector<1x8x8xf32>
    %cst_60 = arith.constant dense<0xFF800000> : vector<1x8xf32>
    %87 = vector.multi_reduction <maximumf>, %86, %cst_60 [2] : vector<1x8x8xf32> to vector<1x8xf32>
    %88 = vector.shape_cast %87 : vector<1x8xf32> to vector<1x8x1xf32>
    %89 = vector.broadcast %88 : vector<1x8x1xf32> to vector<1x8x8xf32>
    %90 = arith.subf %86, %89 : vector<1x8x8xf32>
    %91 = math.exp %90 : vector<1x8x8xf32>
    %cst_61 = arith.constant dense<0.000000e+00> : vector<1x8xf32>
    %92 = vector.multi_reduction <add>, %91, %cst_61 [2] : vector<1x8x8xf32> to vector<1x8xf32>
    %93 = vector.shape_cast %92 : vector<1x8xf32> to vector<1x8x1xf32>
    %94 = tpu.reciprocal %93 {approx = true} : vector<1x8x1xf32> -> vector<1x8x1xf32>
    %95 = vector.broadcast %94 : vector<1x8x1xf32> to vector<1x8x8xf32>
    %96 = arith.mulf %91, %95 : vector<1x8x8xf32>
    %97 = arith.truncf %96 : vector<1x8x8xf32> to vector<1x8x8xbf16>
    %98 = vector.shape_cast %79 : vector<8x16xf32> to vector<1x8x16xf32>
    %99 = arith.truncf %98 : vector<1x8x16xf32> to vector<1x8x16xbf16>
    "tpu.trace_start"() <{level = 10 : i32, message = "bqk,bke->bqe"}> : () -> ()
    %cst_62 = arith.constant dense<0.000000e+00> : vector<1x8x16xf32>
    %100 = tpu.matmul %97, %99, %cst_62 {dimension_numbers = #tpu.dot_dimension_numbers<[2], [1], [1], [2], [0, 0, 0, 1, 1, 2], [0], [0]>} : vector<1x8x8xbf16>, vector<1x8x16xbf16>, vector<1x8x16xf32> -> vector<1x8x16xf32>
    "tpu.trace_stop"() : () -> ()
    %101 = vector.shape_cast %100 : vector<1x8x16xf32> to vector<8x16xf32>
    %102 = arith.truncf %101 : vector<8x16xf32> to vector<8x16xbf16>
    %c1_63 = arith.constant 1 : index
    %c0_64 = arith.constant 0 : index
    %c0_65 = arith.constant 0 : index
    %103 = vector.load %arg11[%c1_63, %c0_64, %c0_65] : memref<2x16x32xbf16, #tpu.memory_space<vmem>>, vector<1x16x32xbf16>
    %104 = vector.shape_cast %103 : vector<1x16x32xbf16> to vector<16x32xbf16>
    %cst_66 = arith.constant dense<0.000000e+00> : vector<8x32xf32>
    %105 = tpu.matmul %102, %104, %cst_66 {dimension_numbers = #tpu.dot_dimension_numbers<[1], [0], [0], [1], [0, 0, 1, 1], [], []>} : vector<8x16xbf16>, vector<16x32xbf16>, vector<8x32xf32> -> vector<8x32xf32>
    %106 = arith.addf %58, %105 : vector<8x32xf32>
    %c0_67 = arith.constant 0 : index
    %c0_68 = arith.constant 0 : index
    %107 = vector.load %arg12[%c0_67, %c0_68] : memref<1x32xf32, #tpu.memory_space<vmem>>, vector<1x32xf32>
    %108 = vector.broadcast %107 : vector<1x32xf32> to vector<8x32xf32>
    %109 = arith.addf %106, %108 : vector<8x32xf32>
    %110 = arith.addf %109, %3 : vector<8x32xf32>
    %c0_69 = arith.constant 0 : index
    %c0_70 = arith.constant 0 : index
    %111 = vector.load %arg13[%c0_69, %c0_70] : memref<1x32xf32, #tpu.memory_space<vmem>>, vector<1x32xf32>
    %c0_71 = arith.constant 0 : index
    %c0_72 = arith.constant 0 : index
    %112 = vector.load %arg14[%c0_71, %c0_72] : memref<1x32xf32, #tpu.memory_space<vmem>>, vector<1x32xf32>
    %cst_73 = arith.constant dense<0.000000e+00> : vector<8xf32>
    %113 = vector.multi_reduction <add>, %110, %cst_73 [1] : vector<8x32xf32> to vector<8xf32>
    %114 = vector.shape_cast %113 : vector<8xf32> to vector<8x1xf32>
    %cst_74 = arith.constant 3.200000e+01 : f32
    %115 = vector.broadcast %cst_74 : f32 to vector<8x1xf32>
    %116 = arith.divf %114, %115 : vector<8x1xf32>
    %117 = vector.broadcast %116 : vector<8x1xf32> to vector<8x32xf32>
    %118 = arith.subf %110, %117 : vector<8x32xf32>
    %119 = arith.mulf %118, %118 : vector<8x32xf32>
    %cst_75 = arith.constant dense<0.000000e+00> : vector<8xf32>
    %120 = vector.multi_reduction <add>, %119, %cst_75 [1] : vector<8x32xf32> to vector<8xf32>
    %121 = vector.shape_cast %120 : vector<8xf32> to vector<8x1xf32>
    %cst_76 = arith.constant 3.200000e+01 : f32
    %122 = vector.broadcast %cst_76 : f32 to vector<8x1xf32>
    %123 = arith.divf %121, %122 : vector<8x1xf32>
    %124 = vector.broadcast %116 : vector<8x1xf32> to vector<8x32xf32>
    %125 = arith.subf %110, %124 : vector<8x32xf32>
    %cst_77 = arith.constant 9.99999974E-6 : f32
    %126 = vector.broadcast %cst_77 : f32 to vector<8x1xf32>
    %127 = arith.addf %123, %126 : vector<8x1xf32>
    %128 = math.rsqrt %127 : vector<8x1xf32>
    %129 = vector.broadcast %128 : vector<8x1xf32> to vector<8x32xf32>
    %130 = arith.mulf %125, %129 : vector<8x32xf32>
    %131 = vector.broadcast %111 : vector<1x32xf32> to vector<8x32xf32>
    %132 = arith.mulf %130, %131 : vector<8x32xf32>
    %133 = vector.broadcast %112 : vector<1x32xf32> to vector<8x32xf32>
    %134 = arith.addf %132, %133 : vector<8x32xf32>
    %135 = vector.broadcast %5 : vector<8x1xf32> to vector<8x32xf32>
    %136 = arith.mulf %134, %135 : vector<8x32xf32>
    %137 = vector.shape_cast %136 : vector<8x32xf32> to vector<1x8x32xf32>
    %c0_78 = arith.constant 0 : index
    %c0_79 = arith.constant 0 : index
    %138 = vector.load %arg15[%c0_78, %c0_79] : memref<288x64xbf16, #tpu.memory_space<vmem>>, vector<288x64xbf16>
    %c0_80 = arith.constant 0 : index
    %c0_81 = arith.constant 0 : index
    %139 = vector.load %arg16[%c0_80, %c0_81] : memref<1x64xf32, #tpu.memory_space<vmem>>, vector<1x64xf32>
    %cst_82 = arith.constant 0.000000e+00 : f32
    %140 = vector.broadcast %cst_82 : f32 to vector<1x4x32xf32>
    %141 = tpu.concatenate %140, %137, %140 in 1 : vector<1x4x32xf32>, vector<1x8x32xf32>, vector<1x4x32xf32> -> vector<1x16x32xf32>
    %142 = vector.extract_strided_slice %141 {offsets = [0, 0, 0], sizes = [1, 8, 32], strides = [1, 1, 1]} : vector<1x16x32xf32> to vector<1x8x32xf32>
    %143 = vector.extract_strided_slice %141 {offsets = [0, 1, 0], sizes = [1, 8, 32], strides = [1, 1, 1]} : vector<1x16x32xf32> to vector<1x8x32xf32>
    %144 = vector.extract_strided_slice %141 {offsets = [0, 2, 0], sizes = [1, 8, 32], strides = [1, 1, 1]} : vector<1x16x32xf32> to vector<1x8x32xf32>
    %145 = vector.extract_strided_slice %141 {offsets = [0, 3, 0], sizes = [1, 8, 32], strides = [1, 1, 1]} : vector<1x16x32xf32> to vector<1x8x32xf32>
    %146 = vector.extract_strided_slice %141 {offsets = [0, 4, 0], sizes = [1, 8, 32], strides = [1, 1, 1]} : vector<1x16x32xf32> to vector<1x8x32xf32>
    %147 = vector.extract_strided_slice %141 {offsets = [0, 5, 0], sizes = [1, 8, 32], strides = [1, 1, 1]} : vector<1x16x32xf32> to vector<1x8x32xf32>
    %148 = vector.extract_strided_slice %141 {offsets = [0, 6, 0], sizes = [1, 8, 32], strides = [1, 1, 1]} : vector<1x16x32xf32> to vector<1x8x32xf32>
    %149 = vector.extract_strided_slice %141 {offsets = [0, 7, 0], sizes = [1, 8, 32], strides = [1, 1, 1]} : vector<1x16x32xf32> to vector<1x8x32xf32>
    %150 = vector.extract_strided_slice %141 {offsets = [0, 8, 0], sizes = [1, 8, 32], strides = [1, 1, 1]} : vector<1x16x32xf32> to vector<1x8x32xf32>
    %151 = tpu.concatenate %142, %143, %144, %145, %146, %147, %148, %149, %150 in 2 : vector<1x8x32xf32>, vector<1x8x32xf32>, vector<1x8x32xf32>, vector<1x8x32xf32>, vector<1x8x32xf32>, vector<1x8x32xf32>, vector<1x8x32xf32>, vector<1x8x32xf32>, vector<1x8x32xf32> -> vector<1x8x288xf32>
    %152 = vector.shape_cast %151 : vector<1x8x288xf32> to vector<8x288xf32>
    %153 = arith.truncf %152 : vector<8x288xf32> to vector<8x288xbf16>
    %cst_83 = arith.constant dense<0.000000e+00> : vector<8x64xf32>
    %154 = tpu.matmul %153, %138, %cst_83 {dimension_numbers = #tpu.dot_dimension_numbers<[1], [0], [0], [1], [0, 0, 1, 1], [], []>} : vector<8x288xbf16>, vector<288x64xbf16>, vector<8x64xf32> -> vector<8x64xf32>
    %155 = vector.broadcast %139 : vector<1x64xf32> to vector<8x64xf32>
    %156 = arith.addf %154, %155 : vector<8x64xf32>
    %157 = vector.shape_cast %156 : vector<8x64xf32> to vector<1x8x64xf32>
    %cst_84 = arith.constant 0.000000e+00 : f32
    %158 = vector.broadcast %cst_84 : f32 to vector<1x8x64xf32>
    %159 = arith.maximumf %157, %158 : vector<1x8x64xf32>
    %160 = vector.shape_cast %159 : vector<1x8x64xf32> to vector<8x64xf32>
    %161 = arith.truncf %160 : vector<8x64xf32> to vector<8x64xbf16>
    %c0_85 = arith.constant 0 : index
    %c0_86 = arith.constant 0 : index
    %162 = vector.load %arg17[%c0_85, %c0_86] : memref<64x32xbf16, #tpu.memory_space<vmem>>, vector<64x32xbf16>
    %cst_87 = arith.constant dense<0.000000e+00> : vector<8x32xf32>
    %163 = tpu.matmul %161, %162, %cst_87 {dimension_numbers = #tpu.dot_dimension_numbers<[1], [0], [0], [1], [0, 0, 1, 1], [], []>} : vector<8x64xbf16>, vector<64x32xbf16>, vector<8x32xf32> -> vector<8x32xf32>
    %c0_88 = arith.constant 0 : index
    %c0_89 = arith.constant 0 : index
    %164 = vector.load %arg18[%c0_88, %c0_89] : memref<1x32xf32, #tpu.memory_space<vmem>>, vector<1x32xf32>
    %165 = vector.broadcast %164 : vector<1x32xf32> to vector<8x32xf32>
    %166 = arith.addf %163, %165 : vector<8x32xf32>
    %167 = arith.addf %166, %136 : vector<8x32xf32>
    %c0_90 = arith.constant 0 : index
    %c0_91 = arith.constant 0 : index
    %168 = vector.load %arg19[%c0_90, %c0_91] : memref<1x32xf32, #tpu.memory_space<vmem>>, vector<1x32xf32>
    %c0_92 = arith.constant 0 : index
    %c0_93 = arith.constant 0 : index
    %169 = vector.load %arg20[%c0_92, %c0_93] : memref<1x32xf32, #tpu.memory_space<vmem>>, vector<1x32xf32>
    %cst_94 = arith.constant dense<0.000000e+00> : vector<8xf32>
    %170 = vector.multi_reduction <add>, %167, %cst_94 [1] : vector<8x32xf32> to vector<8xf32>
    %171 = vector.shape_cast %170 : vector<8xf32> to vector<8x1xf32>
    %cst_95 = arith.constant 3.200000e+01 : f32
    %172 = vector.broadcast %cst_95 : f32 to vector<8x1xf32>
    %173 = arith.divf %171, %172 : vector<8x1xf32>
    %174 = vector.broadcast %173 : vector<8x1xf32> to vector<8x32xf32>
    %175 = arith.subf %167, %174 : vector<8x32xf32>
    %176 = arith.mulf %175, %175 : vector<8x32xf32>
    %cst_96 = arith.constant dense<0.000000e+00> : vector<8xf32>
    %177 = vector.multi_reduction <add>, %176, %cst_96 [1] : vector<8x32xf32> to vector<8xf32>
    %178 = vector.shape_cast %177 : vector<8xf32> to vector<8x1xf32>
    %cst_97 = arith.constant 3.200000e+01 : f32
    %179 = vector.broadcast %cst_97 : f32 to vector<8x1xf32>
    %180 = arith.divf %178, %179 : vector<8x1xf32>
    %181 = vector.broadcast %173 : vector<8x1xf32> to vector<8x32xf32>
    %182 = arith.subf %167, %181 : vector<8x32xf32>
    %cst_98 = arith.constant 9.99999974E-6 : f32
    %183 = vector.broadcast %cst_98 : f32 to vector<8x1xf32>
    %184 = arith.addf %180, %183 : vector<8x1xf32>
    %185 = math.rsqrt %184 : vector<8x1xf32>
    %186 = vector.broadcast %185 : vector<8x1xf32> to vector<8x32xf32>
    %187 = arith.mulf %182, %186 : vector<8x32xf32>
    %188 = vector.broadcast %168 : vector<1x32xf32> to vector<8x32xf32>
    %189 = arith.mulf %187, %188 : vector<8x32xf32>
    %190 = vector.broadcast %169 : vector<1x32xf32> to vector<8x32xf32>
    %191 = arith.addf %189, %190 : vector<8x32xf32>
    %192 = vector.broadcast %5 : vector<8x1xf32> to vector<8x32xf32>
    %193 = arith.mulf %191, %192 : vector<8x32xf32>
    %194 = vector.shape_cast %193 : vector<8x32xf32> to vector<1x8x32xf32>
    %c0_99 = arith.constant 0 : index
    %c0_100 = arith.constant 0 : index
    %c0_101 = arith.constant 0 : index
    %195 = vector.load %arg4[%c0_99, %c0_100, %c0_101] : memref<1x1x32xf32, #tpu.memory_space<vmem>>, vector<1x1x32xf32>
    %196 = vector.broadcast %195 : vector<1x1x32xf32> to vector<1x8x32xf32>
    %197 = arith.addf %194, %196 : vector<1x8x32xf32>
    %c0_102 = arith.constant 0 : index
    %c0_103 = arith.constant 0 : index
    %c0_104 = arith.constant 0 : index
    %198 = vector.load %arg31[%c0_102, %c0_103, %c0_104] : memref<1x8x32xf32, #tpu.memory_space<vmem>>, vector<1x8x32xf32>
    tpu.vector_store %arg31[%c0_102, %c0_103, %c0_104], %197 {strides = array<i32>} : memref<1x8x32xf32, #tpu.memory_space<vmem>>, vector<1x8x32xf32>,
    %199 = vector.shape_cast %1 : vector<1x8x1xf32> to vector<8x1xf32>
    %cst_105 = arith.constant 0.000000e+00 : f32
    %200 = vector.broadcast %cst_105 : f32 to vector<1x1x32xf32>
    %201 = tpu.concatenate %200, %197, %200 in 1 : vector<1x1x32xf32>, vector<1x8x32xf32>, vector<1x1x32xf32> -> vector<1x10x32xf32>
    %202 = vector.extract_strided_slice %201 {offsets = [0, 0, 0], sizes = [1, 8, 32], strides = [1, 1, 1]} : vector<1x10x32xf32> to vector<1x8x32xf32>
    %203 = vector.extract_strided_slice %201 {offsets = [0, 1, 0], sizes = [1, 8, 32], strides = [1, 1, 1]} : vector<1x10x32xf32> to vector<1x8x32xf32>
    %204 = vector.extract_strided_slice %201 {offsets = [0, 2, 0], sizes = [1, 8, 32], strides = [1, 1, 1]} : vector<1x10x32xf32> to vector<1x8x32xf32>
    %205 = tpu.concatenate %202, %203, %204 in 2 : vector<1x8x32xf32>, vector<1x8x32xf32>, vector<1x8x32xf32> -> vector<1x8x96xf32>
    %206 = vector.shape_cast %205 : vector<1x8x96xf32> to vector<8x96xf32>
    %207 = arith.truncf %206 : vector<8x96xf32> to vector<8x96xbf16>
    %c0_106 = arith.constant 0 : index
    %c0_107 = arith.constant 0 : index
    %c0_108 = arith.constant 0 : index
    %208 = vector.load %arg21[%c0_106, %c0_107, %c0_108] : memref<3x96x32xbf16, #tpu.memory_space<vmem>>, vector<1x96x32xbf16>
    %209 = vector.shape_cast %208 : vector<1x96x32xbf16> to vector<96x32xbf16>
    %cst_109 = arith.constant dense<0.000000e+00> : vector<8x32xf32>
    %210 = tpu.matmul %207, %209, %cst_109 {dimension_numbers = #tpu.dot_dimension_numbers<[1], [0], [0], [1], [0, 0, 1, 1], [], []>} : vector<8x96xbf16>, vector<96x32xbf16>, vector<8x32xf32> -> vector<8x32xf32>
    %c0_110 = arith.constant 0 : index
    %c0_111 = arith.constant 0 : index
    %c0_112 = arith.constant 0 : index
    %211 = vector.load %arg22[%c0_110, %c0_111, %c0_112] : memref<3x1x32xf32, #tpu.memory_space<vmem>>, vector<1x1x32xf32>
    %212 = vector.shape_cast %211 : vector<1x1x32xf32> to vector<1x32xf32>
    %213 = vector.broadcast %212 : vector<1x32xf32> to vector<8x32xf32>
    %214 = arith.addf %210, %213 : vector<8x32xf32>
    %cst_113 = arith.constant 0.000000e+00 : f32
    %215 = vector.broadcast %cst_113 : f32 to vector<8x32xf32>
    %216 = arith.maximumf %214, %215 : vector<8x32xf32>
    %c0_114 = arith.constant 0 : index
    %c0_115 = arith.constant 0 : index
    %c0_116 = arith.constant 0 : index
    %217 = vector.load %arg23[%c0_114, %c0_115, %c0_116] : memref<3x1x32xf32, #tpu.memory_space<vmem>>, vector<1x1x32xf32>
    %218 = vector.shape_cast %217 : vector<1x1x32xf32> to vector<1x32xf32>
    %c0_117 = arith.constant 0 : index
    %c0_118 = arith.constant 0 : index
    %c0_119 = arith.constant 0 : index
    %219 = vector.load %arg24[%c0_117, %c0_118, %c0_119] : memref<3x1x32xf32, #tpu.memory_space<vmem>>, vector<1x1x32xf32>
    %220 = vector.shape_cast %219 : vector<1x1x32xf32> to vector<1x32xf32>
    %cst_120 = arith.constant dense<0.000000e+00> : vector<8xf32>
    %221 = vector.multi_reduction <add>, %216, %cst_120 [1] : vector<8x32xf32> to vector<8xf32>
    %222 = vector.shape_cast %221 : vector<8xf32> to vector<8x1xf32>
    %cst_121 = arith.constant 3.200000e+01 : f32
    %223 = vector.broadcast %cst_121 : f32 to vector<8x1xf32>
    %224 = arith.divf %222, %223 : vector<8x1xf32>
    %225 = vector.broadcast %224 : vector<8x1xf32> to vector<8x32xf32>
    %226 = arith.subf %216, %225 : vector<8x32xf32>
    %227 = arith.mulf %226, %226 : vector<8x32xf32>
    %cst_122 = arith.constant dense<0.000000e+00> : vector<8xf32>
    %228 = vector.multi_reduction <add>, %227, %cst_122 [1] : vector<8x32xf32> to vector<8xf32>
    %229 = vector.shape_cast %228 : vector<8xf32> to vector<8x1xf32>
    %cst_123 = arith.constant 3.200000e+01 : f32
    %230 = vector.broadcast %cst_123 : f32 to vector<8x1xf32>
    %231 = arith.divf %229, %230 : vector<8x1xf32>
    %232 = vector.broadcast %224 : vector<8x1xf32> to vector<8x32xf32>
    %233 = arith.subf %216, %232 : vector<8x32xf32>
    %cst_124 = arith.constant 9.99999974E-6 : f32
    %234 = vector.broadcast %cst_124 : f32 to vector<8x1xf32>
    %235 = arith.addf %231, %234 : vector<8x1xf32>
    %236 = math.rsqrt %235 : vector<8x1xf32>
    %237 = vector.broadcast %236 : vector<8x1xf32> to vector<8x32xf32>
    %238 = arith.mulf %233, %237 : vector<8x32xf32>
    %239 = vector.broadcast %218 : vector<1x32xf32> to vector<8x32xf32>
    %240 = arith.mulf %238, %239 : vector<8x32xf32>
    %241 = vector.broadcast %220 : vector<1x32xf32> to vector<8x32xf32>
    %242 = arith.addf %240, %241 : vector<8x32xf32>
    %243 = vector.shape_cast %242 : vector<8x32xf32> to vector<1x8x32xf32>
    %c0_125 = arith.constant 0 : index
    %c0_126 = arith.constant 0 : index
    %c0_127 = arith.constant 0 : index
    %244 = vector.load %arg25[%c0_125, %c0_126, %c0_127] : memref<3x96x32xbf16, #tpu.memory_space<vmem>>, vector<1x96x32xbf16>
    %245 = vector.shape_cast %244 : vector<1x96x32xbf16> to vector<96x32xbf16>
    %c0_128 = arith.constant 0 : index
    %c0_129 = arith.constant 0 : index
    %c0_130 = arith.constant 0 : index
    %246 = vector.load %arg26[%c0_128, %c0_129, %c0_130] : memref<3x1x32xf32, #tpu.memory_space<vmem>>, vector<1x1x32xf32>
    %247 = vector.shape_cast %246 : vector<1x1x32xf32> to vector<1x32xf32>
    %cst_131 = arith.constant 0.000000e+00 : f32
    %248 = vector.broadcast %cst_131 : f32 to vector<1x1x32xf32>
    %249 = tpu.concatenate %248, %243, %248 in 1 : vector<1x1x32xf32>, vector<1x8x32xf32>, vector<1x1x32xf32> -> vector<1x10x32xf32>
    %250 = vector.extract_strided_slice %249 {offsets = [0, 0, 0], sizes = [1, 8, 32], strides = [1, 1, 1]} : vector<1x10x32xf32> to vector<1x8x32xf32>
    %251 = vector.extract_strided_slice %249 {offsets = [0, 1, 0], sizes = [1, 8, 32], strides = [1, 1, 1]} : vector<1x10x32xf32> to vector<1x8x32xf32>
    %252 = vector.extract_strided_slice %249 {offsets = [0, 2, 0], sizes = [1, 8, 32], strides = [1, 1, 1]} : vector<1x10x32xf32> to vector<1x8x32xf32>
    %253 = tpu.concatenate %250, %251, %252 in 2 : vector<1x8x32xf32>, vector<1x8x32xf32>, vector<1x8x32xf32> -> vector<1x8x96xf32>
    %254 = vector.shape_cast %253 : vector<1x8x96xf32> to vector<8x96xf32>
    %255 = arith.truncf %254 : vector<8x96xf32> to vector<8x96xbf16>
    %cst_132 = arith.constant dense<0.000000e+00> : vector<8x32xf32>
    %256 = tpu.matmul %255, %245, %cst_132 {dimension_numbers = #tpu.dot_dimension_numbers<[1], [0], [0], [1], [0, 0, 1, 1], [], []>} : vector<8x96xbf16>, vector<96x32xbf16>, vector<8x32xf32> -> vector<8x32xf32>
    %257 = vector.broadcast %247 : vector<1x32xf32> to vector<8x32xf32>
    %258 = arith.addf %256, %257 : vector<8x32xf32>
    %259 = vector.shape_cast %258 : vector<8x32xf32> to vector<1x8x32xf32>
    %cst_133 = arith.constant 0.000000e+00 : f32
    %260 = vector.broadcast %cst_133 : f32 to vector<1x8x32xf32>
    %261 = arith.maximumf %259, %260 : vector<1x8x32xf32>
    %262 = vector.shape_cast %261 : vector<1x8x32xf32> to vector<8x32xf32>
    %c0_134 = arith.constant 0 : index
    %c0_135 = arith.constant 0 : index
    %c0_136 = arith.constant 0 : index
    %263 = vector.load %arg27[%c0_134, %c0_135, %c0_136] : memref<3x1x32xf32, #tpu.memory_space<vmem>>, vector<1x1x32xf32>
    %264 = vector.shape_cast %263 : vector<1x1x32xf32> to vector<1x32xf32>
    %c0_137 = arith.constant 0 : index
    %c0_138 = arith.constant 0 : index
    %c0_139 = arith.constant 0 : index
    %265 = vector.load %arg28[%c0_137, %c0_138, %c0_139] : memref<3x1x32xf32, #tpu.memory_space<vmem>>, vector<1x1x32xf32>
    %266 = vector.shape_cast %265 : vector<1x1x32xf32> to vector<1x32xf32>
    %cst_140 = arith.constant dense<0.000000e+00> : vector<8xf32>
    %267 = vector.multi_reduction <add>, %262, %cst_140 [1] : vector<8x32xf32> to vector<8xf32>
    %268 = vector.shape_cast %267 : vector<8xf32> to vector<8x1xf32>
    %cst_141 = arith.constant 3.200000e+01 : f32
    %269 = vector.broadcast %cst_141 : f32 to vector<8x1xf32>
    %270 = arith.divf %268, %269 : vector<8x1xf32>
    %271 = vector.broadcast %270 : vector<8x1xf32> to vector<8x32xf32>
    %272 = arith.subf %262, %271 : vector<8x32xf32>
    %273 = arith.mulf %272, %272 : vector<8x32xf32>
    %cst_142 = arith.constant dense<0.000000e+00> : vector<8xf32>
    %274 = vector.multi_reduction <add>, %273, %cst_142 [1] : vector<8x32xf32> to vector<8xf32>
    %275 = vector.shape_cast %274 : vector<8xf32> to vector<8x1xf32>
    %cst_143 = arith.constant 3.200000e+01 : f32
    %276 = vector.broadcast %cst_143 : f32 to vector<8x1xf32>
    %277 = arith.divf %275, %276 : vector<8x1xf32>
    %278 = vector.broadcast %270 : vector<8x1xf32> to vector<8x32xf32>
    %279 = arith.subf %262, %278 : vector<8x32xf32>
    %cst_144 = arith.constant 9.99999974E-6 : f32
    %280 = vector.broadcast %cst_144 : f32 to vector<8x1xf32>
    %281 = arith.addf %277, %280 : vector<8x1xf32>
    %282 = math.rsqrt %281 : vector<8x1xf32>
    %283 = vector.broadcast %282 : vector<8x1xf32> to vector<8x32xf32>
    %284 = arith.mulf %279, %283 : vector<8x32xf32>
    %285 = vector.broadcast %264 : vector<1x32xf32> to vector<8x32xf32>
    %286 = arith.mulf %284, %285 : vector<8x32xf32>
    %287 = vector.broadcast %266 : vector<1x32xf32> to vector<8x32xf32>
    %288 = arith.addf %286, %287 : vector<8x32xf32>
    %289 = arith.truncf %288 : vector<8x32xf32> to vector<8x32xbf16>
    %c0_145 = arith.constant 0 : index
    %c0_146 = arith.constant 0 : index
    %c0_147 = arith.constant 0 : index
    %290 = vector.load %arg29[%c0_145, %c0_146, %c0_147] : memref<3x32x1xbf16, #tpu.memory_space<vmem>>, vector<1x32x1xbf16>
    %291 = vector.shape_cast %290 : vector<1x32x1xbf16> to vector<32x1xbf16>
    %cst_148 = arith.constant dense<0.000000e+00> : vector<8x1xf32>
    %292 = tpu.matmul %289, %291, %cst_148 {dimension_numbers = #tpu.dot_dimension_numbers<[1], [0], [0], [1], [0, 0, 1, 1], [], []>} : vector<8x32xbf16>, vector<32x1xbf16>, vector<8x1xf32> -> vector<8x1xf32>
    %c0_149 = arith.constant 0 : index
    %c0_150 = arith.constant 0 : index
    %c0_151 = arith.constant 0 : index
    %293 = vector.load %arg30[%c0_149, %c0_150, %c0_151] : memref<3x1x1xf32, #tpu.memory_space<vmem>>, vector<1x1x1xf32>
    %294 = vector.shape_cast %293 : vector<1x1x1xf32> to vector<1x1xf32>
    %295 = vector.broadcast %294 : vector<1x1xf32> to vector<8x1xf32>
    %296 = arith.addf %292, %295 : vector<8x1xf32>
    %297 = arith.mulf %296, %199 : vector<8x1xf32>
    %c1_152 = arith.constant 1 : index
    %c0_153 = arith.constant 0 : index
    %c0_154 = arith.constant 0 : index
    %298 = vector.load %arg21[%c1_152, %c0_153, %c0_154] : memref<3x96x32xbf16, #tpu.memory_space<vmem>>, vector<1x96x32xbf16>
    %299 = vector.shape_cast %298 : vector<1x96x32xbf16> to vector<96x32xbf16>
    %cst_155 = arith.constant dense<0.000000e+00> : vector<8x32xf32>
    %300 = tpu.matmul %207, %299, %cst_155 {dimension_numbers = #tpu.dot_dimension_numbers<[1], [0], [0], [1], [0, 0, 1, 1], [], []>} : vector<8x96xbf16>, vector<96x32xbf16>, vector<8x32xf32> -> vector<8x32xf32>
    %c1_156 = arith.constant 1 : index
    %c0_157 = arith.constant 0 : index
    %c0_158 = arith.constant 0 : index
    %301 = vector.load %arg22[%c1_156, %c0_157, %c0_158] : memref<3x1x32xf32, #tpu.memory_space<vmem>>, vector<1x1x32xf32>
    %302 = vector.shape_cast %301 : vector<1x1x32xf32> to vector<1x32xf32>
    %303 = vector.broadcast %302 : vector<1x32xf32> to vector<8x32xf32>
    %304 = arith.addf %300, %303 : vector<8x32xf32>
    %cst_159 = arith.constant 0.000000e+00 : f32
    %305 = vector.broadcast %cst_159 : f32 to vector<8x32xf32>
    %306 = arith.maximumf %304, %305 : vector<8x32xf32>
    %c1_160 = arith.constant 1 : index
    %c0_161 = arith.constant 0 : index
    %c0_162 = arith.constant 0 : index
    %307 = vector.load %arg23[%c1_160, %c0_161, %c0_162] : memref<3x1x32xf32, #tpu.memory_space<vmem>>, vector<1x1x32xf32>
    %308 = vector.shape_cast %307 : vector<1x1x32xf32> to vector<1x32xf32>
    %c1_163 = arith.constant 1 : index
    %c0_164 = arith.constant 0 : index
    %c0_165 = arith.constant 0 : index
    %309 = vector.load %arg24[%c1_163, %c0_164, %c0_165] : memref<3x1x32xf32, #tpu.memory_space<vmem>>, vector<1x1x32xf32>
    %310 = vector.shape_cast %309 : vector<1x1x32xf32> to vector<1x32xf32>
    %cst_166 = arith.constant dense<0.000000e+00> : vector<8xf32>
    %311 = vector.multi_reduction <add>, %306, %cst_166 [1] : vector<8x32xf32> to vector<8xf32>
    %312 = vector.shape_cast %311 : vector<8xf32> to vector<8x1xf32>
    %cst_167 = arith.constant 3.200000e+01 : f32
    %313 = vector.broadcast %cst_167 : f32 to vector<8x1xf32>
    %314 = arith.divf %312, %313 : vector<8x1xf32>
    %315 = vector.broadcast %314 : vector<8x1xf32> to vector<8x32xf32>
    %316 = arith.subf %306, %315 : vector<8x32xf32>
    %317 = arith.mulf %316, %316 : vector<8x32xf32>
    %cst_168 = arith.constant dense<0.000000e+00> : vector<8xf32>
    %318 = vector.multi_reduction <add>, %317, %cst_168 [1] : vector<8x32xf32> to vector<8xf32>
    %319 = vector.shape_cast %318 : vector<8xf32> to vector<8x1xf32>
    %cst_169 = arith.constant 3.200000e+01 : f32
    %320 = vector.broadcast %cst_169 : f32 to vector<8x1xf32>
    %321 = arith.divf %319, %320 : vector<8x1xf32>
    %322 = vector.broadcast %314 : vector<8x1xf32> to vector<8x32xf32>
    %323 = arith.subf %306, %322 : vector<8x32xf32>
    %cst_170 = arith.constant 9.99999974E-6 : f32
    %324 = vector.broadcast %cst_170 : f32 to vector<8x1xf32>
    %325 = arith.addf %321, %324 : vector<8x1xf32>
    %326 = math.rsqrt %325 : vector<8x1xf32>
    %327 = vector.broadcast %326 : vector<8x1xf32> to vector<8x32xf32>
    %328 = arith.mulf %323, %327 : vector<8x32xf32>
    %329 = vector.broadcast %308 : vector<1x32xf32> to vector<8x32xf32>
    %330 = arith.mulf %328, %329 : vector<8x32xf32>
    %331 = vector.broadcast %310 : vector<1x32xf32> to vector<8x32xf32>
    %332 = arith.addf %330, %331 : vector<8x32xf32>
    %333 = vector.shape_cast %332 : vector<8x32xf32> to vector<1x8x32xf32>
    %c1_171 = arith.constant 1 : index
    %c0_172 = arith.constant 0 : index
    %c0_173 = arith.constant 0 : index
    %334 = vector.load %arg25[%c1_171, %c0_172, %c0_173] : memref<3x96x32xbf16, #tpu.memory_space<vmem>>, vector<1x96x32xbf16>
    %335 = vector.shape_cast %334 : vector<1x96x32xbf16> to vector<96x32xbf16>
    %c1_174 = arith.constant 1 : index
    %c0_175 = arith.constant 0 : index
    %c0_176 = arith.constant 0 : index
    %336 = vector.load %arg26[%c1_174, %c0_175, %c0_176] : memref<3x1x32xf32, #tpu.memory_space<vmem>>, vector<1x1x32xf32>
    %337 = vector.shape_cast %336 : vector<1x1x32xf32> to vector<1x32xf32>
    %cst_177 = arith.constant 0.000000e+00 : f32
    %338 = vector.broadcast %cst_177 : f32 to vector<1x1x32xf32>
    %339 = tpu.concatenate %338, %333, %338 in 1 : vector<1x1x32xf32>, vector<1x8x32xf32>, vector<1x1x32xf32> -> vector<1x10x32xf32>
    %340 = vector.extract_strided_slice %339 {offsets = [0, 0, 0], sizes = [1, 8, 32], strides = [1, 1, 1]} : vector<1x10x32xf32> to vector<1x8x32xf32>
    %341 = vector.extract_strided_slice %339 {offsets = [0, 1, 0], sizes = [1, 8, 32], strides = [1, 1, 1]} : vector<1x10x32xf32> to vector<1x8x32xf32>
    %342 = vector.extract_strided_slice %339 {offsets = [0, 2, 0], sizes = [1, 8, 32], strides = [1, 1, 1]} : vector<1x10x32xf32> to vector<1x8x32xf32>
    %343 = tpu.concatenate %340, %341, %342 in 2 : vector<1x8x32xf32>, vector<1x8x32xf32>, vector<1x8x32xf32> -> vector<1x8x96xf32>
    %344 = vector.shape_cast %343 : vector<1x8x96xf32> to vector<8x96xf32>
    %345 = arith.truncf %344 : vector<8x96xf32> to vector<8x96xbf16>
    %cst_178 = arith.constant dense<0.000000e+00> : vector<8x32xf32>
    %346 = tpu.matmul %345, %335, %cst_178 {dimension_numbers = #tpu.dot_dimension_numbers<[1], [0], [0], [1], [0, 0, 1, 1], [], []>} : vector<8x96xbf16>, vector<96x32xbf16>, vector<8x32xf32> -> vector<8x32xf32>
    %347 = vector.broadcast %337 : vector<1x32xf32> to vector<8x32xf32>
    %348 = arith.addf %346, %347 : vector<8x32xf32>
    %349 = vector.shape_cast %348 : vector<8x32xf32> to vector<1x8x32xf32>
    %cst_179 = arith.constant 0.000000e+00 : f32
    %350 = vector.broadcast %cst_179 : f32 to vector<1x8x32xf32>
    %351 = arith.maximumf %349, %350 : vector<1x8x32xf32>
    %352 = vector.shape_cast %351 : vector<1x8x32xf32> to vector<8x32xf32>
    %c1_180 = arith.constant 1 : index
    %c0_181 = arith.constant 0 : index
    %c0_182 = arith.constant 0 : index
    %353 = vector.load %arg27[%c1_180, %c0_181, %c0_182] : memref<3x1x32xf32, #tpu.memory_space<vmem>>, vector<1x1x32xf32>
    %354 = vector.shape_cast %353 : vector<1x1x32xf32> to vector<1x32xf32>
    %c1_183 = arith.constant 1 : index
    %c0_184 = arith.constant 0 : index
    %c0_185 = arith.constant 0 : index
    %355 = vector.load %arg28[%c1_183, %c0_184, %c0_185] : memref<3x1x32xf32, #tpu.memory_space<vmem>>, vector<1x1x32xf32>
    %356 = vector.shape_cast %355 : vector<1x1x32xf32> to vector<1x32xf32>
    %cst_186 = arith.constant dense<0.000000e+00> : vector<8xf32>
    %357 = vector.multi_reduction <add>, %352, %cst_186 [1] : vector<8x32xf32> to vector<8xf32>
    %358 = vector.shape_cast %357 : vector<8xf32> to vector<8x1xf32>
    %cst_187 = arith.constant 3.200000e+01 : f32
    %359 = vector.broadcast %cst_187 : f32 to vector<8x1xf32>
    %360 = arith.divf %358, %359 : vector<8x1xf32>
    %361 = vector.broadcast %360 : vector<8x1xf32> to vector<8x32xf32>
    %362 = arith.subf %352, %361 : vector<8x32xf32>
    %363 = arith.mulf %362, %362 : vector<8x32xf32>
    %cst_188 = arith.constant dense<0.000000e+00> : vector<8xf32>
    %364 = vector.multi_reduction <add>, %363, %cst_188 [1] : vector<8x32xf32> to vector<8xf32>
    %365 = vector.shape_cast %364 : vector<8xf32> to vector<8x1xf32>
    %cst_189 = arith.constant 3.200000e+01 : f32
    %366 = vector.broadcast %cst_189 : f32 to vector<8x1xf32>
    %367 = arith.divf %365, %366 : vector<8x1xf32>
    %368 = vector.broadcast %360 : vector<8x1xf32> to vector<8x32xf32>
    %369 = arith.subf %352, %368 : vector<8x32xf32>
    %cst_190 = arith.constant 9.99999974E-6 : f32
    %370 = vector.broadcast %cst_190 : f32 to vector<8x1xf32>
    %371 = arith.addf %367, %370 : vector<8x1xf32>
    %372 = math.rsqrt %371 : vector<8x1xf32>
    %373 = vector.broadcast %372 : vector<8x1xf32> to vector<8x32xf32>
    %374 = arith.mulf %369, %373 : vector<8x32xf32>
    %375 = vector.broadcast %354 : vector<1x32xf32> to vector<8x32xf32>
    %376 = arith.mulf %374, %375 : vector<8x32xf32>
    %377 = vector.broadcast %356 : vector<1x32xf32> to vector<8x32xf32>
    %378 = arith.addf %376, %377 : vector<8x32xf32>
    %379 = arith.truncf %378 : vector<8x32xf32> to vector<8x32xbf16>
    %c1_191 = arith.constant 1 : index
    %c0_192 = arith.constant 0 : index
    %c0_193 = arith.constant 0 : index
    %380 = vector.load %arg29[%c1_191, %c0_192, %c0_193] : memref<3x32x1xbf16, #tpu.memory_space<vmem>>, vector<1x32x1xbf16>
    %381 = vector.shape_cast %380 : vector<1x32x1xbf16> to vector<32x1xbf16>
    %cst_194 = arith.constant dense<0.000000e+00> : vector<8x1xf32>
    %382 = tpu.matmul %379, %381, %cst_194 {dimension_numbers = #tpu.dot_dimension_numbers<[1], [0], [0], [1], [0, 0, 1, 1], [], []>} : vector<8x32xbf16>, vector<32x1xbf16>, vector<8x1xf32> -> vector<8x1xf32>
    %c1_195 = arith.constant 1 : index
    %c0_196 = arith.constant 0 : index
    %c0_197 = arith.constant 0 : index
    %383 = vector.load %arg30[%c1_195, %c0_196, %c0_197] : memref<3x1x1xf32, #tpu.memory_space<vmem>>, vector<1x1x1xf32>
    %384 = vector.shape_cast %383 : vector<1x1x1xf32> to vector<1x1xf32>
    %385 = vector.broadcast %384 : vector<1x1xf32> to vector<8x1xf32>
    %386 = arith.addf %382, %385 : vector<8x1xf32>
    %387 = arith.mulf %386, %199 : vector<8x1xf32>
    %c2 = arith.constant 2 : index
    %c0_198 = arith.constant 0 : index
    %c0_199 = arith.constant 0 : index
    %388 = vector.load %arg21[%c2, %c0_198, %c0_199] : memref<3x96x32xbf16, #tpu.memory_space<vmem>>, vector<1x96x32xbf16>
    %389 = vector.shape_cast %388 : vector<1x96x32xbf16> to vector<96x32xbf16>
    %cst_200 = arith.constant dense<0.000000e+00> : vector<8x32xf32>
    %390 = tpu.matmul %207, %389, %cst_200 {dimension_numbers = #tpu.dot_dimension_numbers<[1], [0], [0], [1], [0, 0, 1, 1], [], []>} : vector<8x96xbf16>, vector<96x32xbf16>, vector<8x32xf32> -> vector<8x32xf32>
    %c2_201 = arith.constant 2 : index
    %c0_202 = arith.constant 0 : index
    %c0_203 = arith.constant 0 : index
    %391 = vector.load %arg22[%c2_201, %c0_202, %c0_203] : memref<3x1x32xf32, #tpu.memory_space<vmem>>, vector<1x1x32xf32>
    %392 = vector.shape_cast %391 : vector<1x1x32xf32> to vector<1x32xf32>
    %393 = vector.broadcast %392 : vector<1x32xf32> to vector<8x32xf32>
    %394 = arith.addf %390, %393 : vector<8x32xf32>
    %cst_204 = arith.constant 0.000000e+00 : f32
    %395 = vector.broadcast %cst_204 : f32 to vector<8x32xf32>
    %396 = arith.maximumf %394, %395 : vector<8x32xf32>
    %c2_205 = arith.constant 2 : index
    %c0_206 = arith.constant 0 : index
    %c0_207 = arith.constant 0 : index
    %397 = vector.load %arg23[%c2_205, %c0_206, %c0_207] : memref<3x1x32xf32, #tpu.memory_space<vmem>>, vector<1x1x32xf32>
    %398 = vector.shape_cast %397 : vector<1x1x32xf32> to vector<1x32xf32>
    %c2_208 = arith.constant 2 : index
    %c0_209 = arith.constant 0 : index
    %c0_210 = arith.constant 0 : index
    %399 = vector.load %arg24[%c2_208, %c0_209, %c0_210] : memref<3x1x32xf32, #tpu.memory_space<vmem>>, vector<1x1x32xf32>
    %400 = vector.shape_cast %399 : vector<1x1x32xf32> to vector<1x32xf32>
    %cst_211 = arith.constant dense<0.000000e+00> : vector<8xf32>
    %401 = vector.multi_reduction <add>, %396, %cst_211 [1] : vector<8x32xf32> to vector<8xf32>
    %402 = vector.shape_cast %401 : vector<8xf32> to vector<8x1xf32>
    %cst_212 = arith.constant 3.200000e+01 : f32
    %403 = vector.broadcast %cst_212 : f32 to vector<8x1xf32>
    %404 = arith.divf %402, %403 : vector<8x1xf32>
    %405 = vector.broadcast %404 : vector<8x1xf32> to vector<8x32xf32>
    %406 = arith.subf %396, %405 : vector<8x32xf32>
    %407 = arith.mulf %406, %406 : vector<8x32xf32>
    %cst_213 = arith.constant dense<0.000000e+00> : vector<8xf32>
    %408 = vector.multi_reduction <add>, %407, %cst_213 [1] : vector<8x32xf32> to vector<8xf32>
    %409 = vector.shape_cast %408 : vector<8xf32> to vector<8x1xf32>
    %cst_214 = arith.constant 3.200000e+01 : f32
    %410 = vector.broadcast %cst_214 : f32 to vector<8x1xf32>
    %411 = arith.divf %409, %410 : vector<8x1xf32>
    %412 = vector.broadcast %404 : vector<8x1xf32> to vector<8x32xf32>
    %413 = arith.subf %396, %412 : vector<8x32xf32>
    %cst_215 = arith.constant 9.99999974E-6 : f32
    %414 = vector.broadcast %cst_215 : f32 to vector<8x1xf32>
    %415 = arith.addf %411, %414 : vector<8x1xf32>
    %416 = math.rsqrt %415 : vector<8x1xf32>
    %417 = vector.broadcast %416 : vector<8x1xf32> to vector<8x32xf32>
    %418 = arith.mulf %413, %417 : vector<8x32xf32>
    %419 = vector.broadcast %398 : vector<1x32xf32> to vector<8x32xf32>
    %420 = arith.mulf %418, %419 : vector<8x32xf32>
    %421 = vector.broadcast %400 : vector<1x32xf32> to vector<8x32xf32>
    %422 = arith.addf %420, %421 : vector<8x32xf32>
    %423 = vector.shape_cast %422 : vector<8x32xf32> to vector<1x8x32xf32>
    %c2_216 = arith.constant 2 : index
    %c0_217 = arith.constant 0 : index
    %c0_218 = arith.constant 0 : index
    %424 = vector.load %arg25[%c2_216, %c0_217, %c0_218] : memref<3x96x32xbf16, #tpu.memory_space<vmem>>, vector<1x96x32xbf16>
    %425 = vector.shape_cast %424 : vector<1x96x32xbf16> to vector<96x32xbf16>
    %c2_219 = arith.constant 2 : index
    %c0_220 = arith.constant 0 : index
    %c0_221 = arith.constant 0 : index
    %426 = vector.load %arg26[%c2_219, %c0_220, %c0_221] : memref<3x1x32xf32, #tpu.memory_space<vmem>>, vector<1x1x32xf32>
    %427 = vector.shape_cast %426 : vector<1x1x32xf32> to vector<1x32xf32>
    %cst_222 = arith.constant 0.000000e+00 : f32
    %428 = vector.broadcast %cst_222 : f32 to vector<1x1x32xf32>
    %429 = tpu.concatenate %428, %423, %428 in 1 : vector<1x1x32xf32>, vector<1x8x32xf32>, vector<1x1x32xf32> -> vector<1x10x32xf32>
    %430 = vector.extract_strided_slice %429 {offsets = [0, 0, 0], sizes = [1, 8, 32], strides = [1, 1, 1]} : vector<1x10x32xf32> to vector<1x8x32xf32>
    %431 = vector.extract_strided_slice %429 {offsets = [0, 1, 0], sizes = [1, 8, 32], strides = [1, 1, 1]} : vector<1x10x32xf32> to vector<1x8x32xf32>
    %432 = vector.extract_strided_slice %429 {offsets = [0, 2, 0], sizes = [1, 8, 32], strides = [1, 1, 1]} : vector<1x10x32xf32> to vector<1x8x32xf32>
    %433 = tpu.concatenate %430, %431, %432 in 2 : vector<1x8x32xf32>, vector<1x8x32xf32>, vector<1x8x32xf32> -> vector<1x8x96xf32>
    %434 = vector.shape_cast %433 : vector<1x8x96xf32> to vector<8x96xf32>
    %435 = arith.truncf %434 : vector<8x96xf32> to vector<8x96xbf16>
    %cst_223 = arith.constant dense<0.000000e+00> : vector<8x32xf32>
    %436 = tpu.matmul %435, %425, %cst_223 {dimension_numbers = #tpu.dot_dimension_numbers<[1], [0], [0], [1], [0, 0, 1, 1], [], []>} : vector<8x96xbf16>, vector<96x32xbf16>, vector<8x32xf32> -> vector<8x32xf32>
    %437 = vector.broadcast %427 : vector<1x32xf32> to vector<8x32xf32>
    %438 = arith.addf %436, %437 : vector<8x32xf32>
    %439 = vector.shape_cast %438 : vector<8x32xf32> to vector<1x8x32xf32>
    %cst_224 = arith.constant 0.000000e+00 : f32
    %440 = vector.broadcast %cst_224 : f32 to vector<1x8x32xf32>
    %441 = arith.maximumf %439, %440 : vector<1x8x32xf32>
    %442 = vector.shape_cast %441 : vector<1x8x32xf32> to vector<8x32xf32>
    %c2_225 = arith.constant 2 : index
    %c0_226 = arith.constant 0 : index
    %c0_227 = arith.constant 0 : index
    %443 = vector.load %arg27[%c2_225, %c0_226, %c0_227] : memref<3x1x32xf32, #tpu.memory_space<vmem>>, vector<1x1x32xf32>
    %444 = vector.shape_cast %443 : vector<1x1x32xf32> to vector<1x32xf32>
    %c2_228 = arith.constant 2 : index
    %c0_229 = arith.constant 0 : index
    %c0_230 = arith.constant 0 : index
    %445 = vector.load %arg28[%c2_228, %c0_229, %c0_230] : memref<3x1x32xf32, #tpu.memory_space<vmem>>, vector<1x1x32xf32>
    %446 = vector.shape_cast %445 : vector<1x1x32xf32> to vector<1x32xf32>
    %cst_231 = arith.constant dense<0.000000e+00> : vector<8xf32>
    %447 = vector.multi_reduction <add>, %442, %cst_231 [1] : vector<8x32xf32> to vector<8xf32>
    %448 = vector.shape_cast %447 : vector<8xf32> to vector<8x1xf32>
    %cst_232 = arith.constant 3.200000e+01 : f32
    %449 = vector.broadcast %cst_232 : f32 to vector<8x1xf32>
    %450 = arith.divf %448, %449 : vector<8x1xf32>
    %451 = vector.broadcast %450 : vector<8x1xf32> to vector<8x32xf32>
    %452 = arith.subf %442, %451 : vector<8x32xf32>
    %453 = arith.mulf %452, %452 : vector<8x32xf32>
    %cst_233 = arith.constant dense<0.000000e+00> : vector<8xf32>
    %454 = vector.multi_reduction <add>, %453, %cst_233 [1] : vector<8x32xf32> to vector<8xf32>
    %455 = vector.shape_cast %454 : vector<8xf32> to vector<8x1xf32>
    %cst_234 = arith.constant 3.200000e+01 : f32
    %456 = vector.broadcast %cst_234 : f32 to vector<8x1xf32>
    %457 = arith.divf %455, %456 : vector<8x1xf32>
    %458 = vector.broadcast %450 : vector<8x1xf32> to vector<8x32xf32>
    %459 = arith.subf %442, %458 : vector<8x32xf32>
    %cst_235 = arith.constant 9.99999974E-6 : f32
    %460 = vector.broadcast %cst_235 : f32 to vector<8x1xf32>
    %461 = arith.addf %457, %460 : vector<8x1xf32>
    %462 = math.rsqrt %461 : vector<8x1xf32>
    %463 = vector.broadcast %462 : vector<8x1xf32> to vector<8x32xf32>
    %464 = arith.mulf %459, %463 : vector<8x32xf32>
    %465 = vector.broadcast %444 : vector<1x32xf32> to vector<8x32xf32>
    %466 = arith.mulf %464, %465 : vector<8x32xf32>
    %467 = vector.broadcast %446 : vector<1x32xf32> to vector<8x32xf32>
    %468 = arith.addf %466, %467 : vector<8x32xf32>
    %469 = arith.truncf %468 : vector<8x32xf32> to vector<8x32xbf16>
    %c2_236 = arith.constant 2 : index
    %c0_237 = arith.constant 0 : index
    %c0_238 = arith.constant 0 : index
    %470 = vector.load %arg29[%c2_236, %c0_237, %c0_238] : memref<3x32x1xbf16, #tpu.memory_space<vmem>>, vector<1x32x1xbf16>
    %471 = vector.shape_cast %470 : vector<1x32x1xbf16> to vector<32x1xbf16>
    %cst_239 = arith.constant dense<0.000000e+00> : vector<8x1xf32>
    %472 = tpu.matmul %469, %471, %cst_239 {dimension_numbers = #tpu.dot_dimension_numbers<[1], [0], [0], [1], [0, 0, 1, 1], [], []>} : vector<8x32xbf16>, vector<32x1xbf16>, vector<8x1xf32> -> vector<8x1xf32>
    %c2_240 = arith.constant 2 : index
    %c0_241 = arith.constant 0 : index
    %c0_242 = arith.constant 0 : index
    %473 = vector.load %arg30[%c2_240, %c0_241, %c0_242] : memref<3x1x1xf32, #tpu.memory_space<vmem>>, vector<1x1x1xf32>
    %474 = vector.shape_cast %473 : vector<1x1x1xf32> to vector<1x1xf32>
    %475 = vector.broadcast %474 : vector<1x1xf32> to vector<8x1xf32>
    %476 = arith.addf %472, %475 : vector<8x1xf32>
    %477 = arith.mulf %476, %199 : vector<8x1xf32>
    %478 = tpu.concatenate %297, %387, %477 in 1 : vector<8x1xf32>, vector<8x1xf32>, vector<8x1xf32> -> vector<8x3xf32>
    %479 = vector.shape_cast %478 : vector<8x3xf32> to vector<1x8x3xf32>
    %c0_243 = arith.constant 0 : index
    %c0_244 = arith.constant 0 : index
    %c0_245 = arith.constant 0 : index
    %480 = vector.load %arg32[%c0_243, %c0_244, %c0_245] : memref<1x8x3xf32, #tpu.memory_space<vmem>>, vector<1x8x3xf32>
    tpu.vector_store %arg32[%c0_243, %c0_244, %c0_245], %479 {strides = array<i32>} : memref<1x8x3xf32, #tpu.memory_space<vmem>>, vector<1x8x3xf32>,
    return
  }
  func.func @transform_0(%arg0: i32) -> (i32, i32, i32) {
    %c0_i32 = arith.constant 0 : i32
    %c0_i32_0 = arith.constant 0 : i32
    %c0_i32_1 = arith.constant 0 : i32
    return %arg0, %c0_i32, %c0_i32_0 : i32, i32, i32
  }
  func.func @transform_1(%arg0: i32) -> (i32, i32, i32) {
    %c0_i32 = arith.constant 0 : i32
    %c0_i32_0 = arith.constant 0 : i32
    %c0_i32_1 = arith.constant 0 : i32
    return %arg0, %c0_i32, %c0_i32_0 : i32, i32, i32
  }
  func.func @transform_2(%arg0: i32) -> (i32, i32, i32) {
    %c0_i32 = arith.constant 0 : i32
    %c0_i32_0 = arith.constant 0 : i32
    %c0_i32_1 = arith.constant 0 : i32
    return %arg0, %c0_i32, %c0_i32_0 : i32, i32, i32
  }
  func.func @transform_3(%arg0: i32) -> (i32, i32, i32) {
    %c0_i32 = arith.constant 0 : i32
    %c0_i32_0 = arith.constant 0 : i32
    %c0_i32_1 = arith.constant 0 : i32
    return %arg0, %c0_i32, %c0_i32_0 : i32, i32, i32
  }
  func.func @transform_4(%arg0: i32) -> (i32, i32, i32) {
    %c0_i32 = arith.constant 0 : i32
    %c0_i32_0 = arith.constant 0 : i32
    %c0_i32_1 = arith.constant 0 : i32
    %c0_i32_2 = arith.constant 0 : i32
    return %c0_i32, %c0_i32_0, %c0_i32_1 : i32, i32, i32
  }
  func.func @transform_5(%arg0: i32) -> (i32, i32, i32) {
    %c0_i32 = arith.constant 0 : i32
    %c0_i32_0 = arith.constant 0 : i32
    %c0_i32_1 = arith.constant 0 : i32
    %c0_i32_2 = arith.constant 0 : i32
    return %c0_i32, %c0_i32_0, %c0_i32_1 : i32, i32, i32
  }
  func.func @transform_6(%arg0: i32) -> (i32, i32, i32) {
    %c0_i32 = arith.constant 0 : i32
    %c0_i32_0 = arith.constant 0 : i32
    %c0_i32_1 = arith.constant 0 : i32
    %c0_i32_2 = arith.constant 0 : i32
    return %c0_i32, %c0_i32_0, %c0_i32_1 : i32, i32, i32
  }
  func.func @transform_7(%arg0: i32) -> (i32, i32, i32) {
    %c0_i32 = arith.constant 0 : i32
    %c0_i32_0 = arith.constant 0 : i32
    %c0_i32_1 = arith.constant 0 : i32
    %c0_i32_2 = arith.constant 0 : i32
    return %c0_i32, %c0_i32_0, %c0_i32_1 : i32, i32, i32
  }
  func.func @transform_8(%arg0: i32) -> (i32, i32, i32) {
    %c0_i32 = arith.constant 0 : i32
    %c0_i32_0 = arith.constant 0 : i32
    %c0_i32_1 = arith.constant 0 : i32
    %c0_i32_2 = arith.constant 0 : i32
    return %c0_i32, %c0_i32_0, %c0_i32_1 : i32, i32, i32
  }
  func.func @transform_9(%arg0: i32) -> (i32, i32, i32) {
    %c0_i32 = arith.constant 0 : i32
    %c0_i32_0 = arith.constant 0 : i32
    %c0_i32_1 = arith.constant 0 : i32
    %c0_i32_2 = arith.constant 0 : i32
    return %c0_i32, %c0_i32_0, %c0_i32_1 : i32, i32, i32
  }
  func.func @transform_10(%arg0: i32) -> (i32, i32, i32) {
    %c0_i32 = arith.constant 0 : i32
    %c0_i32_0 = arith.constant 0 : i32
    %c0_i32_1 = arith.constant 0 : i32
    %c0_i32_2 = arith.constant 0 : i32
    return %c0_i32, %c0_i32_0, %c0_i32_1 : i32, i32, i32
  }
  func.func @transform_11(%arg0: i32) -> (i32, i32) {
    %c0_i32 = arith.constant 0 : i32
    %c0_i32_0 = arith.constant 0 : i32
    %c0_i32_1 = arith.constant 0 : i32
    return %c0_i32, %c0_i32_0 : i32, i32
  }
  func.func @transform_12(%arg0: i32) -> (i32, i32) {
    %c0_i32 = arith.constant 0 : i32
    %c0_i32_0 = arith.constant 0 : i32
    %c0_i32_1 = arith.constant 0 : i32
    return %c0_i32, %c0_i32_0 : i32, i32
  }
  func.func @transform_13(%arg0: i32) -> (i32, i32) {
    %c0_i32 = arith.constant 0 : i32
    %c0_i32_0 = arith.constant 0 : i32
    %c0_i32_1 = arith.constant 0 : i32
    return %c0_i32, %c0_i32_0 : i32, i32
  }
  func.func @transform_14(%arg0: i32) -> (i32, i32) {
    %c0_i32 = arith.constant 0 : i32
    %c0_i32_0 = arith.constant 0 : i32
    %c0_i32_1 = arith.constant 0 : i32
    return %c0_i32, %c0_i32_0 : i32, i32
  }
  func.func @transform_15(%arg0: i32) -> (i32, i32) {
    %c0_i32 = arith.constant 0 : i32
    %c0_i32_0 = arith.constant 0 : i32
    %c0_i32_1 = arith.constant 0 : i32
    return %c0_i32, %c0_i32_0 : i32, i32
  }
  func.func @transform_16(%arg0: i32) -> (i32, i32) {
    %c0_i32 = arith.constant 0 : i32
    %c0_i32_0 = arith.constant 0 : i32
    %c0_i32_1 = arith.constant 0 : i32
    return %c0_i32, %c0_i32_0 : i32, i32
  }
  func.func @transform_17(%arg0: i32) -> (i32, i32) {
    %c0_i32 = arith.constant 0 : i32
    %c0_i32_0 = arith.constant 0 : i32
    %c0_i32_1 = arith.constant 0 : i32
    return %c0_i32, %c0_i32_0 : i32, i32
  }
  func.func @transform_18(%arg0: i32) -> (i32, i32) {
    %c0_i32 = arith.constant 0 : i32
    %c0_i32_0 = arith.constant 0 : i32
    %c0_i32_1 = arith.constant 0 : i32
    return %c0_i32, %c0_i32_0 : i32, i32
  }
  func.func @transform_19(%arg0: i32) -> (i32, i32) {
    %c0_i32 = arith.constant 0 : i32
    %c0_i32_0 = arith.constant 0 : i32
    %c0_i32_1 = arith.constant 0 : i32
    return %c0_i32, %c0_i32_0 : i32, i32
  }
  func.func @transform_20(%arg0: i32) -> (i32, i32, i32) {
    %c0_i32 = arith.constant 0 : i32
    %c0_i32_0 = arith.constant 0 : i32
    %c0_i32_1 = arith.constant 0 : i32
    %c0_i32_2 = arith.constant 0 : i32
    return %c0_i32, %c0_i32_0, %c0_i32_1 : i32, i32, i32
  }
  func.func @transform_21(%arg0: i32) -> (i32, i32, i32) {
    %c0_i32 = arith.constant 0 : i32
    %c0_i32_0 = arith.constant 0 : i32
    %c0_i32_1 = arith.constant 0 : i32
    %c0_i32_2 = arith.constant 0 : i32
    return %c0_i32, %c0_i32_0, %c0_i32_1 : i32, i32, i32
  }
  func.func @transform_22(%arg0: i32) -> (i32, i32, i32) {
    %c0_i32 = arith.constant 0 : i32
    %c0_i32_0 = arith.constant 0 : i32
    %c0_i32_1 = arith.constant 0 : i32
    %c0_i32_2 = arith.constant 0 : i32
    return %c0_i32, %c0_i32_0, %c0_i32_1 : i32, i32, i32
  }
  func.func @transform_23(%arg0: i32) -> (i32, i32, i32) {
    %c0_i32 = arith.constant 0 : i32
    %c0_i32_0 = arith.constant 0 : i32
    %c0_i32_1 = arith.constant 0 : i32
    %c0_i32_2 = arith.constant 0 : i32
    return %c0_i32, %c0_i32_0, %c0_i32_1 : i32, i32, i32
  }
  func.func @transform_24(%arg0: i32) -> (i32, i32, i32) {
    %c0_i32 = arith.constant 0 : i32
    %c0_i32_0 = arith.constant 0 : i32
    %c0_i32_1 = arith.constant 0 : i32
    %c0_i32_2 = arith.constant 0 : i32
    return %c0_i32, %c0_i32_0, %c0_i32_1 : i32, i32, i32
  }
  func.func @transform_25(%arg0: i32) -> (i32, i32, i32) {
    %c0_i32 = arith.constant 0 : i32
    %c0_i32_0 = arith.constant 0 : i32
    %c0_i32_1 = arith.constant 0 : i32
    %c0_i32_2 = arith.constant 0 : i32
    return %c0_i32, %c0_i32_0, %c0_i32_1 : i32, i32, i32
  }
  func.func @transform_26(%arg0: i32) -> (i32, i32, i32) {
    %c0_i32 = arith.constant 0 : i32
    %c0_i32_0 = arith.constant 0 : i32
    %c0_i32_1 = arith.constant 0 : i32
    %c0_i32_2 = arith.constant 0 : i32
    return %c0_i32, %c0_i32_0, %c0_i32_1 : i32, i32, i32
  }
  func.func @transform_27(%arg0: i32) -> (i32, i32, i32) {
    %c0_i32 = arith.constant 0 : i32
    %c0_i32_0 = arith.constant 0 : i32
    %c0_i32_1 = arith.constant 0 : i32
    %c0_i32_2 = arith.constant 0 : i32
    return %c0_i32, %c0_i32_0, %c0_i32_1 : i32, i32, i32
  }
  func.func @transform_28(%arg0: i32) -> (i32, i32, i32) {
    %c0_i32 = arith.constant 0 : i32
    %c0_i32_0 = arith.constant 0 : i32
    %c0_i32_1 = arith.constant 0 : i32
    %c0_i32_2 = arith.constant 0 : i32
    return %c0_i32, %c0_i32_0, %c0_i32_1 : i32, i32, i32
  }
  func.func @transform_29(%arg0: i32) -> (i32, i32, i32) {
    %c0_i32 = arith.constant 0 : i32
    %c0_i32_0 = arith.constant 0 : i32
    %c0_i32_1 = arith.constant 0 : i32
    %c0_i32_2 = arith.constant 0 : i32
    return %c0_i32, %c0_i32_0, %c0_i32_1 : i32, i32, i32
  }
  func.func @transform_30(%arg0: i32) -> (i32, i32, i32) {
    %c0_i32 = arith.constant 0 : i32
    %c0_i32_0 = arith.constant 0 : i32
    %c0_i32_1 = arith.constant 0 : i32
    return %arg0, %c0_i32, %c0_i32_0 : i32, i32, i32
  }
  func.func @transform_31(%arg0: i32) -> (i32, i32, i32) {
    %c0_i32 = arith.constant 0 : i32
    %c0_i32_0 = arith.constant 0 : i32
    %c0_i32_1 = arith.constant 0 : i32
    return %arg0, %c0_i32, %c0_i32_0 : i32, i32, i32
  }
}

module attributes {stable_mosaic.version = 11 : i64} {
  func.func @_dec_mel_post_kernel(%arg0: i32, %arg1: memref<1x24x32xf32, #tpu.memory_space<vmem>>, %arg2: memref<1x24x1xf32, #tpu.memory_space<vmem>>, %arg3: memref<1x1x24xf32, #tpu.memory_space<vmem>>, %arg4: memref<2x32x16xbf16, #tpu.memory_space<vmem>>, %arg5: memref<2x32x16xbf16, #tpu.memory_space<vmem>>, %arg6: memref<2x32x16xbf16, #tpu.memory_space<vmem>>, %arg7: memref<2x1x16xf32, #tpu.memory_space<vmem>>, %arg8: memref<2x1x16xf32, #tpu.memory_space<vmem>>, %arg9: memref<2x1x16xf32, #tpu.memory_space<vmem>>, %arg10: memref<2x16x32xbf16, #tpu.memory_space<vmem>>, %arg11: memref<1x32xf32, #tpu.memory_space<vmem>>, %arg12: memref<1x32xf32, #tpu.memory_space<vmem>>, %arg13: memref<1x32xf32, #tpu.memory_space<vmem>>, %arg14: memref<288x64xbf16, #tpu.memory_space<vmem>>, %arg15: memref<1x64xf32, #tpu.memory_space<vmem>>, %arg16: memref<64x32xbf16, #tpu.memory_space<vmem>>, %arg17: memref<1x32xf32, #tpu.memory_space<vmem>>, %arg18: memref<1x32xf32, #tpu.memory_space<vmem>>, %arg19: memref<1x32xf32, #tpu.memory_space<vmem>>, %arg20: memref<32x16xbf16, #tpu.memory_space<vmem>>, %arg21: memref<1x16xf32, #tpu.memory_space<vmem>>, %arg22: memref<5x160x32xbf16, #tpu.memory_space<vmem>>, %arg23: memref<5x1x32xf32, #tpu.memory_space<vmem>>, %arg24: memref<1x24x16xf32, #tpu.memory_space<vmem>>, %arg25: memref<1x24x16xf32, #tpu.memory_space<vmem>>) attributes {dimension_semantics = [#tpu.dimension_semantics<parallel>], iteration_bounds = array<i64: 2>, scalar_prefetch = 0 : i64, scratch_operands = 0 : i64, tpu.core_type = #tpu.core_type<tc>, window_params = [{transform_indices = @transform_0, window_bounds = array<i64: 1, 24, 32>}, {transform_indices = @transform_1, window_bounds = array<i64: 1, 24, 1>}, {transform_indices = @transform_2, window_bounds = array<i64: 1, 1, 24>}, {pipeline_mode = #tpu.pipeline_mode<synchronous>, transform_indices = @transform_3, window_bounds = array<i64: 2, 32, 16>}, {pipeline_mode = #tpu.pipeline_mode<synchronous>, transform_indices = @transform_4, window_bounds = array<i64: 2, 32, 16>}, {pipeline_mode = #tpu.pipeline_mode<synchronous>, transform_indices = @transform_5, window_bounds = array<i64: 2, 32, 16>}, {pipeline_mode = #tpu.pipeline_mode<synchronous>, transform_indices = @transform_6, window_bounds = array<i64: 2, 1, 16>}, {pipeline_mode = #tpu.pipeline_mode<synchronous>, transform_indices = @transform_7, window_bounds = array<i64: 2, 1, 16>}, {pipeline_mode = #tpu.pipeline_mode<synchronous>, transform_indices = @transform_8, window_bounds = array<i64: 2, 1, 16>}, {pipeline_mode = #tpu.pipeline_mode<synchronous>, transform_indices = @transform_9, window_bounds = array<i64: 2, 16, 32>}, {pipeline_mode = #tpu.pipeline_mode<synchronous>, transform_indices = @transform_10, window_bounds = array<i64: 1, 32>}, {pipeline_mode = #tpu.pipeline_mode<synchronous>, transform_indices = @transform_11, window_bounds = array<i64: 1, 32>}, {pipeline_mode = #tpu.pipeline_mode<synchronous>, transform_indices = @transform_12, window_bounds = array<i64: 1, 32>}, {pipeline_mode = #tpu.pipeline_mode<synchronous>, transform_indices = @transform_13, window_bounds = array<i64: 288, 64>}, {pipeline_mode = #tpu.pipeline_mode<synchronous>, transform_indices = @transform_14, window_bounds = array<i64: 1, 64>}, {pipeline_mode = #tpu.pipeline_mode<synchronous>, transform_indices = @transform_15, window_bounds = array<i64: 64, 32>}, {pipeline_mode = #tpu.pipeline_mode<synchronous>, transform_indices = @transform_16, window_bounds = array<i64: 1, 32>}, {pipeline_mode = #tpu.pipeline_mode<synchronous>, transform_indices = @transform_17, window_bounds = array<i64: 1, 32>}, {pipeline_mode = #tpu.pipeline_mode<synchronous>, transform_indices = @transform_18, window_bounds = array<i64: 1, 32>}, {pipeline_mode = #tpu.pipeline_mode<synchronous>, transform_indices = @transform_19, window_bounds = array<i64: 32, 16>}, {pipeline_mode = #tpu.pipeline_mode<synchronous>, transform_indices = @transform_20, window_bounds = array<i64: 1, 16>}, {pipeline_mode = #tpu.pipeline_mode<synchronous>, transform_indices = @transform_21, window_bounds = array<i64: 5, 160, 32>}, {pipeline_mode = #tpu.pipeline_mode<synchronous>, transform_indices = @transform_22, window_bounds = array<i64: 5, 1, 32>}, {transform_indices = @transform_23, window_bounds = array<i64: 1, 24, 16>}, {transform_indices = @transform_24, window_bounds = array<i64: 1, 24, 16>}]} {
    %c0 = arith.constant 0 : index
    %c0_0 = arith.constant 0 : index
    %c0_1 = arith.constant 0 : index
    %0 = vector.load %arg1[%c0, %c0_0, %c0_1] : memref<1x24x32xf32, #tpu.memory_space<vmem>>, vector<1x24x32xf32>
    %c0_2 = arith.constant 0 : index
    %c0_3 = arith.constant 0 : index
    %c0_4 = arith.constant 0 : index
    %1 = vector.load %arg2[%c0_2, %c0_3, %c0_4] : memref<1x24x1xf32, #tpu.memory_space<vmem>>, vector<1x24x1xf32>
    %c0_5 = arith.constant 0 : index
    %c0_6 = arith.constant 0 : index
    %c0_7 = arith.constant 0 : index
    %2 = vector.load %arg3[%c0_5, %c0_6, %c0_7] : memref<1x1x24xf32, #tpu.memory_space<vmem>>, vector<1x1x24xf32>
    %3 = vector.shape_cast %0 : vector<1x24x32xf32> to vector<24x32xf32>
    %4 = arith.truncf %3 : vector<24x32xf32> to vector<24x32xbf16>
    %5 = vector.shape_cast %1 : vector<1x24x1xf32> to vector<24x1xf32>
    %cst = arith.constant 1.000000e+00 : f32
    %6 = vector.broadcast %cst : f32 to vector<1x1x24xf32>
    %7 = arith.subf %2, %6 : vector<1x1x24xf32>
    %cst_8 = arith.constant 1.000000e+09 : f32
    %8 = vector.broadcast %cst_8 : f32 to vector<1x1x24xf32>
    %9 = arith.mulf %7, %8 : vector<1x1x24xf32>
    %cst_9 = arith.constant 0.000000e+00 : f32
    %10 = vector.broadcast %cst_9 : f32 to vector<24x32xf32>
    %c0_10 = arith.constant 0 : index
    %c0_11 = arith.constant 0 : index
    %c0_12 = arith.constant 0 : index
    %11 = vector.load %arg4[%c0_10, %c0_11, %c0_12] : memref<2x32x16xbf16, #tpu.memory_space<vmem>>, vector<1x32x16xbf16>
    %12 = vector.shape_cast %11 : vector<1x32x16xbf16> to vector<32x16xbf16>
    %cst_13 = arith.constant dense<0.000000e+00> : vector<24x16xf32>
    %13 = tpu.matmul %4, %12, %cst_13 {dimension_numbers = #tpu.dot_dimension_numbers<[1], [0], [0], [1], [0, 0, 1, 1], [], []>} : vector<24x32xbf16>, vector<32x16xbf16>, vector<24x16xf32> -> vector<24x16xf32>
    %c0_14 = arith.constant 0 : index
    %c0_15 = arith.constant 0 : index
    %c0_16 = arith.constant 0 : index
    %14 = vector.load %arg7[%c0_14, %c0_15, %c0_16] : memref<2x1x16xf32, #tpu.memory_space<vmem>>, vector<1x1x16xf32>
    %15 = vector.shape_cast %14 : vector<1x1x16xf32> to vector<1x16xf32>
    %16 = vector.broadcast %15 : vector<1x16xf32> to vector<24x16xf32>
    %17 = arith.addf %13, %16 : vector<24x16xf32>
    %c0_17 = arith.constant 0 : index
    %c0_18 = arith.constant 0 : index
    %c0_19 = arith.constant 0 : index
    %18 = vector.load %arg5[%c0_17, %c0_18, %c0_19] : memref<2x32x16xbf16, #tpu.memory_space<vmem>>, vector<1x32x16xbf16>
    %19 = vector.shape_cast %18 : vector<1x32x16xbf16> to vector<32x16xbf16>
    %cst_20 = arith.constant dense<0.000000e+00> : vector<24x16xf32>
    %20 = tpu.matmul %4, %19, %cst_20 {dimension_numbers = #tpu.dot_dimension_numbers<[1], [0], [0], [1], [0, 0, 1, 1], [], []>} : vector<24x32xbf16>, vector<32x16xbf16>, vector<24x16xf32> -> vector<24x16xf32>
    %c0_21 = arith.constant 0 : index
    %c0_22 = arith.constant 0 : index
    %c0_23 = arith.constant 0 : index
    %21 = vector.load %arg8[%c0_21, %c0_22, %c0_23] : memref<2x1x16xf32, #tpu.memory_space<vmem>>, vector<1x1x16xf32>
    %22 = vector.shape_cast %21 : vector<1x1x16xf32> to vector<1x16xf32>
    %23 = vector.broadcast %22 : vector<1x16xf32> to vector<24x16xf32>
    %24 = arith.addf %20, %23 : vector<24x16xf32>
    %c0_24 = arith.constant 0 : index
    %c0_25 = arith.constant 0 : index
    %c0_26 = arith.constant 0 : index
    %25 = vector.load %arg6[%c0_24, %c0_25, %c0_26] : memref<2x32x16xbf16, #tpu.memory_space<vmem>>, vector<1x32x16xbf16>
    %26 = vector.shape_cast %25 : vector<1x32x16xbf16> to vector<32x16xbf16>
    %cst_27 = arith.constant dense<0.000000e+00> : vector<24x16xf32>
    %27 = tpu.matmul %4, %26, %cst_27 {dimension_numbers = #tpu.dot_dimension_numbers<[1], [0], [0], [1], [0, 0, 1, 1], [], []>} : vector<24x32xbf16>, vector<32x16xbf16>, vector<24x16xf32> -> vector<24x16xf32>
    %c0_28 = arith.constant 0 : index
    %c0_29 = arith.constant 0 : index
    %c0_30 = arith.constant 0 : index
    %28 = vector.load %arg9[%c0_28, %c0_29, %c0_30] : memref<2x1x16xf32, #tpu.memory_space<vmem>>, vector<1x1x16xf32>
    %29 = vector.shape_cast %28 : vector<1x1x16xf32> to vector<1x16xf32>
    %30 = vector.broadcast %29 : vector<1x16xf32> to vector<24x16xf32>
    %31 = arith.addf %27, %30 : vector<24x16xf32>
    %32 = vector.shape_cast %17 : vector<24x16xf32> to vector<1x24x16xf32>
    %33 = arith.truncf %32 : vector<1x24x16xf32> to vector<1x24x16xbf16>
    %34 = vector.shape_cast %24 : vector<24x16xf32> to vector<1x24x16xf32>
    %35 = arith.truncf %34 : vector<1x24x16xf32> to vector<1x24x16xbf16>
    "tpu.trace_start"() <{level = 10 : i32, message = "bqe,bke->bqk"}> : () -> ()
    %cst_31 = arith.constant dense<0.000000e+00> : vector<1x24x24xf32>
    %36 = tpu.matmul %33, %35, %cst_31 {dimension_numbers = #tpu.dot_dimension_numbers<[2], [2], [1], [1], [0, 0, 0, 1, 1, 1], [0], [0]>} : vector<1x24x16xbf16>, vector<1x24x16xbf16>, vector<1x24x24xf32> -> vector<1x24x24xf32>
    "tpu.trace_stop"() : () -> ()
    %37 = vector.broadcast %9 : vector<1x1x24xf32> to vector<1x24x24xf32>
    %38 = arith.addf %36, %37 : vector<1x24x24xf32>
    %cst_32 = arith.constant dense<0xFF800000> : vector<1x24xf32>
    %39 = vector.multi_reduction <maximumf>, %38, %cst_32 [2] : vector<1x24x24xf32> to vector<1x24xf32>
    %40 = vector.shape_cast %39 : vector<1x24xf32> to vector<1x24x1xf32>
    %41 = vector.broadcast %40 : vector<1x24x1xf32> to vector<1x24x24xf32>
    %42 = arith.subf %38, %41 : vector<1x24x24xf32>
    %43 = math.exp %42 : vector<1x24x24xf32>
    %cst_33 = arith.constant dense<0.000000e+00> : vector<1x24xf32>
    %44 = vector.multi_reduction <add>, %43, %cst_33 [2] : vector<1x24x24xf32> to vector<1x24xf32>
    %45 = vector.shape_cast %44 : vector<1x24xf32> to vector<1x24x1xf32>
    %46 = tpu.reciprocal %45 {approx = true} : vector<1x24x1xf32> -> vector<1x24x1xf32>
    %47 = vector.broadcast %46 : vector<1x24x1xf32> to vector<1x24x24xf32>
    %48 = arith.mulf %43, %47 : vector<1x24x24xf32>
    %49 = arith.truncf %48 : vector<1x24x24xf32> to vector<1x24x24xbf16>
    %50 = vector.shape_cast %31 : vector<24x16xf32> to vector<1x24x16xf32>
    %51 = arith.truncf %50 : vector<1x24x16xf32> to vector<1x24x16xbf16>
    "tpu.trace_start"() <{level = 10 : i32, message = "bqk,bke->bqe"}> : () -> ()
    %cst_34 = arith.constant dense<0.000000e+00> : vector<1x24x16xf32>
    %52 = tpu.matmul %49, %51, %cst_34 {dimension_numbers = #tpu.dot_dimension_numbers<[2], [1], [1], [2], [0, 0, 0, 1, 1, 2], [0], [0]>} : vector<1x24x24xbf16>, vector<1x24x16xbf16>, vector<1x24x16xf32> -> vector<1x24x16xf32>
    "tpu.trace_stop"() : () -> ()
    %53 = vector.shape_cast %52 : vector<1x24x16xf32> to vector<24x16xf32>
    %54 = arith.truncf %53 : vector<24x16xf32> to vector<24x16xbf16>
    %c0_35 = arith.constant 0 : index
    %c0_36 = arith.constant 0 : index
    %c0_37 = arith.constant 0 : index
    %55 = vector.load %arg10[%c0_35, %c0_36, %c0_37] : memref<2x16x32xbf16, #tpu.memory_space<vmem>>, vector<1x16x32xbf16>
    %56 = vector.shape_cast %55 : vector<1x16x32xbf16> to vector<16x32xbf16>
    %cst_38 = arith.constant dense<0.000000e+00> : vector<24x32xf32>
    %57 = tpu.matmul %54, %56, %cst_38 {dimension_numbers = #tpu.dot_dimension_numbers<[1], [0], [0], [1], [0, 0, 1, 1], [], []>} : vector<24x16xbf16>, vector<16x32xbf16>, vector<24x32xf32> -> vector<24x32xf32>
    %58 = arith.addf %10, %57 : vector<24x32xf32>
    %c1 = arith.constant 1 : index
    %c0_39 = arith.constant 0 : index
    %c0_40 = arith.constant 0 : index
    %59 = vector.load %arg4[%c1, %c0_39, %c0_40] : memref<2x32x16xbf16, #tpu.memory_space<vmem>>, vector<1x32x16xbf16>
    %60 = vector.shape_cast %59 : vector<1x32x16xbf16> to vector<32x16xbf16>
    %cst_41 = arith.constant dense<0.000000e+00> : vector<24x16xf32>
    %61 = tpu.matmul %4, %60, %cst_41 {dimension_numbers = #tpu.dot_dimension_numbers<[1], [0], [0], [1], [0, 0, 1, 1], [], []>} : vector<24x32xbf16>, vector<32x16xbf16>, vector<24x16xf32> -> vector<24x16xf32>
    %c1_42 = arith.constant 1 : index
    %c0_43 = arith.constant 0 : index
    %c0_44 = arith.constant 0 : index
    %62 = vector.load %arg7[%c1_42, %c0_43, %c0_44] : memref<2x1x16xf32, #tpu.memory_space<vmem>>, vector<1x1x16xf32>
    %63 = vector.shape_cast %62 : vector<1x1x16xf32> to vector<1x16xf32>
    %64 = vector.broadcast %63 : vector<1x16xf32> to vector<24x16xf32>
    %65 = arith.addf %61, %64 : vector<24x16xf32>
    %c1_45 = arith.constant 1 : index
    %c0_46 = arith.constant 0 : index
    %c0_47 = arith.constant 0 : index
    %66 = vector.load %arg5[%c1_45, %c0_46, %c0_47] : memref<2x32x16xbf16, #tpu.memory_space<vmem>>, vector<1x32x16xbf16>
    %67 = vector.shape_cast %66 : vector<1x32x16xbf16> to vector<32x16xbf16>
    %cst_48 = arith.constant dense<0.000000e+00> : vector<24x16xf32>
    %68 = tpu.matmul %4, %67, %cst_48 {dimension_numbers = #tpu.dot_dimension_numbers<[1], [0], [0], [1], [0, 0, 1, 1], [], []>} : vector<24x32xbf16>, vector<32x16xbf16>, vector<24x16xf32> -> vector<24x16xf32>
    %c1_49 = arith.constant 1 : index
    %c0_50 = arith.constant 0 : index
    %c0_51 = arith.constant 0 : index
    %69 = vector.load %arg8[%c1_49, %c0_50, %c0_51] : memref<2x1x16xf32, #tpu.memory_space<vmem>>, vector<1x1x16xf32>
    %70 = vector.shape_cast %69 : vector<1x1x16xf32> to vector<1x16xf32>
    %71 = vector.broadcast %70 : vector<1x16xf32> to vector<24x16xf32>
    %72 = arith.addf %68, %71 : vector<24x16xf32>
    %c1_52 = arith.constant 1 : index
    %c0_53 = arith.constant 0 : index
    %c0_54 = arith.constant 0 : index
    %73 = vector.load %arg6[%c1_52, %c0_53, %c0_54] : memref<2x32x16xbf16, #tpu.memory_space<vmem>>, vector<1x32x16xbf16>
    %74 = vector.shape_cast %73 : vector<1x32x16xbf16> to vector<32x16xbf16>
    %cst_55 = arith.constant dense<0.000000e+00> : vector<24x16xf32>
    %75 = tpu.matmul %4, %74, %cst_55 {dimension_numbers = #tpu.dot_dimension_numbers<[1], [0], [0], [1], [0, 0, 1, 1], [], []>} : vector<24x32xbf16>, vector<32x16xbf16>, vector<24x16xf32> -> vector<24x16xf32>
    %c1_56 = arith.constant 1 : index
    %c0_57 = arith.constant 0 : index
    %c0_58 = arith.constant 0 : index
    %76 = vector.load %arg9[%c1_56, %c0_57, %c0_58] : memref<2x1x16xf32, #tpu.memory_space<vmem>>, vector<1x1x16xf32>
    %77 = vector.shape_cast %76 : vector<1x1x16xf32> to vector<1x16xf32>
    %78 = vector.broadcast %77 : vector<1x16xf32> to vector<24x16xf32>
    %79 = arith.addf %75, %78 : vector<24x16xf32>
    %80 = vector.shape_cast %65 : vector<24x16xf32> to vector<1x24x16xf32>
    %81 = arith.truncf %80 : vector<1x24x16xf32> to vector<1x24x16xbf16>
    %82 = vector.shape_cast %72 : vector<24x16xf32> to vector<1x24x16xf32>
    %83 = arith.truncf %82 : vector<1x24x16xf32> to vector<1x24x16xbf16>
    "tpu.trace_start"() <{level = 10 : i32, message = "bqe,bke->bqk"}> : () -> ()
    %cst_59 = arith.constant dense<0.000000e+00> : vector<1x24x24xf32>
    %84 = tpu.matmul %81, %83, %cst_59 {dimension_numbers = #tpu.dot_dimension_numbers<[2], [2], [1], [1], [0, 0, 0, 1, 1, 1], [0], [0]>} : vector<1x24x16xbf16>, vector<1x24x16xbf16>, vector<1x24x24xf32> -> vector<1x24x24xf32>
    "tpu.trace_stop"() : () -> ()
    %85 = vector.broadcast %9 : vector<1x1x24xf32> to vector<1x24x24xf32>
    %86 = arith.addf %84, %85 : vector<1x24x24xf32>
    %cst_60 = arith.constant dense<0xFF800000> : vector<1x24xf32>
    %87 = vector.multi_reduction <maximumf>, %86, %cst_60 [2] : vector<1x24x24xf32> to vector<1x24xf32>
    %88 = vector.shape_cast %87 : vector<1x24xf32> to vector<1x24x1xf32>
    %89 = vector.broadcast %88 : vector<1x24x1xf32> to vector<1x24x24xf32>
    %90 = arith.subf %86, %89 : vector<1x24x24xf32>
    %91 = math.exp %90 : vector<1x24x24xf32>
    %cst_61 = arith.constant dense<0.000000e+00> : vector<1x24xf32>
    %92 = vector.multi_reduction <add>, %91, %cst_61 [2] : vector<1x24x24xf32> to vector<1x24xf32>
    %93 = vector.shape_cast %92 : vector<1x24xf32> to vector<1x24x1xf32>
    %94 = tpu.reciprocal %93 {approx = true} : vector<1x24x1xf32> -> vector<1x24x1xf32>
    %95 = vector.broadcast %94 : vector<1x24x1xf32> to vector<1x24x24xf32>
    %96 = arith.mulf %91, %95 : vector<1x24x24xf32>
    %97 = arith.truncf %96 : vector<1x24x24xf32> to vector<1x24x24xbf16>
    %98 = vector.shape_cast %79 : vector<24x16xf32> to vector<1x24x16xf32>
    %99 = arith.truncf %98 : vector<1x24x16xf32> to vector<1x24x16xbf16>
    "tpu.trace_start"() <{level = 10 : i32, message = "bqk,bke->bqe"}> : () -> ()
    %cst_62 = arith.constant dense<0.000000e+00> : vector<1x24x16xf32>
    %100 = tpu.matmul %97, %99, %cst_62 {dimension_numbers = #tpu.dot_dimension_numbers<[2], [1], [1], [2], [0, 0, 0, 1, 1, 2], [0], [0]>} : vector<1x24x24xbf16>, vector<1x24x16xbf16>, vector<1x24x16xf32> -> vector<1x24x16xf32>
    "tpu.trace_stop"() : () -> ()
    %101 = vector.shape_cast %100 : vector<1x24x16xf32> to vector<24x16xf32>
    %102 = arith.truncf %101 : vector<24x16xf32> to vector<24x16xbf16>
    %c1_63 = arith.constant 1 : index
    %c0_64 = arith.constant 0 : index
    %c0_65 = arith.constant 0 : index
    %103 = vector.load %arg10[%c1_63, %c0_64, %c0_65] : memref<2x16x32xbf16, #tpu.memory_space<vmem>>, vector<1x16x32xbf16>
    %104 = vector.shape_cast %103 : vector<1x16x32xbf16> to vector<16x32xbf16>
    %cst_66 = arith.constant dense<0.000000e+00> : vector<24x32xf32>
    %105 = tpu.matmul %102, %104, %cst_66 {dimension_numbers = #tpu.dot_dimension_numbers<[1], [0], [0], [1], [0, 0, 1, 1], [], []>} : vector<24x16xbf16>, vector<16x32xbf16>, vector<24x32xf32> -> vector<24x32xf32>
    %106 = arith.addf %58, %105 : vector<24x32xf32>
    %c0_67 = arith.constant 0 : index
    %c0_68 = arith.constant 0 : index
    %107 = vector.load %arg11[%c0_67, %c0_68] : memref<1x32xf32, #tpu.memory_space<vmem>>, vector<1x32xf32>
    %108 = vector.broadcast %107 : vector<1x32xf32> to vector<24x32xf32>
    %109 = arith.addf %106, %108 : vector<24x32xf32>
    %110 = arith.addf %109, %3 : vector<24x32xf32>
    %c0_69 = arith.constant 0 : index
    %c0_70 = arith.constant 0 : index
    %111 = vector.load %arg12[%c0_69, %c0_70] : memref<1x32xf32, #tpu.memory_space<vmem>>, vector<1x32xf32>
    %c0_71 = arith.constant 0 : index
    %c0_72 = arith.constant 0 : index
    %112 = vector.load %arg13[%c0_71, %c0_72] : memref<1x32xf32, #tpu.memory_space<vmem>>, vector<1x32xf32>
    %cst_73 = arith.constant dense<0.000000e+00> : vector<24xf32>
    %113 = vector.multi_reduction <add>, %110, %cst_73 [1] : vector<24x32xf32> to vector<24xf32>
    %114 = vector.shape_cast %113 : vector<24xf32> to vector<24x1xf32>
    %cst_74 = arith.constant 3.200000e+01 : f32
    %115 = vector.broadcast %cst_74 : f32 to vector<24x1xf32>
    %116 = arith.divf %114, %115 : vector<24x1xf32>
    %117 = vector.broadcast %116 : vector<24x1xf32> to vector<24x32xf32>
    %118 = arith.subf %110, %117 : vector<24x32xf32>
    %119 = arith.mulf %118, %118 : vector<24x32xf32>
    %cst_75 = arith.constant dense<0.000000e+00> : vector<24xf32>
    %120 = vector.multi_reduction <add>, %119, %cst_75 [1] : vector<24x32xf32> to vector<24xf32>
    %121 = vector.shape_cast %120 : vector<24xf32> to vector<24x1xf32>
    %cst_76 = arith.constant 3.200000e+01 : f32
    %122 = vector.broadcast %cst_76 : f32 to vector<24x1xf32>
    %123 = arith.divf %121, %122 : vector<24x1xf32>
    %124 = vector.broadcast %116 : vector<24x1xf32> to vector<24x32xf32>
    %125 = arith.subf %110, %124 : vector<24x32xf32>
    %cst_77 = arith.constant 9.99999974E-6 : f32
    %126 = vector.broadcast %cst_77 : f32 to vector<24x1xf32>
    %127 = arith.addf %123, %126 : vector<24x1xf32>
    %128 = math.rsqrt %127 : vector<24x1xf32>
    %129 = vector.broadcast %128 : vector<24x1xf32> to vector<24x32xf32>
    %130 = arith.mulf %125, %129 : vector<24x32xf32>
    %131 = vector.broadcast %111 : vector<1x32xf32> to vector<24x32xf32>
    %132 = arith.mulf %130, %131 : vector<24x32xf32>
    %133 = vector.broadcast %112 : vector<1x32xf32> to vector<24x32xf32>
    %134 = arith.addf %132, %133 : vector<24x32xf32>
    %135 = vector.broadcast %5 : vector<24x1xf32> to vector<24x32xf32>
    %136 = arith.mulf %134, %135 : vector<24x32xf32>
    %137 = vector.shape_cast %136 : vector<24x32xf32> to vector<1x24x32xf32>
    %c0_78 = arith.constant 0 : index
    %c0_79 = arith.constant 0 : index
    %138 = vector.load %arg14[%c0_78, %c0_79] : memref<288x64xbf16, #tpu.memory_space<vmem>>, vector<288x64xbf16>
    %c0_80 = arith.constant 0 : index
    %c0_81 = arith.constant 0 : index
    %139 = vector.load %arg15[%c0_80, %c0_81] : memref<1x64xf32, #tpu.memory_space<vmem>>, vector<1x64xf32>
    %cst_82 = arith.constant 0.000000e+00 : f32
    %140 = vector.broadcast %cst_82 : f32 to vector<1x4x32xf32>
    %141 = tpu.concatenate %140, %137, %140 in 1 : vector<1x4x32xf32>, vector<1x24x32xf32>, vector<1x4x32xf32> -> vector<1x32x32xf32>
    %142 = vector.extract_strided_slice %141 {offsets = [0, 0, 0], sizes = [1, 24, 32], strides = [1, 1, 1]} : vector<1x32x32xf32> to vector<1x24x32xf32>
    %143 = vector.extract_strided_slice %141 {offsets = [0, 1, 0], sizes = [1, 24, 32], strides = [1, 1, 1]} : vector<1x32x32xf32> to vector<1x24x32xf32>
    %144 = vector.extract_strided_slice %141 {offsets = [0, 2, 0], sizes = [1, 24, 32], strides = [1, 1, 1]} : vector<1x32x32xf32> to vector<1x24x32xf32>
    %145 = vector.extract_strided_slice %141 {offsets = [0, 3, 0], sizes = [1, 24, 32], strides = [1, 1, 1]} : vector<1x32x32xf32> to vector<1x24x32xf32>
    %146 = vector.extract_strided_slice %141 {offsets = [0, 4, 0], sizes = [1, 24, 32], strides = [1, 1, 1]} : vector<1x32x32xf32> to vector<1x24x32xf32>
    %147 = vector.extract_strided_slice %141 {offsets = [0, 5, 0], sizes = [1, 24, 32], strides = [1, 1, 1]} : vector<1x32x32xf32> to vector<1x24x32xf32>
    %148 = vector.extract_strided_slice %141 {offsets = [0, 6, 0], sizes = [1, 24, 32], strides = [1, 1, 1]} : vector<1x32x32xf32> to vector<1x24x32xf32>
    %149 = vector.extract_strided_slice %141 {offsets = [0, 7, 0], sizes = [1, 24, 32], strides = [1, 1, 1]} : vector<1x32x32xf32> to vector<1x24x32xf32>
    %150 = vector.extract_strided_slice %141 {offsets = [0, 8, 0], sizes = [1, 24, 32], strides = [1, 1, 1]} : vector<1x32x32xf32> to vector<1x24x32xf32>
    %151 = tpu.concatenate %142, %143, %144, %145, %146, %147, %148, %149, %150 in 2 : vector<1x24x32xf32>, vector<1x24x32xf32>, vector<1x24x32xf32>, vector<1x24x32xf32>, vector<1x24x32xf32>, vector<1x24x32xf32>, vector<1x24x32xf32>, vector<1x24x32xf32>, vector<1x24x32xf32> -> vector<1x24x288xf32>
    %152 = vector.shape_cast %151 : vector<1x24x288xf32> to vector<24x288xf32>
    %153 = arith.truncf %152 : vector<24x288xf32> to vector<24x288xbf16>
    %cst_83 = arith.constant dense<0.000000e+00> : vector<24x64xf32>
    %154 = tpu.matmul %153, %138, %cst_83 {dimension_numbers = #tpu.dot_dimension_numbers<[1], [0], [0], [1], [0, 0, 1, 1], [], []>} : vector<24x288xbf16>, vector<288x64xbf16>, vector<24x64xf32> -> vector<24x64xf32>
    %155 = vector.broadcast %139 : vector<1x64xf32> to vector<24x64xf32>
    %156 = arith.addf %154, %155 : vector<24x64xf32>
    %157 = vector.shape_cast %156 : vector<24x64xf32> to vector<1x24x64xf32>
    %cst_84 = arith.constant 0.000000e+00 : f32
    %158 = vector.broadcast %cst_84 : f32 to vector<1x24x64xf32>
    %159 = arith.maximumf %157, %158 : vector<1x24x64xf32>
    %160 = vector.shape_cast %159 : vector<1x24x64xf32> to vector<24x64xf32>
    %161 = arith.truncf %160 : vector<24x64xf32> to vector<24x64xbf16>
    %c0_85 = arith.constant 0 : index
    %c0_86 = arith.constant 0 : index
    %162 = vector.load %arg16[%c0_85, %c0_86] : memref<64x32xbf16, #tpu.memory_space<vmem>>, vector<64x32xbf16>
    %cst_87 = arith.constant dense<0.000000e+00> : vector<24x32xf32>
    %163 = tpu.matmul %161, %162, %cst_87 {dimension_numbers = #tpu.dot_dimension_numbers<[1], [0], [0], [1], [0, 0, 1, 1], [], []>} : vector<24x64xbf16>, vector<64x32xbf16>, vector<24x32xf32> -> vector<24x32xf32>
    %c0_88 = arith.constant 0 : index
    %c0_89 = arith.constant 0 : index
    %164 = vector.load %arg17[%c0_88, %c0_89] : memref<1x32xf32, #tpu.memory_space<vmem>>, vector<1x32xf32>
    %165 = vector.broadcast %164 : vector<1x32xf32> to vector<24x32xf32>
    %166 = arith.addf %163, %165 : vector<24x32xf32>
    %167 = arith.addf %166, %136 : vector<24x32xf32>
    %c0_90 = arith.constant 0 : index
    %c0_91 = arith.constant 0 : index
    %168 = vector.load %arg18[%c0_90, %c0_91] : memref<1x32xf32, #tpu.memory_space<vmem>>, vector<1x32xf32>
    %c0_92 = arith.constant 0 : index
    %c0_93 = arith.constant 0 : index
    %169 = vector.load %arg19[%c0_92, %c0_93] : memref<1x32xf32, #tpu.memory_space<vmem>>, vector<1x32xf32>
    %cst_94 = arith.constant dense<0.000000e+00> : vector<24xf32>
    %170 = vector.multi_reduction <add>, %167, %cst_94 [1] : vector<24x32xf32> to vector<24xf32>
    %171 = vector.shape_cast %170 : vector<24xf32> to vector<24x1xf32>
    %cst_95 = arith.constant 3.200000e+01 : f32
    %172 = vector.broadcast %cst_95 : f32 to vector<24x1xf32>
    %173 = arith.divf %171, %172 : vector<24x1xf32>
    %174 = vector.broadcast %173 : vector<24x1xf32> to vector<24x32xf32>
    %175 = arith.subf %167, %174 : vector<24x32xf32>
    %176 = arith.mulf %175, %175 : vector<24x32xf32>
    %cst_96 = arith.constant dense<0.000000e+00> : vector<24xf32>
    %177 = vector.multi_reduction <add>, %176, %cst_96 [1] : vector<24x32xf32> to vector<24xf32>
    %178 = vector.shape_cast %177 : vector<24xf32> to vector<24x1xf32>
    %cst_97 = arith.constant 3.200000e+01 : f32
    %179 = vector.broadcast %cst_97 : f32 to vector<24x1xf32>
    %180 = arith.divf %178, %179 : vector<24x1xf32>
    %181 = vector.broadcast %173 : vector<24x1xf32> to vector<24x32xf32>
    %182 = arith.subf %167, %181 : vector<24x32xf32>
    %cst_98 = arith.constant 9.99999974E-6 : f32
    %183 = vector.broadcast %cst_98 : f32 to vector<24x1xf32>
    %184 = arith.addf %180, %183 : vector<24x1xf32>
    %185 = math.rsqrt %184 : vector<24x1xf32>
    %186 = vector.broadcast %185 : vector<24x1xf32> to vector<24x32xf32>
    %187 = arith.mulf %182, %186 : vector<24x32xf32>
    %188 = vector.broadcast %168 : vector<1x32xf32> to vector<24x32xf32>
    %189 = arith.mulf %187, %188 : vector<24x32xf32>
    %190 = vector.broadcast %169 : vector<1x32xf32> to vector<24x32xf32>
    %191 = arith.addf %189, %190 : vector<24x32xf32>
    %192 = vector.broadcast %5 : vector<24x1xf32> to vector<24x32xf32>
    %193 = arith.mulf %191, %192 : vector<24x32xf32>
    %194 = vector.shape_cast %193 : vector<24x32xf32> to vector<1x24x32xf32>
    %195 = vector.shape_cast %194 : vector<1x24x32xf32> to vector<24x32xf32>
    %196 = arith.truncf %195 : vector<24x32xf32> to vector<24x32xbf16>
    %c0_99 = arith.constant 0 : index
    %c0_100 = arith.constant 0 : index
    %197 = vector.load %arg20[%c0_99, %c0_100] : memref<32x16xbf16, #tpu.memory_space<vmem>>, vector<32x16xbf16>
    %cst_101 = arith.constant dense<0.000000e+00> : vector<24x16xf32>
    %198 = tpu.matmul %196, %197, %cst_101 {dimension_numbers = #tpu.dot_dimension_numbers<[1], [0], [0], [1], [0, 0, 1, 1], [], []>} : vector<24x32xbf16>, vector<32x16xbf16>, vector<24x16xf32> -> vector<24x16xf32>
    %c0_102 = arith.constant 0 : index
    %c0_103 = arith.constant 0 : index
    %199 = vector.load %arg21[%c0_102, %c0_103] : memref<1x16xf32, #tpu.memory_space<vmem>>, vector<1x16xf32>
    %200 = vector.broadcast %199 : vector<1x16xf32> to vector<24x16xf32>
    %201 = arith.addf %198, %200 : vector<24x16xf32>
    %202 = vector.shape_cast %201 : vector<24x16xf32> to vector<1x24x16xf32>
    %c0_104 = arith.constant 0 : index
    %c0_105 = arith.constant 0 : index
    %c0_106 = arith.constant 0 : index
    %203 = vector.load %arg24[%c0_104, %c0_105, %c0_106] : memref<1x24x16xf32, #tpu.memory_space<vmem>>, vector<1x24x16xf32>
    tpu.vector_store %arg24[%c0_104, %c0_105, %c0_106], %202 {strides = array<i32>} : memref<1x24x16xf32, #tpu.memory_space<vmem>>, vector<1x24x16xf32>,
    %cst_107 = arith.constant 0.000000e+00 : f32
    %204 = vector.broadcast %cst_107 : f32 to vector<1x24x16xf32>
    %205 = tpu.concatenate %202, %204 in 2 : vector<1x24x16xf32>, vector<1x24x16xf32> -> vector<1x24x32xf32>
    %c0_108 = arith.constant 0 : index
    %c0_109 = arith.constant 0 : index
    %c0_110 = arith.constant 0 : index
    %206 = vector.load %arg22[%c0_108, %c0_109, %c0_110] : memref<5x160x32xbf16, #tpu.memory_space<vmem>>, vector<1x160x32xbf16>
    %207 = vector.shape_cast %206 : vector<1x160x32xbf16> to vector<160x32xbf16>
    %c0_111 = arith.constant 0 : index
    %c0_112 = arith.constant 0 : index
    %c0_113 = arith.constant 0 : index
    %208 = vector.load %arg23[%c0_111, %c0_112, %c0_113] : memref<5x1x32xf32, #tpu.memory_space<vmem>>, vector<1x1x32xf32>
    %209 = vector.shape_cast %208 : vector<1x1x32xf32> to vector<1x32xf32>
    %cst_114 = arith.constant 0.000000e+00 : f32
    %210 = vector.broadcast %cst_114 : f32 to vector<1x2x32xf32>
    %211 = tpu.concatenate %210, %205, %210 in 1 : vector<1x2x32xf32>, vector<1x24x32xf32>, vector<1x2x32xf32> -> vector<1x28x32xf32>
    %212 = vector.extract_strided_slice %211 {offsets = [0, 0, 0], sizes = [1, 24, 32], strides = [1, 1, 1]} : vector<1x28x32xf32> to vector<1x24x32xf32>
    %213 = vector.extract_strided_slice %211 {offsets = [0, 1, 0], sizes = [1, 24, 32], strides = [1, 1, 1]} : vector<1x28x32xf32> to vector<1x24x32xf32>
    %214 = vector.extract_strided_slice %211 {offsets = [0, 2, 0], sizes = [1, 24, 32], strides = [1, 1, 1]} : vector<1x28x32xf32> to vector<1x24x32xf32>
    %215 = vector.extract_strided_slice %211 {offsets = [0, 3, 0], sizes = [1, 24, 32], strides = [1, 1, 1]} : vector<1x28x32xf32> to vector<1x24x32xf32>
    %216 = vector.extract_strided_slice %211 {offsets = [0, 4, 0], sizes = [1, 24, 32], strides = [1, 1, 1]} : vector<1x28x32xf32> to vector<1x24x32xf32>
    %217 = tpu.concatenate %212, %213, %214, %215, %216 in 2 : vector<1x24x32xf32>, vector<1x24x32xf32>, vector<1x24x32xf32>, vector<1x24x32xf32>, vector<1x24x32xf32> -> vector<1x24x160xf32>
    %218 = vector.shape_cast %217 : vector<1x24x160xf32> to vector<24x160xf32>
    %219 = arith.truncf %218 : vector<24x160xf32> to vector<24x160xbf16>
    %cst_115 = arith.constant dense<0.000000e+00> : vector<24x32xf32>
    %220 = tpu.matmul %219, %207, %cst_115 {dimension_numbers = #tpu.dot_dimension_numbers<[1], [0], [0], [1], [0, 0, 1, 1], [], []>} : vector<24x160xbf16>, vector<160x32xbf16>, vector<24x32xf32> -> vector<24x32xf32>
    %221 = vector.broadcast %209 : vector<1x32xf32> to vector<24x32xf32>
    %222 = arith.addf %220, %221 : vector<24x32xf32>
    %223 = vector.shape_cast %222 : vector<24x32xf32> to vector<1x24x32xf32>
    %224 = math.tanh %223 : vector<1x24x32xf32>
    %c1_116 = arith.constant 1 : index
    %c0_117 = arith.constant 0 : index
    %c0_118 = arith.constant 0 : index
    %225 = vector.load %arg22[%c1_116, %c0_117, %c0_118] : memref<5x160x32xbf16, #tpu.memory_space<vmem>>, vector<1x160x32xbf16>
    %226 = vector.shape_cast %225 : vector<1x160x32xbf16> to vector<160x32xbf16>
    %c1_119 = arith.constant 1 : index
    %c0_120 = arith.constant 0 : index
    %c0_121 = arith.constant 0 : index
    %227 = vector.load %arg23[%c1_119, %c0_120, %c0_121] : memref<5x1x32xf32, #tpu.memory_space<vmem>>, vector<1x1x32xf32>
    %228 = vector.shape_cast %227 : vector<1x1x32xf32> to vector<1x32xf32>
    %cst_122 = arith.constant 0.000000e+00 : f32
    %229 = vector.broadcast %cst_122 : f32 to vector<1x2x32xf32>
    %230 = tpu.concatenate %229, %224, %229 in 1 : vector<1x2x32xf32>, vector<1x24x32xf32>, vector<1x2x32xf32> -> vector<1x28x32xf32>
    %231 = vector.extract_strided_slice %230 {offsets = [0, 0, 0], sizes = [1, 24, 32], strides = [1, 1, 1]} : vector<1x28x32xf32> to vector<1x24x32xf32>
    %232 = vector.extract_strided_slice %230 {offsets = [0, 1, 0], sizes = [1, 24, 32], strides = [1, 1, 1]} : vector<1x28x32xf32> to vector<1x24x32xf32>
    %233 = vector.extract_strided_slice %230 {offsets = [0, 2, 0], sizes = [1, 24, 32], strides = [1, 1, 1]} : vector<1x28x32xf32> to vector<1x24x32xf32>
    %234 = vector.extract_strided_slice %230 {offsets = [0, 3, 0], sizes = [1, 24, 32], strides = [1, 1, 1]} : vector<1x28x32xf32> to vector<1x24x32xf32>
    %235 = vector.extract_strided_slice %230 {offsets = [0, 4, 0], sizes = [1, 24, 32], strides = [1, 1, 1]} : vector<1x28x32xf32> to vector<1x24x32xf32>
    %236 = tpu.concatenate %231, %232, %233, %234, %235 in 2 : vector<1x24x32xf32>, vector<1x24x32xf32>, vector<1x24x32xf32>, vector<1x24x32xf32>, vector<1x24x32xf32> -> vector<1x24x160xf32>
    %237 = vector.shape_cast %236 : vector<1x24x160xf32> to vector<24x160xf32>
    %238 = arith.truncf %237 : vector<24x160xf32> to vector<24x160xbf16>
    %cst_123 = arith.constant dense<0.000000e+00> : vector<24x32xf32>
    %239 = tpu.matmul %238, %226, %cst_123 {dimension_numbers = #tpu.dot_dimension_numbers<[1], [0], [0], [1], [0, 0, 1, 1], [], []>} : vector<24x160xbf16>, vector<160x32xbf16>, vector<24x32xf32> -> vector<24x32xf32>
    %240 = vector.broadcast %228 : vector<1x32xf32> to vector<24x32xf32>
    %241 = arith.addf %239, %240 : vector<24x32xf32>
    %242 = vector.shape_cast %241 : vector<24x32xf32> to vector<1x24x32xf32>
    %243 = math.tanh %242 : vector<1x24x32xf32>
    %c2 = arith.constant 2 : index
    %c0_124 = arith.constant 0 : index
    %c0_125 = arith.constant 0 : index
    %244 = vector.load %arg22[%c2, %c0_124, %c0_125] : memref<5x160x32xbf16, #tpu.memory_space<vmem>>, vector<1x160x32xbf16>
    %245 = vector.shape_cast %244 : vector<1x160x32xbf16> to vector<160x32xbf16>
    %c2_126 = arith.constant 2 : index
    %c0_127 = arith.constant 0 : index
    %c0_128 = arith.constant 0 : index
    %246 = vector.load %arg23[%c2_126, %c0_127, %c0_128] : memref<5x1x32xf32, #tpu.memory_space<vmem>>, vector<1x1x32xf32>
    %247 = vector.shape_cast %246 : vector<1x1x32xf32> to vector<1x32xf32>
    %cst_129 = arith.constant 0.000000e+00 : f32
    %248 = vector.broadcast %cst_129 : f32 to vector<1x2x32xf32>
    %249 = tpu.concatenate %248, %243, %248 in 1 : vector<1x2x32xf32>, vector<1x24x32xf32>, vector<1x2x32xf32> -> vector<1x28x32xf32>
    %250 = vector.extract_strided_slice %249 {offsets = [0, 0, 0], sizes = [1, 24, 32], strides = [1, 1, 1]} : vector<1x28x32xf32> to vector<1x24x32xf32>
    %251 = vector.extract_strided_slice %249 {offsets = [0, 1, 0], sizes = [1, 24, 32], strides = [1, 1, 1]} : vector<1x28x32xf32> to vector<1x24x32xf32>
    %252 = vector.extract_strided_slice %249 {offsets = [0, 2, 0], sizes = [1, 24, 32], strides = [1, 1, 1]} : vector<1x28x32xf32> to vector<1x24x32xf32>
    %253 = vector.extract_strided_slice %249 {offsets = [0, 3, 0], sizes = [1, 24, 32], strides = [1, 1, 1]} : vector<1x28x32xf32> to vector<1x24x32xf32>
    %254 = vector.extract_strided_slice %249 {offsets = [0, 4, 0], sizes = [1, 24, 32], strides = [1, 1, 1]} : vector<1x28x32xf32> to vector<1x24x32xf32>
    %255 = tpu.concatenate %250, %251, %252, %253, %254 in 2 : vector<1x24x32xf32>, vector<1x24x32xf32>, vector<1x24x32xf32>, vector<1x24x32xf32>, vector<1x24x32xf32> -> vector<1x24x160xf32>
    %256 = vector.shape_cast %255 : vector<1x24x160xf32> to vector<24x160xf32>
    %257 = arith.truncf %256 : vector<24x160xf32> to vector<24x160xbf16>
    %cst_130 = arith.constant dense<0.000000e+00> : vector<24x32xf32>
    %258 = tpu.matmul %257, %245, %cst_130 {dimension_numbers = #tpu.dot_dimension_numbers<[1], [0], [0], [1], [0, 0, 1, 1], [], []>} : vector<24x160xbf16>, vector<160x32xbf16>, vector<24x32xf32> -> vector<24x32xf32>
    %259 = vector.broadcast %247 : vector<1x32xf32> to vector<24x32xf32>
    %260 = arith.addf %258, %259 : vector<24x32xf32>
    %261 = vector.shape_cast %260 : vector<24x32xf32> to vector<1x24x32xf32>
    %262 = math.tanh %261 : vector<1x24x32xf32>
    %c3 = arith.constant 3 : index
    %c0_131 = arith.constant 0 : index
    %c0_132 = arith.constant 0 : index
    %263 = vector.load %arg22[%c3, %c0_131, %c0_132] : memref<5x160x32xbf16, #tpu.memory_space<vmem>>, vector<1x160x32xbf16>
    %264 = vector.shape_cast %263 : vector<1x160x32xbf16> to vector<160x32xbf16>
    %c3_133 = arith.constant 3 : index
    %c0_134 = arith.constant 0 : index
    %c0_135 = arith.constant 0 : index
    %265 = vector.load %arg23[%c3_133, %c0_134, %c0_135] : memref<5x1x32xf32, #tpu.memory_space<vmem>>, vector<1x1x32xf32>
    %266 = vector.shape_cast %265 : vector<1x1x32xf32> to vector<1x32xf32>
    %cst_136 = arith.constant 0.000000e+00 : f32
    %267 = vector.broadcast %cst_136 : f32 to vector<1x2x32xf32>
    %268 = tpu.concatenate %267, %262, %267 in 1 : vector<1x2x32xf32>, vector<1x24x32xf32>, vector<1x2x32xf32> -> vector<1x28x32xf32>
    %269 = vector.extract_strided_slice %268 {offsets = [0, 0, 0], sizes = [1, 24, 32], strides = [1, 1, 1]} : vector<1x28x32xf32> to vector<1x24x32xf32>
    %270 = vector.extract_strided_slice %268 {offsets = [0, 1, 0], sizes = [1, 24, 32], strides = [1, 1, 1]} : vector<1x28x32xf32> to vector<1x24x32xf32>
    %271 = vector.extract_strided_slice %268 {offsets = [0, 2, 0], sizes = [1, 24, 32], strides = [1, 1, 1]} : vector<1x28x32xf32> to vector<1x24x32xf32>
    %272 = vector.extract_strided_slice %268 {offsets = [0, 3, 0], sizes = [1, 24, 32], strides = [1, 1, 1]} : vector<1x28x32xf32> to vector<1x24x32xf32>
    %273 = vector.extract_strided_slice %268 {offsets = [0, 4, 0], sizes = [1, 24, 32], strides = [1, 1, 1]} : vector<1x28x32xf32> to vector<1x24x32xf32>
    %274 = tpu.concatenate %269, %270, %271, %272, %273 in 2 : vector<1x24x32xf32>, vector<1x24x32xf32>, vector<1x24x32xf32>, vector<1x24x32xf32>, vector<1x24x32xf32> -> vector<1x24x160xf32>
    %275 = vector.shape_cast %274 : vector<1x24x160xf32> to vector<24x160xf32>
    %276 = arith.truncf %275 : vector<24x160xf32> to vector<24x160xbf16>
    %cst_137 = arith.constant dense<0.000000e+00> : vector<24x32xf32>
    %277 = tpu.matmul %276, %264, %cst_137 {dimension_numbers = #tpu.dot_dimension_numbers<[1], [0], [0], [1], [0, 0, 1, 1], [], []>} : vector<24x160xbf16>, vector<160x32xbf16>, vector<24x32xf32> -> vector<24x32xf32>
    %278 = vector.broadcast %266 : vector<1x32xf32> to vector<24x32xf32>
    %279 = arith.addf %277, %278 : vector<24x32xf32>
    %280 = vector.shape_cast %279 : vector<24x32xf32> to vector<1x24x32xf32>
    %281 = math.tanh %280 : vector<1x24x32xf32>
    %c4 = arith.constant 4 : index
    %c0_138 = arith.constant 0 : index
    %c0_139 = arith.constant 0 : index
    %282 = vector.load %arg22[%c4, %c0_138, %c0_139] : memref<5x160x32xbf16, #tpu.memory_space<vmem>>, vector<1x160x32xbf16>
    %283 = vector.shape_cast %282 : vector<1x160x32xbf16> to vector<160x32xbf16>
    %c4_140 = arith.constant 4 : index
    %c0_141 = arith.constant 0 : index
    %c0_142 = arith.constant 0 : index
    %284 = vector.load %arg23[%c4_140, %c0_141, %c0_142] : memref<5x1x32xf32, #tpu.memory_space<vmem>>, vector<1x1x32xf32>
    %285 = vector.shape_cast %284 : vector<1x1x32xf32> to vector<1x32xf32>
    %cst_143 = arith.constant 0.000000e+00 : f32
    %286 = vector.broadcast %cst_143 : f32 to vector<1x2x32xf32>
    %287 = tpu.concatenate %286, %281, %286 in 1 : vector<1x2x32xf32>, vector<1x24x32xf32>, vector<1x2x32xf32> -> vector<1x28x32xf32>
    %288 = vector.extract_strided_slice %287 {offsets = [0, 0, 0], sizes = [1, 24, 32], strides = [1, 1, 1]} : vector<1x28x32xf32> to vector<1x24x32xf32>
    %289 = vector.extract_strided_slice %287 {offsets = [0, 1, 0], sizes = [1, 24, 32], strides = [1, 1, 1]} : vector<1x28x32xf32> to vector<1x24x32xf32>
    %290 = vector.extract_strided_slice %287 {offsets = [0, 2, 0], sizes = [1, 24, 32], strides = [1, 1, 1]} : vector<1x28x32xf32> to vector<1x24x32xf32>
    %291 = vector.extract_strided_slice %287 {offsets = [0, 3, 0], sizes = [1, 24, 32], strides = [1, 1, 1]} : vector<1x28x32xf32> to vector<1x24x32xf32>
    %292 = vector.extract_strided_slice %287 {offsets = [0, 4, 0], sizes = [1, 24, 32], strides = [1, 1, 1]} : vector<1x28x32xf32> to vector<1x24x32xf32>
    %293 = tpu.concatenate %288, %289, %290, %291, %292 in 2 : vector<1x24x32xf32>, vector<1x24x32xf32>, vector<1x24x32xf32>, vector<1x24x32xf32>, vector<1x24x32xf32> -> vector<1x24x160xf32>
    %294 = vector.shape_cast %293 : vector<1x24x160xf32> to vector<24x160xf32>
    %295 = arith.truncf %294 : vector<24x160xf32> to vector<24x160xbf16>
    %cst_144 = arith.constant dense<0.000000e+00> : vector<24x32xf32>
    %296 = tpu.matmul %295, %283, %cst_144 {dimension_numbers = #tpu.dot_dimension_numbers<[1], [0], [0], [1], [0, 0, 1, 1], [], []>} : vector<24x160xbf16>, vector<160x32xbf16>, vector<24x32xf32> -> vector<24x32xf32>
    %297 = vector.broadcast %285 : vector<1x32xf32> to vector<24x32xf32>
    %298 = arith.addf %296, %297 : vector<24x32xf32>
    %299 = vector.shape_cast %298 : vector<24x32xf32> to vector<1x24x32xf32>
    %300 = vector.extract_strided_slice %299 {offsets = [0, 0, 0], sizes = [1, 24, 16], strides = [1, 1, 1]} : vector<1x24x32xf32> to vector<1x24x16xf32>
    %301 = arith.addf %300, %202 : vector<1x24x16xf32>
    %c0_145 = arith.constant 0 : index
    %c0_146 = arith.constant 0 : index
    %c0_147 = arith.constant 0 : index
    %302 = vector.load %arg25[%c0_145, %c0_146, %c0_147] : memref<1x24x16xf32, #tpu.memory_space<vmem>>, vector<1x24x16xf32>
    tpu.vector_store %arg25[%c0_145, %c0_146, %c0_147], %301 {strides = array<i32>} : memref<1x24x16xf32, #tpu.memory_space<vmem>>, vector<1x24x16xf32>,
    return
  }
  func.func @transform_0(%arg0: i32) -> (i32, i32, i32) {
    %c0_i32 = arith.constant 0 : i32
    %c0_i32_0 = arith.constant 0 : i32
    %c0_i32_1 = arith.constant 0 : i32
    return %arg0, %c0_i32, %c0_i32_0 : i32, i32, i32
  }
  func.func @transform_1(%arg0: i32) -> (i32, i32, i32) {
    %c0_i32 = arith.constant 0 : i32
    %c0_i32_0 = arith.constant 0 : i32
    %c0_i32_1 = arith.constant 0 : i32
    return %arg0, %c0_i32, %c0_i32_0 : i32, i32, i32
  }
  func.func @transform_2(%arg0: i32) -> (i32, i32, i32) {
    %c0_i32 = arith.constant 0 : i32
    %c0_i32_0 = arith.constant 0 : i32
    %c0_i32_1 = arith.constant 0 : i32
    return %arg0, %c0_i32, %c0_i32_0 : i32, i32, i32
  }
  func.func @transform_3(%arg0: i32) -> (i32, i32, i32) {
    %c0_i32 = arith.constant 0 : i32
    %c0_i32_0 = arith.constant 0 : i32
    %c0_i32_1 = arith.constant 0 : i32
    %c0_i32_2 = arith.constant 0 : i32
    return %c0_i32, %c0_i32_0, %c0_i32_1 : i32, i32, i32
  }
  func.func @transform_4(%arg0: i32) -> (i32, i32, i32) {
    %c0_i32 = arith.constant 0 : i32
    %c0_i32_0 = arith.constant 0 : i32
    %c0_i32_1 = arith.constant 0 : i32
    %c0_i32_2 = arith.constant 0 : i32
    return %c0_i32, %c0_i32_0, %c0_i32_1 : i32, i32, i32
  }
  func.func @transform_5(%arg0: i32) -> (i32, i32, i32) {
    %c0_i32 = arith.constant 0 : i32
    %c0_i32_0 = arith.constant 0 : i32
    %c0_i32_1 = arith.constant 0 : i32
    %c0_i32_2 = arith.constant 0 : i32
    return %c0_i32, %c0_i32_0, %c0_i32_1 : i32, i32, i32
  }
  func.func @transform_6(%arg0: i32) -> (i32, i32, i32) {
    %c0_i32 = arith.constant 0 : i32
    %c0_i32_0 = arith.constant 0 : i32
    %c0_i32_1 = arith.constant 0 : i32
    %c0_i32_2 = arith.constant 0 : i32
    return %c0_i32, %c0_i32_0, %c0_i32_1 : i32, i32, i32
  }
  func.func @transform_7(%arg0: i32) -> (i32, i32, i32) {
    %c0_i32 = arith.constant 0 : i32
    %c0_i32_0 = arith.constant 0 : i32
    %c0_i32_1 = arith.constant 0 : i32
    %c0_i32_2 = arith.constant 0 : i32
    return %c0_i32, %c0_i32_0, %c0_i32_1 : i32, i32, i32
  }
  func.func @transform_8(%arg0: i32) -> (i32, i32, i32) {
    %c0_i32 = arith.constant 0 : i32
    %c0_i32_0 = arith.constant 0 : i32
    %c0_i32_1 = arith.constant 0 : i32
    %c0_i32_2 = arith.constant 0 : i32
    return %c0_i32, %c0_i32_0, %c0_i32_1 : i32, i32, i32
  }
  func.func @transform_9(%arg0: i32) -> (i32, i32, i32) {
    %c0_i32 = arith.constant 0 : i32
    %c0_i32_0 = arith.constant 0 : i32
    %c0_i32_1 = arith.constant 0 : i32
    %c0_i32_2 = arith.constant 0 : i32
    return %c0_i32, %c0_i32_0, %c0_i32_1 : i32, i32, i32
  }
  func.func @transform_10(%arg0: i32) -> (i32, i32) {
    %c0_i32 = arith.constant 0 : i32
    %c0_i32_0 = arith.constant 0 : i32
    %c0_i32_1 = arith.constant 0 : i32
    return %c0_i32, %c0_i32_0 : i32, i32
  }
  func.func @transform_11(%arg0: i32) -> (i32, i32) {
    %c0_i32 = arith.constant 0 : i32
    %c0_i32_0 = arith.constant 0 : i32
    %c0_i32_1 = arith.constant 0 : i32
    return %c0_i32, %c0_i32_0 : i32, i32
  }
  func.func @transform_12(%arg0: i32) -> (i32, i32) {
    %c0_i32 = arith.constant 0 : i32
    %c0_i32_0 = arith.constant 0 : i32
    %c0_i32_1 = arith.constant 0 : i32
    return %c0_i32, %c0_i32_0 : i32, i32
  }
  func.func @transform_13(%arg0: i32) -> (i32, i32) {
    %c0_i32 = arith.constant 0 : i32
    %c0_i32_0 = arith.constant 0 : i32
    %c0_i32_1 = arith.constant 0 : i32
    return %c0_i32, %c0_i32_0 : i32, i32
  }
  func.func @transform_14(%arg0: i32) -> (i32, i32) {
    %c0_i32 = arith.constant 0 : i32
    %c0_i32_0 = arith.constant 0 : i32
    %c0_i32_1 = arith.constant 0 : i32
    return %c0_i32, %c0_i32_0 : i32, i32
  }
  func.func @transform_15(%arg0: i32) -> (i32, i32) {
    %c0_i32 = arith.constant 0 : i32
    %c0_i32_0 = arith.constant 0 : i32
    %c0_i32_1 = arith.constant 0 : i32
    return %c0_i32, %c0_i32_0 : i32, i32
  }
  func.func @transform_16(%arg0: i32) -> (i32, i32) {
    %c0_i32 = arith.constant 0 : i32
    %c0_i32_0 = arith.constant 0 : i32
    %c0_i32_1 = arith.constant 0 : i32
    return %c0_i32, %c0_i32_0 : i32, i32
  }
  func.func @transform_17(%arg0: i32) -> (i32, i32) {
    %c0_i32 = arith.constant 0 : i32
    %c0_i32_0 = arith.constant 0 : i32
    %c0_i32_1 = arith.constant 0 : i32
    return %c0_i32, %c0_i32_0 : i32, i32
  }
  func.func @transform_18(%arg0: i32) -> (i32, i32) {
    %c0_i32 = arith.constant 0 : i32
    %c0_i32_0 = arith.constant 0 : i32
    %c0_i32_1 = arith.constant 0 : i32
    return %c0_i32, %c0_i32_0 : i32, i32
  }
  func.func @transform_19(%arg0: i32) -> (i32, i32) {
    %c0_i32 = arith.constant 0 : i32
    %c0_i32_0 = arith.constant 0 : i32
    %c0_i32_1 = arith.constant 0 : i32
    return %c0_i32, %c0_i32_0 : i32, i32
  }
  func.func @transform_20(%arg0: i32) -> (i32, i32) {
    %c0_i32 = arith.constant 0 : i32
    %c0_i32_0 = arith.constant 0 : i32
    %c0_i32_1 = arith.constant 0 : i32
    return %c0_i32, %c0_i32_0 : i32, i32
  }
  func.func @transform_21(%arg0: i32) -> (i32, i32, i32) {
    %c0_i32 = arith.constant 0 : i32
    %c0_i32_0 = arith.constant 0 : i32
    %c0_i32_1 = arith.constant 0 : i32
    %c0_i32_2 = arith.constant 0 : i32
    return %c0_i32, %c0_i32_0, %c0_i32_1 : i32, i32, i32
  }
  func.func @transform_22(%arg0: i32) -> (i32, i32, i32) {
    %c0_i32 = arith.constant 0 : i32
    %c0_i32_0 = arith.constant 0 : i32
    %c0_i32_1 = arith.constant 0 : i32
    %c0_i32_2 = arith.constant 0 : i32
    return %c0_i32, %c0_i32_0, %c0_i32_1 : i32, i32, i32
  }
  func.func @transform_23(%arg0: i32) -> (i32, i32, i32) {
    %c0_i32 = arith.constant 0 : i32
    %c0_i32_0 = arith.constant 0 : i32
    %c0_i32_1 = arith.constant 0 : i32
    return %arg0, %c0_i32, %c0_i32_0 : i32, i32, i32
  }
  func.func @transform_24(%arg0: i32) -> (i32, i32, i32) {
    %c0_i32 = arith.constant 0 : i32
    %c0_i32_0 = arith.constant 0 : i32
    %c0_i32_1 = arith.constant 0 : i32
    return %arg0, %c0_i32, %c0_i32_0 : i32, i32, i32
  }
}

</mosaic_0001>

<llo_original>
// kernel: custom-call.2
$region0: #{custom-call.2}
  %s0 = inlined_call_operand.vmem [shape: u32[2,8], index: 0, kind: output, shape index: {}]

// kernel: ne.4
$region0: #{ne.4}
  #allocation0 [shape = 's32[1]{0}', space=sflag, size = 0x4, scoped, tag = 'scoped memory for ne.4']
  %s0 = inlined_call_operand.vmem [shape: f32[2,8], index: 0, kind: input, shape index: {}, may-alias: {0,1}]
  %s1 = inlined_call_operand.vmem [shape: f32[2,8], index: 1, kind: input, shape index: {}, may-alias: {0,1}]
  %s2 = inlined_call_operand.vmem [shape: pred[2,8], index: 2, kind: output, shape index: {}]
  %v3 = vld [vmem:[%s0] sm:$0x3]
  %v4 = vld [vmem:[%s1] sm:$0x3]
  %5 = xla_tuple %v3, %v4
  %6 = xla_tuple %5
  %vm7 = vcmp.ne.f32.partialorder %v3, %v4
  %v8 = vsel %vm7, 1, 0
  %9 = xla_tuple %v8
  %v10 = vpack.c.b16 0, %v8
  %v11 = vpack.c.b8 0, %v10
  %13 = vst [vmem:[%s2] sm:$0x1] %v11

// kernel: squeeze.15
$region0: #{squeeze.15}
  %s0 = inlined_call_operand.vmem [shape: f32[16], index: 0, kind: input, shape index: {}]
  %s1 = inlined_call_operand.vmem [shape: f32[2,8], index: 1, kind: output, shape index: {}]
  $region1: #{squeeze.15} parent=0
    #allocation0 [shape = 'u8[4096]{0}', space=vmem, size = 0x1000, scoped, tag = 'scoped mem for output reshape']
    #allocation1 [shape = 'u8[4096]{0}', space=vmem, size = 0x1000, scoped, tag = 'scoped mem for input reshape']
    %s3 = sshllo.u32 0, 1
    %v4 = vld [vmem:[%s0] sm:%s3]
    %5 = vst [vmem:[#allocation1] sm:%s3] %v4
    %v6 = vld [vmem:[#allocation1] sm:$0x1]
    %vm7 = vcmask 64512
    %8 = vst.msk [vmem:[#allocation0] sm:$0x1] %vm7, %v6
    %v9 = vld [vmem:[#allocation1] sm:$0x1]
    %10 = vrot.lane.b32.xlu0 %v9, 120
    %v11 = vpop.permute.xlu0 %10
    %vm12 = vcmask 64512
    %s13 = scalar_lea.vmem [#allocation0], 1
    %14 = vst.msk [vmem:[%s13] sm:$0x1] %vm12, %v11
    %s16 = sshllo.u32 0, 2
    %v18 = vld [vmem:[#allocation0] sm:%s16]
    %s19 = sshllo.u32 0, 2
    %20 = vst [vmem:[%s1] sm:%s19] %v18

// kernel: vtts_forward.2
$region0: #{vtts_forward.2}
  #allocation0 [shape = 'u32[]', space=smem, size = 0x4, offset = 0x4, fixed_abs, tag = 'smem constant byte address 0x4 - core index']
  #allocation1 [shape = 'u32[144,128]{1,0:T(1,128)}', space=vmem, size = 0x12000, scoped, tag = 'internal scratch']
  %s0 = inlined_call_operand.smem [shape: u32[32], index: -1, kind: input, shape index: {}]
  %s1 = sld [smem:[%s0]]
  %s2 = scalar_lea.smem %s0, 1
  %s3 = sld [smem:[%s2]]
  %s4 = scalar_lea.smem %s0, 2
  %s5 = sld [smem:[%s4]]
  %s6 = scalar_lea.smem %s0, 3
  %s7 = sld [smem:[%s6]]
  %s8 = scalar_lea.smem %s0, 4
  %s9 = sld [smem:[%s8]]
  %s10 = scalar_lea.smem %s0, 5
  %s11 = sld [smem:[%s10]]
  %s12 = scalar_lea.smem %s0, 6
  %s13 = sld [smem:[%s12]]
  %s14 = scalar_lea.smem %s0, 7
  %s15 = sld [smem:[%s14]]
  %s16 = scalar_lea.smem %s0, 8
  %s17 = sld [smem:[%s16]]
  %s18 = scalar_lea.smem %s0, 9
  %s19 = sld [smem:[%s18]]
  %s20 = scalar_lea.smem %s0, 10
  %s21 = sld [smem:[%s20]]
  %s22 = scalar_lea.smem %s0, 11
  %s23 = sld [smem:[%s22]]
  %s24 = scalar_lea.smem %s0, 12
  %s25 = sld [smem:[%s24]]
  %s26 = scalar_lea.smem %s0, 13
  %s27 = sld [smem:[%s26]]
  %s28 = scalar_lea.smem %s0, 14
  %s29 = sld [smem:[%s28]]
  %s30 = scalar_lea.smem %s0, 15
  %s31 = sld [smem:[%s30]]
  %s32 = scalar_lea.smem %s0, 16
  %s33 = sld [smem:[%s32]]
  %s34 = scalar_lea.smem %s0, 17
  %s35 = sld [smem:[%s34]]
  %s36 = scalar_lea.smem %s0, 18
  %s37 = sld [smem:[%s36]]
  %s38 = scalar_lea.smem %s0, 19
  %s39 = sld [smem:[%s38]]
  %s40 = scalar_lea.smem %s0, 20
  %s41 = sld [smem:[%s40]]
  %s42 = scalar_lea.smem %s0, 21
  %s43 = sld [smem:[%s42]]
  %s44 = scalar_lea.smem %s0, 22
  %s45 = sld [smem:[%s44]]
  %s46 = scalar_lea.smem %s0, 23
  %s47 = sld [smem:[%s46]]
  %s48 = scalar_lea.smem %s0, 24
  %s49 = sld [smem:[%s48]]
  %s50 = scalar_lea.smem %s0, 25
  %s51 = sld [smem:[%s50]]
  %s52 = scalar_lea.smem %s0, 26
  %s53 = sld [smem:[%s52]]
  %s54 = scalar_lea.smem %s0, 27
  %s55 = sld [smem:[%s54]]
  %s56 = scalar_lea.smem %s0, 28
  %s57 = sld [smem:[%s56]]
  %s58 = scalar_lea.smem %s0, 29
  %s59 = sld [smem:[%s58]]
  %s60 = scalar_lea.smem %s0, 30
  %s61 = sld [smem:[%s60]]
  %s62 = scalar_lea.smem %s0, 31
  %s63 = sld [smem:[%s62]]
  %64 = xla_tuple %s61, %s63
  %s65 = sld [smem:[#allocation0]]
  $region161: #{vtts_forward.2} parent=0
    _
  %s67 = ssub.s32 1, %s65
  %s68 = scalar_select 0, %s67, %s65
  loop: start=0, step=1, limit=4
  $region2: #{vtts_forward.2} parent=0 // loop_pre_header
    _
  $region3: #{vtts_forward.2} parent=0 // loop_header
    %s70 = sphi 0, %s74
    %p71 = scmp.ge.s32.totalorder %s70, 4
    %s80 = sphi 0, %s82
    %s83 = sphi 0, %s80
    %s84 = sphi 0, %s83
    %s100 = sphi 0, %s84
    %s106 = sphi 0, %s108
    %s109 = sphi 0, %s106
    %s110 = sphi 0, %s109
    %s126 = sphi 0, %s110
    %s132 = sphi 0, %s134
    %s135 = sphi 0, %s132
    %s136 = sphi 0, %s135
    %s152 = sphi 0, %s136
    %s158 = sphi 0, %s160
    %s161 = sphi 0, %s158
    %s162 = sphi 0, %s161
    %s178 = sphi 0, %s162
    %s182 = sphi 0, %s182
    %s184 = sphi 0, %s182
    %s185 = sphi 0, %s184
    %s199 = sphi 0, %s185
    %s203 = sphi 0, %s203
    %s205 = sphi 0, %s203
    %s206 = sphi 0, %s205
    %s220 = sphi 0, %s206
    %s224 = sphi 0, %s224
    %s226 = sphi 0, %s224
    %s227 = sphi 0, %s226
    %s241 = sphi 0, %s227
    %s245 = sphi 0, %s245
    %s247 = sphi 0, %s245
    %s248 = sphi 0, %s247
    %s262 = sphi 0, %s248
    %s266 = sphi 0, %s266
    %s268 = sphi 0, %s266
    %s269 = sphi 0, %s268
    %s283 = sphi 0, %s269
    %s287 = sphi 0, %s287
    %s289 = sphi 0, %s287
    %s290 = sphi 0, %s289
    %s304 = sphi 0, %s290
    %s308 = sphi 0, %s308
    %s310 = sphi 0, %s308
    %s311 = sphi 0, %s310
    %s325 = sphi 0, %s311
    %s329 = sphi 0, %s329
    %s331 = sphi 0, %s329
    %s332 = sphi 0, %s331
    %s346 = sphi 0, %s332
    %s350 = sphi 0, %s350
    %s352 = sphi 0, %s350
    %s353 = sphi 0, %s352
    %s367 = sphi 0, %s353
    %s371 = sphi 0, %s371
    %s373 = sphi 0, %s371
    %s374 = sphi 0, %s373
    %s388 = sphi 0, %s374
    %s392 = sphi 0, %s392
    %s394 = sphi 0, %s392
    %s395 = sphi 0, %s394
    %s409 = sphi 0, %s395
    %s413 = sphi 0, %s413
    %s415 = sphi 0, %s413
    %s416 = sphi 0, %s415
    %s430 = sphi 0, %s416
    %s434 = sphi 0, %s434
    %s436 = sphi 0, %s434
    %s437 = sphi 0, %s436
    %s451 = sphi 0, %s437
    %s455 = sphi 0, %s455
    %s457 = sphi 0, %s455
    %s458 = sphi 0, %s457
    %s472 = sphi 0, %s458
    %s476 = sphi 0, %s476
    %s478 = sphi 0, %s476
    %s479 = sphi 0, %s478
    %s493 = sphi 0, %s479
    %s497 = sphi 0, %s497
    %s499 = sphi 0, %s497
    %s500 = sphi 0, %s499
    %s514 = sphi 0, %s500
    %s518 = sphi 0, %s518
    %s520 = sphi 0, %s518
    %s521 = sphi 0, %s520
    %s535 = sphi 0, %s521
    %s539 = sphi 0, %s539
    %s541 = sphi 0, %s539
    %s542 = sphi 0, %s541
    %s556 = sphi 0, %s542
    %s560 = sphi 0, %s560
    %s562 = sphi 0, %s560
    %s563 = sphi 0, %s562
    %s577 = sphi 0, %s563
    %s581 = sphi 0, %s581
    %s583 = sphi 0, %s581
    %s584 = sphi 0, %s583
    %s598 = sphi 0, %s584
    %s602 = sphi 0, %s602
    %s604 = sphi 0, %s602
    %s605 = sphi 0, %s604
    %s619 = sphi 0, %s605
    %s623 = sphi 0, %s623
    %s625 = sphi 0, %s623
    %s626 = sphi 0, %s625
    %s640 = sphi 0, %s626
    %s644 = sphi 0, %s644
    %s646 = sphi 0, %s644
    %s647 = sphi 0, %s646
    %s661 = sphi 0, %s647
    %s665 = sphi 0, %s665
    %s667 = sphi 0, %s665
    %s668 = sphi 0, %s667
    %s682 = sphi 0, %s668
    %s686 = sphi 0, %s686
    %s688 = sphi 0, %s686
    %s689 = sphi 0, %s688
    %s703 = sphi 0, %s689
    %s707 = sphi 0, %s707
    %s709 = sphi 0, %s707
    %s710 = sphi 0, %s709
    %s724 = sphi 0, %s710
    %s730 = sphi 0, %s732
    %s733 = sphi 0, %s730
    %s734 = sphi 0, %s733
    %s750 = sphi 0, %s734
    %s756 = sphi 0, %s758
    %s759 = sphi 0, %s756
    %s760 = sphi 0, %s759
    %s776 = sphi 0, %s760
  $region4: #{vtts_forward.2} parent=0 // loop_header_branch
    %73 = sbr.rel (%p71) target = $region8
  $region5: #{vtts_forward.2} parent=0 // loop_body
    %s75 = ssub.s32 %s70, 1
    %s76 = ssub.s32 %s70, 2
    %s77 = sadd.s32 %s70, 1
    %s78 = ssub.s32 %s70, %s77
    %p79 = scmp.eq.s32.totalorder %s78, 0
    %s81 = sadd.s32 %s80, 1
    %s82 = scalar_select %p79, %s80, %s81
    %p85 = pneg %p79
    %p86 = scmp.eq.s32.totalorder %s70, 1
    %p87 = por %p85, %p86
    %p88 = scmp.ne.s32.totalorder %s80, %s83
    %p89 = scmp.eq.s32.totalorder %s70, 0
    %p90 = por %p88, %p89
    %p91 = scmp.ne.s32.totalorder %s80, %s83
    %p92 = scmp.eq.s32.totalorder %s75, 1
    %p93 = por %p91, %p92
    %p94 = scmp.ne.s32.totalorder %s83, %s84
    %p95 = scmp.eq.s32.totalorder %s75, 0
    %p96 = por %p94, %p95
    %p97 = scmp.ne.s32.totalorder %s83, %s84
    %p98 = scmp.eq.s32.totalorder %s76, 1
    %p99 = por %p97, %p98
    %p101 = scmp.ne.s32.totalorder %s84, %s100
    %p102 = scmp.eq.s32.totalorder %s76, 0
    %p103 = por %p101, %p102
    %s104 = ssub.s32 %s70, %s77
    %p105 = scmp.eq.s32.totalorder %s104, 0
    %s107 = sadd.s32 %s106, 1
    %s108 = scalar_select %p105, %s106, %s107
    %p111 = pneg %p105
    %p112 = scmp.eq.s32.totalorder %s70, 1
    %p113 = por %p111, %p112
    %p114 = scmp.ne.s32.totalorder %s106, %s109
    %p115 = scmp.eq.s32.totalorder %s70, 0
    %p116 = por %p114, %p115
    %p117 = scmp.ne.s32.totalorder %s106, %s109
    %p118 = scmp.eq.s32.totalorder %s75, 1
    %p119 = por %p117, %p118
    %p120 = scmp.ne.s32.totalorder %s109, %s110
    %p121 = scmp.eq.s32.totalorder %s75, 0
    %p122 = por %p120, %p121
    %p123 = scmp.ne.s32.totalorder %s109, %s110
    %p124 = scmp.eq.s32.totalorder %s76, 1
    %p125 = por %p123, %p124
    %p127 = scmp.ne.s32.totalorder %s110, %s126
    %p128 = scmp.eq.s32.totalorder %s76, 0
    %p129 = por %p127, %p128
    %s130 = ssub.s32 %s70, %s77
    %p131 = scmp.eq.s32.totalorder %s130, 0
    %s133 = sadd.s32 %s132, 1
    %s134 = scalar_select %p131, %s132, %s133
    %p137 = pneg %p131
    %p138 = scmp.eq.s32.totalorder %s70, 1
    %p139 = por %p137, %p138
    %p140 = scmp.ne.s32.totalorder %s132, %s135
    %p141 = scmp.eq.s32.totalorder %s70, 0
    %p142 = por %p140, %p141
    %p143 = scmp.ne.s32.totalorder %s132, %s135
    %p144 = scmp.eq.s32.totalorder %s75, 1
    %p145 = por %p143, %p144
    %p146 = scmp.ne.s32.totalorder %s135, %s136
    %p147 = scmp.eq.s32.totalorder %s75, 0
    %p148 = por %p146, %p147
    %p149 = scmp.ne.s32.totalorder %s135, %s136
    %p150 = scmp.eq.s32.totalorder %s76, 1
    %p151 = por %p149, %p150
    %p153 = scmp.ne.s32.totalorder %s136, %s152
    %p154 = scmp.eq.s32.totalorder %s76, 0
    %p155 = por %p153, %p154
    %s156 = ssub.s32 %s70, %s77
    %p157 = scmp.eq.s32.totalorder %s156, 0
    %s159 = sadd.s32 %s158, 1
    %s160 = scalar_select %p157, %s158, %s159
    %p163 = pneg %p157
    %p164 = scmp.eq.s32.totalorder %s70, 1
    %p165 = por %p163, %p164
    %p166 = scmp.ne.s32.totalorder %s158, %s161
    %p167 = scmp.eq.s32.totalorder %s70, 0
    %p168 = por %p166, %p167
    %p169 = scmp.ne.s32.totalorder %s158, %s161
    %p170 = scmp.eq.s32.totalorder %s75, 1
    %p171 = por %p169, %p170
    %p172 = scmp.ne.s32.totalorder %s161, %s162
    %p173 = scmp.eq.s32.totalorder %s75, 0
    %p174 = por %p172, %p173
    %p175 = scmp.ne.s32.totalorder %s161, %s162
    %p176 = scmp.eq.s32.totalorder %s76, 1
    %p177 = por %p175, %p176
    %p179 = scmp.ne.s32.totalorder %s162, %s178
    %p180 = scmp.eq.s32.totalorder %s76, 0
    %p181 = por %p179, %p180
    %s183 = sadd.s32 %s182, 1
    %p186 = scmp.eq.s32.totalorder %s70, 1
    %p187 = scmp.ne.s32.totalorder %s182, %s184
    %p188 = scmp.eq.s32.totalorder %s70, 0
    %p189 = por %p187, %p188
    %p190 = scmp.ne.s32.totalorder %s182, %s184
    %p191 = scmp.eq.s32.totalorder %s75, 1
    %p192 = por %p190, %p191
    %p193 = scmp.ne.s32.totalorder %s184, %s185
    %p194 = scmp.eq.s32.totalorder %s75, 0
    %p195 = por %p193, %p194
    %p196 = scmp.ne.s32.totalorder %s184, %s185
    %p197 = scmp.eq.s32.totalorder %s76, 1
    %p198 = por %p196, %p197
    %p200 = scmp.ne.s32.totalorder %s185, %s199
    %p201 = scmp.eq.s32.totalorder %s76, 0
    %p202 = por %p200, %p201
    %s204 = sadd.s32 %s203, 1
    %p207 = scmp.eq.s32.totalorder %s70, 1
    %p208 = scmp.ne.s32.totalorder %s203, %s205
    %p209 = scmp.eq.s32.totalorder %s70, 0
    %p210 = por %p208, %p209
    %p211 = scmp.ne.s32.totalorder %s203, %s205
    %p212 = scmp.eq.s32.totalorder %s75, 1
    %p213 = por %p211, %p212
    %p214 = scmp.ne.s32.totalorder %s205, %s206
    %p215 = scmp.eq.s32.totalorder %s75, 0
    %p216 = por %p214, %p215
    %p217 = scmp.ne.s32.totalorder %s205, %s206
    %p218 = scmp.eq.s32.totalorder %s76, 1
    %p219 = por %p217, %p218
    %p221 = scmp.ne.s32.totalorder %s206, %s220
    %p222 = scmp.eq.s32.totalorder %s76, 0
    %p223 = por %p221, %p222
    %s225 = sadd.s32 %s224, 1
    %p228 = scmp.eq.s32.totalorder %s70, 1
    %p229 = scmp.ne.s32.totalorder %s224, %s226
    %p230 = scmp.eq.s32.totalorder %s70, 0
    %p231 = por %p229, %p230
    %p232 = scmp.ne.s32.totalorder %s224, %s226
    %p233 = scmp.eq.s32.totalorder %s75, 1
    %p234 = por %p232, %p233
    %p235 = scmp.ne.s32.totalorder %s226, %s227
    %p236 = scmp.eq.s32.totalorder %s75, 0
    %p237 = por %p235, %p236
    %p238 = scmp.ne.s32.totalorder %s226, %s227
    %p239 = scmp.eq.s32.totalorder %s76, 1
    %p240 = por %p238, %p239
    %p242 = scmp.ne.s32.totalorder %s227, %s241
    %p243 = scmp.eq.s32.totalorder %s76, 0
    %p244 = por %p242, %p243
    %s246 = sadd.s32 %s245, 1
    %p249 = scmp.eq.s32.totalorder %s70, 1
    %p250 = scmp.ne.s32.totalorder %s245, %s247
    %p251 = scmp.eq.s32.totalorder %s70, 0
    %p252 = por %p250, %p251
    %p253 = scmp.ne.s32.totalorder %s245, %s247
    %p254 = scmp.eq.s32.totalorder %s75, 1
    %p255 = por %p253, %p254
    %p256 = scmp.ne.s32.totalorder %s247, %s248
    %p257 = scmp.eq.s32.totalorder %s75, 0
    %p258 = por %p256, %p257
    %p259 = scmp.ne.s32.totalorder %s247, %s248
    %p260 = scmp.eq.s32.totalorder %s76, 1
    %p261 = por %p259, %p260
    %p263 = scmp.ne.s32.totalorder %s248, %s262
    %p264 = scmp.eq.s32.totalorder %s76, 0
    %p265 = por %p263, %p264
    %s267 = sadd.s32 %s266, 1
    %p270 = scmp.eq.s32.totalorder %s70, 1
    %p271 = scmp.ne.s32.totalorder %s266, %s268
    %p272 = scmp.eq.s32.totalorder %s70, 0
    %p273 = por %p271, %p272
    %p274 = scmp.ne.s32.totalorder %s266, %s268
    %p275 = scmp.eq.s32.totalorder %s75, 1
    %p276 = por %p274, %p275
    %p277 = scmp.ne.s32.totalorder %s268, %s269
    %p278 = scmp.eq.s32.totalorder %s75, 0
    %p279 = por %p277, %p278
    %p280 = scmp.ne.s32.totalorder %s268, %s269
    %p281 = scmp.eq.s32.totalorder %s76, 1
    %p282 = por %p280, %p281
    %p284 = scmp.ne.s32.totalorder %s269, %s283
    %p285 = scmp.eq.s32.totalorder %s76, 0
    %p286 = por %p284, %p285
    %s288 = sadd.s32 %s287, 1
    %p291 = scmp.eq.s32.totalorder %s70, 1
    %p292 = scmp.ne.s32.totalorder %s287, %s289
    %p293 = scmp.eq.s32.totalorder %s70, 0
    %p294 = por %p292, %p293
    %p295 = scmp.ne.s32.totalorder %s287, %s289
    %p296 = scmp.eq.s32.totalorder %s75, 1
    %p297 = por %p295, %p296
    %p298 = scmp.ne.s32.totalorder %s289, %s290
    %p299 = scmp.eq.s32.totalorder %s75, 0
    %p300 = por %p298, %p299
    %p301 = scmp.ne.s32.totalorder %s289, %s290
    %p302 = scmp.eq.s32.totalorder %s76, 1
    %p303 = por %p301, %p302
    %p305 = scmp.ne.s32.totalorder %s290, %s304
    %p306 = scmp.eq.s32.totalorder %s76, 0
    %p307 = por %p305, %p306
    %s309 = sadd.s32 %s308, 1
    %p312 = scmp.eq.s32.totalorder %s70, 1
    %p313 = scmp.ne.s32.totalorder %s308, %s310
    %p314 = scmp.eq.s32.totalorder %s70, 0
    %p315 = por %p313, %p314
    %p316 = scmp.ne.s32.totalorder %s308, %s310
    %p317 = scmp.eq.s32.totalorder %s75, 1
    %p318 = por %p316, %p317
    %p319 = scmp.ne.s32.totalorder %s310, %s311
    %p320 = scmp.eq.s32.totalorder %s75, 0
    %p321 = por %p319, %p320
    %p322 = scmp.ne.s32.totalorder %s310, %s311
    %p323 = scmp.eq.s32.totalorder %s76, 1
    %p324 = por %p322, %p323
    %p326 = scmp.ne.s32.totalorder %s311, %s325
    %p327 = scmp.eq.s32.totalorder %s76, 0
    %p328 = por %p326, %p327
    %s330 = sadd.s32 %s329, 1
    %p333 = scmp.eq.s32.totalorder %s70, 1
    %p334 = scmp.ne.s32.totalorder %s329, %s331
    %p335 = scmp.eq.s32.totalorder %s70, 0
    %p336 = por %p334, %p335
    %p337 = scmp.ne.s32.totalorder %s329, %s331
    %p338 = scmp.eq.s32.totalorder %s75, 1
    %p339 = por %p337, %p338
    %p340 = scmp.ne.s32.totalorder %s331, %s332
    %p341 = scmp.eq.s32.totalorder %s75, 0
    %p342 = por %p340, %p341
    %p343 = scmp.ne.s32.totalorder %s331, %s332
    %p344 = scmp.eq.s32.totalorder %s76, 1
    %p345 = por %p343, %p344
    %p347 = scmp.ne.s32.totalorder %s332, %s346
    %p348 = scmp.eq.s32.totalorder %s76, 0
    %p349 = por %p347, %p348
    %s351 = sadd.s32 %s350, 1
    %p354 = scmp.eq.s32.totalorder %s70, 1
    %p355 = scmp.ne.s32.totalorder %s350, %s352
    %p356 = scmp.eq.s32.totalorder %s70, 0
    %p357 = por %p355, %p356
    %p358 = scmp.ne.s32.totalorder %s350, %s352
    %p359 = scmp.eq.s32.totalorder %s75, 1
    %p360 = por %p358, %p359
    %p361 = scmp.ne.s32.totalorder %s352, %s353
    %p362 = scmp.eq.s32.totalorder %s75, 0
    %p363 = por %p361, %p362
    %p364 = scmp.ne.s32.totalorder %s352, %s353
    %p365 = scmp.eq.s32.totalorder %s76, 1
    %p366 = por %p364, %p365
    %p368 = scmp.ne.s32.totalorder %s353, %s367
    %p369 = scmp.eq.s32.totalorder %s76, 0
    %p370 = por %p368, %p369
    %s372 = sadd.s32 %s371, 1
    %p375 = scmp.eq.s32.totalorder %s70, 1
    %p376 = scmp.ne.s32.totalorder %s371, %s373
    %p377 = scmp.eq.s32.totalorder %s70, 0
    %p378 = por %p376, %p377
    %p379 = scmp.ne.s32.totalorder %s371, %s373
    %p380 = scmp.eq.s32.totalorder %s75, 1
    %p381 = por %p379, %p380
    %p382 = scmp.ne.s32.totalorder %s373, %s374
    %p383 = scmp.eq.s32.totalorder %s75, 0
    %p384 = por %p382, %p383
    %p385 = scmp.ne.s32.totalorder %s373, %s374
    %p386 = scmp.eq.s32.totalorder %s76, 1
    %p387 = por %p385, %p386
    %p389 = scmp.ne.s32.totalorder %s374, %s388
    %p390 = scmp.eq.s32.totalorder %s76, 0
    %p391 = por %p389, %p390
    %s393 = sadd.s32 %s392, 1
    %p396 = scmp.eq.s32.totalorder %s70, 1
    %p397 = scmp.ne.s32.totalorder %s392, %s394
    %p398 = scmp.eq.s32.totalorder %s70, 0
    %p399 = por %p397, %p398
    %p400 = scmp.ne.s32.totalorder %s392, %s394
    %p401 = scmp.eq.s32.totalorder %s75, 1
    %p402 = por %p400, %p401
    %p403 = scmp.ne.s32.totalorder %s394, %s395
    %p404 = scmp.eq.s32.totalorder %s75, 0
    %p405 = por %p403, %p404
    %p406 = scmp.ne.s32.totalorder %s394, %s395
    %p407 = scmp.eq.s32.totalorder %s76, 1
    %p408 = por %p406, %p407
    %p410 = scmp.ne.s32.totalorder %s395, %s409
    %p411 = scmp.eq.s32.totalorder %s76, 0
    %p412 = por %p410, %p411
    %s414 = sadd.s32 %s413, 1
    %p417 = scmp.eq.s32.totalorder %s70, 1
    %p418 = scmp.ne.s32.totalorder %s413, %s415
    %p419 = scmp.eq.s32.totalorder %s70, 0
    %p420 = por %p418, %p419
    %p421 = scmp.ne.s32.totalorder %s413, %s415
    %p422 = scmp.eq.s32.totalorder %s75, 1
    %p423 = por %p421, %p422
    %p424 = scmp.ne.s32.totalorder %s415, %s416
    %p425 = scmp.eq.s32.totalorder %s75, 0
    %p426 = por %p424, %p425
    %p427 = scmp.ne.s32.totalorder %s415, %s416
    %p428 = scmp.eq.s32.totalorder %s76, 1
    %p429 = por %p427, %p428
    %p431 = scmp.ne.s32.totalorder %s416, %s430
    %p432 = scmp.eq.s32.totalorder %s76, 0
    %p433 = por %p431, %p432
    %s435 = sadd.s32 %s434, 1
    %p438 = scmp.eq.s32.totalorder %s70, 1
    %p439 = scmp.ne.s32.totalorder %s434, %s436
    %p440 = scmp.eq.s32.totalorder %s70, 0
    %p441 = por %p439, %p440
    %p442 = scmp.ne.s32.totalorder %s434, %s436
    %p443 = scmp.eq.s32.totalorder %s75, 1
    %p444 = por %p442, %p443
    %p445 = scmp.ne.s32.totalorder %s436, %s437
    %p446 = scmp.eq.s32.totalorder %s75, 0
    %p447 = por %p445, %p446
    %p448 = scmp.ne.s32.totalorder %s436, %s437
    %p449 = scmp.eq.s32.totalorder %s76, 1
    %p450 = por %p448, %p449
    %p452 = scmp.ne.s32.totalorder %s437, %s451
    %p453 = scmp.eq.s32.totalorder %s76, 0
    %p454 = por %p452, %p453
    %s456 = sadd.s32 %s455, 1
    %p459 = scmp.eq.s32.totalorder %s70, 1
    %p460 = scmp.ne.s32.totalorder %s455, %s457
    %p461 = scmp.eq.s32.totalorder %s70, 0
    %p462 = por %p460, %p461
    %p463 = scmp.ne.s32.totalorder %s455, %s457
    %p464 = scmp.eq.s32.totalorder %s75, 1
    %p465 = por %p463, %p464
    %p466 = scmp.ne.s32.totalorder %s457, %s458
    %p467 = scmp.eq.s32.totalorder %s75, 0
    %p468 = por %p466, %p467
    %p469 = scmp.ne.s32.totalorder %s457, %s458
    %p470 = scmp.eq.s32.totalorder %s76, 1
    %p471 = por %p469, %p470
    %p473 = scmp.ne.s32.totalorder %s458, %s472
    %p474 = scmp.eq.s32.totalorder %s76, 0
    %p475 = por %p473, %p474
    %s477 = sadd.s32 %s476, 1
    %p480 = scmp.eq.s32.totalorder %s70, 1
    %p481 = scmp.ne.s32.totalorder %s476, %s478
    %p482 = scmp.eq.s32.totalorder %s70, 0
    %p483 = por %p481, %p482
    %p484 = scmp.ne.s32.totalorder %s476, %s478
    %p485 = scmp.eq.s32.totalorder %s75, 1
    %p486 = por %p484, %p485
    %p487 = scmp.ne.s32.totalorder %s478, %s479
    %p488 = scmp.eq.s32.totalorder %s75, 0
    %p489 = por %p487, %p488
    %p490 = scmp.ne.s32.totalorder %s478, %s479
    %p491 = scmp.eq.s32.totalorder %s76, 1
    %p492 = por %p490, %p491
    %p494 = scmp.ne.s32.totalorder %s479, %s493
    %p495 = scmp.eq.s32.totalorder %s76, 0
    %p496 = por %p494, %p495
    %s498 = sadd.s32 %s497, 1
    %p501 = scmp.eq.s32.totalorder %s70, 1
    %p502 = scmp.ne.s32.totalorder %s497, %s499
    %p503 = scmp.eq.s32.totalorder %s70, 0
    %p504 = por %p502, %p503
    %p505 = scmp.ne.s32.totalorder %s497, %s499
    %p506 = scmp.eq.s32.totalorder %s75, 1
    %p507 = por %p505, %p506
    %p508 = scmp.ne.s32.totalorder %s499, %s500
    %p509 = scmp.eq.s32.totalorder %s75, 0
    %p510 = por %p508, %p509
    %p511 = scmp.ne.s32.totalorder %s499, %s500
    %p512 = scmp.eq.s32.totalorder %s76, 1
    %p513 = por %p511, %p512
    %p515 = scmp.ne.s32.totalorder %s500, %s514
    %p516 = scmp.eq.s32.totalorder %s76, 0
    %p517 = por %p515, %p516
    %s519 = sadd.s32 %s518, 1
    %p522 = scmp.eq.s32.totalorder %s70, 1
    %p523 = scmp.ne.s32.totalorder %s518, %s520
    %p524 = scmp.eq.s32.totalorder %s70, 0
    %p525 = por %p523, %p524
    %p526 = scmp.ne.s32.totalorder %s518, %s520
    %p527 = scmp.eq.s32.totalorder %s75, 1
    %p528 = por %p526, %p527
    %p529 = scmp.ne.s32.totalorder %s520, %s521
    %p530 = scmp.eq.s32.totalorder %s75, 0
    %p531 = por %p529, %p530
    %p532 = scmp.ne.s32.totalorder %s520, %s521
    %p533 = scmp.eq.s32.totalorder %s76, 1
    %p534 = por %p532, %p533
    %p536 = scmp.ne.s32.totalorder %s521, %s535
    %p537 = scmp.eq.s32.totalorder %s76, 0
    %p538 = por %p536, %p537
    %s540 = sadd.s32 %s539, 1
    %p543 = scmp.eq.s32.totalorder %s70, 1
    %p544 = scmp.ne.s32.totalorder %s539, %s541
    %p545 = scmp.eq.s32.totalorder %s70, 0
    %p546 = por %p544, %p545
    %p547 = scmp.ne.s32.totalorder %s539, %s541
    %p548 = scmp.eq.s32.totalorder %s75, 1
    %p549 = por %p547, %p548
    %p550 = scmp.ne.s32.totalorder %s541, %s542
    %p551 = scmp.eq.s32.totalorder %s75, 0
    %p552 = por %p550, %p551
    %p553 = scmp.ne.s32.totalorder %s541, %s542
    %p554 = scmp.eq.s32.totalorder %s76, 1
    %p555 = por %p553, %p554
    %p557 = scmp.ne.s32.totalorder %s542, %s556
    %p558 = scmp.eq.s32.totalorder %s76, 0
    %p559 = por %p557, %p558
    %s561 = sadd.s32 %s560, 1
    %p564 = scmp.eq.s32.totalorder %s70, 1
    %p565 = scmp.ne.s32.totalorder %s560, %s562
    %p566 = scmp.eq.s32.totalorder %s70, 0
    %p567 = por %p565, %p566
    %p568 = scmp.ne.s32.totalorder %s560, %s562
    %p569 = scmp.eq.s32.totalorder %s75, 1
    %p570 = por %p568, %p569
    %p571 = scmp.ne.s32.totalorder %s562, %s563
    %p572 = scmp.eq.s32.totalorder %s75, 0
    %p573 = por %p571, %p572
    %p574 = scmp.ne.s32.totalorder %s562, %s563
    %p575 = scmp.eq.s32.totalorder %s76, 1
    %p576 = por %p574, %p575
    %p578 = scmp.ne.s32.totalorder %s563, %s577
    %p579 = scmp.eq.s32.totalorder %s76, 0
    %p580 = por %p578, %p579
    %s582 = sadd.s32 %s581, 1
    %p585 = scmp.eq.s32.totalorder %s70, 1
    %p586 = scmp.ne.s32.totalorder %s581, %s583
    %p587 = scmp.eq.s32.totalorder %s70, 0
    %p588 = por %p586, %p587
    %p589 = scmp.ne.s32.totalorder %s581, %s583
    %p590 = scmp.eq.s32.totalorder %s75, 1
    %p591 = por %p589, %p590
    %p592 = scmp.ne.s32.totalorder %s583, %s584
    %p593 = scmp.eq.s32.totalorder %s75, 0
    %p594 = por %p592, %p593
    %p595 = scmp.ne.s32.totalorder %s583, %s584
    %p596 = scmp.eq.s32.totalorder %s76, 1
    %p597 = por %p595, %p596
    %p599 = scmp.ne.s32.totalorder %s584, %s598
    %p600 = scmp.eq.s32.totalorder %s76, 0
    %p601 = por %p599, %p600
    %s603 = sadd.s32 %s602, 1
    %p606 = scmp.eq.s32.totalorder %s70, 1
    %p607 = scmp.ne.s32.totalorder %s602, %s604
    %p608 = scmp.eq.s32.totalorder %s70, 0
    %p609 = por %p607, %p608
    %p610 = scmp.ne.s32.totalorder %s602, %s604
    %p611 = scmp.eq.s32.totalorder %s75, 1
    %p612 = por %p610, %p611
    %p613 = scmp.ne.s32.totalorder %s604, %s605
    %p614 = scmp.eq.s32.totalorder %s75, 0
    %p615 = por %p613, %p614
    %p616 = scmp.ne.s32.totalorder %s604, %s605
    %p617 = scmp.eq.s32.totalorder %s76, 1
    %p618 = por %p616, %p617
    %p620 = scmp.ne.s32.totalorder %s605, %s619
    %p621 = scmp.eq.s32.totalorder %s76, 0
    %p622 = por %p620, %p621
    %s624 = sadd.s32 %s623, 1
    %p627 = scmp.eq.s32.totalorder %s70, 1
    %p628 = scmp.ne.s32.totalorder %s623, %s625
    %p629 = scmp.eq.s32.totalorder %s70, 0
    %p630 = por %p628, %p629
    %p631 = scmp.ne.s32.totalorder %s623, %s625
    %p632 = scmp.eq.s32.totalorder %s75, 1
    %p633 = por %p631, %p632
    %p634 = scmp.ne.s32.totalorder %s625, %s626
    %p635 = scmp.eq.s32.totalorder %s75, 0
    %p636 = por %p634, %p635
    %p637 = scmp.ne.s32.totalorder %s625, %s626
    %p638 = scmp.eq.s32.totalorder %s76, 1
    %p639 = por %p637, %p638
    %p641 = scmp.ne.s32.totalorder %s626, %s640
    %p642 = scmp.eq.s32.totalorder %s76, 0
    %p643 = por %p641, %p642
    %s645 = sadd.s32 %s644, 1
    %p648 = scmp.eq.s32.totalorder %s70, 1
    %p649 = scmp.ne.s32.totalorder %s644, %s646
    %p650 = scmp.eq.s32.totalorder %s70, 0
    %p651 = por %p649, %p650
    %p652 = scmp.ne.s32.totalorder %s644, %s646
    %p653 = scmp.eq.s32.totalorder %s75, 1
    %p654 = por %p652, %p653
    %p655 = scmp.ne.s32.totalorder %s646, %s647
    %p656 = scmp.eq.s32.totalorder %s75, 0
    %p657 = por %p655, %p656
    %p658 = scmp.ne.s32.totalorder %s646, %s647
    %p659 = scmp.eq.s32.totalorder %s76, 1
    %p660 = por %p658, %p659
    %p662 = scmp.ne.s32.totalorder %s647, %s661
    %p663 = scmp.eq.s32.totalorder %s76, 0
    %p664 = por %p662, %p663
    %s666 = sadd.s32 %s665, 1
    %p669 = scmp.eq.s32.totalorder %s70, 1
    %p670 = scmp.ne.s32.totalorder %s665, %s667
    %p671 = scmp.eq.s32.totalorder %s70, 0
    %p672 = por %p670, %p671
    %p673 = scmp.ne.s32.totalorder %s665, %s667
    %p674 = scmp.eq.s32.totalorder %s75, 1
    %p675 = por %p673, %p674
    %p676 = scmp.ne.s32.totalorder %s667, %s668
    %p677 = scmp.eq.s32.totalorder %s75, 0
    %p678 = por %p676, %p677
    %p679 = scmp.ne.s32.totalorder %s667, %s668
    %p680 = scmp.eq.s32.totalorder %s76, 1
    %p681 = por %p679, %p680
    %p683 = scmp.ne.s32.totalorder %s668, %s682
    %p684 = scmp.eq.s32.totalorder %s76, 0
    %p685 = por %p683, %p684
    %s687 = sadd.s32 %s686, 1
    %p690 = scmp.eq.s32.totalorder %s70, 1
    %p691 = scmp.ne.s32.totalorder %s686, %s688
    %p692 = scmp.eq.s32.totalorder %s70, 0
    %p693 = por %p691, %p692
    %p694 = scmp.ne.s32.totalorder %s686, %s688
    %p695 = scmp.eq.s32.totalorder %s75, 1
    %p696 = por %p694, %p695
    %p697 = scmp.ne.s32.totalorder %s688, %s689
    %p698 = scmp.eq.s32.totalorder %s75, 0
    %p699 = por %p697, %p698
    %p700 = scmp.ne.s32.totalorder %s688, %s689
    %p701 = scmp.eq.s32.totalorder %s76, 1
    %p702 = por %p700, %p701
    %p704 = scmp.ne.s32.totalorder %s689, %s703
    %p705 = scmp.eq.s32.totalorder %s76, 0
    %p706 = por %p704, %p705
    %s708 = sadd.s32 %s707, 1
    %p711 = scmp.eq.s32.totalorder %s70, 1
    %p712 = scmp.ne.s32.totalorder %s707, %s709
    %p713 = scmp.eq.s32.totalorder %s70, 0
    %p714 = por %p712, %p713
    %p715 = scmp.ne.s32.totalorder %s707, %s709
    %p716 = scmp.eq.s32.totalorder %s75, 1
    %p717 = por %p715, %p716
    %p718 = scmp.ne.s32.totalorder %s709, %s710
    %p719 = scmp.eq.s32.totalorder %s75, 0
    %p720 = por %p718, %p719
    %p721 = scmp.ne.s32.totalorder %s709, %s710
    %p722 = scmp.eq.s32.totalorder %s76, 1
    %p723 = por %p721, %p722
    %p725 = scmp.ne.s32.totalorder %s710, %s724
    %p726 = scmp.eq.s32.totalorder %s76, 0
    %p727 = por %p725, %p726
    %s728 = ssub.s32 %s70, %s77
    %p729 = scmp.eq.s32.totalorder %s728, 0
    %s731 = sadd.s32 %s730, 1
    %s732 = scalar_select %p729, %s730, %s731
    %p735 = pneg %p729
    %p736 = scmp.eq.s32.totalorder %s70, 1
    %p737 = por %p735, %p736
    %p738 = scmp.ne.s32.totalorder %s730, %s733
    %p739 = scmp.eq.s32.totalorder %s70, 0
    %p740 = por %p738, %p739
    %p741 = scmp.ne.s32.totalorder %s730, %s733
    %p742 = scmp.eq.s32.totalorder %s75, 1
    %p743 = por %p741, %p742
    %p744 = scmp.ne.s32.totalorder %s733, %s734
    %p745 = scmp.eq.s32.totalorder %s75, 0
    %p746 = por %p744, %p745
    %p747 = scmp.ne.s32.totalorder %s733, %s734
    %p748 = scmp.eq.s32.totalorder %s76, 1
    %p749 = por %p747, %p748
    %p751 = scmp.ne.s32.totalorder %s734, %s750
    %p752 = scmp.eq.s32.totalorder %s76, 0
    %p753 = por %p751, %p752
    %s754 = ssub.s32 %s70, %s77
    %p755 = scmp.eq.s32.totalorder %s754, 0
    %s757 = sadd.s32 %s756, 1
    %s758 = scalar_select %p755, %s756, %s757
    %p761 = pneg %p755
    %p762 = scmp.eq.s32.totalorder %s70, 1
    %p763 = por %p761, %p762
    %p764 = scmp.ne.s32.totalorder %s756, %s759
    %p765 = scmp.eq.s32.totalorder %s70, 0
    %p766 = por %p764, %p765
    %p767 = scmp.ne.s32.totalorder %s756, %s759
    %p768 = scmp.eq.s32.totalorder %s75, 1
    %p769 = por %p767, %p768
    %p770 = scmp.ne.s32.totalorder %s759, %s760
    %p771 = scmp.eq.s32.totalorder %s75, 0
    %p772 = por %p770, %p771
    %p773 = scmp.ne.s32.totalorder %s759, %s760
    %p774 = scmp.eq.s32.totalorder %s76, 1
    %p775 = por %p773, %p774
    %p777 = scmp.ne.s32.totalorder %s760, %s776
    %p778 = scmp.eq.s32.totalorder %s76, 0
    %p779 = por %p777, %p778
    %p780 = scmp.le.s32.totalorder 1, %s70
    %p781 = scmp.lt.s32.totalorder %s70, 3
    %p782 = pnand %p780, %p781
    %p783 = pneg %p782
    // Predicated region
    $region9: #{vtts_forward.2} parent=5 // pred_check
      _
    $region10: #{vtts_forward.2} parent=5 // pred_check_branch
      %785 = sbr.rel (%p782) target = $region12
    $region11: #{vtts_forward.2} parent=5 // pred_region
      %s786 = ssub.s32 %s70, 1
      // Predicated region
      $region13: #{vtts_forward.2} parent=11 // pred_check
        %p787 = pneg %p195
      $region14: #{vtts_forward.2} parent=11 // pred_check_branch
        %789 = sbr.rel (%p787) target = $region16
      $region15: #{vtts_forward.2} parent=11 // pred_region
        _
      $region16: #{vtts_forward.2} parent=11 // pred_fallthru
        _
      // Predicated region
      $region17: #{vtts_forward.2} parent=11 // pred_check
        %p790 = pneg %p216
      $region18: #{vtts_forward.2} parent=11 // pred_check_branch
        %792 = sbr.rel (%p790) target = $region20
      $region19: #{vtts_forward.2} parent=11 // pred_region
        _
      $region20: #{vtts_forward.2} parent=11 // pred_fallthru
        _
      // Predicated region
      $region21: #{vtts_forward.2} parent=11 // pred_check
        %p793 = pneg %p237
      $region22: #{vtts_forward.2} parent=11 // pred_check_branch
        %795 = sbr.rel (%p793) target = $region24
      $region23: #{vtts_forward.2} parent=11 // pred_region
        _
      $region24: #{vtts_forward.2} parent=11 // pred_fallthru
        _
      // Predicated region
      $region25: #{vtts_forward.2} parent=11 // pred_check
        %p796 = pneg %p258
      $region26: #{vtts_forward.2} parent=11 // pred_check_branch
        %798 = sbr.rel (%p796) target = $region28
      $region27: #{vtts_forward.2} parent=11 // pred_region
        _
      $region28: #{vtts_forward.2} parent=11 // pred_fallthru
        _
      // Predicated region
      $region29: #{vtts_forward.2} parent=11 // pred_check
        %p799 = pneg %p279
      $region30: #{vtts_forward.2} parent=11 // pred_check_branch
        %801 = sbr.rel (%p799) target = $region32
      $region31: #{vtts_forward.2} parent=11 // pred_region
        _
      $region32: #{vtts_forward.2} parent=11 // pred_fallthru
        _
      // Predicated region
      $region33: #{vtts_forward.2} parent=11 // pred_check
        %p802 = pneg %p300
      $region34: #{vtts_forward.2} parent=11 // pred_check_branch
        %804 = sbr.rel (%p802) target = $region36
      $region35: #{vtts_forward.2} parent=11 // pred_region
        _
      $region36: #{vtts_forward.2} parent=11 // pred_fallthru
        _
      // Predicated region
      $region37: #{vtts_forward.2} parent=11 // pred_check
        %p805 = pneg %p321
      $region38: #{vtts_forward.2} parent=11 // pred_check_branch
        %807 = sbr.rel (%p805) target = $region40
      $region39: #{vtts_forward.2} parent=11 // pred_region
        _
      $region40: #{vtts_forward.2} parent=11 // pred_fallthru
        _
      // Predicated region
      $region41: #{vtts_forward.2} parent=11 // pred_check
        %p808 = pneg %p342
      $region42: #{vtts_forward.2} parent=11 // pred_check_branch
        %810 = sbr.rel (%p808) target = $region44
      $region43: #{vtts_forward.2} parent=11 // pred_region
        _
      $region44: #{vtts_forward.2} parent=11 // pred_fallthru
        _
      // Predicated region
      $region45: #{vtts_forward.2} parent=11 // pred_check
        %p811 = pneg %p363
      $region46: #{vtts_forward.2} parent=11 // pred_check_branch
        %813 = sbr.rel (%p811) target = $region48
      $region47: #{vtts_forward.2} parent=11 // pred_region
        _
      $region48: #{vtts_forward.2} parent=11 // pred_fallthru
        _
      // Predicated region
      $region49: #{vtts_forward.2} parent=11 // pred_check
        %p814 = pneg %p384
      $region50: #{vtts_forward.2} parent=11 // pred_check_branch
        %816 = sbr.rel (%p814) target = $region52
      $region51: #{vtts_forward.2} parent=11 // pred_region
        _
      $region52: #{vtts_forward.2} parent=11 // pred_fallthru
        _
      // Predicated region
      $region53: #{vtts_forward.2} parent=11 // pred_check
        %p817 = pneg %p405
      $region54: #{vtts_forward.2} parent=11 // pred_check_branch
        %819 = sbr.rel (%p817) target = $region56
      $region55: #{vtts_forward.2} parent=11 // pred_region
        _
      $region56: #{vtts_forward.2} parent=11 // pred_fallthru
        _
      // Predicated region
      $region57: #{vtts_forward.2} parent=11 // pred_check
        %p820 = pneg %p426
      $region58: #{vtts_forward.2} parent=11 // pred_check_branch
        %822 = sbr.rel (%p820) target = $region60
      $region59: #{vtts_forward.2} parent=11 // pred_region
        _
      $region60: #{vtts_forward.2} parent=11 // pred_fallthru
        _
      // Predicated region
      $region61: #{vtts_forward.2} parent=11 // pred_check
        %p823 = pneg %p447
      $region62: #{vtts_forward.2} parent=11 // pred_check_branch
        %825 = sbr.rel (%p823) target = $region64
      $region63: #{vtts_forward.2} parent=11 // pred_region
        _
      $region64: #{vtts_forward.2} parent=11 // pred_fallthru
        _
      // Predicated region
      $region65: #{vtts_forward.2} parent=11 // pred_check
        %p826 = pneg %p468
      $region66: #{vtts_forward.2} parent=11 // pred_check_branch
        %828 = sbr.rel (%p826) target = $region68
      $region67: #{vtts_forward.2} parent=11 // pred_region
        _
      $region68: #{vtts_forward.2} parent=11 // pred_fallthru
        _
      // Predicated region
      $region69: #{vtts_forward.2} parent=11 // pred_check
        %p829 = pneg %p489
      $region70: #{vtts_forward.2} parent=11 // pred_check_branch
        %831 = sbr.rel (%p829) target = $region72
      $region71: #{vtts_forward.2} parent=11 // pred_region
        _
      $region72: #{vtts_forward.2} parent=11 // pred_fallthru
        _
      // Predicated region
      $region73: #{vtts_forward.2} parent=11 // pred_check
        %p832 = pneg %p510
      $region74: #{vtts_forward.2} parent=11 // pred_check_branch
        %834 = sbr.rel (%p832) target = $region76
      $region75: #{vtts_forward.2} parent=11 // pred_region
        _
      $region76: #{vtts_forward.2} parent=11 // pred_fallthru
        _
      // Predicated region
      $region77: #{vtts_forward.2} parent=11 // pred_check
        %p835 = pneg %p531
      $region78: #{vtts_forward.2} parent=11 // pred_check_branch
        %837 = sbr.rel (%p835) target = $region80
      $region79: #{vtts_forward.2} parent=11 // pred_region
        _
      $region80: #{vtts_forward.2} parent=11 // pred_fallthru
        _
      // Predicated region
      $region81: #{vtts_forward.2} parent=11 // pred_check
        %p838 = pneg %p552
      $region82: #{vtts_forward.2} parent=11 // pred_check_branch
        %840 = sbr.rel (%p838) target = $region84
      $region83: #{vtts_forward.2} parent=11 // pred_region
        _
      $region84: #{vtts_forward.2} parent=11 // pred_fallthru
        _
      // Predicated region
      $region85: #{vtts_forward.2} parent=11 // pred_check
        %p841 = pneg %p573
      $region86: #{vtts_forward.2} parent=11 // pred_check_branch
        %843 = sbr.rel (%p841) target = $region88
      $region87: #{vtts_forward.2} parent=11 // pred_region
        _
      $region88: #{vtts_forward.2} parent=11 // pred_fallthru
        _
      // Predicated region
      $region89: #{vtts_forward.2} parent=11 // pred_check
        %p844 = pneg %p594
      $region90: #{vtts_forward.2} parent=11 // pred_check_branch
        %846 = sbr.rel (%p844) target = $region92
      $region91: #{vtts_forward.2} parent=11 // pred_region
        _
      $region92: #{vtts_forward.2} parent=11 // pred_fallthru
        _
      // Predicated region
      $region93: #{vtts_forward.2} parent=11 // pred_check
        %p847 = pneg %p615
      $region94: #{vtts_forward.2} parent=11 // pred_check_branch
        %849 = sbr.rel (%p847) target = $region96
      $region95: #{vtts_forward.2} parent=11 // pred_region
        _
      $region96: #{vtts_forward.2} parent=11 // pred_fallthru
        _
      // Predicated region
      $region97: #{vtts_forward.2} parent=11 // pred_check
        %p850 = pneg %p636
      $region98: #{vtts_forward.2} parent=11 // pred_check_branch
        %852 = sbr.rel (%p850) target = $region100
      $region99: #{vtts_forward.2} parent=11 // pred_region
        _
      $region100: #{vtts_forward.2} parent=11 // pred_fallthru
        _
      // Predicated region
      $region101: #{vtts_forward.2} parent=11 // pred_check
        %p853 = pneg %p657
      $region102: #{vtts_forward.2} parent=11 // pred_check_branch
        %855 = sbr.rel (%p853) target = $region104
      $region103: #{vtts_forward.2} parent=11 // pred_region
        _
      $region104: #{vtts_forward.2} parent=11 // pred_fallthru
        _
      // Predicated region
      $region105: #{vtts_forward.2} parent=11 // pred_check
        %p856 = pneg %p678
      $region106: #{vtts_forward.2} parent=11 // pred_check_branch
        %858 = sbr.rel (%p856) target = $region108
      $region107: #{vtts_forward.2} parent=11 // pred_region
        _
      $region108: #{vtts_forward.2} parent=11 // pred_fallthru
        _
      // Predicated region
      $region109: #{vtts_forward.2} parent=11 // pred_check
        %p859 = pneg %p699
      $region110: #{vtts_forward.2} parent=11 // pred_check_branch
        %861 = sbr.rel (%p859) target = $region112
      $region111: #{vtts_forward.2} parent=11 // pred_region
        _
      $region112: #{vtts_forward.2} parent=11 // pred_fallthru
        _
      // Predicated region
      $region113: #{vtts_forward.2} parent=11 // pred_check
        %p862 = pneg %p720
      $region114: #{vtts_forward.2} parent=11 // pred_check_branch
        %864 = sbr.rel (%p862) target = $region116
      $region115: #{vtts_forward.2} parent=11 // pred_region
        _
      $region116: #{vtts_forward.2} parent=11 // pred_fallthru
        _
    $region12: #{vtts_forward.2} parent=5 // pred_fallthru
      _
    %p865 = scmp.lt.s32.totalorder %s70, 2
    // Predicated region
    $region117: #{vtts_forward.2} parent=5 // pred_check
      %p866 = pneg %p865
    $region118: #{vtts_forward.2} parent=5 // pred_check_branch
      %868 = sbr.rel (%p866) target = $region120
    $region119: #{vtts_forward.2} parent=5 // pred_region
      // Predicated region
      $region121: #{vtts_forward.2} parent=119 // pred_check
        %p869 = pneg %p90
      $region122: #{vtts_forward.2} parent=119 // pred_check_branch
        %871 = sbr.rel (%p869) target = $region124
      $region123: #{vtts_forward.2} parent=119 // pred_region
        %p872 = scmp.lt.s32.totalorder %s70, 1
        %s873 = scalar_select %p872, %s70, 1
        %s874 = smul.addr %s873, 8
        %s875 = scalar_lea.vmem %s1, %s874
      $region124: #{vtts_forward.2} parent=119 // pred_fallthru
        _
      // Predicated region
      $region125: #{vtts_forward.2} parent=119 // pred_check
        %p876 = pneg %p116
      $region126: #{vtts_forward.2} parent=119 // pred_check_branch
        %878 = sbr.rel (%p876) target = $region128
      $region127: #{vtts_forward.2} parent=119 // pred_region
        %p879 = scmp.lt.s32.totalorder %s70, 1
        %s880 = scalar_select %p879, %s70, 1
        %s881 = smul.addr %s880, 8
        %s882 = scalar_lea.vmem %s3, %s881
      $region128: #{vtts_forward.2} parent=119 // pred_fallthru
        _
      // Predicated region
      $region129: #{vtts_forward.2} parent=119 // pred_check
        %p883 = pneg %p142
      $region130: #{vtts_forward.2} parent=119 // pred_check_branch
        %885 = sbr.rel (%p883) target = $region132
      $region131: #{vtts_forward.2} parent=119 // pred_region
        %p886 = scmp.lt.s32.totalorder %s70, 1
        %s887 = scalar_select %p886, %s70, 1
        %s888 = scalar_lea.vmem %s5, %s887
      $region132: #{vtts_forward.2} parent=119 // pred_fallthru
        _
      // Predicated region
      $region133: #{vtts_forward.2} parent=119 // pred_check
        %p889 = pneg %p168
      $region134: #{vtts_forward.2} parent=119 // pred_check_branch
        %891 = sbr.rel (%p889) target = $region136
      $region135: #{vtts_forward.2} parent=119 // pred_region
        %p892 = scmp.lt.s32.totalorder %s70, 1
        %s893 = scalar_select %p892, %s70, 1
        %s894 = scalar_lea.vmem %s7, %s893
      $region136: #{vtts_forward.2} parent=119 // pred_fallthru
        _
    $region120: #{vtts_forward.2} parent=5 // pred_fallthru
      _
    %p895 = scmp.le.s32.totalorder 1, %s70
    %p896 = scmp.lt.s32.totalorder %s70, 3
    %p897 = pnand %p895, %p896
    %p898 = pneg %p897
    // Predicated region
    $region137: #{vtts_forward.2} parent=5 // pred_check
      _
    $region138: #{vtts_forward.2} parent=5 // pred_check_branch
      %900 = sbr.rel (%p897) target = $region140
    $region139: #{vtts_forward.2} parent=5 // pred_region
      %s901 = ssub.s32 %s70, 1
      %p902 = scmp.lt.s32.totalorder %s75, 1
      %s903 = scalar_select %p902, %s75, 1
      %s904 = smul.addr %s903, 8
      %s905 = scalar_lea.vmem %s1, %s904
      %p906 = pneg %p96
      %p907 = pneg %p93
      %p908 = scmp.lt.s32.totalorder %s75, 1
      %s909 = scalar_select %p908, %s75, 1
      %s910 = smul.addr %s909, 8
      %s911 = scalar_lea.vmem %s3, %s910
      %p912 = pneg %p122
      %p913 = pneg %p119
      %p914 = scmp.lt.s32.totalorder %s75, 1
      %s915 = scalar_select %p914, %s75, 1
      %s916 = scalar_lea.vmem %s5, %s915
      %p917 = pneg %p148
      %p918 = pneg %p145
      %p919 = scmp.lt.s32.totalorder %s75, 1
      %s920 = scalar_select %p919, %s75, 1
      %s921 = scalar_lea.vmem %s7, %s920
      %p922 = pneg %p174
      %p923 = pneg %p171
      %p924 = pneg %p195
      %p925 = pneg %p192
      %p926 = pneg %p216
      %p927 = pneg %p213
      %p928 = pneg %p237
      %p929 = pneg %p234
      %p930 = pneg %p258
      %p931 = pneg %p255
      %p932 = pneg %p279
      %p933 = pneg %p276
      %p934 = pneg %p300
      %p935 = pneg %p297
      %p936 = pneg %p321
      %p937 = pneg %p318
      %p938 = pneg %p342
      %p939 = pneg %p339
      %p940 = pneg %p363
      %p941 = pneg %p360
      %p942 = pneg %p384
      %p943 = pneg %p381
      %p944 = pneg %p405
      %p945 = pneg %p402
      %p946 = pneg %p426
      %p947 = pneg %p423
      %p948 = pneg %p447
      %p949 = pneg %p444
      %p950 = pneg %p468
      %p951 = pneg %p465
      %p952 = pneg %p489
      %p953 = pneg %p486
      %p954 = pneg %p510
      %p955 = pneg %p507
      %p956 = pneg %p531
      %p957 = pneg %p528
      %p958 = pneg %p552
      %p959 = pneg %p549
      %p960 = pneg %p573
      %p961 = pneg %p570
      %p962 = pneg %p594
      %p963 = pneg %p591
      %p964 = pneg %p615
      %p965 = pneg %p612
      %p966 = pneg %p636
      %p967 = pneg %p633
      %p968 = pneg %p657
      %p969 = pneg %p654
      %p970 = pneg %p678
      %p971 = pneg %p675
      %p972 = pneg %p699
      %p973 = pneg %p696
      %p974 = pneg %p720
      %p975 = pneg %p717
      %p976 = pneg %p746
      %p977 = pneg %p743
      %p978 = scmp.lt.s32.totalorder %s75, 1
      %s979 = scalar_select %p978, %s75, 1
      %s980 = smul.addr %s979, 8
      %s981 = scalar_lea.vmem %s61, %s980
      %p982 = pneg %p772
      %p983 = pneg %p769
      %p984 = scmp.lt.s32.totalorder %s75, 1
      %s985 = scalar_select %p984, %s75, 1
      %s986 = smul.addr %s985, 8
      %s987 = scalar_lea.vmem %s63, %s986
      %p988 = scmp.lt.s32.totalorder %s75, 1
      %s989 = scalar_select %p988, %s75, 1
      %s990 = smul.addr %s989, 8
      %s991 = scalar_lea.vmem %s1, %s990
      %p992 = scmp.lt.s32.totalorder %s75, 1
      %s993 = scalar_select %p992, %s75, 1
      %s994 = smul.addr %s993, 8
      %s995 = scalar_lea.vmem %s3, %s994
      %p996 = scmp.lt.s32.totalorder %s75, 1
      %s997 = scalar_select %p996, %s75, 1
      %s998 = scalar_lea.vmem %s5, %s997
      %p999 = scmp.lt.s32.totalorder %s75, 1
      %s1000 = scalar_select %p999, %s75, 1
      %s1001 = scalar_lea.vmem %s7, %s1000
      %p1002 = scmp.lt.s32.totalorder %s75, 1
      %s1003 = scalar_select %p1002, %s75, 1
      %s1004 = smul.addr %s1003, 8
      %s1005 = scalar_lea.vmem %s61, %s1004
      %p1006 = scmp.lt.s32.totalorder %s75, 1
      %s1007 = scalar_select %p1006, %s75, 1
      %s1008 = smul.addr %s1007, 8
      %s1009 = scalar_lea.vmem %s63, %s1008
      %v1011 = vld [vmem:[%s991] sm:$0xff]
      %v1012 = vld [vmem:[%s995] sm:$0xff]
      %v1013 = vld [vmem:[%s998] sm:$0x1]
      %v1014 = vpack.c.bf16 %v1011, %v1011
      %v1015 = vsub.f32 %v1013, 1.0
      %v1016 = vmul.f32 %v1015, 1e+09
      %v1017 = vld [vmem:[%s9] sm:$0xf]
      %v1018 = vld [vmem:[%s9 + $0x4] sm:$0xf]
      %v1019 = vld [vmem:[%s9 + $0x8] sm:$0xf]
      %v1020 = vld [vmem:[%s9 + $0xc] sm:$0xf]
      %v1021 = vld [vmem:[%s15] sm:$0x1]
      %v1023 = vlaneseq
      %v1024 = vshrl.u32 %v1023, 7
      %v1025 = vsub.s32 0, %v1024
      %v1026 = vrot.slane %v1021, %v1025
      %v1032 = vunpack.c.l.b16 %v1017
      %v1033 = vunpack.c.l.b16 %v1018
      %v1034 = vunpack.c.l.b16 %v1019
      %v1035 = vunpack.c.l.b16 %v1020
      %v1036 = vpack.c.b16 %v1033, %v1032
      %v1037 = vpack.c.b16 %v1035, %v1034
      %vm1040 = vcmask 261120
      %v1042 = vsel %vm1040, %v1014, 0
      %1044 = vmatprep.subr.bf16.mxu0 0
      %1045 = vmatpush1.bf16.msra.mxu0 %v1036
      %1046 = vmatprep.subr.bf16.mxu0 0
      %1047 = vmatpush1.bf16.msra.mxu0 %v1037
      %1048 = vmatprep.subr.bf16.mxu0 0
      %1049 = vmatpush1.bf16.msra.mxu0 0
      %1050 = vmatprep.subr.bf16.mxu0 0
      %1051 = vmatpush1.bf16.msra.mxu0 0
      %1052 = vmatprep.subr.bf16.mxu0 0
      %1053 = vmatpush1.bf16.msra.mxu0 0
      %1054 = vmatprep.subr.bf16.mxu0 0
      %1055 = vmatpush1.bf16.msra.mxu0 0
      %1056 = vmatprep.subr.bf16.mxu0 0
      %1057 = vmatpush1.bf16.msra.mxu0 0
      %1058 = vmatprep.subr.bf16.mxu0 0
      %1059 = vmatpush1.bf16.msra.mxu0 0
      %1060 = vmatprep.subr.bf16.mxu0 0
      %1061 = vmatpush1.bf16.msra.mxu0 0
      %1062 = vmatprep.subr.bf16.mxu0 0
      %1063 = vmatpush1.bf16.msra.mxu0 0
      %1064 = vmatprep.subr.bf16.mxu0 0
      %1065 = vmatpush1.bf16.msra.mxu0 0
      %1066 = vmatprep.subr.bf16.mxu0 0
      %1067 = vmatpush1.bf16.msra.mxu0 0
      %1068 = vmatprep.subr.bf16.mxu0 0
      %1069 = vmatpush1.bf16.msra.mxu0 0
      %1070 = vmatprep.subr.bf16.mxu0 0
      %1071 = vmatpush1.bf16.msra.mxu0 0
      %1072 = vmatprep.subr.bf16.mxu0 0
      %1073 = vmatpush1.bf16.msra.mxu0 0
      %1074 = vmatprep.subr.bf16.mxu0 0
      %1075 = vmatpush1.bf16.msra.mxu0 0
      %1076 = vmatprep.mubr.bf16.mxu0 0
      %1077 = vmatmul.mubr.bf16.gmra.mrb[0].mxu0 %v1042
      %v1078 = vpop.f32.mrb[0].mxu0
      %v1079 = vadd.f32 %v1026, %v1078
      %v1080 = vpop.f32.mrb[0].mxu0
      %v1081 = vpop.f32.mrb[0].mxu0
      %v1082 = vpop.f32.mrb[0].mxu0
      %1083 = vdwg.mxu0
      %v1084 = vld [vmem:[%s11] sm:$0xf]
      %v1085 = vld [vmem:[%s11 + $0x4] sm:$0xf]
      %v1086 = vld [vmem:[%s11 + $0x8] sm:$0xf]
      %v1087 = vld [vmem:[%s11 + $0xc] sm:$0xf]
      %v1088 = vld [vmem:[%s17] sm:$0x1]
      %v1090 = vlaneseq
      %v1091 = vshrl.u32 %v1090, 7
      %v1092 = vsub.s32 0, %v1091
      %v1093 = vrot.slane %v1088, %v1092
      %v1099 = vunpack.c.l.b16 %v1084
      %v1100 = vunpack.c.l.b16 %v1085
      %v1101 = vunpack.c.l.b16 %v1086
      %v1102 = vunpack.c.l.b16 %v1087
      %v1103 = vpack.c.b16 %v1100, %v1099
      %v1104 = vpack.c.b16 %v1102, %v1101
      %1107 = vmatprep.subr.bf16.mxu0 0
      %1108 = vmatpush1.bf16.msra.mxu0 %v1103
      %1109 = vmatprep.subr.bf16.mxu0 0
      %1110 = vmatpush1.bf16.msra.mxu0 %v1104
      %1111 = vmatprep.subr.bf16.mxu0 0
      %1112 = vmatpush1.bf16.msra.mxu0 0
      %1113 = vmatprep.subr.bf16.mxu0 0
      %1114 = vmatpush1.bf16.msra.mxu0 0
      %1115 = vmatprep.subr.bf16.mxu0 0
      %1116 = vmatpush1.bf16.msra.mxu0 0
      %1117 = vmatprep.subr.bf16.mxu0 0
      %1118 = vmatpush1.bf16.msra.mxu0 0
      %1119 = vmatprep.subr.bf16.mxu0 0
      %1120 = vmatpush1.bf16.msra.mxu0 0
      %1121 = vmatprep.subr.bf16.mxu0 0
      %1122 = vmatpush1.bf16.msra.mxu0 0
      %1123 = vmatprep.subr.bf16.mxu0 0
      %1124 = vmatpush1.bf16.msra.mxu0 0
      %1125 = vmatprep.subr.bf16.mxu0 0
      %1126 = vmatpush1.bf16.msra.mxu0 0
      %1127 = vmatprep.subr.bf16.mxu0 0
      %1128 = vmatpush1.bf16.msra.mxu0 0
      %1129 = vmatprep.subr.bf16.mxu0 0
      %1130 = vmatpush1.bf16.msra.mxu0 0
      %1131 = vmatprep.subr.bf16.mxu0 0
      %1132 = vmatpush1.bf16.msra.mxu0 0
      %1133 = vmatprep.subr.bf16.mxu0 0
      %1134 = vmatpush1.bf16.msra.mxu0 0
      %1135 = vmatprep.subr.bf16.mxu0 0
      %1136 = vmatpush1.bf16.msra.mxu0 0
      %1137 = vmatprep.subr.bf16.mxu0 0
      %1138 = vmatpush1.bf16.msra.mxu0 0
      %1139 = vmatprep.mubr.bf16.mxu0 0
      %1140 = vmatmul.mubr.bf16.gmra.mrb[0].mxu0 %v1042
      %v1141 = vpop.f32.mrb[0].mxu0
      %v1142 = vadd.f32 %v1093, %v1141
      %v1143 = vpop.f32.mrb[0].mxu0
      %v1144 = vpop.f32.mrb[0].mxu0
      %v1145 = vpop.f32.mrb[0].mxu0
      %1146 = vdwg.mxu0
      %v1147 = vld [vmem:[%s13] sm:$0xf]
      %v1148 = vld [vmem:[%s13 + $0x4] sm:$0xf]
      %v1149 = vld [vmem:[%s13 + $0x8] sm:$0xf]
      %v1150 = vld [vmem:[%s13 + $0xc] sm:$0xf]
      %v1151 = vld [vmem:[%s19] sm:$0x1]
      %v1153 = vlaneseq
      %v1154 = vshrl.u32 %v1153, 7
      %v1155 = vsub.s32 0, %v1154
      %v1156 = vrot.slane %v1151, %v1155
      %v1162 = vunpack.c.l.b16 %v1147
      %v1163 = vunpack.c.l.b16 %v1148
      %v1164 = vunpack.c.l.b16 %v1149
      %v1165 = vunpack.c.l.b16 %v1150
      %v1166 = vpack.c.b16 %v1163, %v1162
      %v1167 = vpack.c.b16 %v1165, %v1164
      %1170 = vmatprep.subr.bf16.mxu0 0
      %1171 = vmatpush1.bf16.msra.mxu0 %v1166
      %1172 = vmatprep.subr.bf16.mxu0 0
      %1173 = vmatpush1.bf16.msra.mxu0 %v1167
      %1174 = vmatprep.subr.bf16.mxu0 0
      %1175 = vmatpush1.bf16.msra.mxu0 0
      %1176 = vmatprep.subr.bf16.mxu0 0
      %1177 = vmatpush1.bf16.msra.mxu0 0
      %1178 = vmatprep.subr.bf16.mxu0 0
      %1179 = vmatpush1.bf16.msra.mxu0 0
      %1180 = vmatprep.subr.bf16.mxu0 0
      %1181 = vmatpush1.bf16.msra.mxu0 0
      %1182 = vmatprep.subr.bf16.mxu0 0
      %1183 = vmatpush1.bf16.msra.mxu0 0
      %1184 = vmatprep.subr.bf16.mxu0 0
      %1185 = vmatpush1.bf16.msra.mxu0 0
      %1186 = vmatprep.subr.bf16.mxu0 0
      %1187 = vmatpush1.bf16.msra.mxu0 0
      %1188 = vmatprep.subr.bf16.mxu0 0
      %1189 = vmatpush1.bf16.msra.mxu0 0
      %1190 = vmatprep.subr.bf16.mxu0 0
      %1191 = vmatpush1.bf16.msra.mxu0 0
      %1192 = vmatprep.subr.bf16.mxu0 0
      %1193 = vmatpush1.bf16.msra.mxu0 0
      %1194 = vmatprep.subr.bf16.mxu0 0
      %1195 = vmatpush1.bf16.msra.mxu0 0
      %1196 = vmatprep.subr.bf16.mxu0 0
      %1197 = vmatpush1.bf16.msra.mxu0 0
      %1198 = vmatprep.subr.bf16.mxu0 0
      %1199 = vmatpush1.bf16.msra.mxu0 0
      %1200 = vmatprep.subr.bf16.mxu0 0
      %1201 = vmatpush1.bf16.msra.mxu0 0
      %1202 = vmatprep.mubr.bf16.mxu0 0
      %1203 = vmatmul.mubr.bf16.gmra.mrb[0].mxu0 %v1042
      %v1204 = vpop.f32.mrb[0].mxu0
      %v1205 = vadd.f32 %v1156, %v1204
      %v1206 = vpop.f32.mrb[0].mxu0
      %v1207 = vpop.f32.mrb[0].mxu0
      %v1208 = vpop.f32.mrb[0].mxu0
      %1209 = vdwg.mxu0
      %v1210 = vpack.c.bf16 %v1079, %v1079
      %v1211 = vpack.c.bf16 %v1142, %v1142
      %v1213 = vlaneseq
      %v1214 = vshrl.u32 %v1213, 7
      %v1215 = vsub.s32 0, %v1214
      %v1216 = vrot.slane %v1016, %v1215
      %vm1218 = vcmask 130048
      %v1220 = vsel %vm1218, %v1210, 0
      %v1223 = vsel %vm1218, %v1211, 0
      %1225 = vmatprep.subr.bf16.mxu0 0
      %1226 = vmatpush1.bf16.xpose.msra.mxu0 %v1223
      %1227 = vmatprep.subr.bf16.mxu0 0
      %1228 = vmatpush1.bf16.xpose.msra.mxu0 0
      %1229 = vmatprep.subr.bf16.mxu0 0
      %1230 = vmatpush1.bf16.xpose.msra.mxu0 0
      %1231 = vmatprep.subr.bf16.mxu0 0
      %1232 = vmatpush1.bf16.xpose.msra.mxu0 0
      %1233 = vmatprep.subr.bf16.mxu0 0
      %1234 = vmatpush1.bf16.xpose.msra.mxu0 0
      %1235 = vmatprep.subr.bf16.mxu0 0
      %1236 = vmatpush1.bf16.xpose.msra.mxu0 0
      %1237 = vmatprep.subr.bf16.mxu0 0
      %1238 = vmatpush1.bf16.xpose.msra.mxu0 0
      %1239 = vmatprep.subr.bf16.mxu0 0
      %1240 = vmatpush1.bf16.xpose.msra.mxu0 0
      %1241 = vmatprep.subr.bf16.mxu0 0
      %1242 = vmatpush1.bf16.xpose.msra.mxu0 0
      %1243 = vmatprep.subr.bf16.mxu0 0
      %1244 = vmatpush1.bf16.xpose.msra.mxu0 0
      %1245 = vmatprep.subr.bf16.mxu0 0
      %1246 = vmatpush1.bf16.xpose.msra.mxu0 0
      %1247 = vmatprep.subr.bf16.mxu0 0
      %1248 = vmatpush1.bf16.xpose.msra.mxu0 0
      %1249 = vmatprep.subr.bf16.mxu0 0
      %1250 = vmatpush1.bf16.xpose.msra.mxu0 0
      %1251 = vmatprep.subr.bf16.mxu0 0
      %1252 = vmatpush1.bf16.xpose.msra.mxu0 0
      %1253 = vmatprep.subr.bf16.mxu0 0
      %1254 = vmatpush1.bf16.xpose.msra.mxu0 0
      %1255 = vmatprep.subr.bf16.mxu0 0
      %1256 = vmatpush1.bf16.xpose.msra.mxu0 0
      %1257 = vmatprep.mubr.bf16.mxu0 0
      %1258 = vmatmul.mubr.bf16.gmra.mrb[0].mxu0 %v1220
      %v1259 = vpop.f32.mrb[0].mxu0
      %v1260 = vadd.f32 %v1216, %v1259
      %v1261 = vpop.f32.mrb[0].mxu0
      %v1262 = vpop.f32.mrb[0].mxu0
      %v1263 = vpop.f32.mrb[0].mxu0
      %1264 = vdwg.mxu0
      %vm1265 = vcmask 64512
      %v1266 = vsel %vm1265, %v1260, -inf
      %1267 = vmax.xlane.f32.xlu0 %v1266
      %v1268 = vpop.xlane.xlu0 %1267
      %v1269 = vsub.f32 %v1260, %v1268
      %v1270 = vmul.f32 %v1269, 1.442695
      %v1271 = vpow.pop %v1270
      %v1272 = vsel %vm1265, %v1271, 0.0
      %1273 = vadd.xlane.f32.xlu0 %v1272
      %v1274 = vpop.xlane.xlu0 %1273
      %v1275 = vrcp.pop %v1274
      %v1276 = vmul.f32 %v1271, %v1275
      %v1277 = vpack.c.bf16 %v1276, %v1276
      %v1278 = vpack.c.bf16 %v1205, %v1205
      %v1280 = vsel %vm1265, %v1277, 0
      %vm1282 = vcmask 1043456
      %v1284 = vsel %vm1282, %v1278, 0
      %1286 = vmatprep.subr.bf16.mxu0 0
      %1287 = vmatpush1.bf16.msra.mxu0 %v1284
      %1288 = vmatprep.subr.bf16.mxu0 0
      %1289 = vmatpush1.bf16.msra.mxu0 0
      %1290 = vmatprep.subr.bf16.mxu0 0
      %1291 = vmatpush1.bf16.msra.mxu0 0
      %1292 = vmatprep.subr.bf16.mxu0 0
      %1293 = vmatpush1.bf16.msra.mxu0 0
      %1294 = vmatprep.subr.bf16.mxu0 0
      %1295 = vmatpush1.bf16.msra.mxu0 0
      %1296 = vmatprep.subr.bf16.mxu0 0
      %1297 = vmatpush1.bf16.msra.mxu0 0
      %1298 = vmatprep.subr.bf16.mxu0 0
      %1299 = vmatpush1.bf16.msra.mxu0 0
      %1300 = vmatprep.subr.bf16.mxu0 0
      %1301 = vmatpush1.bf16.msra.mxu0 0
      %1302 = vmatprep.subr.bf16.mxu0 0
      %1303 = vmatpush1.bf16.msra.mxu0 0
      %1304 = vmatprep.subr.bf16.mxu0 0
      %1305 = vmatpush1.bf16.msra.mxu0 0
      %1306 = vmatprep.subr.bf16.mxu0 0
      %1307 = vmatpush1.bf16.msra.mxu0 0
      %1308 = vmatprep.subr.bf16.mxu0 0
      %1309 = vmatpush1.bf16.msra.mxu0 0
      %1310 = vmatprep.subr.bf16.mxu0 0
      %1311 = vmatpush1.bf16.msra.mxu0 0
      %1312 = vmatprep.subr.bf16.mxu0 0
      %1313 = vmatpush1.bf16.msra.mxu0 0
      %1314 = vmatprep.subr.bf16.mxu0 0
      %1315 = vmatpush1.bf16.msra.mxu0 0
      %1316 = vmatprep.subr.bf16.mxu0 0
      %1317 = vmatpush1.bf16.msra.mxu0 0
      %1318 = vmatprep.mubr.bf16.mxu0 0
      %1319 = vmatmul.mubr.bf16.gmra.mrb[0].mxu0 %v1280
      %v1320 = vpop.f32.mrb[0].mxu0
      %v1321 = vadd.f32 0.0, %v1320
      %v1322 = vpop.f32.mrb[0].mxu0
      %v1323 = vpop.f32.mrb[0].mxu0
      %v1324 = vpop.f32.mrb[0].mxu0
      %1325 = vdwg.mxu0
      %v1326 = vpack.c.bf16 %v1321, %v1321
      %v1327 = vld [vmem:[%s21] sm:$0xf]
      %v1328 = vld [vmem:[%s21 + $0x4] sm:$0xf]
      %s1329 = scalar_lea.vmem %s9, 16
      %v1330 = vld [vmem:[%s1329] sm:$0xf]
      %v1331 = vld [vmem:[%s1329 + $0x4] sm:$0xf]
      %v1332 = vld [vmem:[%s1329 + $0x8] sm:$0xf]
      %v1333 = vld [vmem:[%s1329 + $0xc] sm:$0xf]
      %s1334 = scalar_lea.vmem %s15, 1
      %v1335 = vld [vmem:[%s1334] sm:$0x1]
      %v1337 = vlaneseq
      %v1338 = vshrl.u32 %v1337, 7
      %v1339 = vsub.s32 0, %v1338
      %v1340 = vrot.slane %v1335, %v1339
      %v1346 = vunpack.c.l.b16 %v1330
      %v1347 = vunpack.c.l.b16 %v1331
      %v1348 = vunpack.c.l.b16 %v1332
      %v1349 = vunpack.c.l.b16 %v1333
      %v1350 = vpack.c.b16 %v1347, %v1346
      %v1351 = vpack.c.b16 %v1349, %v1348
      %1354 = vmatprep.subr.bf16.mxu0 0
      %1355 = vmatpush1.bf16.msra.mxu0 %v1350
      %1356 = vmatprep.subr.bf16.mxu0 0
      %1357 = vmatpush1.bf16.msra.mxu0 %v1351
      %1358 = vmatprep.subr.bf16.mxu0 0
      %1359 = vmatpush1.bf16.msra.mxu0 0
      %1360 = vmatprep.subr.bf16.mxu0 0
      %1361 = vmatpush1.bf16.msra.mxu0 0
      %1362 = vmatprep.subr.bf16.mxu0 0
      %1363 = vmatpush1.bf16.msra.mxu0 0
      %1364 = vmatprep.subr.bf16.mxu0 0
      %1365 = vmatpush1.bf16.msra.mxu0 0
      %1366 = vmatprep.subr.bf16.mxu0 0
      %1367 = vmatpush1.bf16.msra.mxu0 0
      %1368 = vmatprep.subr.bf16.mxu0 0
      %1369 = vmatpush1.bf16.msra.mxu0 0
      %1370 = vmatprep.subr.bf16.mxu0 0
      %1371 = vmatpush1.bf16.msra.mxu0 0
      %1372 = vmatprep.subr.bf16.mxu0 0
      %1373 = vmatpush1.bf16.msra.mxu0 0
      %1374 = vmatprep.subr.bf16.mxu0 0
      %1375 = vmatpush1.bf16.msra.mxu0 0
      %1376 = vmatprep.subr.bf16.mxu0 0
      %1377 = vmatpush1.bf16.msra.mxu0 0
      %1378 = vmatprep.subr.bf16.mxu0 0
      %1379 = vmatpush1.bf16.msra.mxu0 0
      %1380 = vmatprep.subr.bf16.mxu0 0
      %1381 = vmatpush1.bf16.msra.mxu0 0
      %1382 = vmatprep.subr.bf16.mxu0 0
      %1383 = vmatpush1.bf16.msra.mxu0 0
      %1384 = vmatprep.subr.bf16.mxu0 0
      %1385 = vmatpush1.bf16.msra.mxu0 0
      %1386 = vmatprep.mubr.bf16.mxu0 0
      %1387 = vmatmul.mubr.bf16.gmra.mrb[0].mxu0 %v1042
      %v1388 = vpop.f32.mrb[0].mxu0
      %v1389 = vadd.f32 %v1340, %v1388
      %v1390 = vpop.f32.mrb[0].mxu0
      %v1391 = vpop.f32.mrb[0].mxu0
      %v1392 = vpop.f32.mrb[0].mxu0
      %1393 = vdwg.mxu0
      %s1394 = scalar_lea.vmem %s11, 16
      %v1395 = vld [vmem:[%s1394] sm:$0xf]
      %v1396 = vld [vmem:[%s1394 + $0x4] sm:$0xf]
      %v1397 = vld [vmem:[%s1394 + $0x8] sm:$0xf]
      %v1398 = vld [vmem:[%s1394 + $0xc] sm:$0xf]
      %s1399 = scalar_lea.vmem %s17, 1
      %v1400 = vld [vmem:[%s1399] sm:$0x1]
      %v1402 = vlaneseq
      %v1403 = vshrl.u32 %v1402, 7
      %v1404 = vsub.s32 0, %v1403
      %v1405 = vrot.slane %v1400, %v1404
      %v1411 = vunpack.c.l.b16 %v1395
      %v1412 = vunpack.c.l.b16 %v1396
      %v1413 = vunpack.c.l.b16 %v1397
      %v1414 = vunpack.c.l.b16 %v1398
      %v1415 = vpack.c.b16 %v1412, %v1411
      %v1416 = vpack.c.b16 %v1414, %v1413
      %1419 = vmatprep.subr.bf16.mxu0 0
      %1420 = vmatpush1.bf16.msra.mxu0 %v1415
      %1421 = vmatprep.subr.bf16.mxu0 0
      %1422 = vmatpush1.bf16.msra.mxu0 %v1416
      %1423 = vmatprep.subr.bf16.mxu0 0
      %1424 = vmatpush1.bf16.msra.mxu0 0
      %1425 = vmatprep.subr.bf16.mxu0 0
      %1426 = vmatpush1.bf16.msra.mxu0 0
      %1427 = vmatprep.subr.bf16.mxu0 0
      %1428 = vmatpush1.bf16.msra.mxu0 0
      %1429 = vmatprep.subr.bf16.mxu0 0
      %1430 = vmatpush1.bf16.msra.mxu0 0
      %1431 = vmatprep.subr.bf16.mxu0 0
      %1432 = vmatpush1.bf16.msra.mxu0 0
      %1433 = vmatprep.subr.bf16.mxu0 0
      %1434 = vmatpush1.bf16.msra.mxu0 0
      %1435 = vmatprep.subr.bf16.mxu0 0
      %1436 = vmatpush1.bf16.msra.mxu0 0
      %1437 = vmatprep.subr.bf16.mxu0 0
      %1438 = vmatpush1.bf16.msra.mxu0 0
      %1439 = vmatprep.subr.bf16.mxu0 0
      %1440 = vmatpush1.bf16.msra.mxu0 0
      %1441 = vmatprep.subr.bf16.mxu0 0
      %1442 = vmatpush1.bf16.msra.mxu0 0
      %1443 = vmatprep.subr.bf16.mxu0 0
      %1444 = vmatpush1.bf16.msra.mxu0 0
      %1445 = vmatprep.subr.bf16.mxu0 0
      %1446 = vmatpush1.bf16.msra.mxu0 0
      %1447 = vmatprep.subr.bf16.mxu0 0
      %1448 = vmatpush1.bf16.msra.mxu0 0
      %1449 = vmatprep.subr.bf16.mxu0 0
      %1450 = vmatpush1.bf16.msra.mxu0 0
      %1451 = vmatprep.mubr.bf16.mxu0 0
      %1452 = vmatmul.mubr.bf16.gmra.mrb[0].mxu0 %v1042
      %v1453 = vpop.f32.mrb[0].mxu0
      %v1454 = vadd.f32 %v1405, %v1453
      %v1455 = vpop.f32.mrb[0].mxu0
      %v1456 = vpop.f32.mrb[0].mxu0
      %v1457 = vpop.f32.mrb[0].mxu0
      %1458 = vdwg.mxu0
      %s1459 = scalar_lea.vmem %s13, 16
      %v1460 = vld [vmem:[%s1459] sm:$0xf]
      %v1461 = vld [vmem:[%s1459 + $0x4] sm:$0xf]
      %v1462 = vld [vmem:[%s1459 + $0x8] sm:$0xf]
      %v1463 = vld [vmem:[%s1459 + $0xc] sm:$0xf]
      %s1464 = scalar_lea.vmem %s19, 1
      %v1465 = vld [vmem:[%s1464] sm:$0x1]
      %v1467 = vlaneseq
      %v1468 = vshrl.u32 %v1467, 7
      %v1469 = vsub.s32 0, %v1468
      %v1470 = vrot.slane %v1465, %v1469
      %v1476 = vunpack.c.l.b16 %v1460
      %v1477 = vunpack.c.l.b16 %v1461
      %v1478 = vunpack.c.l.b16 %v1462
      %v1479 = vunpack.c.l.b16 %v1463
      %v1480 = vpack.c.b16 %v1477, %v1476
      %v1481 = vpack.c.b16 %v1479, %v1478
      %1484 = vmatprep.subr.bf16.mxu0 0
      %1485 = vmatpush1.bf16.msra.mxu0 %v1480
      %1486 = vmatprep.subr.bf16.mxu0 0
      %1487 = vmatpush1.bf16.msra.mxu0 %v1481
      %1488 = vmatprep.subr.bf16.mxu0 0
      %1489 = vmatpush1.bf16.msra.mxu0 0
      %1490 = vmatprep.subr.bf16.mxu0 0
      %1491 = vmatpush1.bf16.msra.mxu0 0
      %1492 = vmatprep.subr.bf16.mxu0 0
      %1493 = vmatpush1.bf16.msra.mxu0 0
      %1494 = vmatprep.subr.bf16.mxu0 0
      %1495 = vmatpush1.bf16.msra.mxu0 0
      %1496 = vmatprep.subr.bf16.mxu0 0
      %1497 = vmatpush1.bf16.msra.mxu0 0
      %1498 = vmatprep.subr.bf16.mxu0 0
      %1499 = vmatpush1.bf16.msra.mxu0 0
      %1500 = vmatprep.subr.bf16.mxu0 0
      %1501 = vmatpush1.bf16.msra.mxu0 0
      %1502 = vmatprep.subr.bf16.mxu0 0
      %1503 = vmatpush1.bf16.msra.mxu0 0
      %1504 = vmatprep.subr.bf16.mxu0 0
      %1505 = vmatpush1.bf16.msra.mxu0 0
      %1506 = vmatprep.subr.bf16.mxu0 0
      %1507 = vmatpush1.bf16.msra.mxu0 0
      %1508 = vmatprep.subr.bf16.mxu0 0
      %1509 = vmatpush1.bf16.msra.mxu0 0
      %1510 = vmatprep.subr.bf16.mxu0 0
      %1511 = vmatpush1.bf16.msra.mxu0 0
      %1512 = vmatprep.subr.bf16.mxu0 0
      %1513 = vmatpush1.bf16.msra.mxu0 0
      %1514 = vmatprep.subr.bf16.mxu0 0
      %1515 = vmatpush1.bf16.msra.mxu0 0
      %1516 = vmatprep.mubr.bf16.mxu0 0
      %1517 = vmatmul.mubr.bf16.gmra.mrb[0].mxu0 %v1042
      %v1518 = vpop.f32.mrb[0].mxu0
      %v1519 = vadd.f32 %v1470, %v1518
      %v1520 = vpop.f32.mrb[0].mxu0
      %v1521 = vpop.f32.mrb[0].mxu0
      %v1522 = vpop.f32.mrb[0].mxu0
      %1523 = vdwg.mxu0
      %v1524 = vpack.c.bf16 %v1389, %v1389
      %v1525 = vpack.c.bf16 %v1454, %v1454
      %v1527 = vsel %vm1218, %v1524, 0
      %v1530 = vsel %vm1218, %v1525, 0
      %1532 = vmatprep.subr.bf16.mxu0 0
      %1533 = vmatpush1.bf16.xpose.msra.mxu0 %v1530
      %1534 = vmatprep.subr.bf16.mxu0 0
      %1535 = vmatpush1.bf16.xpose.msra.mxu0 0
      %1536 = vmatprep.subr.bf16.mxu0 0
      %1537 = vmatpush1.bf16.xpose.msra.mxu0 0
      %1538 = vmatprep.subr.bf16.mxu0 0
      %1539 = vmatpush1.bf16.xpose.msra.mxu0 0
      %1540 = vmatprep.subr.bf16.mxu0 0
      %1541 = vmatpush1.bf16.xpose.msra.mxu0 0
      %1542 = vmatprep.subr.bf16.mxu0 0
      %1543 = vmatpush1.bf16.xpose.msra.mxu0 0
      %1544 = vmatprep.subr.bf16.mxu0 0
      %1545 = vmatpush1.bf16.xpose.msra.mxu0 0
      %1546 = vmatprep.subr.bf16.mxu0 0
      %1547 = vmatpush1.bf16.xpose.msra.mxu0 0
      %1548 = vmatprep.subr.bf16.mxu0 0
      %1549 = vmatpush1.bf16.xpose.msra.mxu0 0
      %1550 = vmatprep.subr.bf16.mxu0 0
      %1551 = vmatpush1.bf16.xpose.msra.mxu0 0
      %1552 = vmatprep.subr.bf16.mxu0 0
      %1553 = vmatpush1.bf16.xpose.msra.mxu0 0
      %1554 = vmatprep.subr.bf16.mxu0 0
      %1555 = vmatpush1.bf16.xpose.msra.mxu0 0
      %1556 = vmatprep.subr.bf16.mxu0 0
      %1557 = vmatpush1.bf16.xpose.msra.mxu0 0
      %1558 = vmatprep.subr.bf16.mxu0 0
      %1559 = vmatpush1.bf16.xpose.msra.mxu0 0
      %1560 = vmatprep.subr.bf16.mxu0 0
      %1561 = vmatpush1.bf16.xpose.msra.mxu0 0
      %1562 = vmatprep.subr.bf16.mxu0 0
      %1563 = vmatpush1.bf16.xpose.msra.mxu0 0
      %1564 = vmatprep.mubr.bf16.mxu0 0
      %1565 = vmatmul.mubr.bf16.gmra.mrb[0].mxu0 %v1527
      %v1566 = vpop.f32.mrb[0].mxu0
      %v1567 = vadd.f32 %v1216, %v1566
      %v1568 = vpop.f32.mrb[0].mxu0
      %v1569 = vpop.f32.mrb[0].mxu0
      %v1570 = vpop.f32.mrb[0].mxu0
      %1571 = vdwg.mxu0
      %v1572 = vsel %vm1265, %v1567, -inf
      %1573 = vmax.xlane.f32.xlu0 %v1572
      %v1574 = vpop.xlane.xlu0 %1573
      %v1575 = vsub.f32 %v1567, %v1574
      %v1576 = vmul.f32 %v1575, 1.442695
      %v1577 = vpow.pop %v1576
      %v1578 = vsel %vm1265, %v1577, 0.0
      %1579 = vadd.xlane.f32.xlu0 %v1578
      %v1580 = vpop.xlane.xlu0 %1579
      %v1581 = vrcp.pop %v1580
      %v1582 = vmul.f32 %v1577, %v1581
      %v1583 = vpack.c.bf16 %v1582, %v1582
      %v1584 = vpack.c.bf16 %v1519, %v1519
      %v1586 = vsel %vm1265, %v1583, 0
      %v1589 = vsel %vm1282, %v1584, 0
      %1591 = vmatprep.subr.bf16.mxu0 0
      %1592 = vmatpush1.bf16.msra.mxu0 %v1589
      %1593 = vmatprep.subr.bf16.mxu0 0
      %1594 = vmatpush1.bf16.msra.mxu0 0
      %1595 = vmatprep.subr.bf16.mxu0 0
      %1596 = vmatpush1.bf16.msra.mxu0 0
      %1597 = vmatprep.subr.bf16.mxu0 0
      %1598 = vmatpush1.bf16.msra.mxu0 0
      %1599 = vmatprep.subr.bf16.mxu0 0
      %1600 = vmatpush1.bf16.msra.mxu0 0
      %1601 = vmatprep.subr.bf16.mxu0 0
      %1602 = vmatpush1.bf16.msra.mxu0 0
      %1603 = vmatprep.subr.bf16.mxu0 0
      %1604 = vmatpush1.bf16.msra.mxu0 0
      %1605 = vmatprep.subr.bf16.mxu0 0
      %1606 = vmatpush1.bf16.msra.mxu0 0
      %1607 = vmatprep.subr.bf16.mxu0 0
      %1608 = vmatpush1.bf16.msra.mxu0 0
      %1609 = vmatprep.subr.bf16.mxu0 0
      %1610 = vmatpush1.bf16.msra.mxu0 0
      %1611 = vmatprep.subr.bf16.mxu0 0
      %1612 = vmatpush1.bf16.msra.mxu0 0
      %1613 = vmatprep.subr.bf16.mxu0 0
      %1614 = vmatpush1.bf16.msra.mxu0 0
      %1615 = vmatprep.subr.bf16.mxu0 0
      %1616 = vmatpush1.bf16.msra.mxu0 0
      %1617 = vmatprep.subr.bf16.mxu0 0
      %1618 = vmatpush1.bf16.msra.mxu0 0
      %1619 = vmatprep.subr.bf16.mxu0 0
      %1620 = vmatpush1.bf16.msra.mxu0 0
      %1621 = vmatprep.subr.bf16.mxu0 0
      %1622 = vmatpush1.bf16.msra.mxu0 0
      %1623 = vmatprep.mubr.bf16.mxu0 0
      %1624 = vmatmul.mubr.bf16.gmra.mrb[0].mxu0 %v1586
      %v1625 = vpop.f32.mrb[0].mxu0
      %v1626 = vadd.f32 0.0, %v1625
      %v1627 = vpop.f32.mrb[0].mxu0
      %v1628 = vpop.f32.mrb[0].mxu0
      %v1629 = vpop.f32.mrb[0].mxu0
      %1630 = vdwg.mxu0
      %v1631 = vpack.c.bf16 %v1626, %v1626
      %s1632 = scalar_lea.vmem %s21, 8
      %v1633 = vld [vmem:[%s1632] sm:$0xf]
      %v1634 = vld [vmem:[%s1632 + $0x4] sm:$0xf]
      %v1637 = vunpack.c.l.b16 %v1633
      %v1638 = vunpack.c.l.b16 %v1634
      %v1639 = vpack.c.b16 %v1638, %v1637
      %v1642 = vsel %vm1218, %v1631, 0
      %1644 = vmatprep.subr.bf16.mxu0 0
      %1645 = vmatpush1.bf16.msra.mxu0 %v1639
      %1646 = vmatprep.subr.bf16.mxu0 0
      %1647 = vmatpush1.bf16.msra.mxu0 0
      %1648 = vmatprep.subr.bf16.mxu0 0
      %1649 = vmatpush1.bf16.msra.mxu0 0
      %1650 = vmatprep.subr.bf16.mxu0 0
      %1651 = vmatpush1.bf16.msra.mxu0 0
      %1652 = vmatprep.subr.bf16.mxu0 0
      %1653 = vmatpush1.bf16.msra.mxu0 0
      %1654 = vmatprep.subr.bf16.mxu0 0
      %1655 = vmatpush1.bf16.msra.mxu0 0
      %1656 = vmatprep.subr.bf16.mxu0 0
      %1657 = vmatpush1.bf16.msra.mxu0 0
      %1658 = vmatprep.subr.bf16.mxu0 0
      %1659 = vmatpush1.bf16.msra.mxu0 0
      %1660 = vmatprep.subr.bf16.mxu0 0
      %1661 = vmatpush1.bf16.msra.mxu0 0
      %1662 = vmatprep.subr.bf16.mxu0 0
      %1663 = vmatpush1.bf16.msra.mxu0 0
      %1664 = vmatprep.subr.bf16.mxu0 0
      %1665 = vmatpush1.bf16.msra.mxu0 0
      %1666 = vmatprep.subr.bf16.mxu0 0
      %1667 = vmatpush1.bf16.msra.mxu0 0
      %1668 = vmatprep.subr.bf16.mxu0 0
      %1669 = vmatpush1.bf16.msra.mxu0 0
      %1670 = vmatprep.subr.bf16.mxu0 0
      %1671 = vmatpush1.bf16.msra.mxu0 0
      %1672 = vmatprep.subr.bf16.mxu0 0
      %1673 = vmatpush1.bf16.msra.mxu0 0
      %1674 = vmatprep.subr.bf16.mxu0 0
      %1675 = vmatpush1.bf16.msra.mxu0 0
      %1676 = vmatprep.mubr.bf16.mxu0 0
      %1677 = vmatmul.mubr.bf16.gmra.mrb[0].mxu0 %v1642
      %v1678 = vpop.f32.mrb[0].mxu0
      %v1679 = vadd.f32 0.0, %v1678
      %v1680 = vpop.f32.mrb[0].mxu0
      %v1681 = vpop.f32.mrb[0].mxu0
      %v1682 = vpop.f32.mrb[0].mxu0
      %1683 = vdwg.mxu0
      %v1686 = vunpack.c.l.b16 %v1327
      %v1687 = vunpack.c.l.b16 %v1328
      %v1688 = vpack.c.b16 %v1687, %v1686
      %v1691 = vsel %vm1218, %v1326, 0
      %1693 = vmatprep.subr.bf16.mxu0 0
      %1694 = vmatpush1.bf16.msra.mxu0 %v1688
      %1695 = vmatprep.subr.bf16.mxu0 0
      %1696 = vmatpush1.bf16.msra.mxu0 0
      %1697 = vmatprep.subr.bf16.mxu0 0
      %1698 = vmatpush1.bf16.msra.mxu0 0
      %1699 = vmatprep.subr.bf16.mxu0 0
      %1700 = vmatpush1.bf16.msra.mxu0 0
      %1701 = vmatprep.subr.bf16.mxu0 0
      %1702 = vmatpush1.bf16.msra.mxu0 0
      %1703 = vmatprep.subr.bf16.mxu0 0
      %1704 = vmatpush1.bf16.msra.mxu0 0
      %1705 = vmatprep.subr.bf16.mxu0 0
      %1706 = vmatpush1.bf16.msra.mxu0 0
      %1707 = vmatprep.subr.bf16.mxu0 0
      %1708 = vmatpush1.bf16.msra.mxu0 0
      %1709 = vmatprep.subr.bf16.mxu0 0
      %1710 = vmatpush1.bf16.msra.mxu0 0
      %1711 = vmatprep.subr.bf16.mxu0 0
      %1712 = vmatpush1.bf16.msra.mxu0 0
      %1713 = vmatprep.subr.bf16.mxu0 0
      %1714 = vmatpush1.bf16.msra.mxu0 0
      %1715 = vmatprep.subr.bf16.mxu0 0
      %1716 = vmatpush1.bf16.msra.mxu0 0
      %1717 = vmatprep.subr.bf16.mxu0 0
      %1718 = vmatpush1.bf16.msra.mxu0 0
      %1719 = vmatprep.subr.bf16.mxu0 0
      %1720 = vmatpush1.bf16.msra.mxu0 0
      %1721 = vmatprep.subr.bf16.mxu0 0
      %1722 = vmatpush1.bf16.msra.mxu0 0
      %1723 = vmatprep.subr.bf16.mxu0 0
      %1724 = vmatpush1.bf16.msra.mxu0 0
      %1725 = vmatprep.mubr.bf16.mxu0 0
      %1726 = vmatmul.mubr.bf16.gmra.mrb[0].mxu0 %v1691
      %v1727 = vpop.f32.mrb[0].mxu0
      %v1728 = vadd.f32 %v1679, %v1727
      %v1729 = vpop.f32.mrb[0].mxu0
      %v1730 = vpop.f32.mrb[0].mxu0
      %v1731 = vpop.f32.mrb[0].mxu0
      %1732 = vdwg.mxu0
      %v1733 = vld [vmem:[%s23] sm:$0x1]
      %v1735 = vlaneseq
      %v1736 = vshrl.u32 %v1735, 7
      %v1737 = vsub.s32 0, %v1736
      %v1738 = vrot.slane %v1733, %v1737
      %v1740 = vadd.f32 %v1728, %v1738
      %v1741 = vadd.f32 %v1740, %v1011
      %v1742 = vld [vmem:[%s25] sm:$0x1]
      %v1743 = vld [vmem:[%s27] sm:$0x1]
      %v1744 = vsel %vm1040, %v1741, 0.0
      %1745 = vadd.xlane.f32.xlu0 %v1744
      %v1746 = vpop.xlane.xlu0 %1745
      %v1747 = vrcp.pop 32.0
      %v1748 = vmul.f32 %v1746, %v1747
      %v1749 = vsub.f32 %v1741, %v1748
      %v1750 = vmul.f32 %v1749, %v1749
      %v1751 = vsel %vm1040, %v1750, 0.0
      %1752 = vadd.xlane.f32.xlu0 %v1751
      %v1753 = vpop.xlane.xlu0 %1752
      %v1754 = vmul.f32 %v1753, %v1747
      %v1755 = vadd.f32 %v1754, 1e-05
      %v1756 = vrsqrt.pop %v1755
      %v1757 = vmul.f32 %v1749, %v1756
      %v1759 = vlaneseq
      %v1760 = vshrl.u32 %v1759, 7
      %v1761 = vsub.s32 0, %v1760
      %v1762 = vrot.slane %v1742, %v1761
      %v1764 = vmul.f32 %v1757, %v1762
      %v1766 = vlaneseq
      %v1767 = vshrl.u32 %v1766, 7
      %v1768 = vsub.s32 0, %v1767
      %v1769 = vrot.slane %v1743, %v1768
      %v1771 = vadd.f32 %v1764, %v1769
      %1773 = vset.pattern.permute.xlu0 0
      %1774 = vperm.xlu0 %1773, %v1012
      %v1775 = vpop.permute.xlu0 %1774
      %v1777 = vmul.f32 %v1771, %v1775
      %v1778 = vld [vmem:[%s29] sm:$0xf]
      %v1779 = vld [vmem:[%s29 + $0x4] sm:$0xf]
      %v1780 = vld [vmem:[%s29 + $0x8] sm:$0xf]
      %v1781 = vld [vmem:[%s29 + $0xc] sm:$0xf]
      %v1782 = vld [vmem:[%s29 + $0x10] sm:$0xf]
      %v1783 = vld [vmem:[%s29 + $0x14] sm:$0xf]
      %v1784 = vld [vmem:[%s29 + $0x18] sm:$0xf]
      %v1785 = vld [vmem:[%s29 + $0x1c] sm:$0xf]
      %v1786 = vld [vmem:[%s29 + $0x20] sm:$0xf]
      %v1787 = vld [vmem:[%s29 + $0x24] sm:$0xf]
      %v1788 = vld [vmem:[%s29 + $0x28] sm:$0xf]
      %v1789 = vld [vmem:[%s29 + $0x2c] sm:$0xf]
      %v1790 = vld [vmem:[%s29 + $0x30] sm:$0xf]
      %v1791 = vld [vmem:[%s29 + $0x34] sm:$0xf]
      %v1792 = vld [vmem:[%s29 + $0x38] sm:$0xf]
      %v1793 = vld [vmem:[%s29 + $0x3c] sm:$0xf]
      %v1794 = vld [vmem:[%s29 + $0x40] sm:$0xf]
      %v1795 = vld [vmem:[%s29 + $0x44] sm:$0xf]
      %v1796 = vld [vmem:[%s29 + $0x48] sm:$0xf]
      %v1797 = vld [vmem:[%s29 + $0x4c] sm:$0xf]
      %v1798 = vld [vmem:[%s29 + $0x50] sm:$0xf]
      %v1799 = vld [vmem:[%s29 + $0x54] sm:$0xf]
      %v1800 = vld [vmem:[%s29 + $0x58] sm:$0xf]
      %v1801 = vld [vmem:[%s29 + $0x5c] sm:$0xf]
      %v1802 = vld [vmem:[%s29 + $0x60] sm:$0xf]
      %v1803 = vld [vmem:[%s29 + $0x64] sm:$0xf]
      %v1804 = vld [vmem:[%s29 + $0x68] sm:$0xf]
      %v1805 = vld [vmem:[%s29 + $0x6c] sm:$0xf]
      %v1806 = vld [vmem:[%s29 + $0x70] sm:$0xf]
      %v1807 = vld [vmem:[%s29 + $0x74] sm:$0xf]
      %v1808 = vld [vmem:[%s29 + $0x78] sm:$0xf]
      %v1809 = vld [vmem:[%s29 + $0x7c] sm:$0xf]
      %v1810 = vld [vmem:[%s29 + $0x80] sm:$0xf]
      %v1811 = vld [vmem:[%s29 + $0x84] sm:$0xf]
      %v1812 = vld [vmem:[%s29 + $0x88] sm:$0xf]
      %v1813 = vld [vmem:[%s29 + $0x8c] sm:$0xf]
      %v1814 = vld [vmem:[%s31] sm:$0x1]
      %v1816 = vrot.slane %v1777, 4
      %v1818 = vsel %vm1282, 0.0, %v1816
      %v1819 = vsel %vm1282, %v1816, 0.0
      %vm1822 = vcmask 1046528
      %v1823 = vrot.slane %v1818, 1
      %v1824 = vrot.slane %v1819, 1
      %v1825 = vsel %vm1822, %v1823, %v1824
      %1826 = vrot.lane.b32.xlu0 %v1825, 32
      %v1827 = vpop.permute.xlu0 %1826
      %vm1829 = vcmask 1045504
      %v1830 = vrot.slane %v1818, 2
      %v1831 = vrot.slane %v1819, 2
      %v1832 = vsel %vm1829, %v1830, %v1831
      %1833 = vrot.lane.b32.xlu0 %v1832, 64
      %v1834 = vpop.permute.xlu0 %1833
      %vm1836 = vcmask 1044480
      %v1837 = vrot.slane %v1818, 3
      %v1838 = vrot.slane %v1819, 3
      %v1839 = vsel %vm1836, %v1837, %v1838
      %1840 = vrot.lane.b32.xlu0 %v1839, 96
      %v1841 = vpop.permute.xlu0 %1840
      %v1843 = vrot.slane %v1818, 4
      %v1844 = vrot.slane %v1819, 4
      %v1845 = vsel %vm1282, %v1843, %v1844
      %vm1847 = vcmask 1042432
      %v1848 = vrot.slane %v1818, 5
      %v1849 = vrot.slane %v1819, 5
      %v1850 = vsel %vm1847, %v1848, %v1849
      %1851 = vrot.lane.b32.xlu0 %v1850, 32
      %v1852 = vpop.permute.xlu0 %1851
      %vm1854 = vcmask 1041408
      %v1855 = vrot.slane %v1818, 6
      %v1856 = vrot.slane %v1819, 6
      %v1857 = vsel %vm1854, %v1855, %v1856
      %1858 = vrot.lane.b32.xlu0 %v1857, 64
      %v1859 = vpop.permute.xlu0 %1858
      %vm1861 = vcmask 1040384
      %v1862 = vrot.slane %v1818, 7
      %v1863 = vrot.slane %v1819, 7
      %v1864 = vsel %vm1861, %v1862, %v1863
      %1865 = vrot.lane.b32.xlu0 %v1864, 96
      %v1866 = vpop.permute.xlu0 %1865
      %v1868 = vsel %vm1040, %v1818, %v1827
      %vm1869 = vcmask 523264
      %v1870 = vsel %vm1869, %v1868, %v1834
      %vm1871 = vcmask 785408
      %v1872 = vsel %vm1871, %v1870, %v1841
      %v1873 = vsel %vm1040, %v1845, %v1852
      %v1874 = vsel %vm1869, %v1873, %v1859
      %v1875 = vsel %vm1871, %v1874, %v1866
      %v1876 = vpack.c.bf16 %v1872, %v1872
      %v1877 = vpack.c.bf16 %v1875, %v1875
      %v1878 = vpack.c.bf16 %v1819, %v1819
      %v1880 = vlaneseq
      %v1881 = vshrl.u32 %v1880, 7
      %v1882 = vsub.s32 0, %v1881
      %v1883 = vrot.slane %v1814, %v1882
      %v1921 = vunpack.c.l.b16 %v1778
      %v1922 = vunpack.c.l.b16 %v1779
      %v1923 = vunpack.c.l.b16 %v1780
      %v1924 = vunpack.c.l.b16 %v1781
      %v1925 = vunpack.c.l.b16 %v1782
      %v1926 = vunpack.c.l.b16 %v1783
      %v1927 = vunpack.c.l.b16 %v1784
      %v1928 = vunpack.c.l.b16 %v1785
      %v1929 = vunpack.c.l.b16 %v1786
      %v1930 = vunpack.c.l.b16 %v1787
      %v1931 = vunpack.c.l.b16 %v1788
      %v1932 = vunpack.c.l.b16 %v1789
      %v1933 = vunpack.c.l.b16 %v1790
      %v1934 = vunpack.c.l.b16 %v1791
      %v1935 = vunpack.c.l.b16 %v1792
      %v1936 = vunpack.c.l.b16 %v1793
      %v1937 = vunpack.c.l.b16 %v1794
      %v1938 = vunpack.c.l.b16 %v1795
      %v1939 = vunpack.c.l.b16 %v1796
      %v1940 = vunpack.c.l.b16 %v1797
      %v1941 = vunpack.c.l.b16 %v1798
      %v1942 = vunpack.c.l.b16 %v1799
      %v1943 = vunpack.c.l.b16 %v1800
      %v1944 = vunpack.c.l.b16 %v1801
      %v1945 = vunpack.c.l.b16 %v1802
      %v1946 = vunpack.c.l.b16 %v1803
      %v1947 = vunpack.c.l.b16 %v1804
      %v1948 = vunpack.c.l.b16 %v1805
      %v1949 = vunpack.c.l.b16 %v1806
      %v1950 = vunpack.c.l.b16 %v1807
      %v1951 = vunpack.c.l.b16 %v1808
      %v1952 = vunpack.c.l.b16 %v1809
      %v1953 = vunpack.c.l.b16 %v1810
      %v1954 = vunpack.c.l.b16 %v1811
      %v1955 = vunpack.c.l.b16 %v1812
      %v1956 = vunpack.c.l.b16 %v1813
      %v1957 = vpack.c.b16 %v1922, %v1921
      %v1958 = vpack.c.b16 %v1924, %v1923
      %v1959 = vpack.c.b16 %v1926, %v1925
      %v1960 = vpack.c.b16 %v1928, %v1927
      %v1961 = vpack.c.b16 %v1930, %v1929
      %v1962 = vpack.c.b16 %v1932, %v1931
      %v1963 = vpack.c.b16 %v1934, %v1933
      %v1964 = vpack.c.b16 %v1936, %v1935
      %v1965 = vpack.c.b16 %v1938, %v1937
      %v1966 = vpack.c.b16 %v1940, %v1939
      %v1967 = vpack.c.b16 %v1942, %v1941
      %v1968 = vpack.c.b16 %v1944, %v1943
      %v1969 = vpack.c.b16 %v1946, %v1945
      %v1970 = vpack.c.b16 %v1948, %v1947
      %v1971 = vpack.c.b16 %v1950, %v1949
      %v1972 = vpack.c.b16 %v1952, %v1951
      %v1973 = vpack.c.b16 %v1954, %v1953
      %v1974 = vpack.c.b16 %v1956, %v1955
      %v1994 = vsel %vm1040, %v1878, 0
      %1996 = vmatprep.subr.bf16.mxu0 0
      %1997 = vmatpush1.bf16.msra.mxu0 %v1957
      %1998 = vmatprep.subr.bf16.mxu0 0
      %1999 = vmatpush1.bf16.msra.mxu0 %v1958
      %2000 = vmatprep.subr.bf16.mxu0 0
      %2001 = vmatpush1.bf16.msra.mxu0 %v1959
      %2002 = vmatprep.subr.bf16.mxu0 0
      %2003 = vmatpush1.bf16.msra.mxu0 %v1960
      %2004 = vmatprep.subr.bf16.mxu0 0
      %2005 = vmatpush1.bf16.msra.mxu0 %v1961
      %2006 = vmatprep.subr.bf16.mxu0 0
      %2007 = vmatpush1.bf16.msra.mxu0 %v1962
      %2008 = vmatprep.subr.bf16.mxu0 0
      %2009 = vmatpush1.bf16.msra.mxu0 %v1963
      %2010 = vmatprep.subr.bf16.mxu0 0
      %2011 = vmatpush1.bf16.msra.mxu0 %v1964
      %2012 = vmatprep.subr.bf16.mxu0 0
      %2013 = vmatpush1.bf16.msra.mxu0 %v1965
      %2014 = vmatprep.subr.bf16.mxu0 0
      %2015 = vmatpush1.bf16.msra.mxu0 %v1966
      %2016 = vmatprep.subr.bf16.mxu0 0
      %2017 = vmatpush1.bf16.msra.mxu0 %v1967
      %2018 = vmatprep.subr.bf16.mxu0 0
      %2019 = vmatpush1.bf16.msra.mxu0 %v1968
      %2020 = vmatprep.subr.bf16.mxu0 0
      %2021 = vmatpush1.bf16.msra.mxu0 %v1969
      %2022 = vmatprep.subr.bf16.mxu0 0
      %2023 = vmatpush1.bf16.msra.mxu0 %v1970
      %2024 = vmatprep.subr.bf16.mxu0 0
      %2025 = vmatpush1.bf16.msra.mxu0 %v1971
      %2026 = vmatprep.subr.bf16.mxu0 0
      %2027 = vmatpush1.bf16.msra.mxu0 %v1972
      %2028 = vmatprep.mubr.bf16.mxu0 %v1877
      %2029 = vmatmul.mubr.bf16.gmra.mrb[0].mxu0 %v1876
      %v2030 = vpop.f32.mrb[0].mxu0
      %v2031 = vadd.f32 %v1883, %v2030
      %v2032 = vpop.f32.mrb[0].mxu0
      %v2033 = vpop.f32.mrb[0].mxu0
      %v2034 = vpop.f32.mrb[0].mxu0
      %2035 = vdwg.mxu0
      %2036 = vmatprep.subr.bf16.mxu0 0
      %2037 = vmatpush1.bf16.msra.mxu0 %v1973
      %2038 = vmatprep.subr.bf16.mxu0 0
      %2039 = vmatpush1.bf16.msra.mxu0 %v1974
      %2040 = vmatprep.subr.bf16.mxu0 0
      %2041 = vmatpush1.bf16.msra.mxu0 0
      %2042 = vmatprep.subr.bf16.mxu0 0
      %2043 = vmatpush1.bf16.msra.mxu0 0
      %2044 = vmatprep.subr.bf16.mxu0 0
      %2045 = vmatpush1.bf16.msra.mxu0 0
      %2046 = vmatprep.subr.bf16.mxu0 0
      %2047 = vmatpush1.bf16.msra.mxu0 0
      %2048 = vmatprep.subr.bf16.mxu0 0
      %2049 = vmatpush1.bf16.msra.mxu0 0
      %2050 = vmatprep.subr.bf16.mxu0 0
      %2051 = vmatpush1.bf16.msra.mxu0 0
      %2052 = vmatprep.subr.bf16.mxu0 0
      %2053 = vmatpush1.bf16.msra.mxu0 0
      %2054 = vmatprep.subr.bf16.mxu0 0
      %2055 = vmatpush1.bf16.msra.mxu0 0
      %2056 = vmatprep.subr.bf16.mxu0 0
      %2057 = vmatpush1.bf16.msra.mxu0 0
      %2058 = vmatprep.subr.bf16.mxu0 0
      %2059 = vmatpush1.bf16.msra.mxu0 0
      %2060 = vmatprep.subr.bf16.mxu0 0
      %2061 = vmatpush1.bf16.msra.mxu0 0
      %2062 = vmatprep.subr.bf16.mxu0 0
      %2063 = vmatpush1.bf16.msra.mxu0 0
      %2064 = vmatprep.subr.bf16.mxu0 0
      %2065 = vmatpush1.bf16.msra.mxu0 0
      %2066 = vmatprep.subr.bf16.mxu0 0
      %2067 = vmatpush1.bf16.msra.mxu0 0
      %2068 = vmatprep.mubr.bf16.mxu0 0
      %2069 = vmatmul.mubr.bf16.gmra.mrb[0].mxu0 %v1994
      %v2070 = vpop.f32.mrb[0].mxu0
      %v2071 = vadd.f32 %v2031, %v2070
      %v2072 = vpop.f32.mrb[0].mxu0
      %v2073 = vpop.f32.mrb[0].mxu0
      %v2074 = vpop.f32.mrb[0].mxu0
      %2075 = vdwg.mxu0
      %v2076 = vmax.f32 %v2071, 0.0
      %v2077 = vpack.c.bf16 %v2076, %v2076
      %v2078 = vld [vmem:[%s33] sm:$0xf]
      %v2079 = vld [vmem:[%s33 + $0x4] sm:$0xf]
      %v2080 = vld [vmem:[%s33 + $0x8] sm:$0xf]
      %v2081 = vld [vmem:[%s33 + $0xc] sm:$0xf]
      %v2082 = vld [vmem:[%s33 + $0x10] sm:$0xf]
      %v2083 = vld [vmem:[%s33 + $0x14] sm:$0xf]
      %v2084 = vld [vmem:[%s33 + $0x18] sm:$0xf]
      %v2085 = vld [vmem:[%s33 + $0x1c] sm:$0xf]
      %v2086 = vld [vmem:[%s35] sm:$0x1]
      %v2088 = vlaneseq
      %v2089 = vshrl.u32 %v2088, 7
      %v2090 = vsub.s32 0, %v2089
      %v2091 = vrot.slane %v2086, %v2090
      %v2101 = vunpack.c.l.b16 %v2078
      %v2102 = vunpack.c.l.b16 %v2079
      %v2103 = vunpack.c.l.b16 %v2080
      %v2104 = vunpack.c.l.b16 %v2081
      %v2105 = vunpack.c.l.b16 %v2082
      %v2106 = vunpack.c.l.b16 %v2083
      %v2107 = vunpack.c.l.b16 %v2084
      %v2108 = vunpack.c.l.b16 %v2085
      %v2109 = vpack.c.b16 %v2102, %v2101
      %v2110 = vpack.c.b16 %v2104, %v2103
      %v2111 = vpack.c.b16 %v2106, %v2105
      %v2112 = vpack.c.b16 %v2108, %v2107
      %v2118 = vsel %vm1869, %v2077, 0
      %2120 = vmatprep.subr.bf16.mxu0 0
      %2121 = vmatpush1.bf16.msra.mxu0 %v2109
      %2122 = vmatprep.subr.bf16.mxu0 0
      %2123 = vmatpush1.bf16.msra.mxu0 %v2110
      %2124 = vmatprep.subr.bf16.mxu0 0
      %2125 = vmatpush1.bf16.msra.mxu0 %v2111
      %2126 = vmatprep.subr.bf16.mxu0 0
      %2127 = vmatpush1.bf16.msra.mxu0 %v2112
      %2128 = vmatprep.subr.bf16.mxu0 0
      %2129 = vmatpush1.bf16.msra.mxu0 0
      %2130 = vmatprep.subr.bf16.mxu0 0
      %2131 = vmatpush1.bf16.msra.mxu0 0
      %2132 = vmatprep.subr.bf16.mxu0 0
      %2133 = vmatpush1.bf16.msra.mxu0 0
      %2134 = vmatprep.subr.bf16.mxu0 0
      %2135 = vmatpush1.bf16.msra.mxu0 0
      %2136 = vmatprep.subr.bf16.mxu0 0
      %2137 = vmatpush1.bf16.msra.mxu0 0
      %2138 = vmatprep.subr.bf16.mxu0 0
      %2139 = vmatpush1.bf16.msra.mxu0 0
      %2140 = vmatprep.subr.bf16.mxu0 0
      %2141 = vmatpush1.bf16.msra.mxu0 0
      %2142 = vmatprep.subr.bf16.mxu0 0
      %2143 = vmatpush1.bf16.msra.mxu0 0
      %2144 = vmatprep.subr.bf16.mxu0 0
      %2145 = vmatpush1.bf16.msra.mxu0 0
      %2146 = vmatprep.subr.bf16.mxu0 0
      %2147 = vmatpush1.bf16.msra.mxu0 0
      %2148 = vmatprep.subr.bf16.mxu0 0
      %2149 = vmatpush1.bf16.msra.mxu0 0
      %2150 = vmatprep.subr.bf16.mxu0 0
      %2151 = vmatpush1.bf16.msra.mxu0 0
      %2152 = vmatprep.mubr.bf16.mxu0 0
      %2153 = vmatmul.mubr.bf16.gmra.mrb[0].mxu0 %v2118
      %v2154 = vpop.f32.mrb[0].mxu0
      %v2155 = vadd.f32 %v2091, %v2154
      %v2156 = vpop.f32.mrb[0].mxu0
      %v2157 = vpop.f32.mrb[0].mxu0
      %v2158 = vpop.f32.mrb[0].mxu0
      %2159 = vdwg.mxu0
      %v2160 = vadd.f32 %v2155, %v1777
      %v2161 = vld [vmem:[%s37] sm:$0x1]
      %v2162 = vld [vmem:[%s39] sm:$0x1]
      %v2163 = vsel %vm1040, %v2160, 0.0
      %2164 = vadd.xlane.f32.xlu0 %v2163
      %v2165 = vpop.xlane.xlu0 %2164
      %v2166 = vmul.f32 %v2165, %v1747
      %v2167 = vsub.f32 %v2160, %v2166
      %v2168 = vmul.f32 %v2167, %v2167
      %v2169 = vsel %vm1040, %v2168, 0.0
      %2170 = vadd.xlane.f32.xlu0 %v2169
      %v2171 = vpop.xlane.xlu0 %2170
      %v2172 = vmul.f32 %v2171, %v1747
      %v2173 = vadd.f32 %v2172, 1e-05
      %v2174 = vrsqrt.pop %v2173
      %v2175 = vmul.f32 %v2167, %v2174
      %v2177 = vlaneseq
      %v2178 = vshrl.u32 %v2177, 7
      %v2179 = vsub.s32 0, %v2178
      %v2180 = vrot.slane %v2161, %v2179
      %v2182 = vmul.f32 %v2175, %v2180
      %v2184 = vlaneseq
      %v2185 = vshrl.u32 %v2184, 7
      %v2186 = vsub.s32 0, %v2185
      %v2187 = vrot.slane %v2162, %v2186
      %v2189 = vadd.f32 %v2182, %v2187
      %v2190 = vmul.f32 %v2189, %v1775
      %v2191 = vld [vmem:[%s1001] sm:$0x1]
      %v2193 = vlaneseq
      %v2194 = vshrl.u32 %v2193, 7
      %v2195 = vsub.s32 0, %v2194
      %v2196 = vrot.slane %v2191, %v2195
      %v2198 = vadd.f32 %v2190, %v2196
      %2199 = vst.msk [vmem:[%s1005] sm:$0xff] %vm1040, %v2198
      %v2201 = vrot.slane %v2198, 7
      %v2203 = vsel %vm1861, 0.0, %v2201
      %v2204 = vsel %vm1861, %v2201, 0.0
      %v2207 = vrot.slane %v2203, 1
      %v2208 = vrot.slane %v2204, 1
      %v2209 = vsel %vm1822, %v2207, %v2208
      %2210 = vrot.lane.b32.xlu0 %v2209, 32
      %v2211 = vpop.permute.xlu0 %2210
      %v2213 = vrot.slane %v2203, 2
      %v2214 = vrot.slane %v2204, 2
      %v2215 = vsel %vm1829, %v2213, %v2214
      %2216 = vrot.lane.b32.xlu0 %v2215, 64
      %v2217 = vpop.permute.xlu0 %2216
      %v2219 = vsel %vm1040, %v2203, %v2211
      %v2220 = vsel %vm1869, %v2219, %v2217
      %v2221 = vpack.c.bf16 %v2220, %v2220
      %v2222 = vld [vmem:[%s41] sm:$0xf]
      %v2223 = vld [vmem:[%s41 + $0x4] sm:$0xf]
      %v2224 = vld [vmem:[%s41 + $0x8] sm:$0xf]
      %v2225 = vld [vmem:[%s41 + $0xc] sm:$0xf]
      %v2226 = vld [vmem:[%s41 + $0x10] sm:$0xf]
      %v2227 = vld [vmem:[%s41 + $0x14] sm:$0xf]
      %v2228 = vld [vmem:[%s41 + $0x18] sm:$0xf]
      %v2229 = vld [vmem:[%s41 + $0x1c] sm:$0xf]
      %v2230 = vld [vmem:[%s41 + $0x20] sm:$0xf]
      %v2231 = vld [vmem:[%s41 + $0x24] sm:$0xf]
      %v2232 = vld [vmem:[%s41 + $0x28] sm:$0xf]
      %v2233 = vld [vmem:[%s41 + $0x2c] sm:$0xf]
      %v2234 = vld [vmem:[%s43] sm:$0x1]
      %v2236 = vlaneseq
      %v2237 = vshrl.u32 %v2236, 7
      %v2238 = vsub.s32 0, %v2237
      %v2239 = vrot.slane %v2234, %v2238
      %v2253 = vunpack.c.l.b16 %v2222
      %v2254 = vunpack.c.l.b16 %v2223
      %v2255 = vunpack.c.l.b16 %v2224
      %v2256 = vunpack.c.l.b16 %v2225
      %v2257 = vunpack.c.l.b16 %v2226
      %v2258 = vunpack.c.l.b16 %v2227
      %v2259 = vunpack.c.l.b16 %v2228
      %v2260 = vunpack.c.l.b16 %v2229
      %v2261 = vunpack.c.l.b16 %v2230
      %v2262 = vunpack.c.l.b16 %v2231
      %v2263 = vunpack.c.l.b16 %v2232
      %v2264 = vunpack.c.l.b16 %v2233
      %v2265 = vpack.c.b16 %v2254, %v2253
      %v2266 = vpack.c.b16 %v2256, %v2255
      %v2267 = vpack.c.b16 %v2258, %v2257
      %v2268 = vpack.c.b16 %v2260, %v2259
      %v2269 = vpack.c.b16 %v2262, %v2261
      %v2270 = vpack.c.b16 %v2264, %v2263
      %v2278 = vsel %vm1871, %v2221, 0
      %2280 = vmatprep.subr.bf16.mxu0 0
      %2281 = vmatpush1.bf16.msra.mxu0 %v2265
      %2282 = vmatprep.subr.bf16.mxu0 0
      %2283 = vmatpush1.bf16.msra.mxu0 %v2266
      %2284 = vmatprep.subr.bf16.mxu0 0
      %2285 = vmatpush1.bf16.msra.mxu0 %v2267
      %2286 = vmatprep.subr.bf16.mxu0 0
      %2287 = vmatpush1.bf16.msra.mxu0 %v2268
      %2288 = vmatprep.subr.bf16.mxu0 0
      %2289 = vmatpush1.bf16.msra.mxu0 %v2269
      %2290 = vmatprep.subr.bf16.mxu0 0
      %2291 = vmatpush1.bf16.msra.mxu0 %v2270
      %2292 = vmatprep.subr.bf16.mxu0 0
      %2293 = vmatpush1.bf16.msra.mxu0 0
      %2294 = vmatprep.subr.bf16.mxu0 0
      %2295 = vmatpush1.bf16.msra.mxu0 0
      %2296 = vmatprep.subr.bf16.mxu0 0
      %2297 = vmatpush1.bf16.msra.mxu0 0
      %2298 = vmatprep.subr.bf16.mxu0 0
      %2299 = vmatpush1.bf16.msra.mxu0 0
      %2300 = vmatprep.subr.bf16.mxu0 0
      %2301 = vmatpush1.bf16.msra.mxu0 0
      %2302 = vmatprep.subr.bf16.mxu0 0
      %2303 = vmatpush1.bf16.msra.mxu0 0
      %2304 = vmatprep.subr.bf16.mxu0 0
      %2305 = vmatpush1.bf16.msra.mxu0 0
      %2306 = vmatprep.subr.bf16.mxu0 0
      %2307 = vmatpush1.bf16.msra.mxu0 0
      %2308 = vmatprep.subr.bf16.mxu0 0
      %2309 = vmatpush1.bf16.msra.mxu0 0
      %2310 = vmatprep.subr.bf16.mxu0 0
      %2311 = vmatpush1.bf16.msra.mxu0 0
      %2312 = vmatprep.mubr.bf16.mxu0 0
      %2313 = vmatmul.mubr.bf16.gmra.mrb[0].mxu0 %v2278
      %v2314 = vpop.f32.mrb[0].mxu0
      %v2315 = vadd.f32 %v2239, %v2314
      %v2316 = vpop.f32.mrb[0].mxu0
      %v2317 = vpop.f32.mrb[0].mxu0
      %v2318 = vpop.f32.mrb[0].mxu0
      %2319 = vdwg.mxu0
      %v2320 = vmax.f32 %v2315, 0.0
      %v2321 = vld [vmem:[%s45] sm:$0x1]
      %v2322 = vld [vmem:[%s47] sm:$0x1]
      %v2323 = vsel %vm1040, %v2320, 0.0
      %2324 = vadd.xlane.f32.xlu0 %v2323
      %v2325 = vpop.xlane.xlu0 %2324
      %v2326 = vmul.f32 %v2325, %v1747
      %v2327 = vsub.f32 %v2320, %v2326
      %v2328 = vmul.f32 %v2327, %v2327
      %v2329 = vsel %vm1040, %v2328, 0.0
      %2330 = vadd.xlane.f32.xlu0 %v2329
      %v2331 = vpop.xlane.xlu0 %2330
      %v2332 = vmul.f32 %v2331, %v1747
      %v2333 = vadd.f32 %v2332, 1e-05
      %v2334 = vrsqrt.pop %v2333
      %v2335 = vmul.f32 %v2327, %v2334
      %v2337 = vlaneseq
      %v2338 = vshrl.u32 %v2337, 7
      %v2339 = vsub.s32 0, %v2338
      %v2340 = vrot.slane %v2321, %v2339
      %v2342 = vmul.f32 %v2335, %v2340
      %v2344 = vlaneseq
      %v2345 = vshrl.u32 %v2344, 7
      %v2346 = vsub.s32 0, %v2345
      %v2347 = vrot.slane %v2322, %v2346
      %v2349 = vadd.f32 %v2342, %v2347
      %v2350 = vld [vmem:[%s49] sm:$0xf]
      %v2351 = vld [vmem:[%s49 + $0x4] sm:$0xf]
      %v2352 = vld [vmem:[%s49 + $0x8] sm:$0xf]
      %v2353 = vld [vmem:[%s49 + $0xc] sm:$0xf]
      %v2354 = vld [vmem:[%s49 + $0x10] sm:$0xf]
      %v2355 = vld [vmem:[%s49 + $0x14] sm:$0xf]
      %v2356 = vld [vmem:[%s49 + $0x18] sm:$0xf]
      %v2357 = vld [vmem:[%s49 + $0x1c] sm:$0xf]
      %v2358 = vld [vmem:[%s49 + $0x20] sm:$0xf]
      %v2359 = vld [vmem:[%s49 + $0x24] sm:$0xf]
      %v2360 = vld [vmem:[%s49 + $0x28] sm:$0xf]
      %v2361 = vld [vmem:[%s49 + $0x2c] sm:$0xf]
      %v2362 = vld [vmem:[%s51] sm:$0x1]
      %v2364 = vrot.slane %v2349, 7
      %v2366 = vsel %vm1861, 0.0, %v2364
      %v2367 = vsel %vm1861, %v2364, 0.0
      %v2370 = vrot.slane %v2366, 1
      %v2371 = vrot.slane %v2367, 1
      %v2372 = vsel %vm1822, %v2370, %v2371
      %2373 = vrot.lane.b32.xlu0 %v2372, 32
      %v2374 = vpop.permute.xlu0 %2373
      %v2376 = vrot.slane %v2366, 2
      %v2377 = vrot.slane %v2367, 2
      %v2378 = vsel %vm1829, %v2376, %v2377
      %2379 = vrot.lane.b32.xlu0 %v2378, 64
      %v2380 = vpop.permute.xlu0 %2379
      %v2382 = vsel %vm1040, %v2366, %v2374
      %v2383 = vsel %vm1869, %v2382, %v2380
      %v2384 = vpack.c.bf16 %v2383, %v2383
      %v2386 = vlaneseq
      %v2387 = vshrl.u32 %v2386, 7
      %v2388 = vsub.s32 0, %v2387
      %v2389 = vrot.slane %v2362, %v2388
      %v2403 = vunpack.c.l.b16 %v2350
      %v2404 = vunpack.c.l.b16 %v2351
      %v2405 = vunpack.c.l.b16 %v2352
      %v2406 = vunpack.c.l.b16 %v2353
      %v2407 = vunpack.c.l.b16 %v2354
      %v2408 = vunpack.c.l.b16 %v2355
      %v2409 = vunpack.c.l.b16 %v2356
      %v2410 = vunpack.c.l.b16 %v2357
      %v2411 = vunpack.c.l.b16 %v2358
      %v2412 = vunpack.c.l.b16 %v2359
      %v2413 = vunpack.c.l.b16 %v2360
      %v2414 = vunpack.c.l.b16 %v2361
      %v2415 = vpack.c.b16 %v2404, %v2403
      %v2416 = vpack.c.b16 %v2406, %v2405
      %v2417 = vpack.c.b16 %v2408, %v2407
      %v2418 = vpack.c.b16 %v2410, %v2409
      %v2419 = vpack.c.b16 %v2412, %v2411
      %v2420 = vpack.c.b16 %v2414, %v2413
      %v2428 = vsel %vm1871, %v2384, 0
      %2430 = vmatprep.subr.bf16.mxu0 0
      %2431 = vmatpush1.bf16.msra.mxu0 %v2415
      %2432 = vmatprep.subr.bf16.mxu0 0
      %2433 = vmatpush1.bf16.msra.mxu0 %v2416
      %2434 = vmatprep.subr.bf16.mxu0 0
      %2435 = vmatpush1.bf16.msra.mxu0 %v2417
      %2436 = vmatprep.subr.bf16.mxu0 0
      %2437 = vmatpush1.bf16.msra.mxu0 %v2418
      %2438 = vmatprep.subr.bf16.mxu0 0
      %2439 = vmatpush1.bf16.msra.mxu0 %v2419
      %2440 = vmatprep.subr.bf16.mxu0 0
      %2441 = vmatpush1.bf16.msra.mxu0 %v2420
      %2442 = vmatprep.subr.bf16.mxu0 0
      %2443 = vmatpush1.bf16.msra.mxu0 0
      %2444 = vmatprep.subr.bf16.mxu0 0
      %2445 = vmatpush1.bf16.msra.mxu0 0
      %2446 = vmatprep.subr.bf16.mxu0 0
      %2447 = vmatpush1.bf16.msra.mxu0 0
      %2448 = vmatprep.subr.bf16.mxu0 0
      %2449 = vmatpush1.bf16.msra.mxu0 0
      %2450 = vmatprep.subr.bf16.mxu0 0
      %2451 = vmatpush1.bf16.msra.mxu0 0
      %2452 = vmatprep.subr.bf16.mxu0 0
      %2453 = vmatpush1.bf16.msra.mxu0 0
      %2454 = vmatprep.subr.bf16.mxu0 0
      %2455 = vmatpush1.bf16.msra.mxu0 0
      %2456 = vmatprep.subr.bf16.mxu0 0
      %2457 = vmatpush1.bf16.msra.mxu0 0
      %2458 = vmatprep.subr.bf16.mxu0 0
      %2459 = vmatpush1.bf16.msra.mxu0 0
      %2460 = vmatprep.subr.bf16.mxu0 0
      %2461 = vmatpush1.bf16.msra.mxu0 0
      %2462 = vmatprep.mubr.bf16.mxu0 0
      %2463 = vmatmul.mubr.bf16.gmra.mrb[0].mxu0 %v2428
      %v2464 = vpop.f32.mrb[0].mxu0
      %v2465 = vadd.f32 %v2389, %v2464
      %v2466 = vpop.f32.mrb[0].mxu0
      %v2467 = vpop.f32.mrb[0].mxu0
      %v2468 = vpop.f32.mrb[0].mxu0
      %2469 = vdwg.mxu0
      %v2470 = vmax.f32 %v2465, 0.0
      %v2471 = vld [vmem:[%s53] sm:$0x1]
      %v2472 = vld [vmem:[%s55] sm:$0x1]
      %v2473 = vsel %vm1040, %v2470, 0.0
      %2474 = vadd.xlane.f32.xlu0 %v2473
      %v2475 = vpop.xlane.xlu0 %2474
      %v2476 = vmul.f32 %v2475, %v1747
      %v2477 = vsub.f32 %v2470, %v2476
      %v2478 = vmul.f32 %v2477, %v2477
      %v2479 = vsel %vm1040, %v2478, 0.0
      %2480 = vadd.xlane.f32.xlu0 %v2479
      %v2481 = vpop.xlane.xlu0 %2480
      %v2482 = vmul.f32 %v2481, %v1747
      %v2483 = vadd.f32 %v2482, 1e-05
      %v2484 = vrsqrt.pop %v2483
      %v2485 = vmul.f32 %v2477, %v2484
      %v2487 = vlaneseq
      %v2488 = vshrl.u32 %v2487, 7
      %v2489 = vsub.s32 0, %v2488
      %v2490 = vrot.slane %v2471, %v2489
      %v2492 = vmul.f32 %v2485, %v2490
      %v2494 = vlaneseq
      %v2495 = vshrl.u32 %v2494, 7
      %v2496 = vsub.s32 0, %v2495
      %v2497 = vrot.slane %v2472, %v2496
      %v2499 = vadd.f32 %v2492, %v2497
      %v2500 = vpack.c.bf16 %v2499, %v2499
      %v2501 = vld [vmem:[%s57] sm:$0xf]
      %v2502 = vld [vmem:[%s57 + $0x4] sm:$0xf]
      %v2503 = vld [vmem:[%s57 + $0x8] sm:$0xf]
      %v2504 = vld [vmem:[%s57 + $0xc] sm:$0xf]
      %v2505 = vld [vmem:[%s59] sm:$0x1]
      %v2507 = vlaneseq
      %v2508 = vshrl.u32 %v2507, 7
      %v2509 = vsub.s32 0, %v2508
      %v2510 = vrot.slane %v2505, %v2509
      %v2516 = vunpack.c.l.b16 %v2501
      %v2517 = vunpack.c.l.b16 %v2502
      %v2518 = vunpack.c.l.b16 %v2503
      %v2519 = vunpack.c.l.b16 %v2504
      %v2520 = vpack.c.b16 %v2517, %v2516
      %v2521 = vpack.c.b16 %v2519, %v2518
      %v2525 = vsel %vm1040, %v2500, 0
      %2527 = vmatprep.subr.bf16.mxu0 0
      %2528 = vmatpush1.bf16.msra.mxu0 %v2520
      %2529 = vmatprep.subr.bf16.mxu0 0
      %2530 = vmatpush1.bf16.msra.mxu0 %v2521
      %2531 = vmatprep.subr.bf16.mxu0 0
      %2532 = vmatpush1.bf16.msra.mxu0 0
      %2533 = vmatprep.subr.bf16.mxu0 0
      %2534 = vmatpush1.bf16.msra.mxu0 0
      %2535 = vmatprep.subr.bf16.mxu0 0
      %2536 = vmatpush1.bf16.msra.mxu0 0
      %2537 = vmatprep.subr.bf16.mxu0 0
      %2538 = vmatpush1.bf16.msra.mxu0 0
      %2539 = vmatprep.subr.bf16.mxu0 0
      %2540 = vmatpush1.bf16.msra.mxu0 0
      %2541 = vmatprep.subr.bf16.mxu0 0
      %2542 = vmatpush1.bf16.msra.mxu0 0
      %2543 = vmatprep.subr.bf16.mxu0 0
      %2544 = vmatpush1.bf16.msra.mxu0 0
      %2545 = vmatprep.subr.bf16.mxu0 0
      %2546 = vmatpush1.bf16.msra.mxu0 0
      %2547 = vmatprep.subr.bf16.mxu0 0
      %2548 = vmatpush1.bf16.msra.mxu0 0
      %2549 = vmatprep.subr.bf16.mxu0 0
      %2550 = vmatpush1.bf16.msra.mxu0 0
      %2551 = vmatprep.subr.bf16.mxu0 0
      %2552 = vmatpush1.bf16.msra.mxu0 0
      %2553 = vmatprep.subr.bf16.mxu0 0
      %2554 = vmatpush1.bf16.msra.mxu0 0
      %2555 = vmatprep.subr.bf16.mxu0 0
      %2556 = vmatpush1.bf16.msra.mxu0 0
      %2557 = vmatprep.subr.bf16.mxu0 0
      %2558 = vmatpush1.bf16.msra.mxu0 0
      %2559 = vmatprep.mubr.bf16.mxu0 0
      %2560 = vmatmul.mubr.bf16.gmra.mrb[0].mxu0 %v2525
      %v2561 = vpop.f32.mrb[0].mxu0
      %v2562 = vadd.f32 %v2510, %v2561
      %v2563 = vpop.f32.mrb[0].mxu0
      %v2564 = vpop.f32.mrb[0].mxu0
      %v2565 = vpop.f32.mrb[0].mxu0
      %2566 = vdwg.mxu0
      %v2567 = vmul.f32 %v2562, %v1012
      %s2568 = scalar_lea.vmem %s41, 48
      %v2569 = vld [vmem:[%s2568] sm:$0xf]
      %v2570 = vld [vmem:[%s2568 + $0x4] sm:$0xf]
      %v2571 = vld [vmem:[%s2568 + $0x8] sm:$0xf]
      %v2572 = vld [vmem:[%s2568 + $0xc] sm:$0xf]
      %v2573 = vld [vmem:[%s2568 + $0x10] sm:$0xf]
      %v2574 = vld [vmem:[%s2568 + $0x14] sm:$0xf]
      %v2575 = vld [vmem:[%s2568 + $0x18] sm:$0xf]
      %v2576 = vld [vmem:[%s2568 + $0x1c] sm:$0xf]
      %v2577 = vld [vmem:[%s2568 + $0x20] sm:$0xf]
      %v2578 = vld [vmem:[%s2568 + $0x24] sm:$0xf]
      %v2579 = vld [vmem:[%s2568 + $0x28] sm:$0xf]
      %v2580 = vld [vmem:[%s2568 + $0x2c] sm:$0xf]
      %s2581 = scalar_lea.vmem %s43, 1
      %v2582 = vld [vmem:[%s2581] sm:$0x1]
      %v2584 = vlaneseq
      %v2585 = vshrl.u32 %v2584, 7
      %v2586 = vsub.s32 0, %v2585
      %v2587 = vrot.slane %v2582, %v2586
      %v2601 = vunpack.c.l.b16 %v2569
      %v2602 = vunpack.c.l.b16 %v2570
      %v2603 = vunpack.c.l.b16 %v2571
      %v2604 = vunpack.c.l.b16 %v2572
      %v2605 = vunpack.c.l.b16 %v2573
      %v2606 = vunpack.c.l.b16 %v2574
      %v2607 = vunpack.c.l.b16 %v2575
      %v2608 = vunpack.c.l.b16 %v2576
      %v2609 = vunpack.c.l.b16 %v2577
      %v2610 = vunpack.c.l.b16 %v2578
      %v2611 = vunpack.c.l.b16 %v2579
      %v2612 = vunpack.c.l.b16 %v2580
      %v2613 = vpack.c.b16 %v2602, %v2601
      %v2614 = vpack.c.b16 %v2604, %v2603
      %v2615 = vpack.c.b16 %v2606, %v2605
      %v2616 = vpack.c.b16 %v2608, %v2607
      %v2617 = vpack.c.b16 %v2610, %v2609
      %v2618 = vpack.c.b16 %v2612, %v2611
      %2625 = vmatprep.subr.bf16.mxu0 0
      %2626 = vmatpush1.bf16.msra.mxu0 %v2613
      %2627 = vmatprep.subr.bf16.mxu0 0
      %2628 = vmatpush1.bf16.msra.mxu0 %v2614
      %2629 = vmatprep.subr.bf16.mxu0 0
      %2630 = vmatpush1.bf16.msra.mxu0 %v2615
      %2631 = vmatprep.subr.bf16.mxu0 0
      %2632 = vmatpush1.bf16.msra.mxu0 %v2616
      %2633 = vmatprep.subr.bf16.mxu0 0
      %2634 = vmatpush1.bf16.msra.mxu0 %v2617
      %2635 = vmatprep.subr.bf16.mxu0 0
      %2636 = vmatpush1.bf16.msra.mxu0 %v2618
      %2637 = vmatprep.subr.bf16.mxu0 0
      %2638 = vmatpush1.bf16.msra.mxu0 0
      %2639 = vmatprep.subr.bf16.mxu0 0
      %2640 = vmatpush1.bf16.msra.mxu0 0
      %2641 = vmatprep.subr.bf16.mxu0 0
      %2642 = vmatpush1.bf16.msra.mxu0 0
      %2643 = vmatprep.subr.bf16.mxu0 0
      %2644 = vmatpush1.bf16.msra.mxu0 0
      %2645 = vmatprep.subr.bf16.mxu0 0
      %2646 = vmatpush1.bf16.msra.mxu0 0
      %2647 = vmatprep.subr.bf16.mxu0 0
      %2648 = vmatpush1.bf16.msra.mxu0 0
      %2649 = vmatprep.subr.bf16.mxu0 0
      %2650 = vmatpush1.bf16.msra.mxu0 0
      %2651 = vmatprep.subr.bf16.mxu0 0
      %2652 = vmatpush1.bf16.msra.mxu0 0
      %2653 = vmatprep.subr.bf16.mxu0 0
      %2654 = vmatpush1.bf16.msra.mxu0 0
      %2655 = vmatprep.subr.bf16.mxu0 0
      %2656 = vmatpush1.bf16.msra.mxu0 0
      %2657 = vmatprep.mubr.bf16.mxu0 0
      %2658 = vmatmul.mubr.bf16.gmra.mrb[0].mxu0 %v2278
      %v2659 = vpop.f32.mrb[0].mxu0
      %v2660 = vadd.f32 %v2587, %v2659
      %v2661 = vpop.f32.mrb[0].mxu0
      %v2662 = vpop.f32.mrb[0].mxu0
      %v2663 = vpop.f32.mrb[0].mxu0
      %2664 = vdwg.mxu0
      %v2665 = vmax.f32 %v2660, 0.0
      %s2666 = scalar_lea.vmem %s45, 1
      %v2667 = vld [vmem:[%s2666] sm:$0x1]
      %s2668 = scalar_lea.vmem %s47, 1
      %v2669 = vld [vmem:[%s2668] sm:$0x1]
      %v2670 = vsel %vm1040, %v2665, 0.0
      %2671 = vadd.xlane.f32.xlu0 %v2670
      %v2672 = vpop.xlane.xlu0 %2671
      %v2673 = vmul.f32 %v2672, %v1747
      %v2674 = vsub.f32 %v2665, %v2673
      %v2675 = vmul.f32 %v2674, %v2674
      %v2676 = vsel %vm1040, %v2675, 0.0
      %2677 = vadd.xlane.f32.xlu0 %v2676
      %v2678 = vpop.xlane.xlu0 %2677
      %v2679 = vmul.f32 %v2678, %v1747
      %v2680 = vadd.f32 %v2679, 1e-05
      %v2681 = vrsqrt.pop %v2680
      %v2682 = vmul.f32 %v2674, %v2681
      %v2684 = vlaneseq
      %v2685 = vshrl.u32 %v2684, 7
      %v2686 = vsub.s32 0, %v2685
      %v2687 = vrot.slane %v2667, %v2686
      %v2689 = vmul.f32 %v2682, %v2687
      %v2691 = vlaneseq
      %v2692 = vshrl.u32 %v2691, 7
      %v2693 = vsub.s32 0, %v2692
      %v2694 = vrot.slane %v2669, %v2693
      %v2696 = vadd.f32 %v2689, %v2694
      %s2697 = scalar_lea.vmem %s49, 48
      %v2698 = vld [vmem:[%s2697] sm:$0xf]
      %v2699 = vld [vmem:[%s2697 + $0x4] sm:$0xf]
      %v2700 = vld [vmem:[%s2697 + $0x8] sm:$0xf]
      %v2701 = vld [vmem:[%s2697 + $0xc] sm:$0xf]
      %v2702 = vld [vmem:[%s2697 + $0x10] sm:$0xf]
      %v2703 = vld [vmem:[%s2697 + $0x14] sm:$0xf]
      %v2704 = vld [vmem:[%s2697 + $0x18] sm:$0xf]
      %v2705 = vld [vmem:[%s2697 + $0x1c] sm:$0xf]
      %v2706 = vld [vmem:[%s2697 + $0x20] sm:$0xf]
      %v2707 = vld [vmem:[%s2697 + $0x24] sm:$0xf]
      %v2708 = vld [vmem:[%s2697 + $0x28] sm:$0xf]
      %v2709 = vld [vmem:[%s2697 + $0x2c] sm:$0xf]
      %s2710 = scalar_lea.vmem %s51, 1
      %v2711 = vld [vmem:[%s2710] sm:$0x1]
      %v2713 = vrot.slane %v2696, 7
      %v2715 = vsel %vm1861, 0.0, %v2713
      %v2716 = vsel %vm1861, %v2713, 0.0
      %v2719 = vrot.slane %v2715, 1
      %v2720 = vrot.slane %v2716, 1
      %v2721 = vsel %vm1822, %v2719, %v2720
      %2722 = vrot.lane.b32.xlu0 %v2721, 32
      %v2723 = vpop.permute.xlu0 %2722
      %v2725 = vrot.slane %v2715, 2
      %v2726 = vrot.slane %v2716, 2
      %v2727 = vsel %vm1829, %v2725, %v2726
      %2728 = vrot.lane.b32.xlu0 %v2727, 64
      %v2729 = vpop.permute.xlu0 %2728
      %v2731 = vsel %vm1040, %v2715, %v2723
      %v2732 = vsel %vm1869, %v2731, %v2729
      %v2733 = vpack.c.bf16 %v2732, %v2732
      %v2735 = vlaneseq
      %v2736 = vshrl.u32 %v2735, 7
      %v2737 = vsub.s32 0, %v2736
      %v2738 = vrot.slane %v2711, %v2737
      %v2752 = vunpack.c.l.b16 %v2698
      %v2753 = vunpack.c.l.b16 %v2699
      %v2754 = vunpack.c.l.b16 %v2700
      %v2755 = vunpack.c.l.b16 %v2701
      %v2756 = vunpack.c.l.b16 %v2702
      %v2757 = vunpack.c.l.b16 %v2703
      %v2758 = vunpack.c.l.b16 %v2704
      %v2759 = vunpack.c.l.b16 %v2705
      %v2760 = vunpack.c.l.b16 %v2706
      %v2761 = vunpack.c.l.b16 %v2707
      %v2762 = vunpack.c.l.b16 %v2708
      %v2763 = vunpack.c.l.b16 %v2709
      %v2764 = vpack.c.b16 %v2753, %v2752
      %v2765 = vpack.c.b16 %v2755, %v2754
      %v2766 = vpack.c.b16 %v2757, %v2756
      %v2767 = vpack.c.b16 %v2759, %v2758
      %v2768 = vpack.c.b16 %v2761, %v2760
      %v2769 = vpack.c.b16 %v2763, %v2762
      %v2777 = vsel %vm1871, %v2733, 0
      %2779 = vmatprep.subr.bf16.mxu0 0
      %2780 = vmatpush1.bf16.msra.mxu0 %v2764
      %2781 = vmatprep.subr.bf16.mxu0 0
      %2782 = vmatpush1.bf16.msra.mxu0 %v2765
      %2783 = vmatprep.subr.bf16.mxu0 0
      %2784 = vmatpush1.bf16.msra.mxu0 %v2766
      %2785 = vmatprep.subr.bf16.mxu0 0
      %2786 = vmatpush1.bf16.msra.mxu0 %v2767
      %2787 = vmatprep.subr.bf16.mxu0 0
      %2788 = vmatpush1.bf16.msra.mxu0 %v2768
      %2789 = vmatprep.subr.bf16.mxu0 0
      %2790 = vmatpush1.bf16.msra.mxu0 %v2769
      %2791 = vmatprep.subr.bf16.mxu0 0
      %2792 = vmatpush1.bf16.msra.mxu0 0
      %2793 = vmatprep.subr.bf16.mxu0 0
      %2794 = vmatpush1.bf16.msra.mxu0 0
      %2795 = vmatprep.subr.bf16.mxu0 0
      %2796 = vmatpush1.bf16.msra.mxu0 0
      %2797 = vmatprep.subr.bf16.mxu0 0
      %2798 = vmatpush1.bf16.msra.mxu0 0
      %2799 = vmatprep.subr.bf16.mxu0 0
      %2800 = vmatpush1.bf16.msra.mxu0 0
      %2801 = vmatprep.subr.bf16.mxu0 0
      %2802 = vmatpush1.bf16.msra.mxu0 0
      %2803 = vmatprep.subr.bf16.mxu0 0
      %2804 = vmatpush1.bf16.msra.mxu0 0
      %2805 = vmatprep.subr.bf16.mxu0 0
      %2806 = vmatpush1.bf16.msra.mxu0 0
      %2807 = vmatprep.subr.bf16.mxu0 0
      %2808 = vmatpush1.bf16.msra.mxu0 0
      %2809 = vmatprep.subr.bf16.mxu0 0
      %2810 = vmatpush1.bf16.msra.mxu0 0
      %2811 = vmatprep.mubr.bf16.mxu0 0
      %2812 = vmatmul.mubr.bf16.gmra.mrb[0].mxu0 %v2777
      %v2813 = vpop.f32.mrb[0].mxu0
      %v2814 = vadd.f32 %v2738, %v2813
      %v2815 = vpop.f32.mrb[0].mxu0
      %v2816 = vpop.f32.mrb[0].mxu0
      %v2817 = vpop.f32.mrb[0].mxu0
      %2818 = vdwg.mxu0
      %v2819 = vmax.f32 %v2814, 0.0
      %s2820 = scalar_lea.vmem %s53, 1
      %v2821 = vld [vmem:[%s2820] sm:$0x1]
      %s2822 = scalar_lea.vmem %s55, 1
      %v2823 = vld [vmem:[%s2822] sm:$0x1]
      %v2824 = vsel %vm1040, %v2819, 0.0
      %2825 = vadd.xlane.f32.xlu0 %v2824
      %v2826 = vpop.xlane.xlu0 %2825
      %v2827 = vmul.f32 %v2826, %v1747
      %v2828 = vsub.f32 %v2819, %v2827
      %v2829 = vmul.f32 %v2828, %v2828
      %v2830 = vsel %vm1040, %v2829, 0.0
      %2831 = vadd.xlane.f32.xlu0 %v2830
      %v2832 = vpop.xlane.xlu0 %2831
      %v2833 = vmul.f32 %v2832, %v1747
      %v2834 = vadd.f32 %v2833, 1e-05
      %v2835 = vrsqrt.pop %v2834
      %v2836 = vmul.f32 %v2828, %v2835
      %v2838 = vlaneseq
      %v2839 = vshrl.u32 %v2838, 7
      %v2840 = vsub.s32 0, %v2839
      %v2841 = vrot.slane %v2821, %v2840
      %v2843 = vmul.f32 %v2836, %v2841
      %v2845 = vlaneseq
      %v2846 = vshrl.u32 %v2845, 7
      %v2847 = vsub.s32 0, %v2846
      %v2848 = vrot.slane %v2823, %v2847
      %v2850 = vadd.f32 %v2843, %v2848
      %v2851 = vpack.c.bf16 %v2850, %v2850
      %s2852 = scalar_lea.vmem %s57, 16
      %v2853 = vld [vmem:[%s2852] sm:$0xf]
      %v2854 = vld [vmem:[%s2852 + $0x4] sm:$0xf]
      %v2855 = vld [vmem:[%s2852 + $0x8] sm:$0xf]
      %v2856 = vld [vmem:[%s2852 + $0xc] sm:$0xf]
      %s2857 = scalar_lea.vmem %s59, 1
      %v2858 = vld [vmem:[%s2857] sm:$0x1]
      %v2860 = vlaneseq
      %v2861 = vshrl.u32 %v2860, 7
      %v2862 = vsub.s32 0, %v2861
      %v2863 = vrot.slane %v2858, %v2862
      %v2869 = vunpack.c.l.b16 %v2853
      %v2870 = vunpack.c.l.b16 %v2854
      %v2871 = vunpack.c.l.b16 %v2855
      %v2872 = vunpack.c.l.b16 %v2856
      %v2873 = vpack.c.b16 %v2870, %v2869
      %v2874 = vpack.c.b16 %v2872, %v2871
      %v2878 = vsel %vm1040, %v2851, 0
      %2880 = vmatprep.subr.bf16.mxu0 0
      %2881 = vmatpush1.bf16.msra.mxu0 %v2873
      %2882 = vmatprep.subr.bf16.mxu0 0
      %2883 = vmatpush1.bf16.msra.mxu0 %v2874
      %2884 = vmatprep.subr.bf16.mxu0 0
      %2885 = vmatpush1.bf16.msra.mxu0 0
      %2886 = vmatprep.subr.bf16.mxu0 0
      %2887 = vmatpush1.bf16.msra.mxu0 0
      %2888 = vmatprep.subr.bf16.mxu0 0
      %2889 = vmatpush1.bf16.msra.mxu0 0
      %2890 = vmatprep.subr.bf16.mxu0 0
      %2891 = vmatpush1.bf16.msra.mxu0 0
      %2892 = vmatprep.subr.bf16.mxu0 0
      %2893 = vmatpush1.bf16.msra.mxu0 0
      %2894 = vmatprep.subr.bf16.mxu0 0
      %2895 = vmatpush1.bf16.msra.mxu0 0
      %2896 = vmatprep.subr.bf16.mxu0 0
      %2897 = vmatpush1.bf16.msra.mxu0 0
      %2898 = vmatprep.subr.bf16.mxu0 0
      %2899 = vmatpush1.bf16.msra.mxu0 0
      %2900 = vmatprep.subr.bf16.mxu0 0
      %2901 = vmatpush1.bf16.msra.mxu0 0
      %2902 = vmatprep.subr.bf16.mxu0 0
      %2903 = vmatpush1.bf16.msra.mxu0 0
      %2904 = vmatprep.subr.bf16.mxu0 0
      %2905 = vmatpush1.bf16.msra.mxu0 0
      %2906 = vmatprep.subr.bf16.mxu0 0
      %2907 = vmatpush1.bf16.msra.mxu0 0
      %2908 = vmatprep.subr.bf16.mxu0 0
      %2909 = vmatpush1.bf16.msra.mxu0 0
      %2910 = vmatprep.subr.bf16.mxu0 0
      %2911 = vmatpush1.bf16.msra.mxu0 0
      %2912 = vmatprep.mubr.bf16.mxu0 0
      %2913 = vmatmul.mubr.bf16.gmra.mrb[0].mxu0 %v2878
      %v2914 = vpop.f32.mrb[0].mxu0
      %v2915 = vadd.f32 %v2863, %v2914
      %v2916 = vpop.f32.mrb[0].mxu0
      %v2917 = vpop.f32.mrb[0].mxu0
      %v2918 = vpop.f32.mrb[0].mxu0
      %2919 = vdwg.mxu0
      %v2920 = vmul.f32 %v2915, %v1012
      %s2921 = scalar_lea.vmem %s41, 96
      %v2922 = vld [vmem:[%s2921] sm:$0xf]
      %v2923 = vld [vmem:[%s2921 + $0x4] sm:$0xf]
      %v2924 = vld [vmem:[%s2921 + $0x8] sm:$0xf]
      %v2925 = vld [vmem:[%s2921 + $0xc] sm:$0xf]
      %v2926 = vld [vmem:[%s2921 + $0x10] sm:$0xf]
      %v2927 = vld [vmem:[%s2921 + $0x14] sm:$0xf]
      %v2928 = vld [vmem:[%s2921 + $0x18] sm:$0xf]
      %v2929 = vld [vmem:[%s2921 + $0x1c] sm:$0xf]
      %v2930 = vld [vmem:[%s2921 + $0x20] sm:$0xf]
      %v2931 = vld [vmem:[%s2921 + $0x24] sm:$0xf]
      %v2932 = vld [vmem:[%s2921 + $0x28] sm:$0xf]
      %v2933 = vld [vmem:[%s2921 + $0x2c] sm:$0xf]
      %s2934 = scalar_lea.vmem %s43, 2
      %v2935 = vld [vmem:[%s2934] sm:$0x1]
      %v2937 = vlaneseq
      %v2938 = vshrl.u32 %v2937, 7
      %v2939 = vsub.s32 0, %v2938
      %v2940 = vrot.slane %v2935, %v2939
      %v2954 = vunpack.c.l.b16 %v2922
      %v2955 = vunpack.c.l.b16 %v2923
      %v2956 = vunpack.c.l.b16 %v2924
      %v2957 = vunpack.c.l.b16 %v2925
      %v2958 = vunpack.c.l.b16 %v2926
      %v2959 = vunpack.c.l.b16 %v2927
      %v2960 = vunpack.c.l.b16 %v2928
      %v2961 = vunpack.c.l.b16 %v2929
      %v2962 = vunpack.c.l.b16 %v2930
      %v2963 = vunpack.c.l.b16 %v2931
      %v2964 = vunpack.c.l.b16 %v2932
      %v2965 = vunpack.c.l.b16 %v2933
      %v2966 = vpack.c.b16 %v2955, %v2954
      %v2967 = vpack.c.b16 %v2957, %v2956
      %v2968 = vpack.c.b16 %v2959, %v2958
      %v2969 = vpack.c.b16 %v2961, %v2960
      %v2970 = vpack.c.b16 %v2963, %v2962
      %v2971 = vpack.c.b16 %v2965, %v2964
      %2978 = vmatprep.subr.bf16.mxu0 0
      %2979 = vmatpush1.bf16.msra.mxu0 %v2966
      %2980 = vmatprep.subr.bf16.mxu0 0
      %2981 = vmatpush1.bf16.msra.mxu0 %v2967
      %2982 = vmatprep.subr.bf16.mxu0 0
      %2983 = vmatpush1.bf16.msra.mxu0 %v2968
      %2984 = vmatprep.subr.bf16.mxu0 0
      %2985 = vmatpush1.bf16.msra.mxu0 %v2969
      %2986 = vmatprep.subr.bf16.mxu0 0
      %2987 = vmatpush1.bf16.msra.mxu0 %v2970
      %2988 = vmatprep.subr.bf16.mxu0 0
      %2989 = vmatpush1.bf16.msra.mxu0 %v2971
      %2990 = vmatprep.subr.bf16.mxu0 0
      %2991 = vmatpush1.bf16.msra.mxu0 0
      %2992 = vmatprep.subr.bf16.mxu0 0
      %2993 = vmatpush1.bf16.msra.mxu0 0
      %2994 = vmatprep.subr.bf16.mxu0 0
      %2995 = vmatpush1.bf16.msra.mxu0 0
      %2996 = vmatprep.subr.bf16.mxu0 0
      %2997 = vmatpush1.bf16.msra.mxu0 0
      %2998 = vmatprep.subr.bf16.mxu0 0
      %2999 = vmatpush1.bf16.msra.mxu0 0
      %3000 = vmatprep.subr.bf16.mxu0 0
      %3001 = vmatpush1.bf16.msra.mxu0 0
      %3002 = vmatprep.subr.bf16.mxu0 0
      %3003 = vmatpush1.bf16.msra.mxu0 0
      %3004 = vmatprep.subr.bf16.mxu0 0
      %3005 = vmatpush1.bf16.msra.mxu0 0
      %3006 = vmatprep.subr.bf16.mxu0 0
      %3007 = vmatpush1.bf16.msra.mxu0 0
      %3008 = vmatprep.subr.bf16.mxu0 0
      %3009 = vmatpush1.bf16.msra.mxu0 0
      %3010 = vmatprep.mubr.bf16.mxu0 0
      %3011 = vmatmul.mubr.bf16.gmra.mrb[0].mxu0 %v2278
      %v3012 = vpop.f32.mrb[0].mxu0
      %v3013 = vadd.f32 %v2940, %v3012
      %v3014 = vpop.f32.mrb[0].mxu0
      %v3015 = vpop.f32.mrb[0].mxu0
      %v3016 = vpop.f32.mrb[0].mxu0
      %3017 = vdwg.mxu0
      %v3018 = vmax.f32 %v3013, 0.0
      %s3019 = scalar_lea.vmem %s45, 2
      %v3020 = vld [vmem:[%s3019] sm:$0x1]
      %s3021 = scalar_lea.vmem %s47, 2
      %v3022 = vld [vmem:[%s3021] sm:$0x1]
      %v3023 = vsel %vm1040, %v3018, 0.0
      %3024 = vadd.xlane.f32.xlu0 %v3023
      %v3025 = vpop.xlane.xlu0 %3024
      %v3026 = vmul.f32 %v3025, %v1747
      %v3027 = vsub.f32 %v3018, %v3026
      %v3028 = vmul.f32 %v3027, %v3027
      %v3029 = vsel %vm1040, %v3028, 0.0
      %3030 = vadd.xlane.f32.xlu0 %v3029
      %v3031 = vpop.xlane.xlu0 %3030
      %v3032 = vmul.f32 %v3031, %v1747
      %v3033 = vadd.f32 %v3032, 1e-05
      %v3034 = vrsqrt.pop %v3033
      %v3035 = vmul.f32 %v3027, %v3034
      %v3037 = vlaneseq
      %v3038 = vshrl.u32 %v3037, 7
      %v3039 = vsub.s32 0, %v3038
      %v3040 = vrot.slane %v3020, %v3039
      %v3042 = vmul.f32 %v3035, %v3040
      %v3044 = vlaneseq
      %v3045 = vshrl.u32 %v3044, 7
      %v3046 = vsub.s32 0, %v3045
      %v3047 = vrot.slane %v3022, %v3046
      %v3049 = vadd.f32 %v3042, %v3047
      %s3050 = scalar_lea.vmem %s49, 96
      %v3051 = vld [vmem:[%s3050] sm:$0xf]
      %v3052 = vld [vmem:[%s3050 + $0x4] sm:$0xf]
      %v3053 = vld [vmem:[%s3050 + $0x8] sm:$0xf]
      %v3054 = vld [vmem:[%s3050 + $0xc] sm:$0xf]
      %v3055 = vld [vmem:[%s3050 + $0x10] sm:$0xf]
      %v3056 = vld [vmem:[%s3050 + $0x14] sm:$0xf]
      %v3057 = vld [vmem:[%s3050 + $0x18] sm:$0xf]
      %v3058 = vld [vmem:[%s3050 + $0x1c] sm:$0xf]
      %v3059 = vld [vmem:[%s3050 + $0x20] sm:$0xf]
      %v3060 = vld [vmem:[%s3050 + $0x24] sm:$0xf]
      %v3061 = vld [vmem:[%s3050 + $0x28] sm:$0xf]
      %v3062 = vld [vmem:[%s3050 + $0x2c] sm:$0xf]
      %s3063 = scalar_lea.vmem %s51, 2
      %v3064 = vld [vmem:[%s3063] sm:$0x1]
      %v3066 = vrot.slane %v3049, 7
      %v3068 = vsel %vm1861, 0.0, %v3066
      %v3069 = vsel %vm1861, %v3066, 0.0
      %v3072 = vrot.slane %v3068, 1
      %v3073 = vrot.slane %v3069, 1
      %v3074 = vsel %vm1822, %v3072, %v3073
      %3075 = vrot.lane.b32.xlu0 %v3074, 32
      %v3076 = vpop.permute.xlu0 %3075
      %v3078 = vrot.slane %v3068, 2
      %v3079 = vrot.slane %v3069, 2
      %v3080 = vsel %vm1829, %v3078, %v3079
      %3081 = vrot.lane.b32.xlu0 %v3080, 64
      %v3082 = vpop.permute.xlu0 %3081
      %v3084 = vsel %vm1040, %v3068, %v3076
      %v3085 = vsel %vm1869, %v3084, %v3082
      %v3086 = vpack.c.bf16 %v3085, %v3085
      %v3088 = vlaneseq
      %v3089 = vshrl.u32 %v3088, 7
      %v3090 = vsub.s32 0, %v3089
      %v3091 = vrot.slane %v3064, %v3090
      %v3105 = vunpack.c.l.b16 %v3051
      %v3106 = vunpack.c.l.b16 %v3052
      %v3107 = vunpack.c.l.b16 %v3053
      %v3108 = vunpack.c.l.b16 %v3054
      %v3109 = vunpack.c.l.b16 %v3055
      %v3110 = vunpack.c.l.b16 %v3056
      %v3111 = vunpack.c.l.b16 %v3057
      %v3112 = vunpack.c.l.b16 %v3058
      %v3113 = vunpack.c.l.b16 %v3059
      %v3114 = vunpack.c.l.b16 %v3060
      %v3115 = vunpack.c.l.b16 %v3061
      %v3116 = vunpack.c.l.b16 %v3062
      %v3117 = vpack.c.b16 %v3106, %v3105
      %v3118 = vpack.c.b16 %v3108, %v3107
      %v3119 = vpack.c.b16 %v3110, %v3109
      %v3120 = vpack.c.b16 %v3112, %v3111
      %v3121 = vpack.c.b16 %v3114, %v3113
      %v3122 = vpack.c.b16 %v3116, %v3115
      %v3130 = vsel %vm1871, %v3086, 0
      %3132 = vmatprep.subr.bf16.mxu0 0
      %3133 = vmatpush1.bf16.msra.mxu0 %v3117
      %3134 = vmatprep.subr.bf16.mxu0 0
      %3135 = vmatpush1.bf16.msra.mxu0 %v3118
      %3136 = vmatprep.subr.bf16.mxu0 0
      %3137 = vmatpush1.bf16.msra.mxu0 %v3119
      %3138 = vmatprep.subr.bf16.mxu0 0
      %3139 = vmatpush1.bf16.msra.mxu0 %v3120
      %3140 = vmatprep.subr.bf16.mxu0 0
      %3141 = vmatpush1.bf16.msra.mxu0 %v3121
      %3142 = vmatprep.subr.bf16.mxu0 0
      %3143 = vmatpush1.bf16.msra.mxu0 %v3122
      %3144 = vmatprep.subr.bf16.mxu0 0
      %3145 = vmatpush1.bf16.msra.mxu0 0
      %3146 = vmatprep.subr.bf16.mxu0 0
      %3147 = vmatpush1.bf16.msra.mxu0 0
      %3148 = vmatprep.subr.bf16.mxu0 0
      %3149 = vmatpush1.bf16.msra.mxu0 0
      %3150 = vmatprep.subr.bf16.mxu0 0
      %3151 = vmatpush1.bf16.msra.mxu0 0
      %3152 = vmatprep.subr.bf16.mxu0 0
      %3153 = vmatpush1.bf16.msra.mxu0 0
      %3154 = vmatprep.subr.bf16.mxu0 0
      %3155 = vmatpush1.bf16.msra.mxu0 0
      %3156 = vmatprep.subr.bf16.mxu0 0
      %3157 = vmatpush1.bf16.msra.mxu0 0
      %3158 = vmatprep.subr.bf16.mxu0 0
      %3159 = vmatpush1.bf16.msra.mxu0 0
      %3160 = vmatprep.subr.bf16.mxu0 0
      %3161 = vmatpush1.bf16.msra.mxu0 0
      %3162 = vmatprep.subr.bf16.mxu0 0
      %3163 = vmatpush1.bf16.msra.mxu0 0
      %3164 = vmatprep.mubr.bf16.mxu0 0
      %3165 = vmatmul.mubr.bf16.gmra.mrb[0].mxu0 %v3130
      %v3166 = vpop.f32.mrb[0].mxu0
      %v3167 = vadd.f32 %v3091, %v3166
      %v3168 = vpop.f32.mrb[0].mxu0
      %v3169 = vpop.f32.mrb[0].mxu0
      %v3170 = vpop.f32.mrb[0].mxu0
      %3171 = vdwg.mxu0
      %v3172 = vmax.f32 %v3167, 0.0
      %s3173 = scalar_lea.vmem %s53, 2
      %v3174 = vld [vmem:[%s3173] sm:$0x1]
      %s3175 = scalar_lea.vmem %s55, 2
      %v3176 = vld [vmem:[%s3175] sm:$0x1]
      %v3177 = vsel %vm1040, %v3172, 0.0
      %3178 = vadd.xlane.f32.xlu0 %v3177
      %v3179 = vpop.xlane.xlu0 %3178
      %v3180 = vmul.f32 %v3179, %v1747
      %v3181 = vsub.f32 %v3172, %v3180
      %v3182 = vmul.f32 %v3181, %v3181
      %v3183 = vsel %vm1040, %v3182, 0.0
      %3184 = vadd.xlane.f32.xlu0 %v3183
      %v3185 = vpop.xlane.xlu0 %3184
      %v3186 = vmul.f32 %v3185, %v1747
      %v3187 = vadd.f32 %v3186, 1e-05
      %v3188 = vrsqrt.pop %v3187
      %v3189 = vmul.f32 %v3181, %v3188
      %v3191 = vlaneseq
      %v3192 = vshrl.u32 %v3191, 7
      %v3193 = vsub.s32 0, %v3192
      %v3194 = vrot.slane %v3174, %v3193
      %v3196 = vmul.f32 %v3189, %v3194
      %v3198 = vlaneseq
      %v3199 = vshrl.u32 %v3198, 7
      %v3200 = vsub.s32 0, %v3199
      %v3201 = vrot.slane %v3176, %v3200
      %v3203 = vadd.f32 %v3196, %v3201
      %v3204 = vpack.c.bf16 %v3203, %v3203
      %s3205 = scalar_lea.vmem %s57, 32
      %v3206 = vld [vmem:[%s3205] sm:$0xf]
      %v3207 = vld [vmem:[%s3205 + $0x4] sm:$0xf]
      %v3208 = vld [vmem:[%s3205 + $0x8] sm:$0xf]
      %v3209 = vld [vmem:[%s3205 + $0xc] sm:$0xf]
      %s3210 = scalar_lea.vmem %s59, 2
      %v3211 = vld [vmem:[%s3210] sm:$0x1]
      %v3213 = vlaneseq
      %v3214 = vshrl.u32 %v3213, 7
      %v3215 = vsub.s32 0, %v3214
      %v3216 = vrot.slane %v3211, %v3215
      %v3222 = vunpack.c.l.b16 %v3206
      %v3223 = vunpack.c.l.b16 %v3207
      %v3224 = vunpack.c.l.b16 %v3208
      %v3225 = vunpack.c.l.b16 %v3209
      %v3226 = vpack.c.b16 %v3223, %v3222
      %v3227 = vpack.c.b16 %v3225, %v3224
      %v3231 = vsel %vm1040, %v3204, 0
      %3233 = vmatprep.subr.bf16.mxu0 0
      %3234 = vmatpush1.bf16.msra.mxu0 %v3226
      %3235 = vmatprep.subr.bf16.mxu0 0
      %3236 = vmatpush1.bf16.msra.mxu0 %v3227
      %3237 = vmatprep.subr.bf16.mxu0 0
      %3238 = vmatpush1.bf16.msra.mxu0 0
      %3239 = vmatprep.subr.bf16.mxu0 0
      %3240 = vmatpush1.bf16.msra.mxu0 0
      %3241 = vmatprep.subr.bf16.mxu0 0
      %3242 = vmatpush1.bf16.msra.mxu0 0
      %3243 = vmatprep.subr.bf16.mxu0 0
      %3244 = vmatpush1.bf16.msra.mxu0 0
      %3245 = vmatprep.subr.bf16.mxu0 0
      %3246 = vmatpush1.bf16.msra.mxu0 0
      %3247 = vmatprep.subr.bf16.mxu0 0
      %3248 = vmatpush1.bf16.msra.mxu0 0
      %3249 = vmatprep.subr.bf16.mxu0 0
      %3250 = vmatpush1.bf16.msra.mxu0 0
      %3251 = vmatprep.subr.bf16.mxu0 0
      %3252 = vmatpush1.bf16.msra.mxu0 0
      %3253 = vmatprep.subr.bf16.mxu0 0
      %3254 = vmatpush1.bf16.msra.mxu0 0
      %3255 = vmatprep.subr.bf16.mxu0 0
      %3256 = vmatpush1.bf16.msra.mxu0 0
      %3257 = vmatprep.subr.bf16.mxu0 0
      %3258 = vmatpush1.bf16.msra.mxu0 0
      %3259 = vmatprep.subr.bf16.mxu0 0
      %3260 = vmatpush1.bf16.msra.mxu0 0
      %3261 = vmatprep.subr.bf16.mxu0 0
      %3262 = vmatpush1.bf16.msra.mxu0 0
      %3263 = vmatprep.subr.bf16.mxu0 0
      %3264 = vmatpush1.bf16.msra.mxu0 0
      %3265 = vmatprep.mubr.bf16.mxu0 0
      %3266 = vmatmul.mubr.bf16.gmra.mrb[0].mxu0 %v3231
      %v3267 = vpop.f32.mrb[0].mxu0
      %v3268 = vadd.f32 %v3216, %v3267
      %v3269 = vpop.f32.mrb[0].mxu0
      %v3270 = vpop.f32.mrb[0].mxu0
      %v3271 = vpop.f32.mrb[0].mxu0
      %3272 = vdwg.mxu0
      %v3273 = vmul.f32 %v3268, %v1012
      %3275 = vrot.lane.b32.xlu0 %v2920, 1
      %v3276 = vpop.permute.xlu0 %3275
      %3279 = vrot.lane.b32.xlu0 %v3273, 2
      %v3280 = vpop.permute.xlu0 %3279
      %vm3282 = vcmask 7168
      %v3283 = vsel %vm3282, %v2567, %v3276
      %vm3284 = vcmask 15360
      %v3285 = vsel %vm3284, %v3283, %v3280
      %vm3286 = vcmask 23552
      %3287 = vst.msk [vmem:[%s1009] sm:$0xff] %vm3286, %v3285
      %p3288 = scmp.lt.s32.totalorder %s75, 1
      %s3289 = scalar_select %p3288, %s75, 1
      %s3290 = smul.addr %s3289, 8
      %s3291 = scalar_lea.vmem %s61, %s3290
      %p3292 = scmp.lt.s32.totalorder %s75, 1
      %s3293 = scalar_select %p3292, %s75, 1
      %s3294 = smul.addr %s3293, 8
      %s3295 = scalar_lea.vmem %s63, %s3294
      // Predicated region
      $region141: #{vtts_forward.2} parent=139 // pred_check
        %p3296 = pneg %p743
      $region142: #{vtts_forward.2} parent=139 // pred_check_branch
        %3298 = sbr.rel (%p3296) target = $region144
      $region143: #{vtts_forward.2} parent=139 // pred_region
        _
      $region144: #{vtts_forward.2} parent=139 // pred_fallthru
        _
      // Predicated region
      $region145: #{vtts_forward.2} parent=139 // pred_check
        %p3299 = pneg %p769
      $region146: #{vtts_forward.2} parent=139 // pred_check_branch
        %3301 = sbr.rel (%p3299) target = $region148
      $region147: #{vtts_forward.2} parent=139 // pred_region
        _
      $region148: #{vtts_forward.2} parent=139 // pred_fallthru
        _
    $region140: #{vtts_forward.2} parent=5 // pred_fallthru
      _
    %p3302 = scmp.le.s32.totalorder 2, %s70
    // Predicated region
    $region149: #{vtts_forward.2} parent=5 // pred_check
      %p3303 = pneg %p3302
    $region150: #{vtts_forward.2} parent=5 // pred_check_branch
      %3305 = sbr.rel (%p3303) target = $region152
    $region151: #{vtts_forward.2} parent=5 // pred_region
      %s3306 = ssub.s32 %s70, 2
      // Predicated region
      $region153: #{vtts_forward.2} parent=151 // pred_check
        %p3307 = pneg %p749
      $region154: #{vtts_forward.2} parent=151 // pred_check_branch
        %3309 = sbr.rel (%p3307) target = $region156
      $region155: #{vtts_forward.2} parent=151 // pred_region
        %p3310 = scmp.lt.s32.totalorder %s76, 1
        %s3311 = scalar_select %p3310, %s76, 1
        %s3312 = smul.addr %s3311, 8
        %s3313 = scalar_lea.vmem %s61, %s3312
      $region156: #{vtts_forward.2} parent=151 // pred_fallthru
        _
      // Predicated region
      $region157: #{vtts_forward.2} parent=151 // pred_check
        %p3314 = pneg %p775
      $region158: #{vtts_forward.2} parent=151 // pred_check_branch
        %3316 = sbr.rel (%p3314) target = $region160
      $region159: #{vtts_forward.2} parent=151 // pred_region
        %p3317 = scmp.lt.s32.totalorder %s76, 1
        %s3318 = scalar_select %p3317, %s76, 1
        %s3319 = smul.addr %s3318, 8
        %s3320 = scalar_lea.vmem %s63, %s3319
      $region160: #{vtts_forward.2} parent=151 // pred_fallthru
        _
    $region152: #{vtts_forward.2} parent=5 // pred_fallthru
      _
  $region6: #{vtts_forward.2} parent=0 // loop_footer
    %s74 = sadd.s32 1, %s70
  $region7: #{vtts_forward.2} parent=0 // loop_footer_branch
    %69 = sbr.rel target = $region3
  $region8: #{vtts_forward.2} parent=0 // loop_exit
    _

// kernel: vtts_forward.3
$region0: #{vtts_forward.3}
  #allocation0 [shape = 'u32[]', space=smem, size = 0x4, offset = 0x4, fixed_abs, tag = 'smem constant byte address 0x4 - core index']
  #allocation1 [shape = 'u32[144,128]{1,0:T(1,128)}', space=vmem, size = 0x12000, scoped, tag = 'internal scratch']
  %s0 = inlined_call_operand.vmem [shape: f32[2,24,32], index: 0, kind: input, shape index: {}]
  %s1 = inlined_call_operand.vmem [shape: f32[2,24,1], index: 1, kind: input, shape index: {}]
  %s2 = inlined_call_operand.vmem [shape: f32[2,1,24], index: 2, kind: input, shape index: {}]
  %s3 = inlined_call_operand.vmem [shape: bf16[2,32,16], index: 3, kind: input, shape index: {}]
  %s4 = inlined_call_operand.vmem [shape: bf16[2,32,16], index: 4, kind: input, shape index: {}]
  %s5 = inlined_call_operand.vmem [shape: bf16[2,32,16], index: 5, kind: input, shape index: {}]
  %s6 = inlined_call_operand.vmem [shape: f32[2,1,16], index: 6, kind: input, shape index: {}]
  %s7 = inlined_call_operand.vmem [shape: f32[2,1,16], index: 7, kind: input, shape index: {}]
  %s8 = inlined_call_operand.vmem [shape: f32[2,1,16], index: 8, kind: input, shape index: {}]
  %s9 = inlined_call_operand.vmem [shape: bf16[2,16,32], index: 9, kind: input, shape index: {}]
  %s10 = inlined_call_operand.vmem [shape: f32[1,32], index: 10, kind: input, shape index: {}]
  %s11 = inlined_call_operand.vmem [shape: f32[1,32], index: 11, kind: input, shape index: {}]
  %s12 = inlined_call_operand.vmem [shape: f32[1,32], index: 12, kind: input, shape index: {}]
  %s13 = inlined_call_operand.vmem [shape: bf16[288,64], index: 13, kind: input, shape index: {}]
  %s14 = inlined_call_operand.vmem [shape: f32[1,64], index: 14, kind: input, shape index: {}]
  %s15 = inlined_call_operand.vmem [shape: bf16[64,32], index: 15, kind: input, shape index: {}]
  %s16 = inlined_call_operand.vmem [shape: f32[1,32], index: 16, kind: input, shape index: {}]
  %s17 = inlined_call_operand.vmem [shape: f32[1,32], index: 17, kind: input, shape index: {}]
  %s18 = inlined_call_operand.vmem [shape: f32[1,32], index: 18, kind: input, shape index: {}]
  %s19 = inlined_call_operand.vmem [shape: bf16[32,16], index: 19, kind: input, shape index: {}]
  %s20 = inlined_call_operand.vmem [shape: f32[1,16], index: 20, kind: input, shape index: {}]
  %s21 = inlined_call_operand.vmem [shape: bf16[5,160,32], index: 21, kind: input, shape index: {}]
  %s22 = inlined_call_operand.vmem [shape: f32[5,1,32], index: 22, kind: input, shape index: {}]
  %s23 = inlined_call_operand.vmem [shape: f32[2,24,16], index: 23, kind: output, shape index: {0}]
  %s24 = inlined_call_operand.vmem [shape: f32[2,24,16], index: 24, kind: output, shape index: {1}]
  %25 = xla_tuple %s23, %s24
  %s26 = sld [smem:[#allocation0]]
  $region133: #{vtts_forward.3} parent=0
    _
  %s28 = ssub.s32 1, %s26
  %s29 = scalar_select 0, %s28, %s26
  loop: start=0, step=1, limit=4
  $region2: #{vtts_forward.3} parent=0 // loop_pre_header
    _
  $region3: #{vtts_forward.3} parent=0 // loop_header
    %s31 = sphi 0, %s35
    %p32 = scmp.ge.s32.totalorder %s31, 4
    %s41 = sphi 0, %s43
    %s44 = sphi 0, %s41
    %s45 = sphi 0, %s44
    %s61 = sphi 0, %s45
    %s67 = sphi 0, %s69
    %s70 = sphi 0, %s67
    %s71 = sphi 0, %s70
    %s87 = sphi 0, %s71
    %s93 = sphi 0, %s95
    %s96 = sphi 0, %s93
    %s97 = sphi 0, %s96
    %s113 = sphi 0, %s97
    %s117 = sphi 0, %s117
    %s119 = sphi 0, %s117
    %s120 = sphi 0, %s119
    %s134 = sphi 0, %s120
    %s138 = sphi 0, %s138
    %s140 = sphi 0, %s138
    %s141 = sphi 0, %s140
    %s155 = sphi 0, %s141
    %s159 = sphi 0, %s159
    %s161 = sphi 0, %s159
    %s162 = sphi 0, %s161
    %s176 = sphi 0, %s162
    %s180 = sphi 0, %s180
    %s182 = sphi 0, %s180
    %s183 = sphi 0, %s182
    %s197 = sphi 0, %s183
    %s201 = sphi 0, %s201
    %s203 = sphi 0, %s201
    %s204 = sphi 0, %s203
    %s218 = sphi 0, %s204
    %s222 = sphi 0, %s222
    %s224 = sphi 0, %s222
    %s225 = sphi 0, %s224
    %s239 = sphi 0, %s225
    %s243 = sphi 0, %s243
    %s245 = sphi 0, %s243
    %s246 = sphi 0, %s245
    %s260 = sphi 0, %s246
    %s264 = sphi 0, %s264
    %s266 = sphi 0, %s264
    %s267 = sphi 0, %s266
    %s281 = sphi 0, %s267
    %s285 = sphi 0, %s285
    %s287 = sphi 0, %s285
    %s288 = sphi 0, %s287
    %s302 = sphi 0, %s288
    %s306 = sphi 0, %s306
    %s308 = sphi 0, %s306
    %s309 = sphi 0, %s308
    %s323 = sphi 0, %s309
    %s327 = sphi 0, %s327
    %s329 = sphi 0, %s327
    %s330 = sphi 0, %s329
    %s344 = sphi 0, %s330
    %s348 = sphi 0, %s348
    %s350 = sphi 0, %s348
    %s351 = sphi 0, %s350
    %s365 = sphi 0, %s351
    %s369 = sphi 0, %s369
    %s371 = sphi 0, %s369
    %s372 = sphi 0, %s371
    %s386 = sphi 0, %s372
    %s390 = sphi 0, %s390
    %s392 = sphi 0, %s390
    %s393 = sphi 0, %s392
    %s407 = sphi 0, %s393
    %s411 = sphi 0, %s411
    %s413 = sphi 0, %s411
    %s414 = sphi 0, %s413
    %s428 = sphi 0, %s414
    %s432 = sphi 0, %s432
    %s434 = sphi 0, %s432
    %s435 = sphi 0, %s434
    %s449 = sphi 0, %s435
    %s453 = sphi 0, %s453
    %s455 = sphi 0, %s453
    %s456 = sphi 0, %s455
    %s470 = sphi 0, %s456
    %s474 = sphi 0, %s474
    %s476 = sphi 0, %s474
    %s477 = sphi 0, %s476
    %s491 = sphi 0, %s477
    %s495 = sphi 0, %s495
    %s497 = sphi 0, %s495
    %s498 = sphi 0, %s497
    %s512 = sphi 0, %s498
    %s516 = sphi 0, %s516
    %s518 = sphi 0, %s516
    %s519 = sphi 0, %s518
    %s533 = sphi 0, %s519
    %s539 = sphi 0, %s541
    %s542 = sphi 0, %s539
    %s543 = sphi 0, %s542
    %s559 = sphi 0, %s543
    %s565 = sphi 0, %s567
    %s568 = sphi 0, %s565
    %s569 = sphi 0, %s568
    %s585 = sphi 0, %s569
  $region4: #{vtts_forward.3} parent=0 // loop_header_branch
    %34 = sbr.rel (%p32) target = $region8
  $region5: #{vtts_forward.3} parent=0 // loop_body
    %s36 = ssub.s32 %s31, 1
    %s37 = ssub.s32 %s31, 2
    %s38 = sadd.s32 %s31, 1
    %s39 = ssub.s32 %s31, %s38
    %p40 = scmp.eq.s32.totalorder %s39, 0
    %s42 = sadd.s32 %s41, 1
    %s43 = scalar_select %p40, %s41, %s42
    %p46 = pneg %p40
    %p47 = scmp.eq.s32.totalorder %s31, 1
    %p48 = por %p46, %p47
    %p49 = scmp.ne.s32.totalorder %s41, %s44
    %p50 = scmp.eq.s32.totalorder %s31, 0
    %p51 = por %p49, %p50
    %p52 = scmp.ne.s32.totalorder %s41, %s44
    %p53 = scmp.eq.s32.totalorder %s36, 1
    %p54 = por %p52, %p53
    %p55 = scmp.ne.s32.totalorder %s44, %s45
    %p56 = scmp.eq.s32.totalorder %s36, 0
    %p57 = por %p55, %p56
    %p58 = scmp.ne.s32.totalorder %s44, %s45
    %p59 = scmp.eq.s32.totalorder %s37, 1
    %p60 = por %p58, %p59
    %p62 = scmp.ne.s32.totalorder %s45, %s61
    %p63 = scmp.eq.s32.totalorder %s37, 0
    %p64 = por %p62, %p63
    %s65 = ssub.s32 %s31, %s38
    %p66 = scmp.eq.s32.totalorder %s65, 0
    %s68 = sadd.s32 %s67, 1
    %s69 = scalar_select %p66, %s67, %s68
    %p72 = pneg %p66
    %p73 = scmp.eq.s32.totalorder %s31, 1
    %p74 = por %p72, %p73
    %p75 = scmp.ne.s32.totalorder %s67, %s70
    %p76 = scmp.eq.s32.totalorder %s31, 0
    %p77 = por %p75, %p76
    %p78 = scmp.ne.s32.totalorder %s67, %s70
    %p79 = scmp.eq.s32.totalorder %s36, 1
    %p80 = por %p78, %p79
    %p81 = scmp.ne.s32.totalorder %s70, %s71
    %p82 = scmp.eq.s32.totalorder %s36, 0
    %p83 = por %p81, %p82
    %p84 = scmp.ne.s32.totalorder %s70, %s71
    %p85 = scmp.eq.s32.totalorder %s37, 1
    %p86 = por %p84, %p85
    %p88 = scmp.ne.s32.totalorder %s71, %s87
    %p89 = scmp.eq.s32.totalorder %s37, 0
    %p90 = por %p88, %p89
    %s91 = ssub.s32 %s31, %s38
    %p92 = scmp.eq.s32.totalorder %s91, 0
    %s94 = sadd.s32 %s93, 1
    %s95 = scalar_select %p92, %s93, %s94
    %p98 = pneg %p92
    %p99 = scmp.eq.s32.totalorder %s31, 1
    %p100 = por %p98, %p99
    %p101 = scmp.ne.s32.totalorder %s93, %s96
    %p102 = scmp.eq.s32.totalorder %s31, 0
    %p103 = por %p101, %p102
    %p104 = scmp.ne.s32.totalorder %s93, %s96
    %p105 = scmp.eq.s32.totalorder %s36, 1
    %p106 = por %p104, %p105
    %p107 = scmp.ne.s32.totalorder %s96, %s97
    %p108 = scmp.eq.s32.totalorder %s36, 0
    %p109 = por %p107, %p108
    %p110 = scmp.ne.s32.totalorder %s96, %s97
    %p111 = scmp.eq.s32.totalorder %s37, 1
    %p112 = por %p110, %p111
    %p114 = scmp.ne.s32.totalorder %s97, %s113
    %p115 = scmp.eq.s32.totalorder %s37, 0
    %p116 = por %p114, %p115
    %s118 = sadd.s32 %s117, 1
    %p121 = scmp.eq.s32.totalorder %s31, 1
    %p122 = scmp.ne.s32.totalorder %s117, %s119
    %p123 = scmp.eq.s32.totalorder %s31, 0
    %p124 = por %p122, %p123
    %p125 = scmp.ne.s32.totalorder %s117, %s119
    %p126 = scmp.eq.s32.totalorder %s36, 1
    %p127 = por %p125, %p126
    %p128 = scmp.ne.s32.totalorder %s119, %s120
    %p129 = scmp.eq.s32.totalorder %s36, 0
    %p130 = por %p128, %p129
    %p131 = scmp.ne.s32.totalorder %s119, %s120
    %p132 = scmp.eq.s32.totalorder %s37, 1
    %p133 = por %p131, %p132
    %p135 = scmp.ne.s32.totalorder %s120, %s134
    %p136 = scmp.eq.s32.totalorder %s37, 0
    %p137 = por %p135, %p136
    %s139 = sadd.s32 %s138, 1
    %p142 = scmp.eq.s32.totalorder %s31, 1
    %p143 = scmp.ne.s32.totalorder %s138, %s140
    %p144 = scmp.eq.s32.totalorder %s31, 0
    %p145 = por %p143, %p144
    %p146 = scmp.ne.s32.totalorder %s138, %s140
    %p147 = scmp.eq.s32.totalorder %s36, 1
    %p148 = por %p146, %p147
    %p149 = scmp.ne.s32.totalorder %s140, %s141
    %p150 = scmp.eq.s32.totalorder %s36, 0
    %p151 = por %p149, %p150
    %p152 = scmp.ne.s32.totalorder %s140, %s141
    %p153 = scmp.eq.s32.totalorder %s37, 1
    %p154 = por %p152, %p153
    %p156 = scmp.ne.s32.totalorder %s141, %s155
    %p157 = scmp.eq.s32.totalorder %s37, 0
    %p158 = por %p156, %p157
    %s160 = sadd.s32 %s159, 1
    %p163 = scmp.eq.s32.totalorder %s31, 1
    %p164 = scmp.ne.s32.totalorder %s159, %s161
    %p165 = scmp.eq.s32.totalorder %s31, 0
    %p166 = por %p164, %p165
    %p167 = scmp.ne.s32.totalorder %s159, %s161
    %p168 = scmp.eq.s32.totalorder %s36, 1
    %p169 = por %p167, %p168
    %p170 = scmp.ne.s32.totalorder %s161, %s162
    %p171 = scmp.eq.s32.totalorder %s36, 0
    %p172 = por %p170, %p171
    %p173 = scmp.ne.s32.totalorder %s161, %s162
    %p174 = scmp.eq.s32.totalorder %s37, 1
    %p175 = por %p173, %p174
    %p177 = scmp.ne.s32.totalorder %s162, %s176
    %p178 = scmp.eq.s32.totalorder %s37, 0
    %p179 = por %p177, %p178
    %s181 = sadd.s32 %s180, 1
    %p184 = scmp.eq.s32.totalorder %s31, 1
    %p185 = scmp.ne.s32.totalorder %s180, %s182
    %p186 = scmp.eq.s32.totalorder %s31, 0
    %p187 = por %p185, %p186
    %p188 = scmp.ne.s32.totalorder %s180, %s182
    %p189 = scmp.eq.s32.totalorder %s36, 1
    %p190 = por %p188, %p189
    %p191 = scmp.ne.s32.totalorder %s182, %s183
    %p192 = scmp.eq.s32.totalorder %s36, 0
    %p193 = por %p191, %p192
    %p194 = scmp.ne.s32.totalorder %s182, %s183
    %p195 = scmp.eq.s32.totalorder %s37, 1
    %p196 = por %p194, %p195
    %p198 = scmp.ne.s32.totalorder %s183, %s197
    %p199 = scmp.eq.s32.totalorder %s37, 0
    %p200 = por %p198, %p199
    %s202 = sadd.s32 %s201, 1
    %p205 = scmp.eq.s32.totalorder %s31, 1
    %p206 = scmp.ne.s32.totalorder %s201, %s203
    %p207 = scmp.eq.s32.totalorder %s31, 0
    %p208 = por %p206, %p207
    %p209 = scmp.ne.s32.totalorder %s201, %s203
    %p210 = scmp.eq.s32.totalorder %s36, 1
    %p211 = por %p209, %p210
    %p212 = scmp.ne.s32.totalorder %s203, %s204
    %p213 = scmp.eq.s32.totalorder %s36, 0
    %p214 = por %p212, %p213
    %p215 = scmp.ne.s32.totalorder %s203, %s204
    %p216 = scmp.eq.s32.totalorder %s37, 1
    %p217 = por %p215, %p216
    %p219 = scmp.ne.s32.totalorder %s204, %s218
    %p220 = scmp.eq.s32.totalorder %s37, 0
    %p221 = por %p219, %p220
    %s223 = sadd.s32 %s222, 1
    %p226 = scmp.eq.s32.totalorder %s31, 1
    %p227 = scmp.ne.s32.totalorder %s222, %s224
    %p228 = scmp.eq.s32.totalorder %s31, 0
    %p229 = por %p227, %p228
    %p230 = scmp.ne.s32.totalorder %s222, %s224
    %p231 = scmp.eq.s32.totalorder %s36, 1
    %p232 = por %p230, %p231
    %p233 = scmp.ne.s32.totalorder %s224, %s225
    %p234 = scmp.eq.s32.totalorder %s36, 0
    %p235 = por %p233, %p234
    %p236 = scmp.ne.s32.totalorder %s224, %s225
    %p237 = scmp.eq.s32.totalorder %s37, 1
    %p238 = por %p236, %p237
    %p240 = scmp.ne.s32.totalorder %s225, %s239
    %p241 = scmp.eq.s32.totalorder %s37, 0
    %p242 = por %p240, %p241
    %s244 = sadd.s32 %s243, 1
    %p247 = scmp.eq.s32.totalorder %s31, 1
    %p248 = scmp.ne.s32.totalorder %s243, %s245
    %p249 = scmp.eq.s32.totalorder %s31, 0
    %p250 = por %p248, %p249
    %p251 = scmp.ne.s32.totalorder %s243, %s245
    %p252 = scmp.eq.s32.totalorder %s36, 1
    %p253 = por %p251, %p252
    %p254 = scmp.ne.s32.totalorder %s245, %s246
    %p255 = scmp.eq.s32.totalorder %s36, 0
    %p256 = por %p254, %p255
    %p257 = scmp.ne.s32.totalorder %s245, %s246
    %p258 = scmp.eq.s32.totalorder %s37, 1
    %p259 = por %p257, %p258
    %p261 = scmp.ne.s32.totalorder %s246, %s260
    %p262 = scmp.eq.s32.totalorder %s37, 0
    %p263 = por %p261, %p262
    %s265 = sadd.s32 %s264, 1
    %p268 = scmp.eq.s32.totalorder %s31, 1
    %p269 = scmp.ne.s32.totalorder %s264, %s266
    %p270 = scmp.eq.s32.totalorder %s31, 0
    %p271 = por %p269, %p270
    %p272 = scmp.ne.s32.totalorder %s264, %s266
    %p273 = scmp.eq.s32.totalorder %s36, 1
    %p274 = por %p272, %p273
    %p275 = scmp.ne.s32.totalorder %s266, %s267
    %p276 = scmp.eq.s32.totalorder %s36, 0
    %p277 = por %p275, %p276
    %p278 = scmp.ne.s32.totalorder %s266, %s267
    %p279 = scmp.eq.s32.totalorder %s37, 1
    %p280 = por %p278, %p279
    %p282 = scmp.ne.s32.totalorder %s267, %s281
    %p283 = scmp.eq.s32.totalorder %s37, 0
    %p284 = por %p282, %p283
    %s286 = sadd.s32 %s285, 1
    %p289 = scmp.eq.s32.totalorder %s31, 1
    %p290 = scmp.ne.s32.totalorder %s285, %s287
    %p291 = scmp.eq.s32.totalorder %s31, 0
    %p292 = por %p290, %p291
    %p293 = scmp.ne.s32.totalorder %s285, %s287
    %p294 = scmp.eq.s32.totalorder %s36, 1
    %p295 = por %p293, %p294
    %p296 = scmp.ne.s32.totalorder %s287, %s288
    %p297 = scmp.eq.s32.totalorder %s36, 0
    %p298 = por %p296, %p297
    %p299 = scmp.ne.s32.totalorder %s287, %s288
    %p300 = scmp.eq.s32.totalorder %s37, 1
    %p301 = por %p299, %p300
    %p303 = scmp.ne.s32.totalorder %s288, %s302
    %p304 = scmp.eq.s32.totalorder %s37, 0
    %p305 = por %p303, %p304
    %s307 = sadd.s32 %s306, 1
    %p310 = scmp.eq.s32.totalorder %s31, 1
    %p311 = scmp.ne.s32.totalorder %s306, %s308
    %p312 = scmp.eq.s32.totalorder %s31, 0
    %p313 = por %p311, %p312
    %p314 = scmp.ne.s32.totalorder %s306, %s308
    %p315 = scmp.eq.s32.totalorder %s36, 1
    %p316 = por %p314, %p315
    %p317 = scmp.ne.s32.totalorder %s308, %s309
    %p318 = scmp.eq.s32.totalorder %s36, 0
    %p319 = por %p317, %p318
    %p320 = scmp.ne.s32.totalorder %s308, %s309
    %p321 = scmp.eq.s32.totalorder %s37, 1
    %p322 = por %p320, %p321
    %p324 = scmp.ne.s32.totalorder %s309, %s323
    %p325 = scmp.eq.s32.totalorder %s37, 0
    %p326 = por %p324, %p325
    %s328 = sadd.s32 %s327, 1
    %p331 = scmp.eq.s32.totalorder %s31, 1
    %p332 = scmp.ne.s32.totalorder %s327, %s329
    %p333 = scmp.eq.s32.totalorder %s31, 0
    %p334 = por %p332, %p333
    %p335 = scmp.ne.s32.totalorder %s327, %s329
    %p336 = scmp.eq.s32.totalorder %s36, 1
    %p337 = por %p335, %p336
    %p338 = scmp.ne.s32.totalorder %s329, %s330
    %p339 = scmp.eq.s32.totalorder %s36, 0
    %p340 = por %p338, %p339
    %p341 = scmp.ne.s32.totalorder %s329, %s330
    %p342 = scmp.eq.s32.totalorder %s37, 1
    %p343 = por %p341, %p342
    %p345 = scmp.ne.s32.totalorder %s330, %s344
    %p346 = scmp.eq.s32.totalorder %s37, 0
    %p347 = por %p345, %p346
    %s349 = sadd.s32 %s348, 1
    %p352 = scmp.eq.s32.totalorder %s31, 1
    %p353 = scmp.ne.s32.totalorder %s348, %s350
    %p354 = scmp.eq.s32.totalorder %s31, 0
    %p355 = por %p353, %p354
    %p356 = scmp.ne.s32.totalorder %s348, %s350
    %p357 = scmp.eq.s32.totalorder %s36, 1
    %p358 = por %p356, %p357
    %p359 = scmp.ne.s32.totalorder %s350, %s351
    %p360 = scmp.eq.s32.totalorder %s36, 0
    %p361 = por %p359, %p360
    %p362 = scmp.ne.s32.totalorder %s350, %s351
    %p363 = scmp.eq.s32.totalorder %s37, 1
    %p364 = por %p362, %p363
    %p366 = scmp.ne.s32.totalorder %s351, %s365
    %p367 = scmp.eq.s32.totalorder %s37, 0
    %p368 = por %p366, %p367
    %s370 = sadd.s32 %s369, 1
    %p373 = scmp.eq.s32.totalorder %s31, 1
    %p374 = scmp.ne.s32.totalorder %s369, %s371
    %p375 = scmp.eq.s32.totalorder %s31, 0
    %p376 = por %p374, %p375
    %p377 = scmp.ne.s32.totalorder %s369, %s371
    %p378 = scmp.eq.s32.totalorder %s36, 1
    %p379 = por %p377, %p378
    %p380 = scmp.ne.s32.totalorder %s371, %s372
    %p381 = scmp.eq.s32.totalorder %s36, 0
    %p382 = por %p380, %p381
    %p383 = scmp.ne.s32.totalorder %s371, %s372
    %p384 = scmp.eq.s32.totalorder %s37, 1
    %p385 = por %p383, %p384
    %p387 = scmp.ne.s32.totalorder %s372, %s386
    %p388 = scmp.eq.s32.totalorder %s37, 0
    %p389 = por %p387, %p388
    %s391 = sadd.s32 %s390, 1
    %p394 = scmp.eq.s32.totalorder %s31, 1
    %p395 = scmp.ne.s32.totalorder %s390, %s392
    %p396 = scmp.eq.s32.totalorder %s31, 0
    %p397 = por %p395, %p396
    %p398 = scmp.ne.s32.totalorder %s390, %s392
    %p399 = scmp.eq.s32.totalorder %s36, 1
    %p400 = por %p398, %p399
    %p401 = scmp.ne.s32.totalorder %s392, %s393
    %p402 = scmp.eq.s32.totalorder %s36, 0
    %p403 = por %p401, %p402
    %p404 = scmp.ne.s32.totalorder %s392, %s393
    %p405 = scmp.eq.s32.totalorder %s37, 1
    %p406 = por %p404, %p405
    %p408 = scmp.ne.s32.totalorder %s393, %s407
    %p409 = scmp.eq.s32.totalorder %s37, 0
    %p410 = por %p408, %p409
    %s412 = sadd.s32 %s411, 1
    %p415 = scmp.eq.s32.totalorder %s31, 1
    %p416 = scmp.ne.s32.totalorder %s411, %s413
    %p417 = scmp.eq.s32.totalorder %s31, 0
    %p418 = por %p416, %p417
    %p419 = scmp.ne.s32.totalorder %s411, %s413
    %p420 = scmp.eq.s32.totalorder %s36, 1
    %p421 = por %p419, %p420
    %p422 = scmp.ne.s32.totalorder %s413, %s414
    %p423 = scmp.eq.s32.totalorder %s36, 0
    %p424 = por %p422, %p423
    %p425 = scmp.ne.s32.totalorder %s413, %s414
    %p426 = scmp.eq.s32.totalorder %s37, 1
    %p427 = por %p425, %p426
    %p429 = scmp.ne.s32.totalorder %s414, %s428
    %p430 = scmp.eq.s32.totalorder %s37, 0
    %p431 = por %p429, %p430
    %s433 = sadd.s32 %s432, 1
    %p436 = scmp.eq.s32.totalorder %s31, 1
    %p437 = scmp.ne.s32.totalorder %s432, %s434
    %p438 = scmp.eq.s32.totalorder %s31, 0
    %p439 = por %p437, %p438
    %p440 = scmp.ne.s32.totalorder %s432, %s434
    %p441 = scmp.eq.s32.totalorder %s36, 1
    %p442 = por %p440, %p441
    %p443 = scmp.ne.s32.totalorder %s434, %s435
    %p444 = scmp.eq.s32.totalorder %s36, 0
    %p445 = por %p443, %p444
    %p446 = scmp.ne.s32.totalorder %s434, %s435
    %p447 = scmp.eq.s32.totalorder %s37, 1
    %p448 = por %p446, %p447
    %p450 = scmp.ne.s32.totalorder %s435, %s449
    %p451 = scmp.eq.s32.totalorder %s37, 0
    %p452 = por %p450, %p451
    %s454 = sadd.s32 %s453, 1
    %p457 = scmp.eq.s32.totalorder %s31, 1
    %p458 = scmp.ne.s32.totalorder %s453, %s455
    %p459 = scmp.eq.s32.totalorder %s31, 0
    %p460 = por %p458, %p459
    %p461 = scmp.ne.s32.totalorder %s453, %s455
    %p462 = scmp.eq.s32.totalorder %s36, 1
    %p463 = por %p461, %p462
    %p464 = scmp.ne.s32.totalorder %s455, %s456
    %p465 = scmp.eq.s32.totalorder %s36, 0
    %p466 = por %p464, %p465
    %p467 = scmp.ne.s32.totalorder %s455, %s456
    %p468 = scmp.eq.s32.totalorder %s37, 1
    %p469 = por %p467, %p468
    %p471 = scmp.ne.s32.totalorder %s456, %s470
    %p472 = scmp.eq.s32.totalorder %s37, 0
    %p473 = por %p471, %p472
    %s475 = sadd.s32 %s474, 1
    %p478 = scmp.eq.s32.totalorder %s31, 1
    %p479 = scmp.ne.s32.totalorder %s474, %s476
    %p480 = scmp.eq.s32.totalorder %s31, 0
    %p481 = por %p479, %p480
    %p482 = scmp.ne.s32.totalorder %s474, %s476
    %p483 = scmp.eq.s32.totalorder %s36, 1
    %p484 = por %p482, %p483
    %p485 = scmp.ne.s32.totalorder %s476, %s477
    %p486 = scmp.eq.s32.totalorder %s36, 0
    %p487 = por %p485, %p486
    %p488 = scmp.ne.s32.totalorder %s476, %s477
    %p489 = scmp.eq.s32.totalorder %s37, 1
    %p490 = por %p488, %p489
    %p492 = scmp.ne.s32.totalorder %s477, %s491
    %p493 = scmp.eq.s32.totalorder %s37, 0
    %p494 = por %p492, %p493
    %s496 = sadd.s32 %s495, 1
    %p499 = scmp.eq.s32.totalorder %s31, 1
    %p500 = scmp.ne.s32.totalorder %s495, %s497
    %p501 = scmp.eq.s32.totalorder %s31, 0
    %p502 = por %p500, %p501
    %p503 = scmp.ne.s32.totalorder %s495, %s497
    %p504 = scmp.eq.s32.totalorder %s36, 1
    %p505 = por %p503, %p504
    %p506 = scmp.ne.s32.totalorder %s497, %s498
    %p507 = scmp.eq.s32.totalorder %s36, 0
    %p508 = por %p506, %p507
    %p509 = scmp.ne.s32.totalorder %s497, %s498
    %p510 = scmp.eq.s32.totalorder %s37, 1
    %p511 = por %p509, %p510
    %p513 = scmp.ne.s32.totalorder %s498, %s512
    %p514 = scmp.eq.s32.totalorder %s37, 0
    %p515 = por %p513, %p514
    %s517 = sadd.s32 %s516, 1
    %p520 = scmp.eq.s32.totalorder %s31, 1
    %p521 = scmp.ne.s32.totalorder %s516, %s518
    %p522 = scmp.eq.s32.totalorder %s31, 0
    %p523 = por %p521, %p522
    %p524 = scmp.ne.s32.totalorder %s516, %s518
    %p525 = scmp.eq.s32.totalorder %s36, 1
    %p526 = por %p524, %p525
    %p527 = scmp.ne.s32.totalorder %s518, %s519
    %p528 = scmp.eq.s32.totalorder %s36, 0
    %p529 = por %p527, %p528
    %p530 = scmp.ne.s32.totalorder %s518, %s519
    %p531 = scmp.eq.s32.totalorder %s37, 1
    %p532 = por %p530, %p531
    %p534 = scmp.ne.s32.totalorder %s519, %s533
    %p535 = scmp.eq.s32.totalorder %s37, 0
    %p536 = por %p534, %p535
    %s537 = ssub.s32 %s31, %s38
    %p538 = scmp.eq.s32.totalorder %s537, 0
    %s540 = sadd.s32 %s539, 1
    %s541 = scalar_select %p538, %s539, %s540
    %p544 = pneg %p538
    %p545 = scmp.eq.s32.totalorder %s31, 1
    %p546 = por %p544, %p545
    %p547 = scmp.ne.s32.totalorder %s539, %s542
    %p548 = scmp.eq.s32.totalorder %s31, 0
    %p549 = por %p547, %p548
    %p550 = scmp.ne.s32.totalorder %s539, %s542
    %p551 = scmp.eq.s32.totalorder %s36, 1
    %p552 = por %p550, %p551
    %p553 = scmp.ne.s32.totalorder %s542, %s543
    %p554 = scmp.eq.s32.totalorder %s36, 0
    %p555 = por %p553, %p554
    %p556 = scmp.ne.s32.totalorder %s542, %s543
    %p557 = scmp.eq.s32.totalorder %s37, 1
    %p558 = por %p556, %p557
    %p560 = scmp.ne.s32.totalorder %s543, %s559
    %p561 = scmp.eq.s32.totalorder %s37, 0
    %p562 = por %p560, %p561
    %s563 = ssub.s32 %s31, %s38
    %p564 = scmp.eq.s32.totalorder %s563, 0
    %s566 = sadd.s32 %s565, 1
    %s567 = scalar_select %p564, %s565, %s566
    %p570 = pneg %p564
    %p571 = scmp.eq.s32.totalorder %s31, 1
    %p572 = por %p570, %p571
    %p573 = scmp.ne.s32.totalorder %s565, %s568
    %p574 = scmp.eq.s32.totalorder %s31, 0
    %p575 = por %p573, %p574
    %p576 = scmp.ne.s32.totalorder %s565, %s568
    %p577 = scmp.eq.s32.totalorder %s36, 1
    %p578 = por %p576, %p577
    %p579 = scmp.ne.s32.totalorder %s568, %s569
    %p580 = scmp.eq.s32.totalorder %s36, 0
    %p581 = por %p579, %p580
    %p582 = scmp.ne.s32.totalorder %s568, %s569
    %p583 = scmp.eq.s32.totalorder %s37, 1
    %p584 = por %p582, %p583
    %p586 = scmp.ne.s32.totalorder %s569, %s585
    %p587 = scmp.eq.s32.totalorder %s37, 0
    %p588 = por %p586, %p587
    %p589 = scmp.le.s32.totalorder 1, %s31
    %p590 = scmp.lt.s32.totalorder %s31, 3
    %p591 = pnand %p589, %p590
    %p592 = pneg %p591
    // Predicated region
    $region9: #{vtts_forward.3} parent=5 // pred_check
      _
    $region10: #{vtts_forward.3} parent=5 // pred_check_branch
      %594 = sbr.rel (%p591) target = $region12
    $region11: #{vtts_forward.3} parent=5 // pred_region
      %s595 = ssub.s32 %s31, 1
      // Predicated region
      $region13: #{vtts_forward.3} parent=11 // pred_check
        %p596 = pneg %p130
      $region14: #{vtts_forward.3} parent=11 // pred_check_branch
        %598 = sbr.rel (%p596) target = $region16
      $region15: #{vtts_forward.3} parent=11 // pred_region
        _
      $region16: #{vtts_forward.3} parent=11 // pred_fallthru
        _
      // Predicated region
      $region17: #{vtts_forward.3} parent=11 // pred_check
        %p599 = pneg %p151
      $region18: #{vtts_forward.3} parent=11 // pred_check_branch
        %601 = sbr.rel (%p599) target = $region20
      $region19: #{vtts_forward.3} parent=11 // pred_region
        _
      $region20: #{vtts_forward.3} parent=11 // pred_fallthru
        _
      // Predicated region
      $region21: #{vtts_forward.3} parent=11 // pred_check
        %p602 = pneg %p172
      $region22: #{vtts_forward.3} parent=11 // pred_check_branch
        %604 = sbr.rel (%p602) target = $region24
      $region23: #{vtts_forward.3} parent=11 // pred_region
        _
      $region24: #{vtts_forward.3} parent=11 // pred_fallthru
        _
      // Predicated region
      $region25: #{vtts_forward.3} parent=11 // pred_check
        %p605 = pneg %p193
      $region26: #{vtts_forward.3} parent=11 // pred_check_branch
        %607 = sbr.rel (%p605) target = $region28
      $region27: #{vtts_forward.3} parent=11 // pred_region
        _
      $region28: #{vtts_forward.3} parent=11 // pred_fallthru
        _
      // Predicated region
      $region29: #{vtts_forward.3} parent=11 // pred_check
        %p608 = pneg %p214
      $region30: #{vtts_forward.3} parent=11 // pred_check_branch
        %610 = sbr.rel (%p608) target = $region32
      $region31: #{vtts_forward.3} parent=11 // pred_region
        _
      $region32: #{vtts_forward.3} parent=11 // pred_fallthru
        _
      // Predicated region
      $region33: #{vtts_forward.3} parent=11 // pred_check
        %p611 = pneg %p235
      $region34: #{vtts_forward.3} parent=11 // pred_check_branch
        %613 = sbr.rel (%p611) target = $region36
      $region35: #{vtts_forward.3} parent=11 // pred_region
        _
      $region36: #{vtts_forward.3} parent=11 // pred_fallthru
        _
      // Predicated region
      $region37: #{vtts_forward.3} parent=11 // pred_check
        %p614 = pneg %p256
      $region38: #{vtts_forward.3} parent=11 // pred_check_branch
        %616 = sbr.rel (%p614) target = $region40
      $region39: #{vtts_forward.3} parent=11 // pred_region
        _
      $region40: #{vtts_forward.3} parent=11 // pred_fallthru
        _
      // Predicated region
      $region41: #{vtts_forward.3} parent=11 // pred_check
        %p617 = pneg %p277
      $region42: #{vtts_forward.3} parent=11 // pred_check_branch
        %619 = sbr.rel (%p617) target = $region44
      $region43: #{vtts_forward.3} parent=11 // pred_region
        _
      $region44: #{vtts_forward.3} parent=11 // pred_fallthru
        _
      // Predicated region
      $region45: #{vtts_forward.3} parent=11 // pred_check
        %p620 = pneg %p298
      $region46: #{vtts_forward.3} parent=11 // pred_check_branch
        %622 = sbr.rel (%p620) target = $region48
      $region47: #{vtts_forward.3} parent=11 // pred_region
        _
      $region48: #{vtts_forward.3} parent=11 // pred_fallthru
        _
      // Predicated region
      $region49: #{vtts_forward.3} parent=11 // pred_check
        %p623 = pneg %p319
      $region50: #{vtts_forward.3} parent=11 // pred_check_branch
        %625 = sbr.rel (%p623) target = $region52
      $region51: #{vtts_forward.3} parent=11 // pred_region
        _
      $region52: #{vtts_forward.3} parent=11 // pred_fallthru
        _
      // Predicated region
      $region53: #{vtts_forward.3} parent=11 // pred_check
        %p626 = pneg %p340
      $region54: #{vtts_forward.3} parent=11 // pred_check_branch
        %628 = sbr.rel (%p626) target = $region56
      $region55: #{vtts_forward.3} parent=11 // pred_region
        _
      $region56: #{vtts_forward.3} parent=11 // pred_fallthru
        _
      // Predicated region
      $region57: #{vtts_forward.3} parent=11 // pred_check
        %p629 = pneg %p361
      $region58: #{vtts_forward.3} parent=11 // pred_check_branch
        %631 = sbr.rel (%p629) target = $region60
      $region59: #{vtts_forward.3} parent=11 // pred_region
        _
      $region60: #{vtts_forward.3} parent=11 // pred_fallthru
        _
      // Predicated region
      $region61: #{vtts_forward.3} parent=11 // pred_check
        %p632 = pneg %p382
      $region62: #{vtts_forward.3} parent=11 // pred_check_branch
        %634 = sbr.rel (%p632) target = $region64
      $region63: #{vtts_forward.3} parent=11 // pred_region
        _
      $region64: #{vtts_forward.3} parent=11 // pred_fallthru
        _
      // Predicated region
      $region65: #{vtts_forward.3} parent=11 // pred_check
        %p635 = pneg %p403
      $region66: #{vtts_forward.3} parent=11 // pred_check_branch
        %637 = sbr.rel (%p635) target = $region68
      $region67: #{vtts_forward.3} parent=11 // pred_region
        _
      $region68: #{vtts_forward.3} parent=11 // pred_fallthru
        _
      // Predicated region
      $region69: #{vtts_forward.3} parent=11 // pred_check
        %p638 = pneg %p424
      $region70: #{vtts_forward.3} parent=11 // pred_check_branch
        %640 = sbr.rel (%p638) target = $region72
      $region71: #{vtts_forward.3} parent=11 // pred_region
        _
      $region72: #{vtts_forward.3} parent=11 // pred_fallthru
        _
      // Predicated region
      $region73: #{vtts_forward.3} parent=11 // pred_check
        %p641 = pneg %p445
      $region74: #{vtts_forward.3} parent=11 // pred_check_branch
        %643 = sbr.rel (%p641) target = $region76
      $region75: #{vtts_forward.3} parent=11 // pred_region
        _
      $region76: #{vtts_forward.3} parent=11 // pred_fallthru
        _
      // Predicated region
      $region77: #{vtts_forward.3} parent=11 // pred_check
        %p644 = pneg %p466
      $region78: #{vtts_forward.3} parent=11 // pred_check_branch
        %646 = sbr.rel (%p644) target = $region80
      $region79: #{vtts_forward.3} parent=11 // pred_region
        _
      $region80: #{vtts_forward.3} parent=11 // pred_fallthru
        _
      // Predicated region
      $region81: #{vtts_forward.3} parent=11 // pred_check
        %p647 = pneg %p487
      $region82: #{vtts_forward.3} parent=11 // pred_check_branch
        %649 = sbr.rel (%p647) target = $region84
      $region83: #{vtts_forward.3} parent=11 // pred_region
        _
      $region84: #{vtts_forward.3} parent=11 // pred_fallthru
        _
      // Predicated region
      $region85: #{vtts_forward.3} parent=11 // pred_check
        %p650 = pneg %p508
      $region86: #{vtts_forward.3} parent=11 // pred_check_branch
        %652 = sbr.rel (%p650) target = $region88
      $region87: #{vtts_forward.3} parent=11 // pred_region
        _
      $region88: #{vtts_forward.3} parent=11 // pred_fallthru
        _
      // Predicated region
      $region89: #{vtts_forward.3} parent=11 // pred_check
        %p653 = pneg %p529
      $region90: #{vtts_forward.3} parent=11 // pred_check_branch
        %655 = sbr.rel (%p653) target = $region92
      $region91: #{vtts_forward.3} parent=11 // pred_region
        _
      $region92: #{vtts_forward.3} parent=11 // pred_fallthru
        _
    $region12: #{vtts_forward.3} parent=5 // pred_fallthru
      _
    %p656 = scmp.lt.s32.totalorder %s31, 2
    // Predicated region
    $region93: #{vtts_forward.3} parent=5 // pred_check
      %p657 = pneg %p656
    $region94: #{vtts_forward.3} parent=5 // pred_check_branch
      %659 = sbr.rel (%p657) target = $region96
    $region95: #{vtts_forward.3} parent=5 // pred_region
      // Predicated region
      $region97: #{vtts_forward.3} parent=95 // pred_check
        %p660 = pneg %p51
      $region98: #{vtts_forward.3} parent=95 // pred_check_branch
        %662 = sbr.rel (%p660) target = $region100
      $region99: #{vtts_forward.3} parent=95 // pred_region
        %p663 = scmp.lt.s32.totalorder %s31, 1
        %s664 = scalar_select %p663, %s31, 1
        %s665 = smul.addr %s664, 3
        %s666 = smul.addr %s665, 8
        %s667 = scalar_lea.vmem %s0, %s666
      $region100: #{vtts_forward.3} parent=95 // pred_fallthru
        _
      // Predicated region
      $region101: #{vtts_forward.3} parent=95 // pred_check
        %p668 = pneg %p77
      $region102: #{vtts_forward.3} parent=95 // pred_check_branch
        %670 = sbr.rel (%p668) target = $region104
      $region103: #{vtts_forward.3} parent=95 // pred_region
        %p671 = scmp.lt.s32.totalorder %s31, 1
        %s672 = scalar_select %p671, %s31, 1
        %s673 = smul.addr %s672, 3
        %s674 = smul.addr %s673, 8
        %s675 = scalar_lea.vmem %s1, %s674
      $region104: #{vtts_forward.3} parent=95 // pred_fallthru
        _
      // Predicated region
      $region105: #{vtts_forward.3} parent=95 // pred_check
        %p676 = pneg %p103
      $region106: #{vtts_forward.3} parent=95 // pred_check_branch
        %678 = sbr.rel (%p676) target = $region108
      $region107: #{vtts_forward.3} parent=95 // pred_region
        %p679 = scmp.lt.s32.totalorder %s31, 1
        %s680 = scalar_select %p679, %s31, 1
        %s681 = scalar_lea.vmem %s2, %s680
      $region108: #{vtts_forward.3} parent=95 // pred_fallthru
        _
    $region96: #{vtts_forward.3} parent=5 // pred_fallthru
      _
    %p682 = scmp.le.s32.totalorder 1, %s31
    %p683 = scmp.lt.s32.totalorder %s31, 3
    %p684 = pnand %p682, %p683
    %p685 = pneg %p684
    // Predicated region
    $region109: #{vtts_forward.3} parent=5 // pred_check
      _
    $region110: #{vtts_forward.3} parent=5 // pred_check_branch
      %687 = sbr.rel (%p684) target = $region112
    $region111: #{vtts_forward.3} parent=5 // pred_region
      %s688 = ssub.s32 %s31, 1
      %p689 = scmp.lt.s32.totalorder %s36, 1
      %s690 = scalar_select %p689, %s36, 1
      %s691 = smul.addr %s690, 3
      %s692 = smul.addr %s691, 8
      %s693 = scalar_lea.vmem %s0, %s692
      %p694 = pneg %p57
      %p695 = pneg %p54
      %p696 = scmp.lt.s32.totalorder %s36, 1
      %s697 = scalar_select %p696, %s36, 1
      %s698 = smul.addr %s697, 3
      %s699 = smul.addr %s698, 8
      %s700 = scalar_lea.vmem %s1, %s699
      %p701 = pneg %p83
      %p702 = pneg %p80
      %p703 = scmp.lt.s32.totalorder %s36, 1
      %s704 = scalar_select %p703, %s36, 1
      %s705 = scalar_lea.vmem %s2, %s704
      %p706 = pneg %p109
      %p707 = pneg %p106
      %p708 = pneg %p130
      %p709 = pneg %p127
      %p710 = pneg %p151
      %p711 = pneg %p148
      %p712 = pneg %p172
      %p713 = pneg %p169
      %p714 = pneg %p193
      %p715 = pneg %p190
      %p716 = pneg %p214
      %p717 = pneg %p211
      %p718 = pneg %p235
      %p719 = pneg %p232
      %p720 = pneg %p256
      %p721 = pneg %p253
      %p722 = pneg %p277
      %p723 = pneg %p274
      %p724 = pneg %p298
      %p725 = pneg %p295
      %p726 = pneg %p319
      %p727 = pneg %p316
      %p728 = pneg %p340
      %p729 = pneg %p337
      %p730 = pneg %p361
      %p731 = pneg %p358
      %p732 = pneg %p382
      %p733 = pneg %p379
      %p734 = pneg %p403
      %p735 = pneg %p400
      %p736 = pneg %p424
      %p737 = pneg %p421
      %p738 = pneg %p445
      %p739 = pneg %p442
      %p740 = pneg %p466
      %p741 = pneg %p463
      %p742 = pneg %p487
      %p743 = pneg %p484
      %p744 = pneg %p508
      %p745 = pneg %p505
      %p746 = pneg %p529
      %p747 = pneg %p526
      %p748 = pneg %p555
      %p749 = pneg %p552
      %p750 = scmp.lt.s32.totalorder %s36, 1
      %s751 = scalar_select %p750, %s36, 1
      %s752 = smul.addr %s751, 3
      %s753 = smul.addr %s752, 8
      %s754 = scalar_lea.vmem %s23, %s753
      %p755 = pneg %p581
      %p756 = pneg %p578
      %p757 = scmp.lt.s32.totalorder %s36, 1
      %s758 = scalar_select %p757, %s36, 1
      %s759 = smul.addr %s758, 3
      %s760 = smul.addr %s759, 8
      %s761 = scalar_lea.vmem %s24, %s760
      %p762 = scmp.lt.s32.totalorder %s36, 1
      %s763 = scalar_select %p762, %s36, 1
      %s764 = smul.addr %s763, 3
      %s765 = smul.addr %s764, 8
      %s766 = scalar_lea.vmem %s0, %s765
      %p767 = scmp.lt.s32.totalorder %s36, 1
      %s768 = scalar_select %p767, %s36, 1
      %s769 = smul.addr %s768, 3
      %s770 = smul.addr %s769, 8
      %s771 = scalar_lea.vmem %s1, %s770
      %p772 = scmp.lt.s32.totalorder %s36, 1
      %s773 = scalar_select %p772, %s36, 1
      %s774 = scalar_lea.vmem %s2, %s773
      %p775 = scmp.lt.s32.totalorder %s36, 1
      %s776 = scalar_select %p775, %s36, 1
      %s777 = smul.addr %s776, 3
      %s778 = smul.addr %s777, 8
      %s779 = scalar_lea.vmem %s23, %s778
      %p780 = scmp.lt.s32.totalorder %s36, 1
      %s781 = scalar_select %p780, %s36, 1
      %s782 = smul.addr %s781, 3
      %s783 = smul.addr %s782, 8
      %s784 = scalar_lea.vmem %s24, %s783
      %v786 = vld [vmem:[%s766] sm:$0xff]
      %v787 = vld [vmem:[%s766 + $0x8] sm:$0xff]
      %v788 = vld [vmem:[%s766 + $0x10] sm:$0xff]
      %v789 = vld [vmem:[%s771] sm:$0xff]
      %v790 = vld [vmem:[%s771 + $0x8] sm:$0xff]
      %v791 = vld [vmem:[%s771 + $0x10] sm:$0xff]
      %v792 = vld [vmem:[%s774] sm:$0x1]
      %v793 = vpack.c.bf16 %v787, %v786
      %v794 = vpack.c.bf16 %v788, %v788
      %v795 = vsub.f32 %v792, 1.0
      %v796 = vmul.f32 %v795, 1e+09
      %v797 = vld [vmem:[%s3] sm:$0xf]
      %v798 = vld [vmem:[%s3 + $0x4] sm:$0xf]
      %v799 = vld [vmem:[%s3 + $0x8] sm:$0xf]
      %v800 = vld [vmem:[%s3 + $0xc] sm:$0xf]
      %v801 = vld [vmem:[%s6] sm:$0x1]
      %v803 = vlaneseq
      %v804 = vshrl.u32 %v803, 7
      %v805 = vsub.s32 0, %v804
      %v806 = vrot.slane %v801, %v805
      %v812 = vunpack.c.l.b16 %v797
      %v813 = vunpack.c.l.b16 %v798
      %v814 = vunpack.c.l.b16 %v799
      %v815 = vunpack.c.l.b16 %v800
      %v816 = vpack.c.b16 %v813, %v812
      %v817 = vpack.c.b16 %v815, %v814
      %vm820 = vcmask 261120
      %v822 = vsel %vm820, %v793, 0
      %v825 = vsel %vm820, %v794, 0
      %827 = vmatprep.subr.bf16.mxu0 0
      %828 = vmatpush1.bf16.msra.mxu0 %v816
      %829 = vmatprep.subr.bf16.mxu0 0
      %830 = vmatpush1.bf16.msra.mxu0 %v817
      %831 = vmatprep.subr.bf16.mxu0 0
      %832 = vmatpush1.bf16.msra.mxu0 0
      %833 = vmatprep.subr.bf16.mxu0 0
      %834 = vmatpush1.bf16.msra.mxu0 0
      %835 = vmatprep.subr.bf16.mxu0 0
      %836 = vmatpush1.bf16.msra.mxu0 0
      %837 = vmatprep.subr.bf16.mxu0 0
      %838 = vmatpush1.bf16.msra.mxu0 0
      %839 = vmatprep.subr.bf16.mxu0 0
      %840 = vmatpush1.bf16.msra.mxu0 0
      %841 = vmatprep.subr.bf16.mxu0 0
      %842 = vmatpush1.bf16.msra.mxu0 0
      %843 = vmatprep.subr.bf16.mxu0 0
      %844 = vmatpush1.bf16.msra.mxu0 0
      %845 = vmatprep.subr.bf16.mxu0 0
      %846 = vmatpush1.bf16.msra.mxu0 0
      %847 = vmatprep.subr.bf16.mxu0 0
      %848 = vmatpush1.bf16.msra.mxu0 0
      %849 = vmatprep.subr.bf16.mxu0 0
      %850 = vmatpush1.bf16.msra.mxu0 0
      %851 = vmatprep.subr.bf16.mxu0 0
      %852 = vmatpush1.bf16.msra.mxu0 0
      %853 = vmatprep.subr.bf16.mxu0 0
      %854 = vmatpush1.bf16.msra.mxu0 0
      %855 = vmatprep.subr.bf16.mxu0 0
      %856 = vmatpush1.bf16.msra.mxu0 0
      %857 = vmatprep.subr.bf16.mxu0 0
      %858 = vmatpush1.bf16.msra.mxu0 0
      %859 = vmatprep.mubr.bf16.mxu0 0
      %860 = vmatmul.mubr.bf16.gmra.mrb[0].mxu0 %v822
      %v861 = vpop.f32.mrb[0].mxu0
      %v862 = vadd.f32 %v806, %v861
      %v863 = vpop.f32.mrb[0].mxu0
      %v864 = vpop.f32.mrb[0].mxu0
      %v865 = vadd.f32 %v806, %v864
      %v866 = vpop.f32.mrb[0].mxu0
      %867 = vmatprep.mubr.bf16.mxu0 0
      %868 = vmatmul.mubr.bf16.gmra.mrb[0].mxu0 %v825
      %v869 = vpop.f32.mrb[0].mxu0
      %v870 = vadd.f32 %v806, %v869
      %v871 = vpop.f32.mrb[0].mxu0
      %v872 = vpop.f32.mrb[0].mxu0
      %v873 = vpop.f32.mrb[0].mxu0
      %874 = vdwg.mxu0
      %v875 = vld [vmem:[%s4] sm:$0xf]
      %v876 = vld [vmem:[%s4 + $0x4] sm:$0xf]
      %v877 = vld [vmem:[%s4 + $0x8] sm:$0xf]
      %v878 = vld [vmem:[%s4 + $0xc] sm:$0xf]
      %v879 = vld [vmem:[%s7] sm:$0x1]
      %v881 = vlaneseq
      %v882 = vshrl.u32 %v881, 7
      %v883 = vsub.s32 0, %v882
      %v884 = vrot.slane %v879, %v883
      %v890 = vunpack.c.l.b16 %v875
      %v891 = vunpack.c.l.b16 %v876
      %v892 = vunpack.c.l.b16 %v877
      %v893 = vunpack.c.l.b16 %v878
      %v894 = vpack.c.b16 %v891, %v890
      %v895 = vpack.c.b16 %v893, %v892
      %898 = vmatprep.subr.bf16.mxu0 0
      %899 = vmatpush1.bf16.msra.mxu0 %v894
      %900 = vmatprep.subr.bf16.mxu0 0
      %901 = vmatpush1.bf16.msra.mxu0 %v895
      %902 = vmatprep.subr.bf16.mxu0 0
      %903 = vmatpush1.bf16.msra.mxu0 0
      %904 = vmatprep.subr.bf16.mxu0 0
      %905 = vmatpush1.bf16.msra.mxu0 0
      %906 = vmatprep.subr.bf16.mxu0 0
      %907 = vmatpush1.bf16.msra.mxu0 0
      %908 = vmatprep.subr.bf16.mxu0 0
      %909 = vmatpush1.bf16.msra.mxu0 0
      %910 = vmatprep.subr.bf16.mxu0 0
      %911 = vmatpush1.bf16.msra.mxu0 0
      %912 = vmatprep.subr.bf16.mxu0 0
      %913 = vmatpush1.bf16.msra.mxu0 0
      %914 = vmatprep.subr.bf16.mxu0 0
      %915 = vmatpush1.bf16.msra.mxu0 0
      %916 = vmatprep.subr.bf16.mxu0 0
      %917 = vmatpush1.bf16.msra.mxu0 0
      %918 = vmatprep.subr.bf16.mxu0 0
      %919 = vmatpush1.bf16.msra.mxu0 0
      %920 = vmatprep.subr.bf16.mxu0 0
      %921 = vmatpush1.bf16.msra.mxu0 0
      %922 = vmatprep.subr.bf16.mxu0 0
      %923 = vmatpush1.bf16.msra.mxu0 0
      %924 = vmatprep.subr.bf16.mxu0 0
      %925 = vmatpush1.bf16.msra.mxu0 0
      %926 = vmatprep.subr.bf16.mxu0 0
      %927 = vmatpush1.bf16.msra.mxu0 0
      %928 = vmatprep.subr.bf16.mxu0 0
      %929 = vmatpush1.bf16.msra.mxu0 0
      %930 = vmatprep.mubr.bf16.mxu0 0
      %931 = vmatmul.mubr.bf16.gmra.mrb[0].mxu0 %v822
      %v932 = vpop.f32.mrb[0].mxu0
      %v933 = vadd.f32 %v884, %v932
      %v934 = vpop.f32.mrb[0].mxu0
      %v935 = vpop.f32.mrb[0].mxu0
      %v936 = vadd.f32 %v884, %v935
      %v937 = vpop.f32.mrb[0].mxu0
      %938 = vmatprep.mubr.bf16.mxu0 0
      %939 = vmatmul.mubr.bf16.gmra.mrb[0].mxu0 %v825
      %v940 = vpop.f32.mrb[0].mxu0
      %v941 = vadd.f32 %v884, %v940
      %v942 = vpop.f32.mrb[0].mxu0
      %v943 = vpop.f32.mrb[0].mxu0
      %v944 = vpop.f32.mrb[0].mxu0
      %945 = vdwg.mxu0
      %v946 = vld [vmem:[%s5] sm:$0xf]
      %v947 = vld [vmem:[%s5 + $0x4] sm:$0xf]
      %v948 = vld [vmem:[%s5 + $0x8] sm:$0xf]
      %v949 = vld [vmem:[%s5 + $0xc] sm:$0xf]
      %v950 = vld [vmem:[%s8] sm:$0x1]
      %v952 = vlaneseq
      %v953 = vshrl.u32 %v952, 7
      %v954 = vsub.s32 0, %v953
      %v955 = vrot.slane %v950, %v954
      %v961 = vunpack.c.l.b16 %v946
      %v962 = vunpack.c.l.b16 %v947
      %v963 = vunpack.c.l.b16 %v948
      %v964 = vunpack.c.l.b16 %v949
      %v965 = vpack.c.b16 %v962, %v961
      %v966 = vpack.c.b16 %v964, %v963
      %969 = vmatprep.subr.bf16.mxu0 0
      %970 = vmatpush1.bf16.msra.mxu0 %v965
      %971 = vmatprep.subr.bf16.mxu0 0
      %972 = vmatpush1.bf16.msra.mxu0 %v966
      %973 = vmatprep.subr.bf16.mxu0 0
      %974 = vmatpush1.bf16.msra.mxu0 0
      %975 = vmatprep.subr.bf16.mxu0 0
      %976 = vmatpush1.bf16.msra.mxu0 0
      %977 = vmatprep.subr.bf16.mxu0 0
      %978 = vmatpush1.bf16.msra.mxu0 0
      %979 = vmatprep.subr.bf16.mxu0 0
      %980 = vmatpush1.bf16.msra.mxu0 0
      %981 = vmatprep.subr.bf16.mxu0 0
      %982 = vmatpush1.bf16.msra.mxu0 0
      %983 = vmatprep.subr.bf16.mxu0 0
      %984 = vmatpush1.bf16.msra.mxu0 0
      %985 = vmatprep.subr.bf16.mxu0 0
      %986 = vmatpush1.bf16.msra.mxu0 0
      %987 = vmatprep.subr.bf16.mxu0 0
      %988 = vmatpush1.bf16.msra.mxu0 0
      %989 = vmatprep.subr.bf16.mxu0 0
      %990 = vmatpush1.bf16.msra.mxu0 0
      %991 = vmatprep.subr.bf16.mxu0 0
      %992 = vmatpush1.bf16.msra.mxu0 0
      %993 = vmatprep.subr.bf16.mxu0 0
      %994 = vmatpush1.bf16.msra.mxu0 0
      %995 = vmatprep.subr.bf16.mxu0 0
      %996 = vmatpush1.bf16.msra.mxu0 0
      %997 = vmatprep.subr.bf16.mxu0 0
      %998 = vmatpush1.bf16.msra.mxu0 0
      %999 = vmatprep.subr.bf16.mxu0 0
      %1000 = vmatpush1.bf16.msra.mxu0 0
      %1001 = vmatprep.mubr.bf16.mxu0 0
      %1002 = vmatmul.mubr.bf16.gmra.mrb[0].mxu0 %v822
      %v1003 = vpop.f32.mrb[0].mxu0
      %v1004 = vadd.f32 %v955, %v1003
      %v1005 = vpop.f32.mrb[0].mxu0
      %v1006 = vpop.f32.mrb[0].mxu0
      %v1007 = vadd.f32 %v955, %v1006
      %v1008 = vpop.f32.mrb[0].mxu0
      %1009 = vmatprep.mubr.bf16.mxu0 0
      %1010 = vmatmul.mubr.bf16.gmra.mrb[0].mxu0 %v825
      %v1011 = vpop.f32.mrb[0].mxu0
      %v1012 = vadd.f32 %v955, %v1011
      %v1013 = vpop.f32.mrb[0].mxu0
      %v1014 = vpop.f32.mrb[0].mxu0
      %v1015 = vpop.f32.mrb[0].mxu0
      %1016 = vdwg.mxu0
      %v1017 = vpack.c.bf16 %v865, %v862
      %v1018 = vpack.c.bf16 %v870, %v870
      %v1019 = vpack.c.bf16 %v936, %v933
      %v1020 = vpack.c.bf16 %v941, %v941
      %v1022 = vlaneseq
      %v1023 = vshrl.u32 %v1022, 7
      %v1024 = vsub.s32 0, %v1023
      %v1025 = vrot.slane %v796, %v1024
      %vm1027 = vcmask 130048
      %v1029 = vsel %vm1027, %v1017, 0
      %v1032 = vsel %vm1027, %v1018, 0
      %v1035 = vsel %vm1027, %v1019, 0
      %v1038 = vsel %vm1027, %v1020, 0
      %1040 = vmatprep.subr.bf16.mxu0 0
      %1041 = vmatpush1.bf16.xpose.msra.mxu0 %v1035
      %1042 = vmatprep.subr.bf16.mxu0 0
      %1043 = vmatpush1.bf16.xpose.msra.mxu0 %v1038
      %1044 = vmatprep.subr.bf16.mxu0 0
      %1045 = vmatpush1.bf16.xpose.msra.mxu0 0
      %1046 = vmatprep.subr.bf16.mxu0 0
      %1047 = vmatpush1.bf16.xpose.msra.mxu0 0
      %1048 = vmatprep.subr.bf16.mxu0 0
      %1049 = vmatpush1.bf16.xpose.msra.mxu0 0
      %1050 = vmatprep.subr.bf16.mxu0 0
      %1051 = vmatpush1.bf16.xpose.msra.mxu0 0
      %1052 = vmatprep.subr.bf16.mxu0 0
      %1053 = vmatpush1.bf16.xpose.msra.mxu0 0
      %1054 = vmatprep.subr.bf16.mxu0 0
      %1055 = vmatpush1.bf16.xpose.msra.mxu0 0
      %1056 = vmatprep.subr.bf16.mxu0 0
      %1057 = vmatpush1.bf16.xpose.msra.mxu0 0
      %1058 = vmatprep.subr.bf16.mxu0 0
      %1059 = vmatpush1.bf16.xpose.msra.mxu0 0
      %1060 = vmatprep.subr.bf16.mxu0 0
      %1061 = vmatpush1.bf16.xpose.msra.mxu0 0
      %1062 = vmatprep.subr.bf16.mxu0 0
      %1063 = vmatpush1.bf16.xpose.msra.mxu0 0
      %1064 = vmatprep.subr.bf16.mxu0 0
      %1065 = vmatpush1.bf16.xpose.msra.mxu0 0
      %1066 = vmatprep.subr.bf16.mxu0 0
      %1067 = vmatpush1.bf16.xpose.msra.mxu0 0
      %1068 = vmatprep.subr.bf16.mxu0 0
      %1069 = vmatpush1.bf16.xpose.msra.mxu0 0
      %1070 = vmatprep.subr.bf16.mxu0 0
      %1071 = vmatpush1.bf16.xpose.msra.mxu0 0
      %1072 = vmatprep.mubr.bf16.mxu0 0
      %1073 = vmatmul.mubr.bf16.gmra.mrb[0].mxu0 %v1029
      %v1074 = vpop.f32.mrb[0].mxu0
      %v1075 = vadd.f32 %v1025, %v1074
      %v1076 = vpop.f32.mrb[0].mxu0
      %v1077 = vpop.f32.mrb[0].mxu0
      %v1078 = vadd.f32 %v1025, %v1077
      %v1079 = vpop.f32.mrb[0].mxu0
      %1080 = vmatprep.mubr.bf16.mxu0 0
      %1081 = vmatmul.mubr.bf16.gmra.mrb[0].mxu0 %v1032
      %v1082 = vpop.f32.mrb[0].mxu0
      %v1083 = vadd.f32 %v1025, %v1082
      %v1084 = vpop.f32.mrb[0].mxu0
      %v1085 = vpop.f32.mrb[0].mxu0
      %v1086 = vpop.f32.mrb[0].mxu0
      %1087 = vdwg.mxu0
      %vm1088 = vcmask 195584
      %v1089 = vsel %vm1088, %v1075, -inf
      %1090 = vmax.xlane.f32.xlu0 %v1089
      %v1091 = vpop.xlane.xlu0 %1090
      %v1092 = vsel %vm1088, %v1078, -inf
      %1093 = vmax.xlane.f32.xlu0 %v1092
      %v1094 = vpop.xlane.xlu0 %1093
      %v1095 = vsel %vm1088, %v1083, -inf
      %1096 = vmax.xlane.f32.xlu0 %v1095
      %v1097 = vpop.xlane.xlu0 %1096
      %v1098 = vsub.f32 %v1075, %v1091
      %v1099 = vsub.f32 %v1078, %v1094
      %v1100 = vsub.f32 %v1083, %v1097
      %v1101 = vmul.f32 %v1098, 1.442695
      %v1102 = vpow.pop %v1101
      %v1103 = vmul.f32 %v1099, 1.442695
      %v1104 = vpow.pop %v1103
      %v1105 = vmul.f32 %v1100, 1.442695
      %v1106 = vpow.pop %v1105
      %v1107 = vsel %vm1088, %v1102, 0.0
      %1108 = vadd.xlane.f32.xlu0 %v1107
      %v1109 = vpop.xlane.xlu0 %1108
      %v1110 = vsel %vm1088, %v1104, 0.0
      %1111 = vadd.xlane.f32.xlu0 %v1110
      %v1112 = vpop.xlane.xlu0 %1111
      %v1113 = vsel %vm1088, %v1106, 0.0
      %1114 = vadd.xlane.f32.xlu0 %v1113
      %v1115 = vpop.xlane.xlu0 %1114
      %v1116 = vrcp.pop %v1109
      %v1117 = vrcp.pop %v1112
      %v1118 = vrcp.pop %v1115
      %v1119 = vmul.f32 %v1102, %v1116
      %v1120 = vmul.f32 %v1104, %v1117
      %v1121 = vmul.f32 %v1106, %v1118
      %v1122 = vpack.c.bf16 %v1120, %v1119
      %v1123 = vpack.c.bf16 %v1121, %v1121
      %v1124 = vpack.c.bf16 %v1007, %v1004
      %v1125 = vpack.c.bf16 %v1012, %v1012
      %v1127 = vsel %vm1088, %v1122, 0
      %v1130 = vsel %vm1088, %v1123, 0
      %vm1132 = vcmask 1043456
      %v1134 = vsel %vm1132, %v1125, 0
      %1136 = vmatprep.subr.bf16.mxu0 0
      %1137 = vmatpush1.bf16.msra.mxu0 %v1124
      %1138 = vmatprep.subr.bf16.mxu0 0
      %1139 = vmatpush1.bf16.msra.mxu0 %v1134
      %1140 = vmatprep.subr.bf16.mxu0 0
      %1141 = vmatpush1.bf16.msra.mxu0 0
      %1142 = vmatprep.subr.bf16.mxu0 0
      %1143 = vmatpush1.bf16.msra.mxu0 0
      %1144 = vmatprep.subr.bf16.mxu0 0
      %1145 = vmatpush1.bf16.msra.mxu0 0
      %1146 = vmatprep.subr.bf16.mxu0 0
      %1147 = vmatpush1.bf16.msra.mxu0 0
      %1148 = vmatprep.subr.bf16.mxu0 0
      %1149 = vmatpush1.bf16.msra.mxu0 0
      %1150 = vmatprep.subr.bf16.mxu0 0
      %1151 = vmatpush1.bf16.msra.mxu0 0
      %1152 = vmatprep.subr.bf16.mxu0 0
      %1153 = vmatpush1.bf16.msra.mxu0 0
      %1154 = vmatprep.subr.bf16.mxu0 0
      %1155 = vmatpush1.bf16.msra.mxu0 0
      %1156 = vmatprep.subr.bf16.mxu0 0
      %1157 = vmatpush1.bf16.msra.mxu0 0
      %1158 = vmatprep.subr.bf16.mxu0 0
      %1159 = vmatpush1.bf16.msra.mxu0 0
      %1160 = vmatprep.subr.bf16.mxu0 0
      %1161 = vmatpush1.bf16.msra.mxu0 0
      %1162 = vmatprep.subr.bf16.mxu0 0
      %1163 = vmatpush1.bf16.msra.mxu0 0
      %1164 = vmatprep.subr.bf16.mxu0 0
      %1165 = vmatpush1.bf16.msra.mxu0 0
      %1166 = vmatprep.subr.bf16.mxu0 0
      %1167 = vmatpush1.bf16.msra.mxu0 0
      %1168 = vmatprep.mubr.bf16.mxu0 0
      %1169 = vmatmul.mubr.bf16.gmra.mrb[0].mxu0 %v1127
      %v1170 = vpop.f32.mrb[0].mxu0
      %v1171 = vadd.f32 0.0, %v1170
      %v1172 = vpop.f32.mrb[0].mxu0
      %v1173 = vpop.f32.mrb[0].mxu0
      %v1174 = vadd.f32 0.0, %v1173
      %v1175 = vpop.f32.mrb[0].mxu0
      %1176 = vmatprep.mubr.bf16.mxu0 0
      %1177 = vmatmul.mubr.bf16.gmra.mrb[0].mxu0 %v1130
      %v1178 = vpop.f32.mrb[0].mxu0
      %v1179 = vadd.f32 0.0, %v1178
      %v1180 = vpop.f32.mrb[0].mxu0
      %v1181 = vpop.f32.mrb[0].mxu0
      %v1182 = vpop.f32.mrb[0].mxu0
      %1183 = vdwg.mxu0
      %v1184 = vpack.c.bf16 %v1174, %v1171
      %v1185 = vpack.c.bf16 %v1179, %v1179
      %v1186 = vld [vmem:[%s9] sm:$0xf]
      %v1187 = vld [vmem:[%s9 + $0x4] sm:$0xf]
      %s1188 = scalar_lea.vmem %s3, 16
      %v1189 = vld [vmem:[%s1188] sm:$0xf]
      %v1190 = vld [vmem:[%s1188 + $0x4] sm:$0xf]
      %v1191 = vld [vmem:[%s1188 + $0x8] sm:$0xf]
      %v1192 = vld [vmem:[%s1188 + $0xc] sm:$0xf]
      %s1193 = scalar_lea.vmem %s6, 1
      %v1194 = vld [vmem:[%s1193] sm:$0x1]
      %v1196 = vlaneseq
      %v1197 = vshrl.u32 %v1196, 7
      %v1198 = vsub.s32 0, %v1197
      %v1199 = vrot.slane %v1194, %v1198
      %v1205 = vunpack.c.l.b16 %v1189
      %v1206 = vunpack.c.l.b16 %v1190
      %v1207 = vunpack.c.l.b16 %v1191
      %v1208 = vunpack.c.l.b16 %v1192
      %v1209 = vpack.c.b16 %v1206, %v1205
      %v1210 = vpack.c.b16 %v1208, %v1207
      %1213 = vmatprep.subr.bf16.mxu0 0
      %1214 = vmatpush1.bf16.msra.mxu0 %v1209
      %1215 = vmatprep.subr.bf16.mxu0 0
      %1216 = vmatpush1.bf16.msra.mxu0 %v1210
      %1217 = vmatprep.subr.bf16.mxu0 0
      %1218 = vmatpush1.bf16.msra.mxu0 0
      %1219 = vmatprep.subr.bf16.mxu0 0
      %1220 = vmatpush1.bf16.msra.mxu0 0
      %1221 = vmatprep.subr.bf16.mxu0 0
      %1222 = vmatpush1.bf16.msra.mxu0 0
      %1223 = vmatprep.subr.bf16.mxu0 0
      %1224 = vmatpush1.bf16.msra.mxu0 0
      %1225 = vmatprep.subr.bf16.mxu0 0
      %1226 = vmatpush1.bf16.msra.mxu0 0
      %1227 = vmatprep.subr.bf16.mxu0 0
      %1228 = vmatpush1.bf16.msra.mxu0 0
      %1229 = vmatprep.subr.bf16.mxu0 0
      %1230 = vmatpush1.bf16.msra.mxu0 0
      %1231 = vmatprep.subr.bf16.mxu0 0
      %1232 = vmatpush1.bf16.msra.mxu0 0
      %1233 = vmatprep.subr.bf16.mxu0 0
      %1234 = vmatpush1.bf16.msra.mxu0 0
      %1235 = vmatprep.subr.bf16.mxu0 0
      %1236 = vmatpush1.bf16.msra.mxu0 0
      %1237 = vmatprep.subr.bf16.mxu0 0
      %1238 = vmatpush1.bf16.msra.mxu0 0
      %1239 = vmatprep.subr.bf16.mxu0 0
      %1240 = vmatpush1.bf16.msra.mxu0 0
      %1241 = vmatprep.subr.bf16.mxu0 0
      %1242 = vmatpush1.bf16.msra.mxu0 0
      %1243 = vmatprep.subr.bf16.mxu0 0
      %1244 = vmatpush1.bf16.msra.mxu0 0
      %1245 = vmatprep.mubr.bf16.mxu0 0
      %1246 = vmatmul.mubr.bf16.gmra.mrb[0].mxu0 %v822
      %v1247 = vpop.f32.mrb[0].mxu0
      %v1248 = vadd.f32 %v1199, %v1247
      %v1249 = vpop.f32.mrb[0].mxu0
      %v1250 = vpop.f32.mrb[0].mxu0
      %v1251 = vadd.f32 %v1199, %v1250
      %v1252 = vpop.f32.mrb[0].mxu0
      %1253 = vmatprep.mubr.bf16.mxu0 0
      %1254 = vmatmul.mubr.bf16.gmra.mrb[0].mxu0 %v825
      %v1255 = vpop.f32.mrb[0].mxu0
      %v1256 = vadd.f32 %v1199, %v1255
      %v1257 = vpop.f32.mrb[0].mxu0
      %v1258 = vpop.f32.mrb[0].mxu0
      %v1259 = vpop.f32.mrb[0].mxu0
      %1260 = vdwg.mxu0
      %s1261 = scalar_lea.vmem %s4, 16
      %v1262 = vld [vmem:[%s1261] sm:$0xf]
      %v1263 = vld [vmem:[%s1261 + $0x4] sm:$0xf]
      %v1264 = vld [vmem:[%s1261 + $0x8] sm:$0xf]
      %v1265 = vld [vmem:[%s1261 + $0xc] sm:$0xf]
      %s1266 = scalar_lea.vmem %s7, 1
      %v1267 = vld [vmem:[%s1266] sm:$0x1]
      %v1269 = vlaneseq
      %v1270 = vshrl.u32 %v1269, 7
      %v1271 = vsub.s32 0, %v1270
      %v1272 = vrot.slane %v1267, %v1271
      %v1278 = vunpack.c.l.b16 %v1262
      %v1279 = vunpack.c.l.b16 %v1263
      %v1280 = vunpack.c.l.b16 %v1264
      %v1281 = vunpack.c.l.b16 %v1265
      %v1282 = vpack.c.b16 %v1279, %v1278
      %v1283 = vpack.c.b16 %v1281, %v1280
      %1286 = vmatprep.subr.bf16.mxu0 0
      %1287 = vmatpush1.bf16.msra.mxu0 %v1282
      %1288 = vmatprep.subr.bf16.mxu0 0
      %1289 = vmatpush1.bf16.msra.mxu0 %v1283
      %1290 = vmatprep.subr.bf16.mxu0 0
      %1291 = vmatpush1.bf16.msra.mxu0 0
      %1292 = vmatprep.subr.bf16.mxu0 0
      %1293 = vmatpush1.bf16.msra.mxu0 0
      %1294 = vmatprep.subr.bf16.mxu0 0
      %1295 = vmatpush1.bf16.msra.mxu0 0
      %1296 = vmatprep.subr.bf16.mxu0 0
      %1297 = vmatpush1.bf16.msra.mxu0 0
      %1298 = vmatprep.subr.bf16.mxu0 0
      %1299 = vmatpush1.bf16.msra.mxu0 0
      %1300 = vmatprep.subr.bf16.mxu0 0
      %1301 = vmatpush1.bf16.msra.mxu0 0
      %1302 = vmatprep.subr.bf16.mxu0 0
      %1303 = vmatpush1.bf16.msra.mxu0 0
      %1304 = vmatprep.subr.bf16.mxu0 0
      %1305 = vmatpush1.bf16.msra.mxu0 0
      %1306 = vmatprep.subr.bf16.mxu0 0
      %1307 = vmatpush1.bf16.msra.mxu0 0
      %1308 = vmatprep.subr.bf16.mxu0 0
      %1309 = vmatpush1.bf16.msra.mxu0 0
      %1310 = vmatprep.subr.bf16.mxu0 0
      %1311 = vmatpush1.bf16.msra.mxu0 0
      %1312 = vmatprep.subr.bf16.mxu0 0
      %1313 = vmatpush1.bf16.msra.mxu0 0
      %1314 = vmatprep.subr.bf16.mxu0 0
      %1315 = vmatpush1.bf16.msra.mxu0 0
      %1316 = vmatprep.subr.bf16.mxu0 0
      %1317 = vmatpush1.bf16.msra.mxu0 0
      %1318 = vmatprep.mubr.bf16.mxu0 0
      %1319 = vmatmul.mubr.bf16.gmra.mrb[0].mxu0 %v822
      %v1320 = vpop.f32.mrb[0].mxu0
      %v1321 = vadd.f32 %v1272, %v1320
      %v1322 = vpop.f32.mrb[0].mxu0
      %v1323 = vpop.f32.mrb[0].mxu0
      %v1324 = vadd.f32 %v1272, %v1323
      %v1325 = vpop.f32.mrb[0].mxu0
      %1326 = vmatprep.mubr.bf16.mxu0 0
      %1327 = vmatmul.mubr.bf16.gmra.mrb[0].mxu0 %v825
      %v1328 = vpop.f32.mrb[0].mxu0
      %v1329 = vadd.f32 %v1272, %v1328
      %v1330 = vpop.f32.mrb[0].mxu0
      %v1331 = vpop.f32.mrb[0].mxu0
      %v1332 = vpop.f32.mrb[0].mxu0
      %1333 = vdwg.mxu0
      %s1334 = scalar_lea.vmem %s5, 16
      %v1335 = vld [vmem:[%s1334] sm:$0xf]
      %v1336 = vld [vmem:[%s1334 + $0x4] sm:$0xf]
      %v1337 = vld [vmem:[%s1334 + $0x8] sm:$0xf]
      %v1338 = vld [vmem:[%s1334 + $0xc] sm:$0xf]
      %s1339 = scalar_lea.vmem %s8, 1
      %v1340 = vld [vmem:[%s1339] sm:$0x1]
      %v1342 = vlaneseq
      %v1343 = vshrl.u32 %v1342, 7
      %v1344 = vsub.s32 0, %v1343
      %v1345 = vrot.slane %v1340, %v1344
      %v1351 = vunpack.c.l.b16 %v1335
      %v1352 = vunpack.c.l.b16 %v1336
      %v1353 = vunpack.c.l.b16 %v1337
      %v1354 = vunpack.c.l.b16 %v1338
      %v1355 = vpack.c.b16 %v1352, %v1351
      %v1356 = vpack.c.b16 %v1354, %v1353
      %1359 = vmatprep.subr.bf16.mxu0 0
      %1360 = vmatpush1.bf16.msra.mxu0 %v1355
      %1361 = vmatprep.subr.bf16.mxu0 0
      %1362 = vmatpush1.bf16.msra.mxu0 %v1356
      %1363 = vmatprep.subr.bf16.mxu0 0
      %1364 = vmatpush1.bf16.msra.mxu0 0
      %1365 = vmatprep.subr.bf16.mxu0 0
      %1366 = vmatpush1.bf16.msra.mxu0 0
      %1367 = vmatprep.subr.bf16.mxu0 0
      %1368 = vmatpush1.bf16.msra.mxu0 0
      %1369 = vmatprep.subr.bf16.mxu0 0
      %1370 = vmatpush1.bf16.msra.mxu0 0
      %1371 = vmatprep.subr.bf16.mxu0 0
      %1372 = vmatpush1.bf16.msra.mxu0 0
      %1373 = vmatprep.subr.bf16.mxu0 0
      %1374 = vmatpush1.bf16.msra.mxu0 0
      %1375 = vmatprep.subr.bf16.mxu0 0
      %1376 = vmatpush1.bf16.msra.mxu0 0
      %1377 = vmatprep.subr.bf16.mxu0 0
      %1378 = vmatpush1.bf16.msra.mxu0 0
      %1379 = vmatprep.subr.bf16.mxu0 0
      %1380 = vmatpush1.bf16.msra.mxu0 0
      %1381 = vmatprep.subr.bf16.mxu0 0
      %1382 = vmatpush1.bf16.msra.mxu0 0
      %1383 = vmatprep.subr.bf16.mxu0 0
      %1384 = vmatpush1.bf16.msra.mxu0 0
      %1385 = vmatprep.subr.bf16.mxu0 0
      %1386 = vmatpush1.bf16.msra.mxu0 0
      %1387 = vmatprep.subr.bf16.mxu0 0
      %1388 = vmatpush1.bf16.msra.mxu0 0
      %1389 = vmatprep.subr.bf16.mxu0 0
      %1390 = vmatpush1.bf16.msra.mxu0 0
      %1391 = vmatprep.mubr.bf16.mxu0 0
      %1392 = vmatmul.mubr.bf16.gmra.mrb[0].mxu0 %v822
      %v1393 = vpop.f32.mrb[0].mxu0
      %v1394 = vadd.f32 %v1345, %v1393
      %v1395 = vpop.f32.mrb[0].mxu0
      %v1396 = vpop.f32.mrb[0].mxu0
      %v1397 = vadd.f32 %v1345, %v1396
      %v1398 = vpop.f32.mrb[0].mxu0
      %1399 = vmatprep.mubr.bf16.mxu0 0
      %1400 = vmatmul.mubr.bf16.gmra.mrb[0].mxu0 %v825
      %v1401 = vpop.f32.mrb[0].mxu0
      %v1402 = vadd.f32 %v1345, %v1401
      %v1403 = vpop.f32.mrb[0].mxu0
      %v1404 = vpop.f32.mrb[0].mxu0
      %v1405 = vpop.f32.mrb[0].mxu0
      %1406 = vdwg.mxu0
      %v1407 = vpack.c.bf16 %v1251, %v1248
      %v1408 = vpack.c.bf16 %v1256, %v1256
      %v1409 = vpack.c.bf16 %v1324, %v1321
      %v1410 = vpack.c.bf16 %v1329, %v1329
      %v1412 = vsel %vm1027, %v1407, 0
      %v1415 = vsel %vm1027, %v1408, 0
      %v1418 = vsel %vm1027, %v1409, 0
      %v1421 = vsel %vm1027, %v1410, 0
      %1423 = vmatprep.subr.bf16.mxu0 0
      %1424 = vmatpush1.bf16.xpose.msra.mxu0 %v1418
      %1425 = vmatprep.subr.bf16.mxu0 0
      %1426 = vmatpush1.bf16.xpose.msra.mxu0 %v1421
      %1427 = vmatprep.subr.bf16.mxu0 0
      %1428 = vmatpush1.bf16.xpose.msra.mxu0 0
      %1429 = vmatprep.subr.bf16.mxu0 0
      %1430 = vmatpush1.bf16.xpose.msra.mxu0 0
      %1431 = vmatprep.subr.bf16.mxu0 0
      %1432 = vmatpush1.bf16.xpose.msra.mxu0 0
      %1433 = vmatprep.subr.bf16.mxu0 0
      %1434 = vmatpush1.bf16.xpose.msra.mxu0 0
      %1435 = vmatprep.subr.bf16.mxu0 0
      %1436 = vmatpush1.bf16.xpose.msra.mxu0 0
      %1437 = vmatprep.subr.bf16.mxu0 0
      %1438 = vmatpush1.bf16.xpose.msra.mxu0 0
      %1439 = vmatprep.subr.bf16.mxu0 0
      %1440 = vmatpush1.bf16.xpose.msra.mxu0 0
      %1441 = vmatprep.subr.bf16.mxu0 0
      %1442 = vmatpush1.bf16.xpose.msra.mxu0 0
      %1443 = vmatprep.subr.bf16.mxu0 0
      %1444 = vmatpush1.bf16.xpose.msra.mxu0 0
      %1445 = vmatprep.subr.bf16.mxu0 0
      %1446 = vmatpush1.bf16.xpose.msra.mxu0 0
      %1447 = vmatprep.subr.bf16.mxu0 0
      %1448 = vmatpush1.bf16.xpose.msra.mxu0 0
      %1449 = vmatprep.subr.bf16.mxu0 0
      %1450 = vmatpush1.bf16.xpose.msra.mxu0 0
      %1451 = vmatprep.subr.bf16.mxu0 0
      %1452 = vmatpush1.bf16.xpose.msra.mxu0 0
      %1453 = vmatprep.subr.bf16.mxu0 0
      %1454 = vmatpush1.bf16.xpose.msra.mxu0 0
      %1455 = vmatprep.mubr.bf16.mxu0 0
      %1456 = vmatmul.mubr.bf16.gmra.mrb[0].mxu0 %v1412
      %v1457 = vpop.f32.mrb[0].mxu0
      %v1458 = vadd.f32 %v1025, %v1457
      %v1459 = vpop.f32.mrb[0].mxu0
      %v1460 = vpop.f32.mrb[0].mxu0
      %v1461 = vadd.f32 %v1025, %v1460
      %v1462 = vpop.f32.mrb[0].mxu0
      %1463 = vmatprep.mubr.bf16.mxu0 0
      %1464 = vmatmul.mubr.bf16.gmra.mrb[0].mxu0 %v1415
      %v1465 = vpop.f32.mrb[0].mxu0
      %v1466 = vadd.f32 %v1025, %v1465
      %v1467 = vpop.f32.mrb[0].mxu0
      %v1468 = vpop.f32.mrb[0].mxu0
      %v1469 = vpop.f32.mrb[0].mxu0
      %1470 = vdwg.mxu0
      %v1471 = vsel %vm1088, %v1458, -inf
      %1472 = vmax.xlane.f32.xlu0 %v1471
      %v1473 = vpop.xlane.xlu0 %1472
      %v1474 = vsel %vm1088, %v1461, -inf
      %1475 = vmax.xlane.f32.xlu0 %v1474
      %v1476 = vpop.xlane.xlu0 %1475
      %v1477 = vsel %vm1088, %v1466, -inf
      %1478 = vmax.xlane.f32.xlu0 %v1477
      %v1479 = vpop.xlane.xlu0 %1478
      %v1480 = vsub.f32 %v1458, %v1473
      %v1481 = vsub.f32 %v1461, %v1476
      %v1482 = vsub.f32 %v1466, %v1479
      %v1483 = vmul.f32 %v1480, 1.442695
      %v1484 = vpow.pop %v1483
      %v1485 = vmul.f32 %v1481, 1.442695
      %v1486 = vpow.pop %v1485
      %v1487 = vmul.f32 %v1482, 1.442695
      %v1488 = vpow.pop %v1487
      %v1489 = vsel %vm1088, %v1484, 0.0
      %1490 = vadd.xlane.f32.xlu0 %v1489
      %v1491 = vpop.xlane.xlu0 %1490
      %v1492 = vsel %vm1088, %v1486, 0.0
      %1493 = vadd.xlane.f32.xlu0 %v1492
      %v1494 = vpop.xlane.xlu0 %1493
      %v1495 = vsel %vm1088, %v1488, 0.0
      %1496 = vadd.xlane.f32.xlu0 %v1495
      %v1497 = vpop.xlane.xlu0 %1496
      %v1498 = vrcp.pop %v1491
      %v1499 = vrcp.pop %v1494
      %v1500 = vrcp.pop %v1497
      %v1501 = vmul.f32 %v1484, %v1498
      %v1502 = vmul.f32 %v1486, %v1499
      %v1503 = vmul.f32 %v1488, %v1500
      %v1504 = vpack.c.bf16 %v1502, %v1501
      %v1505 = vpack.c.bf16 %v1503, %v1503
      %v1506 = vpack.c.bf16 %v1397, %v1394
      %v1507 = vpack.c.bf16 %v1402, %v1402
      %v1509 = vsel %vm1088, %v1504, 0
      %v1512 = vsel %vm1088, %v1505, 0
      %v1515 = vsel %vm1132, %v1507, 0
      %1517 = vmatprep.subr.bf16.mxu0 0
      %1518 = vmatpush1.bf16.msra.mxu0 %v1506
      %1519 = vmatprep.subr.bf16.mxu0 0
      %1520 = vmatpush1.bf16.msra.mxu0 %v1515
      %1521 = vmatprep.subr.bf16.mxu0 0
      %1522 = vmatpush1.bf16.msra.mxu0 0
      %1523 = vmatprep.subr.bf16.mxu0 0
      %1524 = vmatpush1.bf16.msra.mxu0 0
      %1525 = vmatprep.subr.bf16.mxu0 0
      %1526 = vmatpush1.bf16.msra.mxu0 0
      %1527 = vmatprep.subr.bf16.mxu0 0
      %1528 = vmatpush1.bf16.msra.mxu0 0
      %1529 = vmatprep.subr.bf16.mxu0 0
      %1530 = vmatpush1.bf16.msra.mxu0 0
      %1531 = vmatprep.subr.bf16.mxu0 0
      %1532 = vmatpush1.bf16.msra.mxu0 0
      %1533 = vmatprep.subr.bf16.mxu0 0
      %1534 = vmatpush1.bf16.msra.mxu0 0
      %1535 = vmatprep.subr.bf16.mxu0 0
      %1536 = vmatpush1.bf16.msra.mxu0 0
      %1537 = vmatprep.subr.bf16.mxu0 0
      %1538 = vmatpush1.bf16.msra.mxu0 0
      %1539 = vmatprep.subr.bf16.mxu0 0
      %1540 = vmatpush1.bf16.msra.mxu0 0
      %1541 = vmatprep.subr.bf16.mxu0 0
      %1542 = vmatpush1.bf16.msra.mxu0 0
      %1543 = vmatprep.subr.bf16.mxu0 0
      %1544 = vmatpush1.bf16.msra.mxu0 0
      %1545 = vmatprep.subr.bf16.mxu0 0
      %1546 = vmatpush1.bf16.msra.mxu0 0
      %1547 = vmatprep.subr.bf16.mxu0 0
      %1548 = vmatpush1.bf16.msra.mxu0 0
      %1549 = vmatprep.mubr.bf16.mxu0 0
      %1550 = vmatmul.mubr.bf16.gmra.mrb[0].mxu0 %v1509
      %v1551 = vpop.f32.mrb[0].mxu0
      %v1552 = vadd.f32 0.0, %v1551
      %v1553 = vpop.f32.mrb[0].mxu0
      %v1554 = vpop.f32.mrb[0].mxu0
      %v1555 = vadd.f32 0.0, %v1554
      %v1556 = vpop.f32.mrb[0].mxu0
      %1557 = vmatprep.mubr.bf16.mxu0 0
      %1558 = vmatmul.mubr.bf16.gmra.mrb[0].mxu0 %v1512
      %v1559 = vpop.f32.mrb[0].mxu0
      %v1560 = vadd.f32 0.0, %v1559
      %v1561 = vpop.f32.mrb[0].mxu0
      %v1562 = vpop.f32.mrb[0].mxu0
      %v1563 = vpop.f32.mrb[0].mxu0
      %1564 = vdwg.mxu0
      %v1565 = vpack.c.bf16 %v1555, %v1552
      %v1566 = vpack.c.bf16 %v1560, %v1560
      %s1567 = scalar_lea.vmem %s9, 8
      %v1568 = vld [vmem:[%s1567] sm:$0xf]
      %v1569 = vld [vmem:[%s1567 + $0x4] sm:$0xf]
      %v1572 = vunpack.c.l.b16 %v1568
      %v1573 = vunpack.c.l.b16 %v1569
      %v1574 = vpack.c.b16 %v1573, %v1572
      %v1577 = vsel %vm1027, %v1565, 0
      %v1580 = vsel %vm1027, %v1566, 0
      %1582 = vmatprep.subr.bf16.mxu0 0
      %1583 = vmatpush1.bf16.msra.mxu0 %v1574
      %1584 = vmatprep.subr.bf16.mxu0 0
      %1585 = vmatpush1.bf16.msra.mxu0 0
      %1586 = vmatprep.subr.bf16.mxu0 0
      %1587 = vmatpush1.bf16.msra.mxu0 0
      %1588 = vmatprep.subr.bf16.mxu0 0
      %1589 = vmatpush1.bf16.msra.mxu0 0
      %1590 = vmatprep.subr.bf16.mxu0 0
      %1591 = vmatpush1.bf16.msra.mxu0 0
      %1592 = vmatprep.subr.bf16.mxu0 0
      %1593 = vmatpush1.bf16.msra.mxu0 0
      %1594 = vmatprep.subr.bf16.mxu0 0
      %1595 = vmatpush1.bf16.msra.mxu0 0
      %1596 = vmatprep.subr.bf16.mxu0 0
      %1597 = vmatpush1.bf16.msra.mxu0 0
      %1598 = vmatprep.subr.bf16.mxu0 0
      %1599 = vmatpush1.bf16.msra.mxu0 0
      %1600 = vmatprep.subr.bf16.mxu0 0
      %1601 = vmatpush1.bf16.msra.mxu0 0
      %1602 = vmatprep.subr.bf16.mxu0 0
      %1603 = vmatpush1.bf16.msra.mxu0 0
      %1604 = vmatprep.subr.bf16.mxu0 0
      %1605 = vmatpush1.bf16.msra.mxu0 0
      %1606 = vmatprep.subr.bf16.mxu0 0
      %1607 = vmatpush1.bf16.msra.mxu0 0
      %1608 = vmatprep.subr.bf16.mxu0 0
      %1609 = vmatpush1.bf16.msra.mxu0 0
      %1610 = vmatprep.subr.bf16.mxu0 0
      %1611 = vmatpush1.bf16.msra.mxu0 0
      %1612 = vmatprep.subr.bf16.mxu0 0
      %1613 = vmatpush1.bf16.msra.mxu0 0
      %1614 = vmatprep.mubr.bf16.mxu0 0
      %1615 = vmatmul.mubr.bf16.gmra.mrb[0].mxu0 %v1577
      %v1616 = vpop.f32.mrb[0].mxu0
      %v1617 = vadd.f32 0.0, %v1616
      %v1618 = vpop.f32.mrb[0].mxu0
      %v1619 = vpop.f32.mrb[0].mxu0
      %v1620 = vadd.f32 0.0, %v1619
      %v1621 = vpop.f32.mrb[0].mxu0
      %1622 = vmatprep.mubr.bf16.mxu0 0
      %1623 = vmatmul.mubr.bf16.gmra.mrb[0].mxu0 %v1580
      %v1624 = vpop.f32.mrb[0].mxu0
      %v1625 = vadd.f32 0.0, %v1624
      %v1626 = vpop.f32.mrb[0].mxu0
      %v1627 = vpop.f32.mrb[0].mxu0
      %v1628 = vpop.f32.mrb[0].mxu0
      %1629 = vdwg.mxu0
      %v1632 = vunpack.c.l.b16 %v1186
      %v1633 = vunpack.c.l.b16 %v1187
      %v1634 = vpack.c.b16 %v1633, %v1632
      %v1637 = vsel %vm1027, %v1184, 0
      %v1640 = vsel %vm1027, %v1185, 0
      %1642 = vmatprep.subr.bf16.mxu0 0
      %1643 = vmatpush1.bf16.msra.mxu0 %v1634
      %1644 = vmatprep.subr.bf16.mxu0 0
      %1645 = vmatpush1.bf16.msra.mxu0 0
      %1646 = vmatprep.subr.bf16.mxu0 0
      %1647 = vmatpush1.bf16.msra.mxu0 0
      %1648 = vmatprep.subr.bf16.mxu0 0
      %1649 = vmatpush1.bf16.msra.mxu0 0
      %1650 = vmatprep.subr.bf16.mxu0 0
      %1651 = vmatpush1.bf16.msra.mxu0 0
      %1652 = vmatprep.subr.bf16.mxu0 0
      %1653 = vmatpush1.bf16.msra.mxu0 0
      %1654 = vmatprep.subr.bf16.mxu0 0
      %1655 = vmatpush1.bf16.msra.mxu0 0
      %1656 = vmatprep.subr.bf16.mxu0 0
      %1657 = vmatpush1.bf16.msra.mxu0 0
      %1658 = vmatprep.subr.bf16.mxu0 0
      %1659 = vmatpush1.bf16.msra.mxu0 0
      %1660 = vmatprep.subr.bf16.mxu0 0
      %1661 = vmatpush1.bf16.msra.mxu0 0
      %1662 = vmatprep.subr.bf16.mxu0 0
      %1663 = vmatpush1.bf16.msra.mxu0 0
      %1664 = vmatprep.subr.bf16.mxu0 0
      %1665 = vmatpush1.bf16.msra.mxu0 0
      %1666 = vmatprep.subr.bf16.mxu0 0
      %1667 = vmatpush1.bf16.msra.mxu0 0
      %1668 = vmatprep.subr.bf16.mxu0 0
      %1669 = vmatpush1.bf16.msra.mxu0 0
      %1670 = vmatprep.subr.bf16.mxu0 0
      %1671 = vmatpush1.bf16.msra.mxu0 0
      %1672 = vmatprep.subr.bf16.mxu0 0
      %1673 = vmatpush1.bf16.msra.mxu0 0
      %1674 = vmatprep.mubr.bf16.mxu0 0
      %1675 = vmatmul.mubr.bf16.gmra.mrb[0].mxu0 %v1637
      %v1676 = vpop.f32.mrb[0].mxu0
      %v1677 = vadd.f32 %v1617, %v1676
      %v1678 = vpop.f32.mrb[0].mxu0
      %v1679 = vpop.f32.mrb[0].mxu0
      %v1680 = vadd.f32 %v1620, %v1679
      %v1681 = vpop.f32.mrb[0].mxu0
      %1682 = vmatprep.mubr.bf16.mxu0 0
      %1683 = vmatmul.mubr.bf16.gmra.mrb[0].mxu0 %v1640
      %v1684 = vpop.f32.mrb[0].mxu0
      %v1685 = vadd.f32 %v1625, %v1684
      %v1686 = vpop.f32.mrb[0].mxu0
      %v1687 = vpop.f32.mrb[0].mxu0
      %v1688 = vpop.f32.mrb[0].mxu0
      %1689 = vdwg.mxu0
      %v1690 = vld [vmem:[%s10] sm:$0x1]
      %v1692 = vlaneseq
      %v1693 = vshrl.u32 %v1692, 7
      %v1694 = vsub.s32 0, %v1693
      %v1695 = vrot.slane %v1690, %v1694
      %v1697 = vadd.f32 %v1677, %v1695
      %v1698 = vadd.f32 %v1680, %v1695
      %v1699 = vadd.f32 %v1685, %v1695
      %v1700 = vadd.f32 %v1697, %v786
      %v1701 = vadd.f32 %v1698, %v787
      %v1702 = vadd.f32 %v1699, %v788
      %v1703 = vld [vmem:[%s11] sm:$0x1]
      %v1704 = vld [vmem:[%s12] sm:$0x1]
      %v1705 = vsel %vm820, %v1700, 0.0
      %1706 = vadd.xlane.f32.xlu0 %v1705
      %v1707 = vpop.xlane.xlu0 %1706
      %v1708 = vsel %vm820, %v1701, 0.0
      %1709 = vadd.xlane.f32.xlu0 %v1708
      %v1710 = vpop.xlane.xlu0 %1709
      %v1711 = vsel %vm820, %v1702, 0.0
      %1712 = vadd.xlane.f32.xlu0 %v1711
      %v1713 = vpop.xlane.xlu0 %1712
      %v1714 = vrcp.pop 32.0
      %v1715 = vmul.f32 %v1707, %v1714
      %v1716 = vmul.f32 %v1710, %v1714
      %v1717 = vmul.f32 %v1713, %v1714
      %v1718 = vsub.f32 %v1700, %v1715
      %v1719 = vsub.f32 %v1701, %v1716
      %v1720 = vsub.f32 %v1702, %v1717
      %v1721 = vmul.f32 %v1718, %v1718
      %v1722 = vmul.f32 %v1719, %v1719
      %v1723 = vmul.f32 %v1720, %v1720
      %v1724 = vsel %vm820, %v1721, 0.0
      %1725 = vadd.xlane.f32.xlu0 %v1724
      %v1726 = vpop.xlane.xlu0 %1725
      %v1727 = vsel %vm820, %v1722, 0.0
      %1728 = vadd.xlane.f32.xlu0 %v1727
      %v1729 = vpop.xlane.xlu0 %1728
      %v1730 = vsel %vm820, %v1723, 0.0
      %1731 = vadd.xlane.f32.xlu0 %v1730
      %v1732 = vpop.xlane.xlu0 %1731
      %v1733 = vmul.f32 %v1726, %v1714
      %v1734 = vmul.f32 %v1729, %v1714
      %v1735 = vmul.f32 %v1732, %v1714
      %v1736 = vadd.f32 %v1733, 1e-05
      %v1737 = vadd.f32 %v1734, 1e-05
      %v1738 = vadd.f32 %v1735, 1e-05
      %v1739 = vrsqrt.pop %v1736
      %v1740 = vrsqrt.pop %v1737
      %v1741 = vrsqrt.pop %v1738
      %v1742 = vmul.f32 %v1718, %v1739
      %v1743 = vmul.f32 %v1719, %v1740
      %v1744 = vmul.f32 %v1720, %v1741
      %v1746 = vlaneseq
      %v1747 = vshrl.u32 %v1746, 7
      %v1748 = vsub.s32 0, %v1747
      %v1749 = vrot.slane %v1703, %v1748
      %v1751 = vmul.f32 %v1742, %v1749
      %v1752 = vmul.f32 %v1743, %v1749
      %v1753 = vmul.f32 %v1744, %v1749
      %v1755 = vlaneseq
      %v1756 = vshrl.u32 %v1755, 7
      %v1757 = vsub.s32 0, %v1756
      %v1758 = vrot.slane %v1704, %v1757
      %v1760 = vadd.f32 %v1751, %v1758
      %v1761 = vadd.f32 %v1752, %v1758
      %v1762 = vadd.f32 %v1753, %v1758
      %1764 = vset.pattern.permute.xlu0 0
      %1765 = vperm.xlu0 %1764, %v789
      %v1766 = vpop.permute.xlu0 %1765
      %1769 = vset.pattern.permute.xlu0 0
      %1770 = vperm.xlu0 %1769, %v790
      %v1771 = vpop.permute.xlu0 %1770
      %1774 = vset.pattern.permute.xlu0 0
      %1775 = vperm.xlu0 %1774, %v791
      %v1776 = vpop.permute.xlu0 %1775
      %v1778 = vmul.f32 %v1760, %v1766
      %v1779 = vmul.f32 %v1761, %v1771
      %v1780 = vmul.f32 %v1762, %v1776
      %v1781 = vld [vmem:[%s13] sm:$0xf]
      %v1782 = vld [vmem:[%s13 + $0x4] sm:$0xf]
      %v1783 = vld [vmem:[%s13 + $0x8] sm:$0xf]
      %v1784 = vld [vmem:[%s13 + $0xc] sm:$0xf]
      %v1785 = vld [vmem:[%s13 + $0x10] sm:$0xf]
      %v1786 = vld [vmem:[%s13 + $0x14] sm:$0xf]
      %v1787 = vld [vmem:[%s13 + $0x18] sm:$0xf]
      %v1788 = vld [vmem:[%s13 + $0x1c] sm:$0xf]
      %v1789 = vld [vmem:[%s13 + $0x20] sm:$0xf]
      %v1790 = vld [vmem:[%s13 + $0x24] sm:$0xf]
      %v1791 = vld [vmem:[%s13 + $0x28] sm:$0xf]
      %v1792 = vld [vmem:[%s13 + $0x2c] sm:$0xf]
      %v1793 = vld [vmem:[%s13 + $0x30] sm:$0xf]
      %v1794 = vld [vmem:[%s13 + $0x34] sm:$0xf]
      %v1795 = vld [vmem:[%s13 + $0x38] sm:$0xf]
      %v1796 = vld [vmem:[%s13 + $0x3c] sm:$0xf]
      %v1797 = vld [vmem:[%s13 + $0x40] sm:$0xf]
      %v1798 = vld [vmem:[%s13 + $0x44] sm:$0xf]
      %v1799 = vld [vmem:[%s13 + $0x48] sm:$0xf]
      %v1800 = vld [vmem:[%s13 + $0x4c] sm:$0xf]
      %v1801 = vld [vmem:[%s13 + $0x50] sm:$0xf]
      %v1802 = vld [vmem:[%s13 + $0x54] sm:$0xf]
      %v1803 = vld [vmem:[%s13 + $0x58] sm:$0xf]
      %v1804 = vld [vmem:[%s13 + $0x5c] sm:$0xf]
      %v1805 = vld [vmem:[%s13 + $0x60] sm:$0xf]
      %v1806 = vld [vmem:[%s13 + $0x64] sm:$0xf]
      %v1807 = vld [vmem:[%s13 + $0x68] sm:$0xf]
      %v1808 = vld [vmem:[%s13 + $0x6c] sm:$0xf]
      %v1809 = vld [vmem:[%s13 + $0x70] sm:$0xf]
      %v1810 = vld [vmem:[%s13 + $0x74] sm:$0xf]
      %v1811 = vld [vmem:[%s13 + $0x78] sm:$0xf]
      %v1812 = vld [vmem:[%s13 + $0x7c] sm:$0xf]
      %v1813 = vld [vmem:[%s13 + $0x80] sm:$0xf]
      %v1814 = vld [vmem:[%s13 + $0x84] sm:$0xf]
      %v1815 = vld [vmem:[%s13 + $0x88] sm:$0xf]
      %v1816 = vld [vmem:[%s13 + $0x8c] sm:$0xf]
      %v1817 = vld [vmem:[%s14] sm:$0x1]
      %v1821 = vrot.slane %v1778, 4
      %v1822 = vrot.slane %v1779, 4
      %v1823 = vsel %vm1132, %v1821, %v1822
      %v1824 = vrot.slane %v1780, 4
      %v1825 = vsel %vm1132, %v1822, %v1824
      %v1830 = vsel %vm1132, 0.0, %v1821
      %v1831 = vsel %vm1132, %v1824, 0.0
      %vm1834 = vcmask 1046528
      %v1835 = vrot.slane %v1830, 1
      %v1836 = vrot.slane %v1823, 1
      %v1837 = vsel %vm1834, %v1835, %v1836
      %v1838 = vrot.slane %v1825, 1
      %v1839 = vsel %vm1834, %v1836, %v1838
      %v1840 = vrot.slane %v1831, 1
      %v1841 = vsel %vm1834, %v1838, %v1840
      %1842 = vrot.lane.b32.xlu0 %v1837, 32
      %v1843 = vpop.permute.xlu0 %1842
      %1844 = vrot.lane.b32.xlu0 %v1839, 32
      %v1845 = vpop.permute.xlu0 %1844
      %1846 = vrot.lane.b32.xlu0 %v1841, 32
      %v1847 = vpop.permute.xlu0 %1846
      %vm1851 = vcmask 1045504
      %v1852 = vrot.slane %v1830, 2
      %v1853 = vrot.slane %v1823, 2
      %v1854 = vsel %vm1851, %v1852, %v1853
      %v1855 = vrot.slane %v1825, 2
      %v1856 = vsel %vm1851, %v1853, %v1855
      %v1857 = vrot.slane %v1831, 2
      %v1858 = vsel %vm1851, %v1855, %v1857
      %1859 = vrot.lane.b32.xlu0 %v1854, 64
      %v1860 = vpop.permute.xlu0 %1859
      %1861 = vrot.lane.b32.xlu0 %v1856, 64
      %v1862 = vpop.permute.xlu0 %1861
      %1863 = vrot.lane.b32.xlu0 %v1858, 64
      %v1864 = vpop.permute.xlu0 %1863
      %vm1868 = vcmask 1044480
      %v1869 = vrot.slane %v1830, 3
      %v1870 = vrot.slane %v1823, 3
      %v1871 = vsel %vm1868, %v1869, %v1870
      %v1872 = vrot.slane %v1825, 3
      %v1873 = vsel %vm1868, %v1870, %v1872
      %v1874 = vrot.slane %v1831, 3
      %v1875 = vsel %vm1868, %v1872, %v1874
      %1876 = vrot.lane.b32.xlu0 %v1871, 96
      %v1877 = vpop.permute.xlu0 %1876
      %1878 = vrot.lane.b32.xlu0 %v1873, 96
      %v1879 = vpop.permute.xlu0 %1878
      %1880 = vrot.lane.b32.xlu0 %v1875, 96
      %v1881 = vpop.permute.xlu0 %1880
      %v1885 = vrot.slane %v1830, 4
      %v1886 = vrot.slane %v1823, 4
      %v1887 = vsel %vm1132, %v1885, %v1886
      %v1888 = vrot.slane %v1825, 4
      %v1889 = vsel %vm1132, %v1886, %v1888
      %v1890 = vrot.slane %v1831, 4
      %v1891 = vsel %vm1132, %v1888, %v1890
      %vm1895 = vcmask 1042432
      %v1896 = vrot.slane %v1830, 5
      %v1897 = vrot.slane %v1823, 5
      %v1898 = vsel %vm1895, %v1896, %v1897
      %v1899 = vrot.slane %v1825, 5
      %v1900 = vsel %vm1895, %v1897, %v1899
      %v1901 = vrot.slane %v1831, 5
      %v1902 = vsel %vm1895, %v1899, %v1901
      %1903 = vrot.lane.b32.xlu0 %v1898, 32
      %v1904 = vpop.permute.xlu0 %1903
      %1905 = vrot.lane.b32.xlu0 %v1900, 32
      %v1906 = vpop.permute.xlu0 %1905
      %1907 = vrot.lane.b32.xlu0 %v1902, 32
      %v1908 = vpop.permute.xlu0 %1907
      %vm1912 = vcmask 1041408
      %v1913 = vrot.slane %v1830, 6
      %v1914 = vrot.slane %v1823, 6
      %v1915 = vsel %vm1912, %v1913, %v1914
      %v1916 = vrot.slane %v1825, 6
      %v1917 = vsel %vm1912, %v1914, %v1916
      %v1918 = vrot.slane %v1831, 6
      %v1919 = vsel %vm1912, %v1916, %v1918
      %1920 = vrot.lane.b32.xlu0 %v1915, 64
      %v1921 = vpop.permute.xlu0 %1920
      %1922 = vrot.lane.b32.xlu0 %v1917, 64
      %v1923 = vpop.permute.xlu0 %1922
      %1924 = vrot.lane.b32.xlu0 %v1919, 64
      %v1925 = vpop.permute.xlu0 %1924
      %vm1929 = vcmask 1040384
      %v1930 = vrot.slane %v1830, 7
      %v1931 = vrot.slane %v1823, 7
      %v1932 = vsel %vm1929, %v1930, %v1931
      %v1933 = vrot.slane %v1825, 7
      %v1934 = vsel %vm1929, %v1931, %v1933
      %v1935 = vrot.slane %v1831, 7
      %v1936 = vsel %vm1929, %v1933, %v1935
      %1937 = vrot.lane.b32.xlu0 %v1932, 96
      %v1938 = vpop.permute.xlu0 %1937
      %1939 = vrot.lane.b32.xlu0 %v1934, 96
      %v1940 = vpop.permute.xlu0 %1939
      %1941 = vrot.lane.b32.xlu0 %v1936, 96
      %v1942 = vpop.permute.xlu0 %1941
      %v1946 = vsel %vm820, %v1830, %v1843
      %v1947 = vsel %vm820, %v1823, %v1845
      %v1948 = vsel %vm820, %v1825, %v1847
      %vm1949 = vcmask 523264
      %v1950 = vsel %vm1949, %v1946, %v1860
      %v1951 = vsel %vm1949, %v1947, %v1862
      %v1952 = vsel %vm1949, %v1948, %v1864
      %vm1953 = vcmask 785408
      %v1954 = vsel %vm1953, %v1950, %v1877
      %v1955 = vsel %vm1953, %v1951, %v1879
      %v1956 = vsel %vm1953, %v1952, %v1881
      %v1957 = vsel %vm820, %v1887, %v1904
      %v1958 = vsel %vm820, %v1889, %v1906
      %v1959 = vsel %vm820, %v1891, %v1908
      %v1960 = vsel %vm1949, %v1957, %v1921
      %v1961 = vsel %vm1949, %v1958, %v1923
      %v1962 = vsel %vm1949, %v1959, %v1925
      %v1963 = vsel %vm1953, %v1960, %v1938
      %v1964 = vsel %vm1953, %v1961, %v1940
      %v1965 = vsel %vm1953, %v1962, %v1942
      %v1966 = vpack.c.bf16 %v1955, %v1954
      %v1967 = vpack.c.bf16 %v1964, %v1963
      %v1968 = vpack.c.bf16 %v1825, %v1823
      %v1969 = vpack.c.bf16 %v1956, %v1956
      %v1970 = vpack.c.bf16 %v1965, %v1965
      %v1971 = vpack.c.bf16 %v1831, %v1831
      %v1973 = vlaneseq
      %v1974 = vshrl.u32 %v1973, 7
      %v1975 = vsub.s32 0, %v1974
      %v1976 = vrot.slane %v1817, %v1975
      %v2014 = vunpack.c.l.b16 %v1781
      %v2015 = vunpack.c.l.b16 %v1782
      %v2016 = vunpack.c.l.b16 %v1783
      %v2017 = vunpack.c.l.b16 %v1784
      %v2018 = vunpack.c.l.b16 %v1785
      %v2019 = vunpack.c.l.b16 %v1786
      %v2020 = vunpack.c.l.b16 %v1787
      %v2021 = vunpack.c.l.b16 %v1788
      %v2022 = vunpack.c.l.b16 %v1789
      %v2023 = vunpack.c.l.b16 %v1790
      %v2024 = vunpack.c.l.b16 %v1791
      %v2025 = vunpack.c.l.b16 %v1792
      %v2026 = vunpack.c.l.b16 %v1793
      %v2027 = vunpack.c.l.b16 %v1794
      %v2028 = vunpack.c.l.b16 %v1795
      %v2029 = vunpack.c.l.b16 %v1796
      %v2030 = vunpack.c.l.b16 %v1797
      %v2031 = vunpack.c.l.b16 %v1798
      %v2032 = vunpack.c.l.b16 %v1799
      %v2033 = vunpack.c.l.b16 %v1800
      %v2034 = vunpack.c.l.b16 %v1801
      %v2035 = vunpack.c.l.b16 %v1802
      %v2036 = vunpack.c.l.b16 %v1803
      %v2037 = vunpack.c.l.b16 %v1804
      %v2038 = vunpack.c.l.b16 %v1805
      %v2039 = vunpack.c.l.b16 %v1806
      %v2040 = vunpack.c.l.b16 %v1807
      %v2041 = vunpack.c.l.b16 %v1808
      %v2042 = vunpack.c.l.b16 %v1809
      %v2043 = vunpack.c.l.b16 %v1810
      %v2044 = vunpack.c.l.b16 %v1811
      %v2045 = vunpack.c.l.b16 %v1812
      %v2046 = vunpack.c.l.b16 %v1813
      %v2047 = vunpack.c.l.b16 %v1814
      %v2048 = vunpack.c.l.b16 %v1815
      %v2049 = vunpack.c.l.b16 %v1816
      %v2050 = vpack.c.b16 %v2015, %v2014
      %v2051 = vpack.c.b16 %v2017, %v2016
      %v2052 = vpack.c.b16 %v2019, %v2018
      %v2053 = vpack.c.b16 %v2021, %v2020
      %v2054 = vpack.c.b16 %v2023, %v2022
      %v2055 = vpack.c.b16 %v2025, %v2024
      %v2056 = vpack.c.b16 %v2027, %v2026
      %v2057 = vpack.c.b16 %v2029, %v2028
      %v2058 = vpack.c.b16 %v2031, %v2030
      %v2059 = vpack.c.b16 %v2033, %v2032
      %v2060 = vpack.c.b16 %v2035, %v2034
      %v2061 = vpack.c.b16 %v2037, %v2036
      %v2062 = vpack.c.b16 %v2039, %v2038
      %v2063 = vpack.c.b16 %v2041, %v2040
      %v2064 = vpack.c.b16 %v2043, %v2042
      %v2065 = vpack.c.b16 %v2045, %v2044
      %v2066 = vpack.c.b16 %v2047, %v2046
      %v2067 = vpack.c.b16 %v2049, %v2048
      %v2087 = vsel %vm820, %v1968, 0
      %v2090 = vsel %vm820, %v1971, 0
      %2092 = vmatprep.subr.bf16.mxu0 0
      %2093 = vmatpush1.bf16.msra.mxu0 %v2050
      %2094 = vmatprep.subr.bf16.mxu0 0
      %2095 = vmatpush1.bf16.msra.mxu0 %v2051
      %2096 = vmatprep.subr.bf16.mxu0 0
      %2097 = vmatpush1.bf16.msra.mxu0 %v2052
      %2098 = vmatprep.subr.bf16.mxu0 0
      %2099 = vmatpush1.bf16.msra.mxu0 %v2053
      %2100 = vmatprep.subr.bf16.mxu0 0
      %2101 = vmatpush1.bf16.msra.mxu0 %v2054
      %2102 = vmatprep.subr.bf16.mxu0 0
      %2103 = vmatpush1.bf16.msra.mxu0 %v2055
      %2104 = vmatprep.subr.bf16.mxu0 0
      %2105 = vmatpush1.bf16.msra.mxu0 %v2056
      %2106 = vmatprep.subr.bf16.mxu0 0
      %2107 = vmatpush1.bf16.msra.mxu0 %v2057
      %2108 = vmatprep.subr.bf16.mxu0 0
      %2109 = vmatpush1.bf16.msra.mxu0 %v2058
      %2110 = vmatprep.subr.bf16.mxu0 0
      %2111 = vmatpush1.bf16.msra.mxu0 %v2059
      %2112 = vmatprep.subr.bf16.mxu0 0
      %2113 = vmatpush1.bf16.msra.mxu0 %v2060
      %2114 = vmatprep.subr.bf16.mxu0 0
      %2115 = vmatpush1.bf16.msra.mxu0 %v2061
      %2116 = vmatprep.subr.bf16.mxu0 0
      %2117 = vmatpush1.bf16.msra.mxu0 %v2062
      %2118 = vmatprep.subr.bf16.mxu0 0
      %2119 = vmatpush1.bf16.msra.mxu0 %v2063
      %2120 = vmatprep.subr.bf16.mxu0 0
      %2121 = vmatpush1.bf16.msra.mxu0 %v2064
      %2122 = vmatprep.subr.bf16.mxu0 0
      %2123 = vmatpush1.bf16.msra.mxu0 %v2065
      %2124 = vmatprep.mubr.bf16.mxu0 %v1967
      %2125 = vmatmul.mubr.bf16.gmra.mrb[0].mxu0 %v1966
      %v2126 = vpop.f32.mrb[0].mxu0
      %v2127 = vadd.f32 %v1976, %v2126
      %v2128 = vpop.f32.mrb[0].mxu0
      %v2129 = vpop.f32.mrb[0].mxu0
      %v2130 = vadd.f32 %v1976, %v2129
      %v2131 = vpop.f32.mrb[0].mxu0
      %2132 = vmatprep.mubr.bf16.mxu0 %v1970
      %2133 = vmatmul.mubr.bf16.gmra.mrb[0].mxu0 %v1969
      %v2134 = vpop.f32.mrb[0].mxu0
      %v2135 = vadd.f32 %v1976, %v2134
      %v2136 = vpop.f32.mrb[0].mxu0
      %v2137 = vpop.f32.mrb[0].mxu0
      %v2138 = vpop.f32.mrb[0].mxu0
      %2139 = vdwg.mxu0
      %2140 = vmatprep.subr.bf16.mxu0 0
      %2141 = vmatpush1.bf16.msra.mxu0 %v2066
      %2142 = vmatprep.subr.bf16.mxu0 0
      %2143 = vmatpush1.bf16.msra.mxu0 %v2067
      %2144 = vmatprep.subr.bf16.mxu0 0
      %2145 = vmatpush1.bf16.msra.mxu0 0
      %2146 = vmatprep.subr.bf16.mxu0 0
      %2147 = vmatpush1.bf16.msra.mxu0 0
      %2148 = vmatprep.subr.bf16.mxu0 0
      %2149 = vmatpush1.bf16.msra.mxu0 0
      %2150 = vmatprep.subr.bf16.mxu0 0
      %2151 = vmatpush1.bf16.msra.mxu0 0
      %2152 = vmatprep.subr.bf16.mxu0 0
      %2153 = vmatpush1.bf16.msra.mxu0 0
      %2154 = vmatprep.subr.bf16.mxu0 0
      %2155 = vmatpush1.bf16.msra.mxu0 0
      %2156 = vmatprep.subr.bf16.mxu0 0
      %2157 = vmatpush1.bf16.msra.mxu0 0
      %2158 = vmatprep.subr.bf16.mxu0 0
      %2159 = vmatpush1.bf16.msra.mxu0 0
      %2160 = vmatprep.subr.bf16.mxu0 0
      %2161 = vmatpush1.bf16.msra.mxu0 0
      %2162 = vmatprep.subr.bf16.mxu0 0
      %2163 = vmatpush1.bf16.msra.mxu0 0
      %2164 = vmatprep.subr.bf16.mxu0 0
      %2165 = vmatpush1.bf16.msra.mxu0 0
      %2166 = vmatprep.subr.bf16.mxu0 0
      %2167 = vmatpush1.bf16.msra.mxu0 0
      %2168 = vmatprep.subr.bf16.mxu0 0
      %2169 = vmatpush1.bf16.msra.mxu0 0
      %2170 = vmatprep.subr.bf16.mxu0 0
      %2171 = vmatpush1.bf16.msra.mxu0 0
      %2172 = vmatprep.mubr.bf16.mxu0 0
      %2173 = vmatmul.mubr.bf16.gmra.mrb[0].mxu0 %v2087
      %v2174 = vpop.f32.mrb[0].mxu0
      %v2175 = vadd.f32 %v2127, %v2174
      %v2176 = vpop.f32.mrb[0].mxu0
      %v2177 = vpop.f32.mrb[0].mxu0
      %v2178 = vadd.f32 %v2130, %v2177
      %v2179 = vpop.f32.mrb[0].mxu0
      %2180 = vmatprep.mubr.bf16.mxu0 0
      %2181 = vmatmul.mubr.bf16.gmra.mrb[0].mxu0 %v2090
      %v2182 = vpop.f32.mrb[0].mxu0
      %v2183 = vadd.f32 %v2135, %v2182
      %v2184 = vpop.f32.mrb[0].mxu0
      %v2185 = vpop.f32.mrb[0].mxu0
      %v2186 = vpop.f32.mrb[0].mxu0
      %2187 = vdwg.mxu0
      %v2188 = vmax.f32 %v2175, 0.0
      %v2189 = vmax.f32 %v2178, 0.0
      %v2190 = vmax.f32 %v2183, 0.0
      %v2191 = vpack.c.bf16 %v2189, %v2188
      %v2192 = vpack.c.bf16 %v2190, %v2190
      %v2193 = vld [vmem:[%s15] sm:$0xf]
      %v2194 = vld [vmem:[%s15 + $0x4] sm:$0xf]
      %v2195 = vld [vmem:[%s15 + $0x8] sm:$0xf]
      %v2196 = vld [vmem:[%s15 + $0xc] sm:$0xf]
      %v2197 = vld [vmem:[%s15 + $0x10] sm:$0xf]
      %v2198 = vld [vmem:[%s15 + $0x14] sm:$0xf]
      %v2199 = vld [vmem:[%s15 + $0x18] sm:$0xf]
      %v2200 = vld [vmem:[%s15 + $0x1c] sm:$0xf]
      %v2201 = vld [vmem:[%s16] sm:$0x1]
      %v2203 = vlaneseq
      %v2204 = vshrl.u32 %v2203, 7
      %v2205 = vsub.s32 0, %v2204
      %v2206 = vrot.slane %v2201, %v2205
      %v2216 = vunpack.c.l.b16 %v2193
      %v2217 = vunpack.c.l.b16 %v2194
      %v2218 = vunpack.c.l.b16 %v2195
      %v2219 = vunpack.c.l.b16 %v2196
      %v2220 = vunpack.c.l.b16 %v2197
      %v2221 = vunpack.c.l.b16 %v2198
      %v2222 = vunpack.c.l.b16 %v2199
      %v2223 = vunpack.c.l.b16 %v2200
      %v2224 = vpack.c.b16 %v2217, %v2216
      %v2225 = vpack.c.b16 %v2219, %v2218
      %v2226 = vpack.c.b16 %v2221, %v2220
      %v2227 = vpack.c.b16 %v2223, %v2222
      %v2233 = vsel %vm1949, %v2191, 0
      %v2236 = vsel %vm1949, %v2192, 0
      %2238 = vmatprep.subr.bf16.mxu0 0
      %2239 = vmatpush1.bf16.msra.mxu0 %v2224
      %2240 = vmatprep.subr.bf16.mxu0 0
      %2241 = vmatpush1.bf16.msra.mxu0 %v2225
      %2242 = vmatprep.subr.bf16.mxu0 0
      %2243 = vmatpush1.bf16.msra.mxu0 %v2226
      %2244 = vmatprep.subr.bf16.mxu0 0
      %2245 = vmatpush1.bf16.msra.mxu0 %v2227
      %2246 = vmatprep.subr.bf16.mxu0 0
      %2247 = vmatpush1.bf16.msra.mxu0 0
      %2248 = vmatprep.subr.bf16.mxu0 0
      %2249 = vmatpush1.bf16.msra.mxu0 0
      %2250 = vmatprep.subr.bf16.mxu0 0
      %2251 = vmatpush1.bf16.msra.mxu0 0
      %2252 = vmatprep.subr.bf16.mxu0 0
      %2253 = vmatpush1.bf16.msra.mxu0 0
      %2254 = vmatprep.subr.bf16.mxu0 0
      %2255 = vmatpush1.bf16.msra.mxu0 0
      %2256 = vmatprep.subr.bf16.mxu0 0
      %2257 = vmatpush1.bf16.msra.mxu0 0
      %2258 = vmatprep.subr.bf16.mxu0 0
      %2259 = vmatpush1.bf16.msra.mxu0 0
      %2260 = vmatprep.subr.bf16.mxu0 0
      %2261 = vmatpush1.bf16.msra.mxu0 0
      %2262 = vmatprep.subr.bf16.mxu0 0
      %2263 = vmatpush1.bf16.msra.mxu0 0
      %2264 = vmatprep.subr.bf16.mxu0 0
      %2265 = vmatpush1.bf16.msra.mxu0 0
      %2266 = vmatprep.subr.bf16.mxu0 0
      %2267 = vmatpush1.bf16.msra.mxu0 0
      %2268 = vmatprep.subr.bf16.mxu0 0
      %2269 = vmatpush1.bf16.msra.mxu0 0
      %2270 = vmatprep.mubr.bf16.mxu0 0
      %2271 = vmatmul.mubr.bf16.gmra.mrb[0].mxu0 %v2233
      %v2272 = vpop.f32.mrb[0].mxu0
      %v2273 = vadd.f32 %v2206, %v2272
      %v2274 = vpop.f32.mrb[0].mxu0
      %v2275 = vpop.f32.mrb[0].mxu0
      %v2276 = vadd.f32 %v2206, %v2275
      %v2277 = vpop.f32.mrb[0].mxu0
      %2278 = vmatprep.mubr.bf16.mxu0 0
      %2279 = vmatmul.mubr.bf16.gmra.mrb[0].mxu0 %v2236
      %v2280 = vpop.f32.mrb[0].mxu0
      %v2281 = vadd.f32 %v2206, %v2280
      %v2282 = vpop.f32.mrb[0].mxu0
      %v2283 = vpop.f32.mrb[0].mxu0
      %v2284 = vpop.f32.mrb[0].mxu0
      %2285 = vdwg.mxu0
      %v2286 = vadd.f32 %v2273, %v1778
      %v2287 = vadd.f32 %v2276, %v1779
      %v2288 = vadd.f32 %v2281, %v1780
      %v2289 = vld [vmem:[%s17] sm:$0x1]
      %v2290 = vld [vmem:[%s18] sm:$0x1]
      %v2291 = vsel %vm820, %v2286, 0.0
      %2292 = vadd.xlane.f32.xlu0 %v2291
      %v2293 = vpop.xlane.xlu0 %2292
      %v2294 = vsel %vm820, %v2287, 0.0
      %2295 = vadd.xlane.f32.xlu0 %v2294
      %v2296 = vpop.xlane.xlu0 %2295
      %v2297 = vsel %vm820, %v2288, 0.0
      %2298 = vadd.xlane.f32.xlu0 %v2297
      %v2299 = vpop.xlane.xlu0 %2298
      %v2300 = vmul.f32 %v2293, %v1714
      %v2301 = vmul.f32 %v2296, %v1714
      %v2302 = vmul.f32 %v2299, %v1714
      %v2303 = vsub.f32 %v2286, %v2300
      %v2304 = vsub.f32 %v2287, %v2301
      %v2305 = vsub.f32 %v2288, %v2302
      %v2306 = vmul.f32 %v2303, %v2303
      %v2307 = vmul.f32 %v2304, %v2304
      %v2308 = vmul.f32 %v2305, %v2305
      %v2309 = vsel %vm820, %v2306, 0.0
      %2310 = vadd.xlane.f32.xlu0 %v2309
      %v2311 = vpop.xlane.xlu0 %2310
      %v2312 = vsel %vm820, %v2307, 0.0
      %2313 = vadd.xlane.f32.xlu0 %v2312
      %v2314 = vpop.xlane.xlu0 %2313
      %v2315 = vsel %vm820, %v2308, 0.0
      %2316 = vadd.xlane.f32.xlu0 %v2315
      %v2317 = vpop.xlane.xlu0 %2316
      %v2318 = vmul.f32 %v2311, %v1714
      %v2319 = vmul.f32 %v2314, %v1714
      %v2320 = vmul.f32 %v2317, %v1714
      %v2321 = vadd.f32 %v2318, 1e-05
      %v2322 = vadd.f32 %v2319, 1e-05
      %v2323 = vadd.f32 %v2320, 1e-05
      %v2324 = vrsqrt.pop %v2321
      %v2325 = vrsqrt.pop %v2322
      %v2326 = vrsqrt.pop %v2323
      %v2327 = vmul.f32 %v2303, %v2324
      %v2328 = vmul.f32 %v2304, %v2325
      %v2329 = vmul.f32 %v2305, %v2326
      %v2331 = vlaneseq
      %v2332 = vshrl.u32 %v2331, 7
      %v2333 = vsub.s32 0, %v2332
      %v2334 = vrot.slane %v2289, %v2333
      %v2336 = vmul.f32 %v2327, %v2334
      %v2337 = vmul.f32 %v2328, %v2334
      %v2338 = vmul.f32 %v2329, %v2334
      %v2340 = vlaneseq
      %v2341 = vshrl.u32 %v2340, 7
      %v2342 = vsub.s32 0, %v2341
      %v2343 = vrot.slane %v2290, %v2342
      %v2345 = vadd.f32 %v2336, %v2343
      %v2346 = vadd.f32 %v2337, %v2343
      %v2347 = vadd.f32 %v2338, %v2343
      %v2348 = vmul.f32 %v2345, %v1766
      %v2349 = vmul.f32 %v2346, %v1771
      %v2350 = vmul.f32 %v2347, %v1776
      %v2351 = vpack.c.bf16 %v2349, %v2348
      %v2352 = vpack.c.bf16 %v2350, %v2350
      %v2353 = vld [vmem:[%s19] sm:$0xf]
      %v2354 = vld [vmem:[%s19 + $0x4] sm:$0xf]
      %v2355 = vld [vmem:[%s19 + $0x8] sm:$0xf]
      %v2356 = vld [vmem:[%s19 + $0xc] sm:$0xf]
      %v2357 = vld [vmem:[%s20] sm:$0x1]
      %v2359 = vlaneseq
      %v2360 = vshrl.u32 %v2359, 7
      %v2361 = vsub.s32 0, %v2360
      %v2362 = vrot.slane %v2357, %v2361
      %v2368 = vunpack.c.l.b16 %v2353
      %v2369 = vunpack.c.l.b16 %v2354
      %v2370 = vunpack.c.l.b16 %v2355
      %v2371 = vunpack.c.l.b16 %v2356
      %v2372 = vpack.c.b16 %v2369, %v2368
      %v2373 = vpack.c.b16 %v2371, %v2370
      %v2377 = vsel %vm820, %v2351, 0
      %v2380 = vsel %vm820, %v2352, 0
      %2382 = vmatprep.subr.bf16.mxu0 0
      %2383 = vmatpush1.bf16.msra.mxu0 %v2372
      %2384 = vmatprep.subr.bf16.mxu0 0
      %2385 = vmatpush1.bf16.msra.mxu0 %v2373
      %2386 = vmatprep.subr.bf16.mxu0 0
      %2387 = vmatpush1.bf16.msra.mxu0 0
      %2388 = vmatprep.subr.bf16.mxu0 0
      %2389 = vmatpush1.bf16.msra.mxu0 0
      %2390 = vmatprep.subr.bf16.mxu0 0
      %2391 = vmatpush1.bf16.msra.mxu0 0
      %2392 = vmatprep.subr.bf16.mxu0 0
      %2393 = vmatpush1.bf16.msra.mxu0 0
      %2394 = vmatprep.subr.bf16.mxu0 0
      %2395 = vmatpush1.bf16.msra.mxu0 0
      %2396 = vmatprep.subr.bf16.mxu0 0
      %2397 = vmatpush1.bf16.msra.mxu0 0
      %2398 = vmatprep.subr.bf16.mxu0 0
      %2399 = vmatpush1.bf16.msra.mxu0 0
      %2400 = vmatprep.subr.bf16.mxu0 0
      %2401 = vmatpush1.bf16.msra.mxu0 0
      %2402 = vmatprep.subr.bf16.mxu0 0
      %2403 = vmatpush1.bf16.msra.mxu0 0
      %2404 = vmatprep.subr.bf16.mxu0 0
      %2405 = vmatpush1.bf16.msra.mxu0 0
      %2406 = vmatprep.subr.bf16.mxu0 0
      %2407 = vmatpush1.bf16.msra.mxu0 0
      %2408 = vmatprep.subr.bf16.mxu0 0
      %2409 = vmatpush1.bf16.msra.mxu0 0
      %2410 = vmatprep.subr.bf16.mxu0 0
      %2411 = vmatpush1.bf16.msra.mxu0 0
      %2412 = vmatprep.subr.bf16.mxu0 0
      %2413 = vmatpush1.bf16.msra.mxu0 0
      %2414 = vmatprep.mubr.bf16.mxu0 0
      %2415 = vmatmul.mubr.bf16.gmra.mrb[0].mxu0 %v2377
      %v2416 = vpop.f32.mrb[0].mxu0
      %v2417 = vadd.f32 %v2362, %v2416
      %v2418 = vpop.f32.mrb[0].mxu0
      %v2419 = vpop.f32.mrb[0].mxu0
      %v2420 = vadd.f32 %v2362, %v2419
      %v2421 = vpop.f32.mrb[0].mxu0
      %2422 = vmatprep.mubr.bf16.mxu0 0
      %2423 = vmatmul.mubr.bf16.gmra.mrb[0].mxu0 %v2380
      %v2424 = vpop.f32.mrb[0].mxu0
      %v2425 = vadd.f32 %v2362, %v2424
      %v2426 = vpop.f32.mrb[0].mxu0
      %v2427 = vpop.f32.mrb[0].mxu0
      %v2428 = vpop.f32.mrb[0].mxu0
      %2429 = vdwg.mxu0
      %2430 = vst.msk [vmem:[%s779] sm:$0xff] %vm1027, %v2417
      %2431 = vst.msk [vmem:[%s779 + $0x8] sm:$0xff] %vm1027, %v2420
      %2432 = vst.msk [vmem:[%s779 + $0x10] sm:$0xff] %vm1027, %v2425
      %v2433 = vsel %vm1027, %v2417, 0.0
      %v2434 = vsel %vm1027, %v2420, 0.0
      %v2435 = vsel %vm1027, %v2425, 0.0
      %v2436 = vld [vmem:[%s21] sm:$0xf]
      %v2437 = vld [vmem:[%s21 + $0x4] sm:$0xf]
      %v2438 = vld [vmem:[%s21 + $0x8] sm:$0xf]
      %v2439 = vld [vmem:[%s21 + $0xc] sm:$0xf]
      %v2440 = vld [vmem:[%s21 + $0x10] sm:$0xf]
      %v2441 = vld [vmem:[%s21 + $0x14] sm:$0xf]
      %v2442 = vld [vmem:[%s21 + $0x18] sm:$0xf]
      %v2443 = vld [vmem:[%s21 + $0x1c] sm:$0xf]
      %v2444 = vld [vmem:[%s21 + $0x20] sm:$0xf]
      %v2445 = vld [vmem:[%s21 + $0x24] sm:$0xf]
      %v2446 = vld [vmem:[%s21 + $0x28] sm:$0xf]
      %v2447 = vld [vmem:[%s21 + $0x2c] sm:$0xf]
      %v2448 = vld [vmem:[%s21 + $0x30] sm:$0xf]
      %v2449 = vld [vmem:[%s21 + $0x34] sm:$0xf]
      %v2450 = vld [vmem:[%s21 + $0x38] sm:$0xf]
      %v2451 = vld [vmem:[%s21 + $0x3c] sm:$0xf]
      %v2452 = vld [vmem:[%s21 + $0x40] sm:$0xf]
      %v2453 = vld [vmem:[%s21 + $0x44] sm:$0xf]
      %v2454 = vld [vmem:[%s21 + $0x48] sm:$0xf]
      %v2455 = vld [vmem:[%s21 + $0x4c] sm:$0xf]
      %v2456 = vld [vmem:[%s22] sm:$0x1]
      %v2460 = vrot.slane %v2433, 6
      %v2461 = vrot.slane %v2434, 6
      %v2462 = vsel %vm1912, %v2460, %v2461
      %v2463 = vrot.slane %v2435, 6
      %v2464 = vsel %vm1912, %v2461, %v2463
      %v2469 = vsel %vm1912, 0.0, %v2460
      %v2470 = vsel %vm1912, %v2463, 0.0
      %v2473 = vrot.slane %v2469, 1
      %v2474 = vrot.slane %v2462, 1
      %v2475 = vsel %vm1834, %v2473, %v2474
      %v2476 = vrot.slane %v2464, 1
      %v2477 = vsel %vm1834, %v2474, %v2476
      %v2478 = vrot.slane %v2470, 1
      %v2479 = vsel %vm1834, %v2476, %v2478
      %2480 = vrot.lane.b32.xlu0 %v2475, 32
      %v2481 = vpop.permute.xlu0 %2480
      %2482 = vrot.lane.b32.xlu0 %v2477, 32
      %v2483 = vpop.permute.xlu0 %2482
      %2484 = vrot.lane.b32.xlu0 %v2479, 32
      %v2485 = vpop.permute.xlu0 %2484
      %v2489 = vrot.slane %v2469, 2
      %v2490 = vrot.slane %v2462, 2
      %v2491 = vsel %vm1851, %v2489, %v2490
      %v2492 = vrot.slane %v2464, 2
      %v2493 = vsel %vm1851, %v2490, %v2492
      %v2494 = vrot.slane %v2470, 2
      %v2495 = vsel %vm1851, %v2492, %v2494
      %2496 = vrot.lane.b32.xlu0 %v2491, 64
      %v2497 = vpop.permute.xlu0 %2496
      %2498 = vrot.lane.b32.xlu0 %v2493, 64
      %v2499 = vpop.permute.xlu0 %2498
      %2500 = vrot.lane.b32.xlu0 %v2495, 64
      %v2501 = vpop.permute.xlu0 %2500
      %v2505 = vrot.slane %v2469, 3
      %v2506 = vrot.slane %v2462, 3
      %v2507 = vsel %vm1868, %v2505, %v2506
      %v2508 = vrot.slane %v2464, 3
      %v2509 = vsel %vm1868, %v2506, %v2508
      %v2510 = vrot.slane %v2470, 3
      %v2511 = vsel %vm1868, %v2508, %v2510
      %2512 = vrot.lane.b32.xlu0 %v2507, 96
      %v2513 = vpop.permute.xlu0 %2512
      %2514 = vrot.lane.b32.xlu0 %v2509, 96
      %v2515 = vpop.permute.xlu0 %2514
      %2516 = vrot.lane.b32.xlu0 %v2511, 96
      %v2517 = vpop.permute.xlu0 %2516
      %v2521 = vrot.slane %v2469, 4
      %v2522 = vrot.slane %v2462, 4
      %v2523 = vsel %vm1132, %v2521, %v2522
      %v2524 = vrot.slane %v2464, 4
      %v2525 = vsel %vm1132, %v2522, %v2524
      %v2526 = vrot.slane %v2470, 4
      %v2527 = vsel %vm1132, %v2524, %v2526
      %v2531 = vsel %vm820, %v2469, %v2481
      %v2532 = vsel %vm820, %v2462, %v2483
      %v2533 = vsel %vm820, %v2464, %v2485
      %v2534 = vsel %vm1949, %v2531, %v2497
      %v2535 = vsel %vm1949, %v2532, %v2499
      %v2536 = vsel %vm1949, %v2533, %v2501
      %v2537 = vsel %vm1953, %v2534, %v2513
      %v2538 = vsel %vm1953, %v2535, %v2515
      %v2539 = vsel %vm1953, %v2536, %v2517
      %v2540 = vpack.c.bf16 %v2538, %v2537
      %v2541 = vpack.c.bf16 %v2525, %v2523
      %v2542 = vpack.c.bf16 %v2539, %v2539
      %v2543 = vpack.c.bf16 %v2527, %v2527
      %v2545 = vlaneseq
      %v2546 = vshrl.u32 %v2545, 7
      %v2547 = vsub.s32 0, %v2546
      %v2548 = vrot.slane %v2456, %v2547
      %v2570 = vunpack.c.l.b16 %v2436
      %v2571 = vunpack.c.l.b16 %v2437
      %v2572 = vunpack.c.l.b16 %v2438
      %v2573 = vunpack.c.l.b16 %v2439
      %v2574 = vunpack.c.l.b16 %v2440
      %v2575 = vunpack.c.l.b16 %v2441
      %v2576 = vunpack.c.l.b16 %v2442
      %v2577 = vunpack.c.l.b16 %v2443
      %v2578 = vunpack.c.l.b16 %v2444
      %v2579 = vunpack.c.l.b16 %v2445
      %v2580 = vunpack.c.l.b16 %v2446
      %v2581 = vunpack.c.l.b16 %v2447
      %v2582 = vunpack.c.l.b16 %v2448
      %v2583 = vunpack.c.l.b16 %v2449
      %v2584 = vunpack.c.l.b16 %v2450
      %v2585 = vunpack.c.l.b16 %v2451
      %v2586 = vunpack.c.l.b16 %v2452
      %v2587 = vunpack.c.l.b16 %v2453
      %v2588 = vunpack.c.l.b16 %v2454
      %v2589 = vunpack.c.l.b16 %v2455
      %v2590 = vpack.c.b16 %v2571, %v2570
      %v2591 = vpack.c.b16 %v2573, %v2572
      %v2592 = vpack.c.b16 %v2575, %v2574
      %v2593 = vpack.c.b16 %v2577, %v2576
      %v2594 = vpack.c.b16 %v2579, %v2578
      %v2595 = vpack.c.b16 %v2581, %v2580
      %v2596 = vpack.c.b16 %v2583, %v2582
      %v2597 = vpack.c.b16 %v2585, %v2584
      %v2598 = vpack.c.b16 %v2587, %v2586
      %v2599 = vpack.c.b16 %v2589, %v2588
      %v2611 = vsel %vm820, %v2541, 0
      %v2614 = vsel %vm820, %v2543, 0
      %2616 = vmatprep.subr.bf16.mxu0 0
      %2617 = vmatpush1.bf16.msra.mxu0 %v2590
      %2618 = vmatprep.subr.bf16.mxu0 0
      %2619 = vmatpush1.bf16.msra.mxu0 %v2591
      %2620 = vmatprep.subr.bf16.mxu0 0
      %2621 = vmatpush1.bf16.msra.mxu0 %v2592
      %2622 = vmatprep.subr.bf16.mxu0 0
      %2623 = vmatpush1.bf16.msra.mxu0 %v2593
      %2624 = vmatprep.subr.bf16.mxu0 0
      %2625 = vmatpush1.bf16.msra.mxu0 %v2594
      %2626 = vmatprep.subr.bf16.mxu0 0
      %2627 = vmatpush1.bf16.msra.mxu0 %v2595
      %2628 = vmatprep.subr.bf16.mxu0 0
      %2629 = vmatpush1.bf16.msra.mxu0 %v2596
      %2630 = vmatprep.subr.bf16.mxu0 0
      %2631 = vmatpush1.bf16.msra.mxu0 %v2597
      %2632 = vmatprep.subr.bf16.mxu0 0
      %2633 = vmatpush1.bf16.msra.mxu0 %v2598
      %2634 = vmatprep.subr.bf16.mxu0 0
      %2635 = vmatpush1.bf16.msra.mxu0 %v2599
      %2636 = vmatprep.subr.bf16.mxu0 0
      %2637 = vmatpush1.bf16.msra.mxu0 0
      %2638 = vmatprep.subr.bf16.mxu0 0
      %2639 = vmatpush1.bf16.msra.mxu0 0
      %2640 = vmatprep.subr.bf16.mxu0 0
      %2641 = vmatpush1.bf16.msra.mxu0 0
      %2642 = vmatprep.subr.bf16.mxu0 0
      %2643 = vmatpush1.bf16.msra.mxu0 0
      %2644 = vmatprep.subr.bf16.mxu0 0
      %2645 = vmatpush1.bf16.msra.mxu0 0
      %2646 = vmatprep.subr.bf16.mxu0 0
      %2647 = vmatpush1.bf16.msra.mxu0 0
      %2648 = vmatprep.mubr.bf16.mxu0 %v2611
      %2649 = vmatmul.mubr.bf16.gmra.mrb[0].mxu0 %v2540
      %v2650 = vpop.f32.mrb[0].mxu0
      %v2651 = vadd.f32 %v2548, %v2650
      %v2652 = vpop.f32.mrb[0].mxu0
      %v2653 = vpop.f32.mrb[0].mxu0
      %v2654 = vadd.f32 %v2548, %v2653
      %v2655 = vpop.f32.mrb[0].mxu0
      %2656 = vmatprep.mubr.bf16.mxu0 %v2614
      %2657 = vmatmul.mubr.bf16.gmra.mrb[0].mxu0 %v2542
      %v2658 = vpop.f32.mrb[0].mxu0
      %v2659 = vadd.f32 %v2548, %v2658
      %v2660 = vpop.f32.mrb[0].mxu0
      %v2661 = vpop.f32.mrb[0].mxu0
      %v2662 = vpop.f32.mrb[0].mxu0
      %2663 = vdwg.mxu0
      %v2664 = vtanh.pop %v2651
      %v2665 = vtanh.pop %v2654
      %v2666 = vtanh.pop %v2659
      %s2667 = scalar_lea.vmem %s21, 80
      %v2668 = vld [vmem:[%s2667] sm:$0xf]
      %v2669 = vld [vmem:[%s2667 + $0x4] sm:$0xf]
      %v2670 = vld [vmem:[%s2667 + $0x8] sm:$0xf]
      %v2671 = vld [vmem:[%s2667 + $0xc] sm:$0xf]
      %v2672 = vld [vmem:[%s2667 + $0x10] sm:$0xf]
      %v2673 = vld [vmem:[%s2667 + $0x14] sm:$0xf]
      %v2674 = vld [vmem:[%s2667 + $0x18] sm:$0xf]
      %v2675 = vld [vmem:[%s2667 + $0x1c] sm:$0xf]
      %v2676 = vld [vmem:[%s2667 + $0x20] sm:$0xf]
      %v2677 = vld [vmem:[%s2667 + $0x24] sm:$0xf]
      %v2678 = vld [vmem:[%s2667 + $0x28] sm:$0xf]
      %v2679 = vld [vmem:[%s2667 + $0x2c] sm:$0xf]
      %v2680 = vld [vmem:[%s2667 + $0x30] sm:$0xf]
      %v2681 = vld [vmem:[%s2667 + $0x34] sm:$0xf]
      %v2682 = vld [vmem:[%s2667 + $0x38] sm:$0xf]
      %v2683 = vld [vmem:[%s2667 + $0x3c] sm:$0xf]
      %v2684 = vld [vmem:[%s2667 + $0x40] sm:$0xf]
      %v2685 = vld [vmem:[%s2667 + $0x44] sm:$0xf]
      %v2686 = vld [vmem:[%s2667 + $0x48] sm:$0xf]
      %v2687 = vld [vmem:[%s2667 + $0x4c] sm:$0xf]
      %s2688 = scalar_lea.vmem %s22, 1
      %v2689 = vld [vmem:[%s2688] sm:$0x1]
      %v2693 = vrot.slane %v2664, 6
      %v2694 = vrot.slane %v2665, 6
      %v2695 = vsel %vm1912, %v2693, %v2694
      %v2696 = vrot.slane %v2666, 6
      %v2697 = vsel %vm1912, %v2694, %v2696
      %v2702 = vsel %vm1912, 0.0, %v2693
      %v2703 = vsel %vm1912, %v2696, 0.0
      %v2706 = vrot.slane %v2702, 1
      %v2707 = vrot.slane %v2695, 1
      %v2708 = vsel %vm1834, %v2706, %v2707
      %v2709 = vrot.slane %v2697, 1
      %v2710 = vsel %vm1834, %v2707, %v2709
      %v2711 = vrot.slane %v2703, 1
      %v2712 = vsel %vm1834, %v2709, %v2711
      %2713 = vrot.lane.b32.xlu0 %v2708, 32
      %v2714 = vpop.permute.xlu0 %2713
      %2715 = vrot.lane.b32.xlu0 %v2710, 32
      %v2716 = vpop.permute.xlu0 %2715
      %2717 = vrot.lane.b32.xlu0 %v2712, 32
      %v2718 = vpop.permute.xlu0 %2717
      %v2722 = vrot.slane %v2702, 2
      %v2723 = vrot.slane %v2695, 2
      %v2724 = vsel %vm1851, %v2722, %v2723
      %v2725 = vrot.slane %v2697, 2
      %v2726 = vsel %vm1851, %v2723, %v2725
      %v2727 = vrot.slane %v2703, 2
      %v2728 = vsel %vm1851, %v2725, %v2727
      %2729 = vrot.lane.b32.xlu0 %v2724, 64
      %v2730 = vpop.permute.xlu0 %2729
      %2731 = vrot.lane.b32.xlu0 %v2726, 64
      %v2732 = vpop.permute.xlu0 %2731
      %2733 = vrot.lane.b32.xlu0 %v2728, 64
      %v2734 = vpop.permute.xlu0 %2733
      %v2738 = vrot.slane %v2702, 3
      %v2739 = vrot.slane %v2695, 3
      %v2740 = vsel %vm1868, %v2738, %v2739
      %v2741 = vrot.slane %v2697, 3
      %v2742 = vsel %vm1868, %v2739, %v2741
      %v2743 = vrot.slane %v2703, 3
      %v2744 = vsel %vm1868, %v2741, %v2743
      %2745 = vrot.lane.b32.xlu0 %v2740, 96
      %v2746 = vpop.permute.xlu0 %2745
      %2747 = vrot.lane.b32.xlu0 %v2742, 96
      %v2748 = vpop.permute.xlu0 %2747
      %2749 = vrot.lane.b32.xlu0 %v2744, 96
      %v2750 = vpop.permute.xlu0 %2749
      %v2754 = vrot.slane %v2702, 4
      %v2755 = vrot.slane %v2695, 4
      %v2756 = vsel %vm1132, %v2754, %v2755
      %v2757 = vrot.slane %v2697, 4
      %v2758 = vsel %vm1132, %v2755, %v2757
      %v2759 = vrot.slane %v2703, 4
      %v2760 = vsel %vm1132, %v2757, %v2759
      %v2764 = vsel %vm820, %v2702, %v2714
      %v2765 = vsel %vm820, %v2695, %v2716
      %v2766 = vsel %vm820, %v2697, %v2718
      %v2767 = vsel %vm1949, %v2764, %v2730
      %v2768 = vsel %vm1949, %v2765, %v2732
      %v2769 = vsel %vm1949, %v2766, %v2734
      %v2770 = vsel %vm1953, %v2767, %v2746
      %v2771 = vsel %vm1953, %v2768, %v2748
      %v2772 = vsel %vm1953, %v2769, %v2750
      %v2773 = vpack.c.bf16 %v2771, %v2770
      %v2774 = vpack.c.bf16 %v2758, %v2756
      %v2775 = vpack.c.bf16 %v2772, %v2772
      %v2776 = vpack.c.bf16 %v2760, %v2760
      %v2778 = vlaneseq
      %v2779 = vshrl.u32 %v2778, 7
      %v2780 = vsub.s32 0, %v2779
      %v2781 = vrot.slane %v2689, %v2780
      %v2803 = vunpack.c.l.b16 %v2668
      %v2804 = vunpack.c.l.b16 %v2669
      %v2805 = vunpack.c.l.b16 %v2670
      %v2806 = vunpack.c.l.b16 %v2671
      %v2807 = vunpack.c.l.b16 %v2672
      %v2808 = vunpack.c.l.b16 %v2673
      %v2809 = vunpack.c.l.b16 %v2674
      %v2810 = vunpack.c.l.b16 %v2675
      %v2811 = vunpack.c.l.b16 %v2676
      %v2812 = vunpack.c.l.b16 %v2677
      %v2813 = vunpack.c.l.b16 %v2678
      %v2814 = vunpack.c.l.b16 %v2679
      %v2815 = vunpack.c.l.b16 %v2680
      %v2816 = vunpack.c.l.b16 %v2681
      %v2817 = vunpack.c.l.b16 %v2682
      %v2818 = vunpack.c.l.b16 %v2683
      %v2819 = vunpack.c.l.b16 %v2684
      %v2820 = vunpack.c.l.b16 %v2685
      %v2821 = vunpack.c.l.b16 %v2686
      %v2822 = vunpack.c.l.b16 %v2687
      %v2823 = vpack.c.b16 %v2804, %v2803
      %v2824 = vpack.c.b16 %v2806, %v2805
      %v2825 = vpack.c.b16 %v2808, %v2807
      %v2826 = vpack.c.b16 %v2810, %v2809
      %v2827 = vpack.c.b16 %v2812, %v2811
      %v2828 = vpack.c.b16 %v2814, %v2813
      %v2829 = vpack.c.b16 %v2816, %v2815
      %v2830 = vpack.c.b16 %v2818, %v2817
      %v2831 = vpack.c.b16 %v2820, %v2819
      %v2832 = vpack.c.b16 %v2822, %v2821
      %v2844 = vsel %vm820, %v2774, 0
      %v2847 = vsel %vm820, %v2776, 0
      %2849 = vmatprep.subr.bf16.mxu0 0
      %2850 = vmatpush1.bf16.msra.mxu0 %v2823
      %2851 = vmatprep.subr.bf16.mxu0 0
      %2852 = vmatpush1.bf16.msra.mxu0 %v2824
      %2853 = vmatprep.subr.bf16.mxu0 0
      %2854 = vmatpush1.bf16.msra.mxu0 %v2825
      %2855 = vmatprep.subr.bf16.mxu0 0
      %2856 = vmatpush1.bf16.msra.mxu0 %v2826
      %2857 = vmatprep.subr.bf16.mxu0 0
      %2858 = vmatpush1.bf16.msra.mxu0 %v2827
      %2859 = vmatprep.subr.bf16.mxu0 0
      %2860 = vmatpush1.bf16.msra.mxu0 %v2828
      %2861 = vmatprep.subr.bf16.mxu0 0
      %2862 = vmatpush1.bf16.msra.mxu0 %v2829
      %2863 = vmatprep.subr.bf16.mxu0 0
      %2864 = vmatpush1.bf16.msra.mxu0 %v2830
      %2865 = vmatprep.subr.bf16.mxu0 0
      %2866 = vmatpush1.bf16.msra.mxu0 %v2831
      %2867 = vmatprep.subr.bf16.mxu0 0
      %2868 = vmatpush1.bf16.msra.mxu0 %v2832
      %2869 = vmatprep.subr.bf16.mxu0 0
      %2870 = vmatpush1.bf16.msra.mxu0 0
      %2871 = vmatprep.subr.bf16.mxu0 0
      %2872 = vmatpush1.bf16.msra.mxu0 0
      %2873 = vmatprep.subr.bf16.mxu0 0
      %2874 = vmatpush1.bf16.msra.mxu0 0
      %2875 = vmatprep.subr.bf16.mxu0 0
      %2876 = vmatpush1.bf16.msra.mxu0 0
      %2877 = vmatprep.subr.bf16.mxu0 0
      %2878 = vmatpush1.bf16.msra.mxu0 0
      %2879 = vmatprep.subr.bf16.mxu0 0
      %2880 = vmatpush1.bf16.msra.mxu0 0
      %2881 = vmatprep.mubr.bf16.mxu0 %v2844
      %2882 = vmatmul.mubr.bf16.gmra.mrb[0].mxu0 %v2773
      %v2883 = vpop.f32.mrb[0].mxu0
      %v2884 = vadd.f32 %v2781, %v2883
      %v2885 = vpop.f32.mrb[0].mxu0
      %v2886 = vpop.f32.mrb[0].mxu0
      %v2887 = vadd.f32 %v2781, %v2886
      %v2888 = vpop.f32.mrb[0].mxu0
      %2889 = vmatprep.mubr.bf16.mxu0 %v2847
      %2890 = vmatmul.mubr.bf16.gmra.mrb[0].mxu0 %v2775
      %v2891 = vpop.f32.mrb[0].mxu0
      %v2892 = vadd.f32 %v2781, %v2891
      %v2893 = vpop.f32.mrb[0].mxu0
      %v2894 = vpop.f32.mrb[0].mxu0
      %v2895 = vpop.f32.mrb[0].mxu0
      %2896 = vdwg.mxu0
      %v2897 = vtanh.pop %v2884
      %v2898 = vtanh.pop %v2887
      %v2899 = vtanh.pop %v2892
      %s2900 = scalar_lea.vmem %s21, 160
      %v2901 = vld [vmem:[%s2900] sm:$0xf]
      %v2902 = vld [vmem:[%s2900 + $0x4] sm:$0xf]
      %v2903 = vld [vmem:[%s2900 + $0x8] sm:$0xf]
      %v2904 = vld [vmem:[%s2900 + $0xc] sm:$0xf]
      %v2905 = vld [vmem:[%s2900 + $0x10] sm:$0xf]
      %v2906 = vld [vmem:[%s2900 + $0x14] sm:$0xf]
      %v2907 = vld [vmem:[%s2900 + $0x18] sm:$0xf]
      %v2908 = vld [vmem:[%s2900 + $0x1c] sm:$0xf]
      %v2909 = vld [vmem:[%s2900 + $0x20] sm:$0xf]
      %v2910 = vld [vmem:[%s2900 + $0x24] sm:$0xf]
      %v2911 = vld [vmem:[%s2900 + $0x28] sm:$0xf]
      %v2912 = vld [vmem:[%s2900 + $0x2c] sm:$0xf]
      %v2913 = vld [vmem:[%s2900 + $0x30] sm:$0xf]
      %v2914 = vld [vmem:[%s2900 + $0x34] sm:$0xf]
      %v2915 = vld [vmem:[%s2900 + $0x38] sm:$0xf]
      %v2916 = vld [vmem:[%s2900 + $0x3c] sm:$0xf]
      %v2917 = vld [vmem:[%s2900 + $0x40] sm:$0xf]
      %v2918 = vld [vmem:[%s2900 + $0x44] sm:$0xf]
      %v2919 = vld [vmem:[%s2900 + $0x48] sm:$0xf]
      %v2920 = vld [vmem:[%s2900 + $0x4c] sm:$0xf]
      %s2921 = scalar_lea.vmem %s22, 2
      %v2922 = vld [vmem:[%s2921] sm:$0x1]
      %v2926 = vrot.slane %v2897, 6
      %v2927 = vrot.slane %v2898, 6
      %v2928 = vsel %vm1912, %v2926, %v2927
      %v2929 = vrot.slane %v2899, 6
      %v2930 = vsel %vm1912, %v2927, %v2929
      %v2935 = vsel %vm1912, 0.0, %v2926
      %v2936 = vsel %vm1912, %v2929, 0.0
      %v2939 = vrot.slane %v2935, 1
      %v2940 = vrot.slane %v2928, 1
      %v2941 = vsel %vm1834, %v2939, %v2940
      %v2942 = vrot.slane %v2930, 1
      %v2943 = vsel %vm1834, %v2940, %v2942
      %v2944 = vrot.slane %v2936, 1
      %v2945 = vsel %vm1834, %v2942, %v2944
      %2946 = vrot.lane.b32.xlu0 %v2941, 32
      %v2947 = vpop.permute.xlu0 %2946
      %2948 = vrot.lane.b32.xlu0 %v2943, 32
      %v2949 = vpop.permute.xlu0 %2948
      %2950 = vrot.lane.b32.xlu0 %v2945, 32
      %v2951 = vpop.permute.xlu0 %2950
      %v2955 = vrot.slane %v2935, 2
      %v2956 = vrot.slane %v2928, 2
      %v2957 = vsel %vm1851, %v2955, %v2956
      %v2958 = vrot.slane %v2930, 2
      %v2959 = vsel %vm1851, %v2956, %v2958
      %v2960 = vrot.slane %v2936, 2
      %v2961 = vsel %vm1851, %v2958, %v2960
      %2962 = vrot.lane.b32.xlu0 %v2957, 64
      %v2963 = vpop.permute.xlu0 %2962
      %2964 = vrot.lane.b32.xlu0 %v2959, 64
      %v2965 = vpop.permute.xlu0 %2964
      %2966 = vrot.lane.b32.xlu0 %v2961, 64
      %v2967 = vpop.permute.xlu0 %2966
      %v2971 = vrot.slane %v2935, 3
      %v2972 = vrot.slane %v2928, 3
      %v2973 = vsel %vm1868, %v2971, %v2972
      %v2974 = vrot.slane %v2930, 3
      %v2975 = vsel %vm1868, %v2972, %v2974
      %v2976 = vrot.slane %v2936, 3
      %v2977 = vsel %vm1868, %v2974, %v2976
      %2978 = vrot.lane.b32.xlu0 %v2973, 96
      %v2979 = vpop.permute.xlu0 %2978
      %2980 = vrot.lane.b32.xlu0 %v2975, 96
      %v2981 = vpop.permute.xlu0 %2980
      %2982 = vrot.lane.b32.xlu0 %v2977, 96
      %v2983 = vpop.permute.xlu0 %2982
      %v2987 = vrot.slane %v2935, 4
      %v2988 = vrot.slane %v2928, 4
      %v2989 = vsel %vm1132, %v2987, %v2988
      %v2990 = vrot.slane %v2930, 4
      %v2991 = vsel %vm1132, %v2988, %v2990
      %v2992 = vrot.slane %v2936, 4
      %v2993 = vsel %vm1132, %v2990, %v2992
      %v2997 = vsel %vm820, %v2935, %v2947
      %v2998 = vsel %vm820, %v2928, %v2949
      %v2999 = vsel %vm820, %v2930, %v2951
      %v3000 = vsel %vm1949, %v2997, %v2963
      %v3001 = vsel %vm1949, %v2998, %v2965
      %v3002 = vsel %vm1949, %v2999, %v2967
      %v3003 = vsel %vm1953, %v3000, %v2979
      %v3004 = vsel %vm1953, %v3001, %v2981
      %v3005 = vsel %vm1953, %v3002, %v2983
      %v3006 = vpack.c.bf16 %v3004, %v3003
      %v3007 = vpack.c.bf16 %v2991, %v2989
      %v3008 = vpack.c.bf16 %v3005, %v3005
      %v3009 = vpack.c.bf16 %v2993, %v2993
      %v3011 = vlaneseq
      %v3012 = vshrl.u32 %v3011, 7
      %v3013 = vsub.s32 0, %v3012
      %v3014 = vrot.slane %v2922, %v3013
      %v3036 = vunpack.c.l.b16 %v2901
      %v3037 = vunpack.c.l.b16 %v2902
      %v3038 = vunpack.c.l.b16 %v2903
      %v3039 = vunpack.c.l.b16 %v2904
      %v3040 = vunpack.c.l.b16 %v2905
      %v3041 = vunpack.c.l.b16 %v2906
      %v3042 = vunpack.c.l.b16 %v2907
      %v3043 = vunpack.c.l.b16 %v2908
      %v3044 = vunpack.c.l.b16 %v2909
      %v3045 = vunpack.c.l.b16 %v2910
      %v3046 = vunpack.c.l.b16 %v2911
      %v3047 = vunpack.c.l.b16 %v2912
      %v3048 = vunpack.c.l.b16 %v2913
      %v3049 = vunpack.c.l.b16 %v2914
      %v3050 = vunpack.c.l.b16 %v2915
      %v3051 = vunpack.c.l.b16 %v2916
      %v3052 = vunpack.c.l.b16 %v2917
      %v3053 = vunpack.c.l.b16 %v2918
      %v3054 = vunpack.c.l.b16 %v2919
      %v3055 = vunpack.c.l.b16 %v2920
      %v3056 = vpack.c.b16 %v3037, %v3036
      %v3057 = vpack.c.b16 %v3039, %v3038
      %v3058 = vpack.c.b16 %v3041, %v3040
      %v3059 = vpack.c.b16 %v3043, %v3042
      %v3060 = vpack.c.b16 %v3045, %v3044
      %v3061 = vpack.c.b16 %v3047, %v3046
      %v3062 = vpack.c.b16 %v3049, %v3048
      %v3063 = vpack.c.b16 %v3051, %v3050
      %v3064 = vpack.c.b16 %v3053, %v3052
      %v3065 = vpack.c.b16 %v3055, %v3054
      %v3077 = vsel %vm820, %v3007, 0
      %v3080 = vsel %vm820, %v3009, 0
      %3082 = vmatprep.subr.bf16.mxu0 0
      %3083 = vmatpush1.bf16.msra.mxu0 %v3056
      %3084 = vmatprep.subr.bf16.mxu0 0
      %3085 = vmatpush1.bf16.msra.mxu0 %v3057
      %3086 = vmatprep.subr.bf16.mxu0 0
      %3087 = vmatpush1.bf16.msra.mxu0 %v3058
      %3088 = vmatprep.subr.bf16.mxu0 0
      %3089 = vmatpush1.bf16.msra.mxu0 %v3059
      %3090 = vmatprep.subr.bf16.mxu0 0
      %3091 = vmatpush1.bf16.msra.mxu0 %v3060
      %3092 = vmatprep.subr.bf16.mxu0 0
      %3093 = vmatpush1.bf16.msra.mxu0 %v3061
      %3094 = vmatprep.subr.bf16.mxu0 0
      %3095 = vmatpush1.bf16.msra.mxu0 %v3062
      %3096 = vmatprep.subr.bf16.mxu0 0
      %3097 = vmatpush1.bf16.msra.mxu0 %v3063
      %3098 = vmatprep.subr.bf16.mxu0 0
      %3099 = vmatpush1.bf16.msra.mxu0 %v3064
      %3100 = vmatprep.subr.bf16.mxu0 0
      %3101 = vmatpush1.bf16.msra.mxu0 %v3065
      %3102 = vmatprep.subr.bf16.mxu0 0
      %3103 = vmatpush1.bf16.msra.mxu0 0
      %3104 = vmatprep.subr.bf16.mxu0 0
      %3105 = vmatpush1.bf16.msra.mxu0 0
      %3106 = vmatprep.subr.bf16.mxu0 0
      %3107 = vmatpush1.bf16.msra.mxu0 0
      %3108 = vmatprep.subr.bf16.mxu0 0
      %3109 = vmatpush1.bf16.msra.mxu0 0
      %3110 = vmatprep.subr.bf16.mxu0 0
      %3111 = vmatpush1.bf16.msra.mxu0 0
      %3112 = vmatprep.subr.bf16.mxu0 0
      %3113 = vmatpush1.bf16.msra.mxu0 0
      %3114 = vmatprep.mubr.bf16.mxu0 %v3077
      %3115 = vmatmul.mubr.bf16.gmra.mrb[0].mxu0 %v3006
      %v3116 = vpop.f32.mrb[0].mxu0
      %v3117 = vadd.f32 %v3014, %v3116
      %v3118 = vpop.f32.mrb[0].mxu0
      %v3119 = vpop.f32.mrb[0].mxu0
      %v3120 = vadd.f32 %v3014, %v3119
      %v3121 = vpop.f32.mrb[0].mxu0
      %3122 = vmatprep.mubr.bf16.mxu0 %v3080
      %3123 = vmatmul.mubr.bf16.gmra.mrb[0].mxu0 %v3008
      %v3124 = vpop.f32.mrb[0].mxu0
      %v3125 = vadd.f32 %v3014, %v3124
      %v3126 = vpop.f32.mrb[0].mxu0
      %v3127 = vpop.f32.mrb[0].mxu0
      %v3128 = vpop.f32.mrb[0].mxu0
      %3129 = vdwg.mxu0
      %v3130 = vtanh.pop %v3117
      %v3131 = vtanh.pop %v3120
      %v3132 = vtanh.pop %v3125
      %s3133 = scalar_lea.vmem %s21, 240
      %v3134 = vld [vmem:[%s3133] sm:$0xf]
      %v3135 = vld [vmem:[%s3133 + $0x4] sm:$0xf]
      %v3136 = vld [vmem:[%s3133 + $0x8] sm:$0xf]
      %v3137 = vld [vmem:[%s3133 + $0xc] sm:$0xf]
      %v3138 = vld [vmem:[%s3133 + $0x10] sm:$0xf]
      %v3139 = vld [vmem:[%s3133 + $0x14] sm:$0xf]
      %v3140 = vld [vmem:[%s3133 + $0x18] sm:$0xf]
      %v3141 = vld [vmem:[%s3133 + $0x1c] sm:$0xf]
      %v3142 = vld [vmem:[%s3133 + $0x20] sm:$0xf]
      %v3143 = vld [vmem:[%s3133 + $0x24] sm:$0xf]
      %v3144 = vld [vmem:[%s3133 + $0x28] sm:$0xf]
      %v3145 = vld [vmem:[%s3133 + $0x2c] sm:$0xf]
      %v3146 = vld [vmem:[%s3133 + $0x30] sm:$0xf]
      %v3147 = vld [vmem:[%s3133 + $0x34] sm:$0xf]
      %v3148 = vld [vmem:[%s3133 + $0x38] sm:$0xf]
      %v3149 = vld [vmem:[%s3133 + $0x3c] sm:$0xf]
      %v3150 = vld [vmem:[%s3133 + $0x40] sm:$0xf]
      %v3151 = vld [vmem:[%s3133 + $0x44] sm:$0xf]
      %v3152 = vld [vmem:[%s3133 + $0x48] sm:$0xf]
      %v3153 = vld [vmem:[%s3133 + $0x4c] sm:$0xf]
      %s3154 = scalar_lea.vmem %s22, 3
      %v3155 = vld [vmem:[%s3154] sm:$0x1]
      %v3159 = vrot.slane %v3130, 6
      %v3160 = vrot.slane %v3131, 6
      %v3161 = vsel %vm1912, %v3159, %v3160
      %v3162 = vrot.slane %v3132, 6
      %v3163 = vsel %vm1912, %v3160, %v3162
      %v3168 = vsel %vm1912, 0.0, %v3159
      %v3169 = vsel %vm1912, %v3162, 0.0
      %v3172 = vrot.slane %v3168, 1
      %v3173 = vrot.slane %v3161, 1
      %v3174 = vsel %vm1834, %v3172, %v3173
      %v3175 = vrot.slane %v3163, 1
      %v3176 = vsel %vm1834, %v3173, %v3175
      %v3177 = vrot.slane %v3169, 1
      %v3178 = vsel %vm1834, %v3175, %v3177
      %3179 = vrot.lane.b32.xlu0 %v3174, 32
      %v3180 = vpop.permute.xlu0 %3179
      %3181 = vrot.lane.b32.xlu0 %v3176, 32
      %v3182 = vpop.permute.xlu0 %3181
      %3183 = vrot.lane.b32.xlu0 %v3178, 32
      %v3184 = vpop.permute.xlu0 %3183
      %v3188 = vrot.slane %v3168, 2
      %v3189 = vrot.slane %v3161, 2
      %v3190 = vsel %vm1851, %v3188, %v3189
      %v3191 = vrot.slane %v3163, 2
      %v3192 = vsel %vm1851, %v3189, %v3191
      %v3193 = vrot.slane %v3169, 2
      %v3194 = vsel %vm1851, %v3191, %v3193
      %3195 = vrot.lane.b32.xlu0 %v3190, 64
      %v3196 = vpop.permute.xlu0 %3195
      %3197 = vrot.lane.b32.xlu0 %v3192, 64
      %v3198 = vpop.permute.xlu0 %3197
      %3199 = vrot.lane.b32.xlu0 %v3194, 64
      %v3200 = vpop.permute.xlu0 %3199
      %v3204 = vrot.slane %v3168, 3
      %v3205 = vrot.slane %v3161, 3
      %v3206 = vsel %vm1868, %v3204, %v3205
      %v3207 = vrot.slane %v3163, 3
      %v3208 = vsel %vm1868, %v3205, %v3207
      %v3209 = vrot.slane %v3169, 3
      %v3210 = vsel %vm1868, %v3207, %v3209
      %3211 = vrot.lane.b32.xlu0 %v3206, 96
      %v3212 = vpop.permute.xlu0 %3211
      %3213 = vrot.lane.b32.xlu0 %v3208, 96
      %v3214 = vpop.permute.xlu0 %3213
      %3215 = vrot.lane.b32.xlu0 %v3210, 96
      %v3216 = vpop.permute.xlu0 %3215
      %v3220 = vrot.slane %v3168, 4
      %v3221 = vrot.slane %v3161, 4
      %v3222 = vsel %vm1132, %v3220, %v3221
      %v3223 = vrot.slane %v3163, 4
      %v3224 = vsel %vm1132, %v3221, %v3223
      %v3225 = vrot.slane %v3169, 4
      %v3226 = vsel %vm1132, %v3223, %v3225
      %v3230 = vsel %vm820, %v3168, %v3180
      %v3231 = vsel %vm820, %v3161, %v3182
      %v3232 = vsel %vm820, %v3163, %v3184
      %v3233 = vsel %vm1949, %v3230, %v3196
      %v3234 = vsel %vm1949, %v3231, %v3198
      %v3235 = vsel %vm1949, %v3232, %v3200
      %v3236 = vsel %vm1953, %v3233, %v3212
      %v3237 = vsel %vm1953, %v3234, %v3214
      %v3238 = vsel %vm1953, %v3235, %v3216
      %v3239 = vpack.c.bf16 %v3237, %v3236
      %v3240 = vpack.c.bf16 %v3224, %v3222
      %v3241 = vpack.c.bf16 %v3238, %v3238
      %v3242 = vpack.c.bf16 %v3226, %v3226
      %v3244 = vlaneseq
      %v3245 = vshrl.u32 %v3244, 7
      %v3246 = vsub.s32 0, %v3245
      %v3247 = vrot.slane %v3155, %v3246
      %v3269 = vunpack.c.l.b16 %v3134
      %v3270 = vunpack.c.l.b16 %v3135
      %v3271 = vunpack.c.l.b16 %v3136
      %v3272 = vunpack.c.l.b16 %v3137
      %v3273 = vunpack.c.l.b16 %v3138
      %v3274 = vunpack.c.l.b16 %v3139
      %v3275 = vunpack.c.l.b16 %v3140
      %v3276 = vunpack.c.l.b16 %v3141
      %v3277 = vunpack.c.l.b16 %v3142
      %v3278 = vunpack.c.l.b16 %v3143
      %v3279 = vunpack.c.l.b16 %v3144
      %v3280 = vunpack.c.l.b16 %v3145
      %v3281 = vunpack.c.l.b16 %v3146
      %v3282 = vunpack.c.l.b16 %v3147
      %v3283 = vunpack.c.l.b16 %v3148
      %v3284 = vunpack.c.l.b16 %v3149
      %v3285 = vunpack.c.l.b16 %v3150
      %v3286 = vunpack.c.l.b16 %v3151
      %v3287 = vunpack.c.l.b16 %v3152
      %v3288 = vunpack.c.l.b16 %v3153
      %v3289 = vpack.c.b16 %v3270, %v3269
      %v3290 = vpack.c.b16 %v3272, %v3271
      %v3291 = vpack.c.b16 %v3274, %v3273
      %v3292 = vpack.c.b16 %v3276, %v3275
      %v3293 = vpack.c.b16 %v3278, %v3277
      %v3294 = vpack.c.b16 %v3280, %v3279
      %v3295 = vpack.c.b16 %v3282, %v3281
      %v3296 = vpack.c.b16 %v3284, %v3283
      %v3297 = vpack.c.b16 %v3286, %v3285
      %v3298 = vpack.c.b16 %v3288, %v3287
      %v3310 = vsel %vm820, %v3240, 0
      %v3313 = vsel %vm820, %v3242, 0
      %3315 = vmatprep.subr.bf16.mxu0 0
      %3316 = vmatpush1.bf16.msra.mxu0 %v3289
      %3317 = vmatprep.subr.bf16.mxu0 0
      %3318 = vmatpush1.bf16.msra.mxu0 %v3290
      %3319 = vmatprep.subr.bf16.mxu0 0
      %3320 = vmatpush1.bf16.msra.mxu0 %v3291
      %3321 = vmatprep.subr.bf16.mxu0 0
      %3322 = vmatpush1.bf16.msra.mxu0 %v3292
      %3323 = vmatprep.subr.bf16.mxu0 0
      %3324 = vmatpush1.bf16.msra.mxu0 %v3293
      %3325 = vmatprep.subr.bf16.mxu0 0
      %3326 = vmatpush1.bf16.msra.mxu0 %v3294
      %3327 = vmatprep.subr.bf16.mxu0 0
      %3328 = vmatpush1.bf16.msra.mxu0 %v3295
      %3329 = vmatprep.subr.bf16.mxu0 0
      %3330 = vmatpush1.bf16.msra.mxu0 %v3296
      %3331 = vmatprep.subr.bf16.mxu0 0
      %3332 = vmatpush1.bf16.msra.mxu0 %v3297
      %3333 = vmatprep.subr.bf16.mxu0 0
      %3334 = vmatpush1.bf16.msra.mxu0 %v3298
      %3335 = vmatprep.subr.bf16.mxu0 0
      %3336 = vmatpush1.bf16.msra.mxu0 0
      %3337 = vmatprep.subr.bf16.mxu0 0
      %3338 = vmatpush1.bf16.msra.mxu0 0
      %3339 = vmatprep.subr.bf16.mxu0 0
      %3340 = vmatpush1.bf16.msra.mxu0 0
      %3341 = vmatprep.subr.bf16.mxu0 0
      %3342 = vmatpush1.bf16.msra.mxu0 0
      %3343 = vmatprep.subr.bf16.mxu0 0
      %3344 = vmatpush1.bf16.msra.mxu0 0
      %3345 = vmatprep.subr.bf16.mxu0 0
      %3346 = vmatpush1.bf16.msra.mxu0 0
      %3347 = vmatprep.mubr.bf16.mxu0 %v3310
      %3348 = vmatmul.mubr.bf16.gmra.mrb[0].mxu0 %v3239
      %v3349 = vpop.f32.mrb[0].mxu0
      %v3350 = vadd.f32 %v3247, %v3349
      %v3351 = vpop.f32.mrb[0].mxu0
      %v3352 = vpop.f32.mrb[0].mxu0
      %v3353 = vadd.f32 %v3247, %v3352
      %v3354 = vpop.f32.mrb[0].mxu0
      %3355 = vmatprep.mubr.bf16.mxu0 %v3313
      %3356 = vmatmul.mubr.bf16.gmra.mrb[0].mxu0 %v3241
      %v3357 = vpop.f32.mrb[0].mxu0
      %v3358 = vadd.f32 %v3247, %v3357
      %v3359 = vpop.f32.mrb[0].mxu0
      %v3360 = vpop.f32.mrb[0].mxu0
      %v3361 = vpop.f32.mrb[0].mxu0
      %3362 = vdwg.mxu0
      %v3363 = vtanh.pop %v3350
      %v3364 = vtanh.pop %v3353
      %v3365 = vtanh.pop %v3358
      %s3366 = scalar_lea.vmem %s21, 320
      %v3367 = vld [vmem:[%s3366] sm:$0xf]
      %v3368 = vld [vmem:[%s3366 + $0x4] sm:$0xf]
      %v3369 = vld [vmem:[%s3366 + $0x8] sm:$0xf]
      %v3370 = vld [vmem:[%s3366 + $0xc] sm:$0xf]
      %v3371 = vld [vmem:[%s3366 + $0x10] sm:$0xf]
      %v3372 = vld [vmem:[%s3366 + $0x14] sm:$0xf]
      %v3373 = vld [vmem:[%s3366 + $0x18] sm:$0xf]
      %v3374 = vld [vmem:[%s3366 + $0x1c] sm:$0xf]
      %v3375 = vld [vmem:[%s3366 + $0x20] sm:$0xf]
      %v3376 = vld [vmem:[%s3366 + $0x24] sm:$0xf]
      %v3377 = vld [vmem:[%s3366 + $0x28] sm:$0xf]
      %v3378 = vld [vmem:[%s3366 + $0x2c] sm:$0xf]
      %v3379 = vld [vmem:[%s3366 + $0x30] sm:$0xf]
      %v3380 = vld [vmem:[%s3366 + $0x34] sm:$0xf]
      %v3381 = vld [vmem:[%s3366 + $0x38] sm:$0xf]
      %v3382 = vld [vmem:[%s3366 + $0x3c] sm:$0xf]
      %v3383 = vld [vmem:[%s3366 + $0x40] sm:$0xf]
      %v3384 = vld [vmem:[%s3366 + $0x44] sm:$0xf]
      %v3385 = vld [vmem:[%s3366 + $0x48] sm:$0xf]
      %v3386 = vld [vmem:[%s3366 + $0x4c] sm:$0xf]
      %s3387 = scalar_lea.vmem %s22, 4
      %v3388 = vld [vmem:[%s3387] sm:$0x1]
      %v3392 = vrot.slane %v3363, 6
      %v3393 = vrot.slane %v3364, 6
      %v3394 = vsel %vm1912, %v3392, %v3393
      %v3395 = vrot.slane %v3365, 6
      %v3396 = vsel %vm1912, %v3393, %v3395
      %v3401 = vsel %vm1912, 0.0, %v3392
      %v3402 = vsel %vm1912, %v3395, 0.0
      %v3405 = vrot.slane %v3401, 1
      %v3406 = vrot.slane %v3394, 1
      %v3407 = vsel %vm1834, %v3405, %v3406
      %v3408 = vrot.slane %v3396, 1
      %v3409 = vsel %vm1834, %v3406, %v3408
      %v3410 = vrot.slane %v3402, 1
      %v3411 = vsel %vm1834, %v3408, %v3410
      %3412 = vrot.lane.b32.xlu0 %v3407, 32
      %v3413 = vpop.permute.xlu0 %3412
      %3414 = vrot.lane.b32.xlu0 %v3409, 32
      %v3415 = vpop.permute.xlu0 %3414
      %3416 = vrot.lane.b32.xlu0 %v3411, 32
      %v3417 = vpop.permute.xlu0 %3416
      %v3421 = vrot.slane %v3401, 2
      %v3422 = vrot.slane %v3394, 2
      %v3423 = vsel %vm1851, %v3421, %v3422
      %v3424 = vrot.slane %v3396, 2
      %v3425 = vsel %vm1851, %v3422, %v3424
      %v3426 = vrot.slane %v3402, 2
      %v3427 = vsel %vm1851, %v3424, %v3426
      %3428 = vrot.lane.b32.xlu0 %v3423, 64
      %v3429 = vpop.permute.xlu0 %3428
      %3430 = vrot.lane.b32.xlu0 %v3425, 64
      %v3431 = vpop.permute.xlu0 %3430
      %3432 = vrot.lane.b32.xlu0 %v3427, 64
      %v3433 = vpop.permute.xlu0 %3432
      %v3437 = vrot.slane %v3401, 3
      %v3438 = vrot.slane %v3394, 3
      %v3439 = vsel %vm1868, %v3437, %v3438
      %v3440 = vrot.slane %v3396, 3
      %v3441 = vsel %vm1868, %v3438, %v3440
      %v3442 = vrot.slane %v3402, 3
      %v3443 = vsel %vm1868, %v3440, %v3442
      %3444 = vrot.lane.b32.xlu0 %v3439, 96
      %v3445 = vpop.permute.xlu0 %3444
      %3446 = vrot.lane.b32.xlu0 %v3441, 96
      %v3447 = vpop.permute.xlu0 %3446
      %3448 = vrot.lane.b32.xlu0 %v3443, 96
      %v3449 = vpop.permute.xlu0 %3448
      %v3453 = vrot.slane %v3401, 4
      %v3454 = vrot.slane %v3394, 4
      %v3455 = vsel %vm1132, %v3453, %v3454
      %v3456 = vrot.slane %v3396, 4
      %v3457 = vsel %vm1132, %v3454, %v3456
      %v3458 = vrot.slane %v3402, 4
      %v3459 = vsel %vm1132, %v3456, %v3458
      %v3463 = vsel %vm820, %v3401, %v3413
      %v3464 = vsel %vm820, %v3394, %v3415
      %v3465 = vsel %vm820, %v3396, %v3417
      %v3466 = vsel %vm1949, %v3463, %v3429
      %v3467 = vsel %vm1949, %v3464, %v3431
      %v3468 = vsel %vm1949, %v3465, %v3433
      %v3469 = vsel %vm1953, %v3466, %v3445
      %v3470 = vsel %vm1953, %v3467, %v3447
      %v3471 = vsel %vm1953, %v3468, %v3449
      %v3472 = vpack.c.bf16 %v3470, %v3469
      %v3473 = vpack.c.bf16 %v3457, %v3455
      %v3474 = vpack.c.bf16 %v3471, %v3471
      %v3475 = vpack.c.bf16 %v3459, %v3459
      %v3477 = vlaneseq
      %v3478 = vshrl.u32 %v3477, 7
      %v3479 = vsub.s32 0, %v3478
      %v3480 = vrot.slane %v3388, %v3479
      %v3502 = vunpack.c.l.b16 %v3367
      %v3503 = vunpack.c.l.b16 %v3368
      %v3504 = vunpack.c.l.b16 %v3369
      %v3505 = vunpack.c.l.b16 %v3370
      %v3506 = vunpack.c.l.b16 %v3371
      %v3507 = vunpack.c.l.b16 %v3372
      %v3508 = vunpack.c.l.b16 %v3373
      %v3509 = vunpack.c.l.b16 %v3374
      %v3510 = vunpack.c.l.b16 %v3375
      %v3511 = vunpack.c.l.b16 %v3376
      %v3512 = vunpack.c.l.b16 %v3377
      %v3513 = vunpack.c.l.b16 %v3378
      %v3514 = vunpack.c.l.b16 %v3379
      %v3515 = vunpack.c.l.b16 %v3380
      %v3516 = vunpack.c.l.b16 %v3381
      %v3517 = vunpack.c.l.b16 %v3382
      %v3518 = vunpack.c.l.b16 %v3383
      %v3519 = vunpack.c.l.b16 %v3384
      %v3520 = vunpack.c.l.b16 %v3385
      %v3521 = vunpack.c.l.b16 %v3386
      %v3522 = vpack.c.b16 %v3503, %v3502
      %v3523 = vpack.c.b16 %v3505, %v3504
      %v3524 = vpack.c.b16 %v3507, %v3506
      %v3525 = vpack.c.b16 %v3509, %v3508
      %v3526 = vpack.c.b16 %v3511, %v3510
      %v3527 = vpack.c.b16 %v3513, %v3512
      %v3528 = vpack.c.b16 %v3515, %v3514
      %v3529 = vpack.c.b16 %v3517, %v3516
      %v3530 = vpack.c.b16 %v3519, %v3518
      %v3531 = vpack.c.b16 %v3521, %v3520
      %v3543 = vsel %vm820, %v3473, 0
      %v3546 = vsel %vm820, %v3475, 0
      %3548 = vmatprep.subr.bf16.mxu0 0
      %3549 = vmatpush1.bf16.msra.mxu0 %v3522
      %3550 = vmatprep.subr.bf16.mxu0 0
      %3551 = vmatpush1.bf16.msra.mxu0 %v3523
      %3552 = vmatprep.subr.bf16.mxu0 0
      %3553 = vmatpush1.bf16.msra.mxu0 %v3524
      %3554 = vmatprep.subr.bf16.mxu0 0
      %3555 = vmatpush1.bf16.msra.mxu0 %v3525
      %3556 = vmatprep.subr.bf16.mxu0 0
      %3557 = vmatpush1.bf16.msra.mxu0 %v3526
      %3558 = vmatprep.subr.bf16.mxu0 0
      %3559 = vmatpush1.bf16.msra.mxu0 %v3527
      %3560 = vmatprep.subr.bf16.mxu0 0
      %3561 = vmatpush1.bf16.msra.mxu0 %v3528
      %3562 = vmatprep.subr.bf16.mxu0 0
      %3563 = vmatpush1.bf16.msra.mxu0 %v3529
      %3564 = vmatprep.subr.bf16.mxu0 0
      %3565 = vmatpush1.bf16.msra.mxu0 %v3530
      %3566 = vmatprep.subr.bf16.mxu0 0
      %3567 = vmatpush1.bf16.msra.mxu0 %v3531
      %3568 = vmatprep.subr.bf16.mxu0 0
      %3569 = vmatpush1.bf16.msra.mxu0 0
      %3570 = vmatprep.subr.bf16.mxu0 0
      %3571 = vmatpush1.bf16.msra.mxu0 0
      %3572 = vmatprep.subr.bf16.mxu0 0
      %3573 = vmatpush1.bf16.msra.mxu0 0
      %3574 = vmatprep.subr.bf16.mxu0 0
      %3575 = vmatpush1.bf16.msra.mxu0 0
      %3576 = vmatprep.subr.bf16.mxu0 0
      %3577 = vmatpush1.bf16.msra.mxu0 0
      %3578 = vmatprep.subr.bf16.mxu0 0
      %3579 = vmatpush1.bf16.msra.mxu0 0
      %3580 = vmatprep.mubr.bf16.mxu0 %v3543
      %3581 = vmatmul.mubr.bf16.gmra.mrb[0].mxu0 %v3472
      %v3582 = vpop.f32.mrb[0].mxu0
      %v3583 = vadd.f32 %v3480, %v3582
      %v3584 = vpop.f32.mrb[0].mxu0
      %v3585 = vpop.f32.mrb[0].mxu0
      %v3586 = vadd.f32 %v3480, %v3585
      %v3587 = vpop.f32.mrb[0].mxu0
      %3588 = vmatprep.mubr.bf16.mxu0 %v3546
      %3589 = vmatmul.mubr.bf16.gmra.mrb[0].mxu0 %v3474
      %v3590 = vpop.f32.mrb[0].mxu0
      %v3591 = vadd.f32 %v3480, %v3590
      %v3592 = vpop.f32.mrb[0].mxu0
      %v3593 = vpop.f32.mrb[0].mxu0
      %v3594 = vpop.f32.mrb[0].mxu0
      %3595 = vdwg.mxu0
      %v3596 = vadd.f32 %v3583, %v2417
      %v3597 = vadd.f32 %v3586, %v2420
      %v3598 = vadd.f32 %v3591, %v2425
      %3599 = vst.msk [vmem:[%s784] sm:$0xff] %vm1027, %v3596
      %3600 = vst.msk [vmem:[%s784 + $0x8] sm:$0xff] %vm1027, %v3597
      %3601 = vst.msk [vmem:[%s784 + $0x10] sm:$0xff] %vm1027, %v3598
      %p3602 = scmp.lt.s32.totalorder %s36, 1
      %s3603 = scalar_select %p3602, %s36, 1
      %s3604 = smul.addr %s3603, 3
      %s3605 = smul.addr %s3604, 8
      %s3606 = scalar_lea.vmem %s23, %s3605
      %p3607 = scmp.lt.s32.totalorder %s36, 1
      %s3608 = scalar_select %p3607, %s36, 1
      %s3609 = smul.addr %s3608, 3
      %s3610 = smul.addr %s3609, 8
      %s3611 = scalar_lea.vmem %s24, %s3610
      // Predicated region
      $region113: #{vtts_forward.3} parent=111 // pred_check
        %p3612 = pneg %p552
      $region114: #{vtts_forward.3} parent=111 // pred_check_branch
        %3614 = sbr.rel (%p3612) target = $region116
      $region115: #{vtts_forward.3} parent=111 // pred_region
        _
      $region116: #{vtts_forward.3} parent=111 // pred_fallthru
        _
      // Predicated region
      $region117: #{vtts_forward.3} parent=111 // pred_check
        %p3615 = pneg %p578
      $region118: #{vtts_forward.3} parent=111 // pred_check_branch
        %3617 = sbr.rel (%p3615) target = $region120
      $region119: #{vtts_forward.3} parent=111 // pred_region
        _
      $region120: #{vtts_forward.3} parent=111 // pred_fallthru
        _
    $region112: #{vtts_forward.3} parent=5 // pred_fallthru
      _
    %p3618 = scmp.le.s32.totalorder 2, %s31
    // Predicated region
    $region121: #{vtts_forward.3} parent=5 // pred_check
      %p3619 = pneg %p3618
    $region122: #{vtts_forward.3} parent=5 // pred_check_branch
      %3621 = sbr.rel (%p3619) target = $region124
    $region123: #{vtts_forward.3} parent=5 // pred_region
      %s3622 = ssub.s32 %s31, 2
      // Predicated region
      $region125: #{vtts_forward.3} parent=123 // pred_check
        %p3623 = pneg %p558
      $region126: #{vtts_forward.3} parent=123 // pred_check_branch
        %3625 = sbr.rel (%p3623) target = $region128
      $region127: #{vtts_forward.3} parent=123 // pred_region
        %p3626 = scmp.lt.s32.totalorder %s37, 1
        %s3627 = scalar_select %p3626, %s37, 1
        %s3628 = smul.addr %s3627, 3
        %s3629 = smul.addr %s3628, 8
        %s3630 = scalar_lea.vmem %s23, %s3629
      $region128: #{vtts_forward.3} parent=123 // pred_fallthru
        _
      // Predicated region
      $region129: #{vtts_forward.3} parent=123 // pred_check
        %p3631 = pneg %p584
      $region130: #{vtts_forward.3} parent=123 // pred_check_branch
        %3633 = sbr.rel (%p3631) target = $region132
      $region131: #{vtts_forward.3} parent=123 // pred_region
        %p3634 = scmp.lt.s32.totalorder %s37, 1
        %s3635 = scalar_select %p3634, %s37, 1
        %s3636 = smul.addr %s3635, 3
        %s3637 = smul.addr %s3636, 8
        %s3638 = scalar_lea.vmem %s24, %s3637
      $region132: #{vtts_forward.3} parent=123 // pred_fallthru
        _
    $region124: #{vtts_forward.3} parent=5 // pred_fallthru
      _
  $region6: #{vtts_forward.3} parent=0 // loop_footer
    %s35 = sadd.s32 1, %s31
  $region7: #{vtts_forward.3} parent=0 // loop_footer_branch
    %30 = sbr.rel target = $region3
  $region8: #{vtts_forward.3} parent=0 // loop_exit
    _

</llo_original>
